<compile_context>
chip_gen: v7x
topology: tpu7x:2x2x1
jax: 0.10.0
libtpu: 0.0.40
codegen_flags: <defaults>
</compile_context>

<pallas_src>
import functools
import math

import numpy as np
import jax
import jax.numpy as jnp
from jax.experimental import pallas as pl
from jax.experimental.pallas import tpu as pltpu

# ----------------------------- config ---------------------------------------
B = 2            # batch
SEQ_LEN = 16     # opt.seq_len
ENC_IN = 4       # opt.enc_in
MARK_IN = 4      # time-feature count used by TimeFeatureEmbedding
D_MODEL = 32     # opt.d_model
N_HEADS = 4      # opt.n_heads
D_K = 64
D_V = 64
E_LAYERS = 2     # opt.e_layers
D_BOTTLENECK = 64
WINDOW = [2]     # non-classification task -> window_size = [2]
INNER = 5


# ---------------------- static pyramid structures ---------------------------
def get_mask(input_size, window_size, inner_size):
    """PAM-Naive attention mask (True = blocked) and per-level sizes."""
    all_size = [input_size]
    for w in window_size:
        all_size.append(all_size[-1] // w)
    seq_length = sum(all_size)
    mask = np.zeros((seq_length, seq_length), dtype=np.float32)

    inner_window = inner_size // 2
    for layer_idx in range(len(all_size)):
        start = sum(all_size[:layer_idx])
        for i in range(start, start + all_size[layer_idx]):
            left = max(i - inner_window, start)
            right = min(i + inner_window + 1, start + all_size[layer_idx])
            mask[i, left:right] = 1

    for layer_idx in range(1, len(all_size)):
        start = sum(all_size[:layer_idx])
        for i in range(start, start + all_size[layer_idx]):
            left = (start - all_size[layer_idx - 1]) + (i - start) * window_size[layer_idx - 1]
            if i == (start + all_size[layer_idx] - 1):
                right = start
            else:
                right = (start - all_size[layer_idx - 1]) + (i - start + 1) * window_size[layer_idx - 1]
            mask[i, left:right] = 1
            mask[left:right, i] = 1

    mask = (1 - mask).astype(bool)  # True = blocked
    return mask, all_size


def refer_points(all_sizes, window_size):
    """Indexes used to gather one node per pyramid level for each base position."""
    input_size = all_sizes[0]
    indexes = np.zeros((input_size, len(all_sizes)), dtype=np.int64)
    for i in range(input_size):
        indexes[i, 0] = i
        former = i
        for j in range(1, len(all_sizes)):
            start = sum(all_sizes[:j])
            inner = former - (start - all_sizes[j - 1])
            former = start + min(inner // window_size[j - 1], all_sizes[j] - 1)
            indexes[i, j] = former
    return indexes


def positional_embedding(L, d_model):
    pe = np.zeros((L, d_model), dtype=np.float32)
    position = np.arange(L, dtype=np.float32)[:, None]
    div_term = np.exp(np.arange(0, d_model, 2, dtype=np.float32)
                      * -(math.log(10000.0) / d_model))
    pe[:, 0::2] = np.sin(position * div_term)
    pe[:, 1::2] = np.cos(position * div_term)
    return pe


# ------------------------ in-kernel math helpers ------------------------------
def _erf(x):
    # Abramowitz & Stegun 7.1.26 (max abs err ~1.5e-7); exp-only (EUP-safe).
    a1, a2, a3, a4, a5 = 0.254829592, -0.284496736, 1.421413741, -1.453152027, 1.061405429
    p = 0.3275911
    s = jnp.where(x >= 0.0, 1.0, -1.0)
    ax = jnp.abs(x)
    t = 1.0 / (1.0 + p * ax)
    poly = ((((a5 * t + a4) * t + a3) * t + a2) * t + a1) * t
    return s * (1.0 - poly * jnp.exp(-ax * ax))


def _gelu(x):
    # torch.nn.functional.gelu default (erf form)
    return 0.5 * x * (1.0 + _erf(x * 0.7071067811865476))


def _elu(x):
    return jnp.where(x > 0.0, x, jnp.exp(jnp.minimum(x, 0.0)) - 1.0)


def _layernorm(x, g, b, eps):
    mu = jnp.mean(x, axis=-1, keepdims=True)
    xc = x - mu
    var = jnp.mean(xc * xc, axis=-1, keepdims=True)
    return xc * jax.lax.rsqrt(var + eps) * g + b


# --------------------------- the fused kernel ---------------------------------
def _encoder_kernel(*refs, cfg):
    (Bb, L, enc_in, mark_in, d_model, n_heads, d_k, d_v, e_layers,
     window, all_size) = cfg
    n_levels = len(all_size)
    Lt = sum(all_size)
    up_rows = sum(all_size[1:])
    f32 = jnp.float32

    n_fixed = 23
    (x_enc_ref, x_mark_ref, pos_ref, maskb_ref,
     embw_ref, embb_ref,
     downw_ref, downb_ref, upw_ref, upb_ref, ln0g_ref, ln0b_ref,
     qkvw_ref, fcw_ref, fcb_ref, ln1g_ref, ln1b_ref,
     w1_ref, b1_ref, w2_ref, b2_ref, ln2g_ref, ln2b_ref) = refs[:n_fixed]
    conv_refs = refs[n_fixed:n_fixed + 2 * len(window)]
    repsel_refs = refs[n_fixed + 2 * len(window):
                       n_fixed + 2 * len(window) + (n_levels - 1)]
    out_ref = refs[-2]
    bott_ref = refs[-1]            # VMEM scratch (B*L, d_bottleneck)

    def mm(a, b):
        return jnp.dot(a, b, preferred_element_type=f32)

    # --- DataEmbedding: circular 3-tap token conv + time linear + positional ---
    # Folded into ONE (B*L, 3*enc_in+mark_in) x (3*enc_in+mark_in, d_model) matmul.
    x3 = x_enc_ref[...]            # (B, L, enc_in)
    xm3 = x_mark_ref[...]          # (B, L, mark_in)
    rows = []
    for b in range(Bb):            # cheap layout work only; the matmul is batch-fused
        xb = x3[b]                 # (L, enc_in)
        rows.append(jnp.concatenate(
            [jnp.roll(xb, 1, axis=0),   # x[t-1] (circular)
             xb,                        # x[t]
             jnp.roll(xb, -1, axis=0),  # x[t+1] (circular)
             xm3[b]],                   # time features
            axis=-1))
    emb_in = jnp.concatenate(rows, axis=0)                       # (B*L, 3*enc_in+mark_in)
    seq = mm(emb_in, embw_ref[...]) + embb_ref[...] + pos_ref[...]   # (B*L, d_model)

    # --- Bottleneck_Construct (down-proj, strided conv+BN+ELU, up-proj, concat, LN)
    cur = mm(seq, downw_ref[...]) + downb_ref[...]                # (B*L, d_b)
    d_b = cur.shape[-1]
    pooled = []
    for li, w in enumerate(window):
        rows_in = Bb * all_size[li]
        rows_out = Bb * all_size[li + 1]
        tap_ref, cb_ref = conv_refs[2 * li], conv_refs[2 * li + 1]
        bott_ref[0:rows_in, :] = cur
        acc = None
        for t in range(w):
            # strided conv tap: rows t, t+w, t+2w, ... (BatchNorm folded host-side)
            tap_rows = bott_ref[pl.ds(t, rows_out, stride=w), :]
            term = mm(tap_rows, tap_ref[t])
            acc = term if acc is None else acc + term
        cur = _elu(acc + cb_ref[...])
        pooled.append(cur)
    if len(pooled) == 1:
        allin = pooled[0]
    else:  # reorder per-level blocks into batch-major ordering
        parts = [p.reshape(Bb, all_size[i + 1], d_b) for i, p in enumerate(pooled)]
        allin = jnp.concatenate(parts, axis=1).reshape(Bb * up_rows, d_b)
    allin = mm(allin, upw_ref[...]) + upb_ref[...]                # (B*up_rows, d_model)

    x = jnp.concatenate([seq.reshape(Bb, L, d_model),
                         allin.reshape(Bb, up_rows, d_model)],
                        axis=1).reshape(Bb * Lt, d_model)
    x = _layernorm(x, ln0g_ref[...], ln0b_ref[...], 1e-5)

    # --- encoder layers: post-norm MHA + post-norm GELU FFN ----------------------
    mask_bias = maskb_ref[...]     # (Lt, Lt) additive (-1e9 on blocked)
    for l in range(e_layers):
        qkv = mm(x, qkvw_ref[l])                          # (B*Lt, 3*H*d_k); 1/sqrt(dk) folded into Q
        qkv3 = qkv.reshape(Bb, Lt, 3 * n_heads * d_k)
        heads = []
        for h in range(n_heads):
            q = qkv3[:, :, h * d_k:(h + 1) * d_k]
            k = qkv3[:, :, (n_heads + h) * d_k:(n_heads + h + 1) * d_k]
            v = qkv3[:, :, 2 * n_heads * d_k + h * d_v:
                           2 * n_heads * d_k + (h + 1) * d_v]
            s = jnp.einsum('bqd,bkd->bqk', q, k, preferred_element_type=f32)
            s = s + mask_bias
            s = s - jnp.max(s, axis=-1, keepdims=True)
            p = jnp.exp(s)
            p = p / jnp.sum(p, axis=-1, keepdims=True)    # exact softmax division
            heads.append(jnp.einsum('bqk,bkd->bqd', p, v,
                                    preferred_element_type=f32))
        merged = jnp.concatenate(heads, axis=-1).reshape(Bb * Lt, n_heads * d_v)
        o = mm(merged, fcw_ref[l]) + fcb_ref[l]           # single output projection
        x = _layernorm(o + x, ln1g_ref[l], ln1b_ref[l], 1e-6)

        hh = _gelu(mm(x, w1_ref[l]) + b1_ref[l])
        y = mm(hh, w2_ref[l]) + b2_ref[l]
        x = _layernorm(y + x, ln2g_ref[l], ln2b_ref[l], 1e-6)

    # --- pyramid gather: level 0 is identity, level j>=1 via tiny repeat matmul --
    for b in range(Bb):
        base = b * Lt
        parts = [x[base:base + L, :]]
        for j in range(1, n_levels):
            start = base + sum(all_size[:j])
            blk = x[start:start + all_size[j], :]
            parts.append(mm(repsel_refs[j - 1][...], blk))
        out_ref[b] = parts[0] if n_levels == 1 else jnp.concatenate(parts, axis=-1)


# ------------------------------ wrapper ---------------------------------------
def encoder_forward(params, x_enc, x_mark_enc, mask_bool, indexes, pos_emb, all_size):
    Bb, L, enc_in = x_enc.shape
    mark_in = x_mark_enc.shape[-1]
    n_levels = len(all_size)
    f32 = jnp.float32
    d_b = params["down_w"].shape[1]

    # ---- one-time host-side packing (weights + small constants) ----
    mask_bias = jnp.asarray(mask_bool, f32) * (-1e9)               # additive mask bias

    # DataEmbedding folded weight: [tap(t-1); tap(t); tap(t+1); time_w]
    tokw = jnp.transpose(params["token_conv_w"], (2, 1, 0)).astype(f32)   # (3, enc_in, d_model)
    embw = jnp.concatenate([tokw[0], tokw[1], tokw[2],
                            params["time_w"].astype(f32)], axis=0)
    embb = params["time_b"].reshape(1, -1).astype(f32)
    pos_t = jnp.tile(jnp.asarray(pos_emb, f32), (Bb, 1))           # (B*L, d_model)

    downw = params["down_w"].astype(f32)
    downb = params["down_b"].reshape(1, -1).astype(f32)
    upw = params["up_w"].astype(f32)
    upb = params["up_b"].reshape(1, -1).astype(f32)
    ln0g = params["bn_gamma"].reshape(1, -1).astype(f32)
    ln0b = params["bn_beta"].reshape(1, -1).astype(f32)

    # eval-mode BatchNorm1d (mean=0, var=1, identity affine) folded into the conv.
    # TODO(synk): for a trained checkpoint fold the trained running stats here.
    bn_scale = 1.0 / math.sqrt(1.0 + 1e-5)
    conv_inputs = []
    for li, _ in enumerate(WINDOW):
        taps = (jnp.transpose(params["conv_w"][li], (2, 1, 0)) * bn_scale).astype(f32)  # (w, d_b, d_b)
        cb = (params["conv_b"][li].reshape(1, -1) * bn_scale).astype(f32)
        conv_inputs += [taps, cb]

    inv_temp = 1.0 / math.sqrt(float(D_K))                         # folded into Q weights
    layers = params["layers"]
    qkvw = jnp.stack([jnp.concatenate([lp["wq"] * inv_temp, lp["wk"], lp["wv"]], axis=1)
                      for lp in layers]).astype(f32)               # (E, d_model, 3*H*d_k)
    fcw = jnp.stack([lp["fc_w"] for lp in layers]).astype(f32)
    fcb = jnp.stack([lp["fc_b"].reshape(1, -1) for lp in layers]).astype(f32)
    ln1g = jnp.stack([lp["ln1_g"].reshape(1, -1) for lp in layers]).astype(f32)
    ln1b = jnp.stack([lp["ln1_b"].reshape(1, -1) for lp in layers]).astype(f32)
    w1 = jnp.stack([lp["w1"] for lp in layers]).astype(f32)
    b1 = jnp.stack([lp["b1"].reshape(1, -1) for lp in layers]).astype(f32)
    w2 = jnp.stack([lp["w2"] for lp in layers]).astype(f32)
    b2 = jnp.stack([lp["b2"].reshape(1, -1) for lp in layers]).astype(f32)
    ln2g = jnp.stack([lp["ln2_g"].reshape(1, -1) for lp in layers]).astype(f32)
    ln2b = jnp.stack([lp["ln2_b"].reshape(1, -1) for lp in layers]).astype(f32)

    # pyramid repeat-gather matrices for levels >= 1 (level 0 is the identity)
    repsel_inputs = []
    for j in range(1, n_levels):
        start = sum(all_size[:j])
        rep = np.zeros((L, all_size[j]), np.float32)
        for i in range(L):
            rep[i, int(indexes[i, j]) - start] = 1.0
        repsel_inputs.append(jnp.asarray(rep))

    inputs = ([x_enc.astype(f32), x_mark_enc.astype(f32), pos_t, mask_bias,
               embw, embb, downw, downb, upw, upb, ln0g, ln0b,
               qkvw, fcw, fcb, ln1g, ln1b, w1, b1, w2, b2, ln2g, ln2b]
              + conv_inputs + repsel_inputs)

    cfg = (Bb, L, enc_in, mark_in, D_MODEL, N_HEADS, D_K, D_V, E_LAYERS,
           tuple(WINDOW), tuple(all_size))

    def full_spec(a):
        nd = a.ndim
        return pl.BlockSpec(a.shape, lambda i, nd=nd: (0,) * nd)

    out = pl.pallas_call(
        functools.partial(_encoder_kernel, cfg=cfg),
        out_shape=jax.ShapeDtypeStruct((Bb, L, n_levels * D_MODEL), f32),
        grid=(1,),
        in_specs=[full_spec(a) for a in inputs],
        out_specs=pl.BlockSpec((Bb, L, n_levels * D_MODEL), lambda i: (0, 0, 0)),
        scratch_shapes=[pltpu.VMEM((Bb * L, d_b), jnp.float32)],
        compiler_params=pltpu.CompilerParams(dimension_semantics=("arbitrary",)),
    )(*inputs)
    return out


# ------------------------------ params ----------------------------------------
def init_params(key):
    def nrm(k, shape, scale=0.05):
        return scale * jax.random.normal(k, shape, dtype=jnp.float32)
    keys = iter(jax.random.split(key, 64))
    ps = {
        "token_conv_w": nrm(next(keys), (D_MODEL, ENC_IN, 3)),   # torch Conv1d layout (out, in, k)
        "time_w": nrm(next(keys), (MARK_IN, D_MODEL)),           # Linear stored as (in, out)
        "time_b": nrm(next(keys), (D_MODEL,)),
        "down_w": nrm(next(keys), (D_MODEL, D_BOTTLENECK)),
        "down_b": nrm(next(keys), (D_BOTTLENECK,)),
        "conv_w": [nrm(next(keys), (D_BOTTLENECK, D_BOTTLENECK, w)) for w in WINDOW],
        "conv_b": [nrm(next(keys), (D_BOTTLENECK,)) for _ in WINDOW],
        "up_w": nrm(next(keys), (D_BOTTLENECK, D_MODEL)),
        "up_b": nrm(next(keys), (D_MODEL,)),
        "bn_gamma": jnp.ones((D_MODEL,), jnp.float32),
        "bn_beta": jnp.zeros((D_MODEL,), jnp.float32),
        "layers": [],
    }
    for _ in range(E_LAYERS):
        ps["layers"].append({
            "wq": nrm(next(keys), (D_MODEL, N_HEADS * D_K)),
            "wk": nrm(next(keys), (D_MODEL, N_HEADS * D_K)),
            "wv": nrm(next(keys), (D_MODEL, N_HEADS * D_V)),
            "fc_w": nrm(next(keys), (N_HEADS * D_V, D_MODEL)),
            "fc_b": nrm(next(keys), (D_MODEL,)),
            "ln1_g": jnp.ones((D_MODEL,), jnp.float32),
            "ln1_b": jnp.zeros((D_MODEL,), jnp.float32),
            "w1": nrm(next(keys), (D_MODEL, D_MODEL)),
            "b1": nrm(next(keys), (D_MODEL,)),
            "w2": nrm(next(keys), (D_MODEL, D_MODEL)),
            "b2": nrm(next(keys), (D_MODEL,)),
            "ln2_g": jnp.ones((D_MODEL,), jnp.float32),
            "ln2_b": jnp.zeros((D_MODEL,), jnp.float32),
        })
    return ps


# --------------------------------- main ----------------------------------------
if __name__ == "__main__":
    key = jax.random.PRNGKey(0)
    kx, km, kp = jax.random.split(key, 3)
    x_enc = jax.random.normal(kx, (B, SEQ_LEN, ENC_IN), dtype=jnp.float32)
    x_mark_enc = jax.random.normal(km, (B, SEQ_LEN, MARK_IN), dtype=jnp.float32)
    params = init_params(kp)

    mask_bool, all_size = get_mask(SEQ_LEN, WINDOW, INNER)
    indexes = refer_points(all_size, WINDOW)
    pos_emb = positional_embedding(SEQ_LEN, D_MODEL)

    out = encoder_forward(params, x_enc, x_mark_enc, mask_bool, indexes, pos_emb, all_size)
    out = jax.block_until_ready(out)
    assert out.shape == (B, SEQ_LEN, len(all_size) * D_MODEL), out.shape
    assert bool(jnp.all(jnp.isfinite(out)))
    print("KERNEL_OK")
</pallas_src>

<mosaic_0001>
module attributes {stable_mosaic.version = 11 : i64} {
  func.func @_encoder_kernel(%arg0: i32, %arg1: memref<2x16x4xf32, #tpu.memory_space<vmem>>, %arg2: memref<2x16x4xf32, #tpu.memory_space<vmem>>, %arg3: memref<32x32xf32, #tpu.memory_space<vmem>>, %arg4: memref<24x24xf32, #tpu.memory_space<vmem>>, %arg5: memref<16x32xf32, #tpu.memory_space<vmem>>, %arg6: memref<1x32xf32, #tpu.memory_space<vmem>>, %arg7: memref<32x64xf32, #tpu.memory_space<vmem>>, %arg8: memref<1x64xf32, #tpu.memory_space<vmem>>, %arg9: memref<64x32xf32, #tpu.memory_space<vmem>>, %arg10: memref<1x32xf32, #tpu.memory_space<vmem>>, %arg11: memref<1x32xf32, #tpu.memory_space<vmem>>, %arg12: memref<1x32xf32, #tpu.memory_space<vmem>>, %arg13: memref<2x32x768xf32, #tpu.memory_space<vmem>>, %arg14: memref<2x256x32xf32, #tpu.memory_space<vmem>>, %arg15: memref<2x1x32xf32, #tpu.memory_space<vmem>>, %arg16: memref<2x1x32xf32, #tpu.memory_space<vmem>>, %arg17: memref<2x1x32xf32, #tpu.memory_space<vmem>>, %arg18: memref<2x32x32xf32, #tpu.memory_space<vmem>>, %arg19: memref<2x1x32xf32, #tpu.memory_space<vmem>>, %arg20: memref<2x32x32xf32, #tpu.memory_space<vmem>>, %arg21: memref<2x1x32xf32, #tpu.memory_space<vmem>>, %arg22: memref<2x1x32xf32, #tpu.memory_space<vmem>>, %arg23: memref<2x1x32xf32, #tpu.memory_space<vmem>>, %arg24: memref<2x64x64xf32, #tpu.memory_space<vmem>>, %arg25: memref<1x64xf32, #tpu.memory_space<vmem>>, %arg26: memref<16x8xf32, #tpu.memory_space<vmem>>, %arg27: memref<2x16x64xf32, #tpu.memory_space<vmem>>, %arg28: memref<32x64xf32, #tpu.memory_space<vmem>>) attributes {dimension_semantics = [#tpu.dimension_semantics<arbitrary>], iteration_bounds = array<i64: 1>, scalar_prefetch = 0 : i64, scratch_operands = 1 : i64, tpu.core_type = #tpu.core_type<tc>, window_params = [{pipeline_mode = #tpu.pipeline_mode<synchronous>, transform_indices = @transform_0, window_bounds = array<i64: 2, 16, 4>}, {pipeline_mode = #tpu.pipeline_mode<synchronous>, transform_indices = @transform_1, window_bounds = array<i64: 2, 16, 4>}, {pipeline_mode = #tpu.pipeline_mode<synchronous>, transform_indices = @transform_2, window_bounds = array<i64: 32, 32>}, {pipeline_mode = #tpu.pipeline_mode<synchronous>, transform_indices = @transform_3, window_bounds = array<i64: 24, 24>}, {pipeline_mode = #tpu.pipeline_mode<synchronous>, transform_indices = @transform_4, window_bounds = array<i64: 16, 32>}, {pipeline_mode = #tpu.pipeline_mode<synchronous>, transform_indices = @transform_5, window_bounds = array<i64: 1, 32>}, {pipeline_mode = #tpu.pipeline_mode<synchronous>, transform_indices = @transform_6, window_bounds = array<i64: 32, 64>}, {pipeline_mode = #tpu.pipeline_mode<synchronous>, transform_indices = @transform_7, window_bounds = array<i64: 1, 64>}, {pipeline_mode = #tpu.pipeline_mode<synchronous>, transform_indices = @transform_8, window_bounds = array<i64: 64, 32>}, {pipeline_mode = #tpu.pipeline_mode<synchronous>, transform_indices = @transform_9, window_bounds = array<i64: 1, 32>}, {pipeline_mode = #tpu.pipeline_mode<synchronous>, transform_indices = @transform_10, window_bounds = array<i64: 1, 32>}, {pipeline_mode = #tpu.pipeline_mode<synchronous>, transform_indices = @transform_11, window_bounds = array<i64: 1, 32>}, {pipeline_mode = #tpu.pipeline_mode<synchronous>, transform_indices = @transform_12, window_bounds = array<i64: 2, 32, 768>}, {pipeline_mode = #tpu.pipeline_mode<synchronous>, transform_indices = @transform_13, window_bounds = array<i64: 2, 256, 32>}, {pipeline_mode = #tpu.pipeline_mode<synchronous>, transform_indices = @transform_14, window_bounds = array<i64: 2, 1, 32>}, {pipeline_mode = #tpu.pipeline_mode<synchronous>, transform_indices = @transform_15, window_bounds = array<i64: 2, 1, 32>}, {pipeline_mode = #tpu.pipeline_mode<synchronous>, transform_indices = @transform_16, window_bounds = array<i64: 2, 1, 32>}, {pipeline_mode = #tpu.pipeline_mode<synchronous>, transform_indices = @transform_17, window_bounds = array<i64: 2, 32, 32>}, {pipeline_mode = #tpu.pipeline_mode<synchronous>, transform_indices = @transform_18, window_bounds = array<i64: 2, 1, 32>}, {pipeline_mode = #tpu.pipeline_mode<synchronous>, transform_indices = @transform_19, window_bounds = array<i64: 2, 32, 32>}, {pipeline_mode = #tpu.pipeline_mode<synchronous>, transform_indices = @transform_20, window_bounds = array<i64: 2, 1, 32>}, {pipeline_mode = #tpu.pipeline_mode<synchronous>, transform_indices = @transform_21, window_bounds = array<i64: 2, 1, 32>}, {pipeline_mode = #tpu.pipeline_mode<synchronous>, transform_indices = @transform_22, window_bounds = array<i64: 2, 1, 32>}, {pipeline_mode = #tpu.pipeline_mode<synchronous>, transform_indices = @transform_23, window_bounds = array<i64: 2, 64, 64>}, {pipeline_mode = #tpu.pipeline_mode<synchronous>, transform_indices = @transform_24, window_bounds = array<i64: 1, 64>}, {pipeline_mode = #tpu.pipeline_mode<synchronous>, transform_indices = @transform_25, window_bounds = array<i64: 16, 8>}, {pipeline_mode = #tpu.pipeline_mode<synchronous>, transform_indices = @transform_26, window_bounds = array<i64: 2, 16, 64>}]} {
    %c0 = arith.constant 0 : index
    %c0_0 = arith.constant 0 : index
    %c0_1 = arith.constant 0 : index
    %0 = vector.load %arg1[%c0, %c0_0, %c0_1] : memref<2x16x4xf32, #tpu.memory_space<vmem>>, vector<2x16x4xf32>
    %c0_2 = arith.constant 0 : index
    %c0_3 = arith.constant 0 : index
    %c0_4 = arith.constant 0 : index
    %1 = vector.load %arg2[%c0_2, %c0_3, %c0_4] : memref<2x16x4xf32, #tpu.memory_space<vmem>>, vector<2x16x4xf32>
    %2 = vector.extract_strided_slice %0 {offsets = [0, 0, 0], sizes = [1, 16, 4], strides = [1, 1, 1]} : vector<2x16x4xf32> to vector<1x16x4xf32>
    %3 = vector.shape_cast %2 : vector<1x16x4xf32> to vector<16x4xf32>
    %4 = vector.extract_strided_slice %3 {offsets = [15, 0], sizes = [1, 4], strides = [1, 1]} : vector<16x4xf32> to vector<1x4xf32>
    %5 = vector.extract_strided_slice %3 {offsets = [0, 0], sizes = [15, 4], strides = [1, 1]} : vector<16x4xf32> to vector<15x4xf32>
    %6 = tpu.concatenate %4, %5 in 0 : vector<1x4xf32>, vector<15x4xf32> -> vector<16x4xf32>
    %7 = vector.extract_strided_slice %3 {offsets = [1, 0], sizes = [15, 4], strides = [1, 1]} : vector<16x4xf32> to vector<15x4xf32>
    %8 = vector.extract_strided_slice %3 {offsets = [0, 0], sizes = [1, 4], strides = [1, 1]} : vector<16x4xf32> to vector<1x4xf32>
    %9 = tpu.concatenate %7, %8 in 0 : vector<15x4xf32>, vector<1x4xf32> -> vector<16x4xf32>
    %10 = vector.extract_strided_slice %1 {offsets = [0, 0, 0], sizes = [1, 16, 4], strides = [1, 1, 1]} : vector<2x16x4xf32> to vector<1x16x4xf32>
    %11 = vector.shape_cast %10 : vector<1x16x4xf32> to vector<16x4xf32>
    %12 = tpu.concatenate %6, %3, %9, %11 in 1 : vector<16x4xf32>, vector<16x4xf32>, vector<16x4xf32>, vector<16x4xf32> -> vector<16x16xf32>
    %13 = vector.extract_strided_slice %0 {offsets = [1, 0, 0], sizes = [1, 16, 4], strides = [1, 1, 1]} : vector<2x16x4xf32> to vector<1x16x4xf32>
    %14 = vector.shape_cast %13 : vector<1x16x4xf32> to vector<16x4xf32>
    %15 = vector.extract_strided_slice %14 {offsets = [15, 0], sizes = [1, 4], strides = [1, 1]} : vector<16x4xf32> to vector<1x4xf32>
    %16 = vector.extract_strided_slice %14 {offsets = [0, 0], sizes = [15, 4], strides = [1, 1]} : vector<16x4xf32> to vector<15x4xf32>
    %17 = tpu.concatenate %15, %16 in 0 : vector<1x4xf32>, vector<15x4xf32> -> vector<16x4xf32>
    %18 = vector.extract_strided_slice %14 {offsets = [1, 0], sizes = [15, 4], strides = [1, 1]} : vector<16x4xf32> to vector<15x4xf32>
    %19 = vector.extract_strided_slice %14 {offsets = [0, 0], sizes = [1, 4], strides = [1, 1]} : vector<16x4xf32> to vector<1x4xf32>
    %20 = tpu.concatenate %18, %19 in 0 : vector<15x4xf32>, vector<1x4xf32> -> vector<16x4xf32>
    %21 = vector.extract_strided_slice %1 {offsets = [1, 0, 0], sizes = [1, 16, 4], strides = [1, 1, 1]} : vector<2x16x4xf32> to vector<1x16x4xf32>
    %22 = vector.shape_cast %21 : vector<1x16x4xf32> to vector<16x4xf32>
    %23 = tpu.concatenate %17, %14, %20, %22 in 1 : vector<16x4xf32>, vector<16x4xf32>, vector<16x4xf32>, vector<16x4xf32> -> vector<16x16xf32>
    %24 = tpu.concatenate %12, %23 in 0 : vector<16x16xf32>, vector<16x16xf32> -> vector<32x16xf32>
    %c0_5 = arith.constant 0 : index
    %c0_6 = arith.constant 0 : index
    %25 = vector.load %arg5[%c0_5, %c0_6] : memref<16x32xf32, #tpu.memory_space<vmem>>, vector<16x32xf32>
    %cst = arith.constant dense<0.000000e+00> : vector<32x32xf32>
    %26 = tpu.matmul %24, %25, %cst {dimension_numbers = #tpu.dot_dimension_numbers<[1], [0], [0], [1], [0, 0, 1, 1], [], []>} : vector<32x16xf32>, vector<16x32xf32>, vector<32x32xf32> -> vector<32x32xf32>
    %c0_7 = arith.constant 0 : index
    %c0_8 = arith.constant 0 : index
    %27 = vector.load %arg6[%c0_7, %c0_8] : memref<1x32xf32, #tpu.memory_space<vmem>>, vector<1x32xf32>
    %28 = vector.broadcast %27 : vector<1x32xf32> to vector<32x32xf32>
    %29 = arith.addf %26, %28 : vector<32x32xf32>
    %c0_9 = arith.constant 0 : index
    %c0_10 = arith.constant 0 : index
    %30 = vector.load %arg3[%c0_9, %c0_10] : memref<32x32xf32, #tpu.memory_space<vmem>>, vector<32x32xf32>
    %31 = arith.addf %29, %30 : vector<32x32xf32>
    %c0_11 = arith.constant 0 : index
    %c0_12 = arith.constant 0 : index
    %32 = vector.load %arg7[%c0_11, %c0_12] : memref<32x64xf32, #tpu.memory_space<vmem>>, vector<32x64xf32>
    %cst_13 = arith.constant dense<0.000000e+00> : vector<32x64xf32>
    %33 = tpu.matmul %31, %32, %cst_13 {dimension_numbers = #tpu.dot_dimension_numbers<[1], [0], [0], [1], [0, 0, 1, 1], [], []>} : vector<32x32xf32>, vector<32x64xf32>, vector<32x64xf32> -> vector<32x64xf32>
    %c0_14 = arith.constant 0 : index
    %c0_15 = arith.constant 0 : index
    %34 = vector.load %arg8[%c0_14, %c0_15] : memref<1x64xf32, #tpu.memory_space<vmem>>, vector<1x64xf32>
    %35 = vector.broadcast %34 : vector<1x64xf32> to vector<32x64xf32>
    %36 = arith.addf %33, %35 : vector<32x64xf32>
    %c0_16 = arith.constant 0 : index
    %c0_17 = arith.constant 0 : index
    %37 = vector.load %arg28[%c0_16, %c0_17] : memref<32x64xf32, #tpu.memory_space<vmem>>, vector<32x64xf32>
    tpu.vector_store %arg28[%c0_16, %c0_17], %36 {strides = array<i32>} : memref<32x64xf32, #tpu.memory_space<vmem>>, vector<32x64xf32>,
    %c0_18 = arith.constant 0 : index
    %c0_19 = arith.constant 0 : index
    %38 = tpu.strided_load %arg28[%c0_18, %c0_19] {strides = array<i32: 2, 1>} : memref<32x64xf32, #tpu.memory_space<vmem>>, vector<16x64xf32>
    %c0_20 = arith.constant 0 : index
    %c0_21 = arith.constant 0 : index
    %c0_22 = arith.constant 0 : index
    %39 = vector.load %arg24[%c0_20, %c0_21, %c0_22] : memref<2x64x64xf32, #tpu.memory_space<vmem>>, vector<1x64x64xf32>
    %40 = vector.shape_cast %39 : vector<1x64x64xf32> to vector<64x64xf32>
    %cst_23 = arith.constant dense<0.000000e+00> : vector<16x64xf32>
    %41 = tpu.matmul %38, %40, %cst_23 {dimension_numbers = #tpu.dot_dimension_numbers<[1], [0], [0], [1], [0, 0, 1, 1], [], []>} : vector<16x64xf32>, vector<64x64xf32>, vector<16x64xf32> -> vector<16x64xf32>
    %c1 = arith.constant 1 : index
    %c0_24 = arith.constant 0 : index
    %42 = tpu.strided_load %arg28[%c1, %c0_24] {strides = array<i32: 2, 1>} : memref<32x64xf32, #tpu.memory_space<vmem>>, vector<16x64xf32>
    %c1_25 = arith.constant 1 : index
    %c0_26 = arith.constant 0 : index
    %c0_27 = arith.constant 0 : index
    %43 = vector.load %arg24[%c1_25, %c0_26, %c0_27] : memref<2x64x64xf32, #tpu.memory_space<vmem>>, vector<1x64x64xf32>
    %44 = vector.shape_cast %43 : vector<1x64x64xf32> to vector<64x64xf32>
    %cst_28 = arith.constant dense<0.000000e+00> : vector<16x64xf32>
    %45 = tpu.matmul %42, %44, %cst_28 {dimension_numbers = #tpu.dot_dimension_numbers<[1], [0], [0], [1], [0, 0, 1, 1], [], []>} : vector<16x64xf32>, vector<64x64xf32>, vector<16x64xf32> -> vector<16x64xf32>
    %46 = arith.addf %41, %45 : vector<16x64xf32>
    %c0_29 = arith.constant 0 : index
    %c0_30 = arith.constant 0 : index
    %47 = vector.load %arg25[%c0_29, %c0_30] : memref<1x64xf32, #tpu.memory_space<vmem>>, vector<1x64xf32>
    %48 = vector.broadcast %47 : vector<1x64xf32> to vector<16x64xf32>
    %49 = arith.addf %46, %48 : vector<16x64xf32>
    %cst_31 = arith.constant 0.000000e+00 : f32
    %50 = vector.broadcast %cst_31 : f32 to vector<16x64xf32>
    %51 = arith.cmpf ogt, %49, %50 : vector<16x64xf32>
    %cst_32 = arith.constant 0.000000e+00 : f32
    %52 = vector.broadcast %cst_32 : f32 to vector<16x64xf32>
    %53 = arith.minimumf %49, %52 : vector<16x64xf32>
    %54 = math.exp %53 : vector<16x64xf32>
    %cst_33 = arith.constant 1.000000e+00 : f32
    %55 = vector.broadcast %cst_33 : f32 to vector<16x64xf32>
    %56 = arith.subf %54, %55 : vector<16x64xf32>
    %57 = arith.select %51, %49, %56 : vector<16x64xi1>, vector<16x64xf32>
    %c0_34 = arith.constant 0 : index
    %c0_35 = arith.constant 0 : index
    %58 = vector.load %arg9[%c0_34, %c0_35] : memref<64x32xf32, #tpu.memory_space<vmem>>, vector<64x32xf32>
    %cst_36 = arith.constant dense<0.000000e+00> : vector<16x32xf32>
    %59 = tpu.matmul %57, %58, %cst_36 {dimension_numbers = #tpu.dot_dimension_numbers<[1], [0], [0], [1], [0, 0, 1, 1], [], []>} : vector<16x64xf32>, vector<64x32xf32>, vector<16x32xf32> -> vector<16x32xf32>
    %c0_37 = arith.constant 0 : index
    %c0_38 = arith.constant 0 : index
    %60 = vector.load %arg10[%c0_37, %c0_38] : memref<1x32xf32, #tpu.memory_space<vmem>>, vector<1x32xf32>
    %61 = vector.broadcast %60 : vector<1x32xf32> to vector<16x32xf32>
    %62 = arith.addf %59, %61 : vector<16x32xf32>
    %63 = vector.shape_cast %31 : vector<32x32xf32> to vector<2x16x32xf32>
    %64 = vector.shape_cast %62 : vector<16x32xf32> to vector<2x8x32xf32>
    %65 = tpu.concatenate %63, %64 in 1 : vector<2x16x32xf32>, vector<2x8x32xf32> -> vector<2x24x32xf32>
    %66 = vector.shape_cast %65 : vector<2x24x32xf32> to vector<48x32xf32>
    %c0_39 = arith.constant 0 : index
    %c0_40 = arith.constant 0 : index
    %67 = vector.load %arg11[%c0_39, %c0_40] : memref<1x32xf32, #tpu.memory_space<vmem>>, vector<1x32xf32>
    %c0_41 = arith.constant 0 : index
    %c0_42 = arith.constant 0 : index
    %68 = vector.load %arg12[%c0_41, %c0_42] : memref<1x32xf32, #tpu.memory_space<vmem>>, vector<1x32xf32>
    %cst_43 = arith.constant dense<0.000000e+00> : vector<48xf32>
    %69 = vector.multi_reduction <add>, %66, %cst_43 [1] : vector<48x32xf32> to vector<48xf32>
    %70 = vector.shape_cast %69 : vector<48xf32> to vector<48x1xf32>
    %cst_44 = arith.constant 3.200000e+01 : f32
    %71 = vector.broadcast %cst_44 : f32 to vector<48x1xf32>
    %72 = arith.divf %70, %71 : vector<48x1xf32>
    %73 = vector.broadcast %72 : vector<48x1xf32> to vector<48x32xf32>
    %74 = arith.subf %66, %73 : vector<48x32xf32>
    %75 = arith.mulf %74, %74 : vector<48x32xf32>
    %cst_45 = arith.constant dense<0.000000e+00> : vector<48xf32>
    %76 = vector.multi_reduction <add>, %75, %cst_45 [1] : vector<48x32xf32> to vector<48xf32>
    %77 = vector.shape_cast %76 : vector<48xf32> to vector<48x1xf32>
    %cst_46 = arith.constant 3.200000e+01 : f32
    %78 = vector.broadcast %cst_46 : f32 to vector<48x1xf32>
    %79 = arith.divf %77, %78 : vector<48x1xf32>
    %cst_47 = arith.constant 9.99999974E-6 : f32
    %80 = vector.broadcast %cst_47 : f32 to vector<48x1xf32>
    %81 = arith.addf %79, %80 : vector<48x1xf32>
    %82 = math.rsqrt %81 : vector<48x1xf32>
    %83 = vector.broadcast %82 : vector<48x1xf32> to vector<48x32xf32>
    %84 = arith.mulf %74, %83 : vector<48x32xf32>
    %85 = vector.broadcast %67 : vector<1x32xf32> to vector<48x32xf32>
    %86 = arith.mulf %84, %85 : vector<48x32xf32>
    %87 = vector.broadcast %68 : vector<1x32xf32> to vector<48x32xf32>
    %88 = arith.addf %86, %87 : vector<48x32xf32>
    %c0_48 = arith.constant 0 : index
    %c0_49 = arith.constant 0 : index
    %89 = vector.load %arg4[%c0_48, %c0_49] : memref<24x24xf32, #tpu.memory_space<vmem>>, vector<24x24xf32>
    %c0_50 = arith.constant 0 : index
    %c0_51 = arith.constant 0 : index
    %c0_52 = arith.constant 0 : index
    %90 = vector.load %arg13[%c0_50, %c0_51, %c0_52] : memref<2x32x768xf32, #tpu.memory_space<vmem>>, vector<1x32x768xf32>
    %91 = vector.shape_cast %90 : vector<1x32x768xf32> to vector<32x768xf32>
    %cst_53 = arith.constant dense<0.000000e+00> : vector<48x768xf32>
    %92 = tpu.matmul %88, %91, %cst_53 {dimension_numbers = #tpu.dot_dimension_numbers<[1], [0], [0], [1], [0, 0, 1, 1], [], []>} : vector<48x32xf32>, vector<32x768xf32>, vector<48x768xf32> -> vector<48x768xf32>
    %93 = vector.shape_cast %92 : vector<48x768xf32> to vector<2x24x768xf32>
    %94 = vector.extract_strided_slice %93 {offsets = [0, 0, 0], sizes = [2, 24, 64], strides = [1, 1, 1]} : vector<2x24x768xf32> to vector<2x24x64xf32>
    %95 = vector.extract_strided_slice %93 {offsets = [0, 0, 256], sizes = [2, 24, 64], strides = [1, 1, 1]} : vector<2x24x768xf32> to vector<2x24x64xf32>
    %96 = vector.extract_strided_slice %93 {offsets = [0, 0, 512], sizes = [2, 24, 64], strides = [1, 1, 1]} : vector<2x24x768xf32> to vector<2x24x64xf32>
    "tpu.trace_start"() <{level = 10 : i32, message = "bqd,bkd->bqk"}> : () -> ()
    %cst_54 = arith.constant dense<0.000000e+00> : vector<2x24x24xf32>
    %97 = tpu.matmul %94, %95, %cst_54 {dimension_numbers = #tpu.dot_dimension_numbers<[2], [2], [1], [1], [0, 0, 0, 1, 1, 1], [0], [0]>} : vector<2x24x64xf32>, vector<2x24x64xf32>, vector<2x24x24xf32> -> vector<2x24x24xf32>
    "tpu.trace_stop"() : () -> ()
    %98 = vector.shape_cast %89 : vector<24x24xf32> to vector<1x24x24xf32>
    %99 = vector.broadcast %98 : vector<1x24x24xf32> to vector<2x24x24xf32>
    %100 = arith.addf %97, %99 : vector<2x24x24xf32>
    %cst_55 = arith.constant dense<0xFF800000> : vector<2x24xf32>
    %101 = vector.multi_reduction <maximumf>, %100, %cst_55 [2] : vector<2x24x24xf32> to vector<2x24xf32>
    %102 = vector.shape_cast %101 : vector<2x24xf32> to vector<2x24x1xf32>
    %103 = vector.broadcast %102 : vector<2x24x1xf32> to vector<2x24x24xf32>
    %104 = arith.subf %100, %103 : vector<2x24x24xf32>
    %105 = math.exp %104 : vector<2x24x24xf32>
    %cst_56 = arith.constant dense<0.000000e+00> : vector<2x24xf32>
    %106 = vector.multi_reduction <add>, %105, %cst_56 [2] : vector<2x24x24xf32> to vector<2x24xf32>
    %107 = vector.shape_cast %106 : vector<2x24xf32> to vector<2x24x1xf32>
    %108 = vector.broadcast %107 : vector<2x24x1xf32> to vector<2x24x24xf32>
    %109 = arith.divf %105, %108 : vector<2x24x24xf32>
    "tpu.trace_start"() <{level = 10 : i32, message = "bqk,bkd->bqd"}> : () -> ()
    %cst_57 = arith.constant dense<0.000000e+00> : vector<2x24x64xf32>
    %110 = tpu.matmul %109, %96, %cst_57 {dimension_numbers = #tpu.dot_dimension_numbers<[2], [1], [1], [2], [0, 0, 0, 1, 1, 2], [0], [0]>} : vector<2x24x24xf32>, vector<2x24x64xf32>, vector<2x24x64xf32> -> vector<2x24x64xf32>
    "tpu.trace_stop"() : () -> ()
    %111 = vector.extract_strided_slice %93 {offsets = [0, 0, 64], sizes = [2, 24, 64], strides = [1, 1, 1]} : vector<2x24x768xf32> to vector<2x24x64xf32>
    %112 = vector.extract_strided_slice %93 {offsets = [0, 0, 320], sizes = [2, 24, 64], strides = [1, 1, 1]} : vector<2x24x768xf32> to vector<2x24x64xf32>
    %113 = vector.extract_strided_slice %93 {offsets = [0, 0, 576], sizes = [2, 24, 64], strides = [1, 1, 1]} : vector<2x24x768xf32> to vector<2x24x64xf32>
    "tpu.trace_start"() <{level = 10 : i32, message = "bqd,bkd->bqk"}> : () -> ()
    %cst_58 = arith.constant dense<0.000000e+00> : vector<2x24x24xf32>
    %114 = tpu.matmul %111, %112, %cst_58 {dimension_numbers = #tpu.dot_dimension_numbers<[2], [2], [1], [1], [0, 0, 0, 1, 1, 1], [0], [0]>} : vector<2x24x64xf32>, vector<2x24x64xf32>, vector<2x24x24xf32> -> vector<2x24x24xf32>
    "tpu.trace_stop"() : () -> ()
    %115 = vector.shape_cast %89 : vector<24x24xf32> to vector<1x24x24xf32>
    %116 = vector.broadcast %115 : vector<1x24x24xf32> to vector<2x24x24xf32>
    %117 = arith.addf %114, %116 : vector<2x24x24xf32>
    %cst_59 = arith.constant dense<0xFF800000> : vector<2x24xf32>
    %118 = vector.multi_reduction <maximumf>, %117, %cst_59 [2] : vector<2x24x24xf32> to vector<2x24xf32>
    %119 = vector.shape_cast %118 : vector<2x24xf32> to vector<2x24x1xf32>
    %120 = vector.broadcast %119 : vector<2x24x1xf32> to vector<2x24x24xf32>
    %121 = arith.subf %117, %120 : vector<2x24x24xf32>
    %122 = math.exp %121 : vector<2x24x24xf32>
    %cst_60 = arith.constant dense<0.000000e+00> : vector<2x24xf32>
    %123 = vector.multi_reduction <add>, %122, %cst_60 [2] : vector<2x24x24xf32> to vector<2x24xf32>
    %124 = vector.shape_cast %123 : vector<2x24xf32> to vector<2x24x1xf32>
    %125 = vector.broadcast %124 : vector<2x24x1xf32> to vector<2x24x24xf32>
    %126 = arith.divf %122, %125 : vector<2x24x24xf32>
    "tpu.trace_start"() <{level = 10 : i32, message = "bqk,bkd->bqd"}> : () -> ()
    %cst_61 = arith.constant dense<0.000000e+00> : vector<2x24x64xf32>
    %127 = tpu.matmul %126, %113, %cst_61 {dimension_numbers = #tpu.dot_dimension_numbers<[2], [1], [1], [2], [0, 0, 0, 1, 1, 2], [0], [0]>} : vector<2x24x24xf32>, vector<2x24x64xf32>, vector<2x24x64xf32> -> vector<2x24x64xf32>
    "tpu.trace_stop"() : () -> ()
    %128 = vector.extract_strided_slice %93 {offsets = [0, 0, 128], sizes = [2, 24, 64], strides = [1, 1, 1]} : vector<2x24x768xf32> to vector<2x24x64xf32>
    %129 = vector.extract_strided_slice %93 {offsets = [0, 0, 384], sizes = [2, 24, 64], strides = [1, 1, 1]} : vector<2x24x768xf32> to vector<2x24x64xf32>
    %130 = vector.extract_strided_slice %93 {offsets = [0, 0, 640], sizes = [2, 24, 64], strides = [1, 1, 1]} : vector<2x24x768xf32> to vector<2x24x64xf32>
    "tpu.trace_start"() <{level = 10 : i32, message = "bqd,bkd->bqk"}> : () -> ()
    %cst_62 = arith.constant dense<0.000000e+00> : vector<2x24x24xf32>
    %131 = tpu.matmul %128, %129, %cst_62 {dimension_numbers = #tpu.dot_dimension_numbers<[2], [2], [1], [1], [0, 0, 0, 1, 1, 1], [0], [0]>} : vector<2x24x64xf32>, vector<2x24x64xf32>, vector<2x24x24xf32> -> vector<2x24x24xf32>
    "tpu.trace_stop"() : () -> ()
    %132 = vector.shape_cast %89 : vector<24x24xf32> to vector<1x24x24xf32>
    %133 = vector.broadcast %132 : vector<1x24x24xf32> to vector<2x24x24xf32>
    %134 = arith.addf %131, %133 : vector<2x24x24xf32>
    %cst_63 = arith.constant dense<0xFF800000> : vector<2x24xf32>
    %135 = vector.multi_reduction <maximumf>, %134, %cst_63 [2] : vector<2x24x24xf32> to vector<2x24xf32>
    %136 = vector.shape_cast %135 : vector<2x24xf32> to vector<2x24x1xf32>
    %137 = vector.broadcast %136 : vector<2x24x1xf32> to vector<2x24x24xf32>
    %138 = arith.subf %134, %137 : vector<2x24x24xf32>
    %139 = math.exp %138 : vector<2x24x24xf32>
    %cst_64 = arith.constant dense<0.000000e+00> : vector<2x24xf32>
    %140 = vector.multi_reduction <add>, %139, %cst_64 [2] : vector<2x24x24xf32> to vector<2x24xf32>
    %141 = vector.shape_cast %140 : vector<2x24xf32> to vector<2x24x1xf32>
    %142 = vector.broadcast %141 : vector<2x24x1xf32> to vector<2x24x24xf32>
    %143 = arith.divf %139, %142 : vector<2x24x24xf32>
    "tpu.trace_start"() <{level = 10 : i32, message = "bqk,bkd->bqd"}> : () -> ()
    %cst_65 = arith.constant dense<0.000000e+00> : vector<2x24x64xf32>
    %144 = tpu.matmul %143, %130, %cst_65 {dimension_numbers = #tpu.dot_dimension_numbers<[2], [1], [1], [2], [0, 0, 0, 1, 1, 2], [0], [0]>} : vector<2x24x24xf32>, vector<2x24x64xf32>, vector<2x24x64xf32> -> vector<2x24x64xf32>
    "tpu.trace_stop"() : () -> ()
    %145 = vector.extract_strided_slice %93 {offsets = [0, 0, 192], sizes = [2, 24, 64], strides = [1, 1, 1]} : vector<2x24x768xf32> to vector<2x24x64xf32>
    %146 = vector.extract_strided_slice %93 {offsets = [0, 0, 448], sizes = [2, 24, 64], strides = [1, 1, 1]} : vector<2x24x768xf32> to vector<2x24x64xf32>
    %147 = vector.extract_strided_slice %93 {offsets = [0, 0, 704], sizes = [2, 24, 64], strides = [1, 1, 1]} : vector<2x24x768xf32> to vector<2x24x64xf32>
    "tpu.trace_start"() <{level = 10 : i32, message = "bqd,bkd->bqk"}> : () -> ()
    %cst_66 = arith.constant dense<0.000000e+00> : vector<2x24x24xf32>
    %148 = tpu.matmul %145, %146, %cst_66 {dimension_numbers = #tpu.dot_dimension_numbers<[2], [2], [1], [1], [0, 0, 0, 1, 1, 1], [0], [0]>} : vector<2x24x64xf32>, vector<2x24x64xf32>, vector<2x24x24xf32> -> vector<2x24x24xf32>
    "tpu.trace_stop"() : () -> ()
    %149 = vector.shape_cast %89 : vector<24x24xf32> to vector<1x24x24xf32>
    %150 = vector.broadcast %149 : vector<1x24x24xf32> to vector<2x24x24xf32>
    %151 = arith.addf %148, %150 : vector<2x24x24xf32>
    %cst_67 = arith.constant dense<0xFF800000> : vector<2x24xf32>
    %152 = vector.multi_reduction <maximumf>, %151, %cst_67 [2] : vector<2x24x24xf32> to vector<2x24xf32>
    %153 = vector.shape_cast %152 : vector<2x24xf32> to vector<2x24x1xf32>
    %154 = vector.broadcast %153 : vector<2x24x1xf32> to vector<2x24x24xf32>
    %155 = arith.subf %151, %154 : vector<2x24x24xf32>
    %156 = math.exp %155 : vector<2x24x24xf32>
    %cst_68 = arith.constant dense<0.000000e+00> : vector<2x24xf32>
    %157 = vector.multi_reduction <add>, %156, %cst_68 [2] : vector<2x24x24xf32> to vector<2x24xf32>
    %158 = vector.shape_cast %157 : vector<2x24xf32> to vector<2x24x1xf32>
    %159 = vector.broadcast %158 : vector<2x24x1xf32> to vector<2x24x24xf32>
    %160 = arith.divf %156, %159 : vector<2x24x24xf32>
    "tpu.trace_start"() <{level = 10 : i32, message = "bqk,bkd->bqd"}> : () -> ()
    %cst_69 = arith.constant dense<0.000000e+00> : vector<2x24x64xf32>
    %161 = tpu.matmul %160, %147, %cst_69 {dimension_numbers = #tpu.dot_dimension_numbers<[2], [1], [1], [2], [0, 0, 0, 1, 1, 2], [0], [0]>} : vector<2x24x24xf32>, vector<2x24x64xf32>, vector<2x24x64xf32> -> vector<2x24x64xf32>
    "tpu.trace_stop"() : () -> ()
    %162 = tpu.concatenate %110, %127, %144, %161 in 2 : vector<2x24x64xf32>, vector<2x24x64xf32>, vector<2x24x64xf32>, vector<2x24x64xf32> -> vector<2x24x256xf32>
    %163 = vector.shape_cast %162 : vector<2x24x256xf32> to vector<48x256xf32>
    %c0_70 = arith.constant 0 : index
    %c0_71 = arith.constant 0 : index
    %c0_72 = arith.constant 0 : index
    %164 = vector.load %arg14[%c0_70, %c0_71, %c0_72] : memref<2x256x32xf32, #tpu.memory_space<vmem>>, vector<1x256x32xf32>
    %165 = vector.shape_cast %164 : vector<1x256x32xf32> to vector<256x32xf32>
    %cst_73 = arith.constant dense<0.000000e+00> : vector<48x32xf32>
    %166 = tpu.matmul %163, %165, %cst_73 {dimension_numbers = #tpu.dot_dimension_numbers<[1], [0], [0], [1], [0, 0, 1, 1], [], []>} : vector<48x256xf32>, vector<256x32xf32>, vector<48x32xf32> -> vector<48x32xf32>
    %c0_74 = arith.constant 0 : index
    %c0_75 = arith.constant 0 : index
    %c0_76 = arith.constant 0 : index
    %167 = vector.load %arg15[%c0_74, %c0_75, %c0_76] : memref<2x1x32xf32, #tpu.memory_space<vmem>>, vector<1x1x32xf32>
    %168 = vector.shape_cast %167 : vector<1x1x32xf32> to vector<1x32xf32>
    %169 = vector.broadcast %168 : vector<1x32xf32> to vector<48x32xf32>
    %170 = arith.addf %166, %169 : vector<48x32xf32>
    %171 = arith.addf %170, %88 : vector<48x32xf32>
    %c0_77 = arith.constant 0 : index
    %c0_78 = arith.constant 0 : index
    %c0_79 = arith.constant 0 : index
    %172 = vector.load %arg16[%c0_77, %c0_78, %c0_79] : memref<2x1x32xf32, #tpu.memory_space<vmem>>, vector<1x1x32xf32>
    %173 = vector.shape_cast %172 : vector<1x1x32xf32> to vector<1x32xf32>
    %c0_80 = arith.constant 0 : index
    %c0_81 = arith.constant 0 : index
    %c0_82 = arith.constant 0 : index
    %174 = vector.load %arg17[%c0_80, %c0_81, %c0_82] : memref<2x1x32xf32, #tpu.memory_space<vmem>>, vector<1x1x32xf32>
    %175 = vector.shape_cast %174 : vector<1x1x32xf32> to vector<1x32xf32>
    %cst_83 = arith.constant dense<0.000000e+00> : vector<48xf32>
    %176 = vector.multi_reduction <add>, %171, %cst_83 [1] : vector<48x32xf32> to vector<48xf32>
    %177 = vector.shape_cast %176 : vector<48xf32> to vector<48x1xf32>
    %cst_84 = arith.constant 3.200000e+01 : f32
    %178 = vector.broadcast %cst_84 : f32 to vector<48x1xf32>
    %179 = arith.divf %177, %178 : vector<48x1xf32>
    %180 = vector.broadcast %179 : vector<48x1xf32> to vector<48x32xf32>
    %181 = arith.subf %171, %180 : vector<48x32xf32>
    %182 = arith.mulf %181, %181 : vector<48x32xf32>
    %cst_85 = arith.constant dense<0.000000e+00> : vector<48xf32>
    %183 = vector.multi_reduction <add>, %182, %cst_85 [1] : vector<48x32xf32> to vector<48xf32>
    %184 = vector.shape_cast %183 : vector<48xf32> to vector<48x1xf32>
    %cst_86 = arith.constant 3.200000e+01 : f32
    %185 = vector.broadcast %cst_86 : f32 to vector<48x1xf32>
    %186 = arith.divf %184, %185 : vector<48x1xf32>
    %cst_87 = arith.constant 9.99999997E-7 : f32
    %187 = vector.broadcast %cst_87 : f32 to vector<48x1xf32>
    %188 = arith.addf %186, %187 : vector<48x1xf32>
    %189 = math.rsqrt %188 : vector<48x1xf32>
    %190 = vector.broadcast %189 : vector<48x1xf32> to vector<48x32xf32>
    %191 = arith.mulf %181, %190 : vector<48x32xf32>
    %192 = vector.broadcast %173 : vector<1x32xf32> to vector<48x32xf32>
    %193 = arith.mulf %191, %192 : vector<48x32xf32>
    %194 = vector.broadcast %175 : vector<1x32xf32> to vector<48x32xf32>
    %195 = arith.addf %193, %194 : vector<48x32xf32>
    %c0_88 = arith.constant 0 : index
    %c0_89 = arith.constant 0 : index
    %c0_90 = arith.constant 0 : index
    %196 = vector.load %arg18[%c0_88, %c0_89, %c0_90] : memref<2x32x32xf32, #tpu.memory_space<vmem>>, vector<1x32x32xf32>
    %197 = vector.shape_cast %196 : vector<1x32x32xf32> to vector<32x32xf32>
    %cst_91 = arith.constant dense<0.000000e+00> : vector<48x32xf32>
    %198 = tpu.matmul %195, %197, %cst_91 {dimension_numbers = #tpu.dot_dimension_numbers<[1], [0], [0], [1], [0, 0, 1, 1], [], []>} : vector<48x32xf32>, vector<32x32xf32>, vector<48x32xf32> -> vector<48x32xf32>
    %c0_92 = arith.constant 0 : index
    %c0_93 = arith.constant 0 : index
    %c0_94 = arith.constant 0 : index
    %199 = vector.load %arg19[%c0_92, %c0_93, %c0_94] : memref<2x1x32xf32, #tpu.memory_space<vmem>>, vector<1x1x32xf32>
    %200 = vector.shape_cast %199 : vector<1x1x32xf32> to vector<1x32xf32>
    %201 = vector.broadcast %200 : vector<1x32xf32> to vector<48x32xf32>
    %202 = arith.addf %198, %201 : vector<48x32xf32>
    %cst_95 = arith.constant 5.000000e-01 : f32
    %203 = vector.broadcast %cst_95 : f32 to vector<48x32xf32>
    %204 = arith.mulf %203, %202 : vector<48x32xf32>
    %cst_96 = arith.constant 0.707106769 : f32
    %205 = vector.broadcast %cst_96 : f32 to vector<48x32xf32>
    %206 = arith.mulf %202, %205 : vector<48x32xf32>
    %cst_97 = arith.constant 0.000000e+00 : f32
    %207 = vector.broadcast %cst_97 : f32 to vector<48x32xf32>
    %208 = arith.cmpf oge, %206, %207 : vector<48x32xf32>
    %cst_98 = arith.constant 1.000000e+00 : f32
    %cst_99 = arith.constant -1.000000e+00 : f32
    %209 = vector.broadcast %cst_98 : f32 to vector<48x32xf32>
    %210 = vector.broadcast %cst_99 : f32 to vector<48x32xf32>
    %211 = arith.select %208, %209, %210 : vector<48x32xi1>, vector<48x32xf32>
    %212 = math.absf %206 : vector<48x32xf32>
    %cst_100 = arith.constant 0.327591091 : f32
    %213 = vector.broadcast %cst_100 : f32 to vector<48x32xf32>
    %214 = arith.mulf %213, %212 : vector<48x32xf32>
    %cst_101 = arith.constant 1.000000e+00 : f32
    %215 = vector.broadcast %cst_101 : f32 to vector<48x32xf32>
    %216 = arith.addf %215, %214 : vector<48x32xf32>
    %cst_102 = arith.constant 1.000000e+00 : f32
    %217 = vector.broadcast %cst_102 : f32 to vector<48x32xf32>
    %218 = arith.divf %217, %216 : vector<48x32xf32>
    %cst_103 = arith.constant 1.06140542 : f32
    %219 = vector.broadcast %cst_103 : f32 to vector<48x32xf32>
    %220 = arith.mulf %219, %218 : vector<48x32xf32>
    %cst_104 = arith.constant -1.45315206 : f32
    %221 = vector.broadcast %cst_104 : f32 to vector<48x32xf32>
    %222 = arith.addf %220, %221 : vector<48x32xf32>
    %223 = arith.mulf %222, %218 : vector<48x32xf32>
    %cst_105 = arith.constant 1.42141378 : f32
    %224 = vector.broadcast %cst_105 : f32 to vector<48x32xf32>
    %225 = arith.addf %223, %224 : vector<48x32xf32>
    %226 = arith.mulf %225, %218 : vector<48x32xf32>
    %cst_106 = arith.constant -0.284496725 : f32
    %227 = vector.broadcast %cst_106 : f32 to vector<48x32xf32>
    %228 = arith.addf %226, %227 : vector<48x32xf32>
    %229 = arith.mulf %228, %218 : vector<48x32xf32>
    %cst_107 = arith.constant 0.254829586 : f32
    %230 = vector.broadcast %cst_107 : f32 to vector<48x32xf32>
    %231 = arith.addf %229, %230 : vector<48x32xf32>
    %232 = arith.mulf %231, %218 : vector<48x32xf32>
    %cst_108 = arith.constant 0.000000e+00 : f32
    %233 = vector.broadcast %cst_108 : f32 to vector<48x32xf32>
    %234 = arith.subf %233, %212 : vector<48x32xf32>
    %235 = arith.mulf %234, %212 : vector<48x32xf32>
    %236 = math.exp %235 : vector<48x32xf32>
    %237 = arith.mulf %232, %236 : vector<48x32xf32>
    %cst_109 = arith.constant 1.000000e+00 : f32
    %238 = vector.broadcast %cst_109 : f32 to vector<48x32xf32>
    %239 = arith.subf %238, %237 : vector<48x32xf32>
    %240 = arith.mulf %211, %239 : vector<48x32xf32>
    %cst_110 = arith.constant 1.000000e+00 : f32
    %241 = vector.broadcast %cst_110 : f32 to vector<48x32xf32>
    %242 = arith.addf %241, %240 : vector<48x32xf32>
    %243 = arith.mulf %204, %242 : vector<48x32xf32>
    %c0_111 = arith.constant 0 : index
    %c0_112 = arith.constant 0 : index
    %c0_113 = arith.constant 0 : index
    %244 = vector.load %arg20[%c0_111, %c0_112, %c0_113] : memref<2x32x32xf32, #tpu.memory_space<vmem>>, vector<1x32x32xf32>
    %245 = vector.shape_cast %244 : vector<1x32x32xf32> to vector<32x32xf32>
    %cst_114 = arith.constant dense<0.000000e+00> : vector<48x32xf32>
    %246 = tpu.matmul %243, %245, %cst_114 {dimension_numbers = #tpu.dot_dimension_numbers<[1], [0], [0], [1], [0, 0, 1, 1], [], []>} : vector<48x32xf32>, vector<32x32xf32>, vector<48x32xf32> -> vector<48x32xf32>
    %c0_115 = arith.constant 0 : index
    %c0_116 = arith.constant 0 : index
    %c0_117 = arith.constant 0 : index
    %247 = vector.load %arg21[%c0_115, %c0_116, %c0_117] : memref<2x1x32xf32, #tpu.memory_space<vmem>>, vector<1x1x32xf32>
    %248 = vector.shape_cast %247 : vector<1x1x32xf32> to vector<1x32xf32>
    %249 = vector.broadcast %248 : vector<1x32xf32> to vector<48x32xf32>
    %250 = arith.addf %246, %249 : vector<48x32xf32>
    %251 = arith.addf %250, %195 : vector<48x32xf32>
    %c0_118 = arith.constant 0 : index
    %c0_119 = arith.constant 0 : index
    %c0_120 = arith.constant 0 : index
    %252 = vector.load %arg22[%c0_118, %c0_119, %c0_120] : memref<2x1x32xf32, #tpu.memory_space<vmem>>, vector<1x1x32xf32>
    %253 = vector.shape_cast %252 : vector<1x1x32xf32> to vector<1x32xf32>
    %c0_121 = arith.constant 0 : index
    %c0_122 = arith.constant 0 : index
    %c0_123 = arith.constant 0 : index
    %254 = vector.load %arg23[%c0_121, %c0_122, %c0_123] : memref<2x1x32xf32, #tpu.memory_space<vmem>>, vector<1x1x32xf32>
    %255 = vector.shape_cast %254 : vector<1x1x32xf32> to vector<1x32xf32>
    %cst_124 = arith.constant dense<0.000000e+00> : vector<48xf32>
    %256 = vector.multi_reduction <add>, %251, %cst_124 [1] : vector<48x32xf32> to vector<48xf32>
    %257 = vector.shape_cast %256 : vector<48xf32> to vector<48x1xf32>
    %cst_125 = arith.constant 3.200000e+01 : f32
    %258 = vector.broadcast %cst_125 : f32 to vector<48x1xf32>
    %259 = arith.divf %257, %258 : vector<48x1xf32>
    %260 = vector.broadcast %259 : vector<48x1xf32> to vector<48x32xf32>
    %261 = arith.subf %251, %260 : vector<48x32xf32>
    %262 = arith.mulf %261, %261 : vector<48x32xf32>
    %cst_126 = arith.constant dense<0.000000e+00> : vector<48xf32>
    %263 = vector.multi_reduction <add>, %262, %cst_126 [1] : vector<48x32xf32> to vector<48xf32>
    %264 = vector.shape_cast %263 : vector<48xf32> to vector<48x1xf32>
    %cst_127 = arith.constant 3.200000e+01 : f32
    %265 = vector.broadcast %cst_127 : f32 to vector<48x1xf32>
    %266 = arith.divf %264, %265 : vector<48x1xf32>
    %cst_128 = arith.constant 9.99999997E-7 : f32
    %267 = vector.broadcast %cst_128 : f32 to vector<48x1xf32>
    %268 = arith.addf %266, %267 : vector<48x1xf32>
    %269 = math.rsqrt %268 : vector<48x1xf32>
    %270 = vector.broadcast %269 : vector<48x1xf32> to vector<48x32xf32>
    %271 = arith.mulf %261, %270 : vector<48x32xf32>
    %272 = vector.broadcast %253 : vector<1x32xf32> to vector<48x32xf32>
    %273 = arith.mulf %271, %272 : vector<48x32xf32>
    %274 = vector.broadcast %255 : vector<1x32xf32> to vector<48x32xf32>
    %275 = arith.addf %273, %274 : vector<48x32xf32>
    %c1_129 = arith.constant 1 : index
    %c0_130 = arith.constant 0 : index
    %c0_131 = arith.constant 0 : index
    %276 = vector.load %arg13[%c1_129, %c0_130, %c0_131] : memref<2x32x768xf32, #tpu.memory_space<vmem>>, vector<1x32x768xf32>
    %277 = vector.shape_cast %276 : vector<1x32x768xf32> to vector<32x768xf32>
    %cst_132 = arith.constant dense<0.000000e+00> : vector<48x768xf32>
    %278 = tpu.matmul %275, %277, %cst_132 {dimension_numbers = #tpu.dot_dimension_numbers<[1], [0], [0], [1], [0, 0, 1, 1], [], []>} : vector<48x32xf32>, vector<32x768xf32>, vector<48x768xf32> -> vector<48x768xf32>
    %279 = vector.shape_cast %278 : vector<48x768xf32> to vector<2x24x768xf32>
    %280 = vector.extract_strided_slice %279 {offsets = [0, 0, 0], sizes = [2, 24, 64], strides = [1, 1, 1]} : vector<2x24x768xf32> to vector<2x24x64xf32>
    %281 = vector.extract_strided_slice %279 {offsets = [0, 0, 256], sizes = [2, 24, 64], strides = [1, 1, 1]} : vector<2x24x768xf32> to vector<2x24x64xf32>
    %282 = vector.extract_strided_slice %279 {offsets = [0, 0, 512], sizes = [2, 24, 64], strides = [1, 1, 1]} : vector<2x24x768xf32> to vector<2x24x64xf32>
    "tpu.trace_start"() <{level = 10 : i32, message = "bqd,bkd->bqk"}> : () -> ()
    %cst_133 = arith.constant dense<0.000000e+00> : vector<2x24x24xf32>
    %283 = tpu.matmul %280, %281, %cst_133 {dimension_numbers = #tpu.dot_dimension_numbers<[2], [2], [1], [1], [0, 0, 0, 1, 1, 1], [0], [0]>} : vector<2x24x64xf32>, vector<2x24x64xf32>, vector<2x24x24xf32> -> vector<2x24x24xf32>
    "tpu.trace_stop"() : () -> ()
    %284 = vector.shape_cast %89 : vector<24x24xf32> to vector<1x24x24xf32>
    %285 = vector.broadcast %284 : vector<1x24x24xf32> to vector<2x24x24xf32>
    %286 = arith.addf %283, %285 : vector<2x24x24xf32>
    %cst_134 = arith.constant dense<0xFF800000> : vector<2x24xf32>
    %287 = vector.multi_reduction <maximumf>, %286, %cst_134 [2] : vector<2x24x24xf32> to vector<2x24xf32>
    %288 = vector.shape_cast %287 : vector<2x24xf32> to vector<2x24x1xf32>
    %289 = vector.broadcast %288 : vector<2x24x1xf32> to vector<2x24x24xf32>
    %290 = arith.subf %286, %289 : vector<2x24x24xf32>
    %291 = math.exp %290 : vector<2x24x24xf32>
    %cst_135 = arith.constant dense<0.000000e+00> : vector<2x24xf32>
    %292 = vector.multi_reduction <add>, %291, %cst_135 [2] : vector<2x24x24xf32> to vector<2x24xf32>
    %293 = vector.shape_cast %292 : vector<2x24xf32> to vector<2x24x1xf32>
    %294 = vector.broadcast %293 : vector<2x24x1xf32> to vector<2x24x24xf32>
    %295 = arith.divf %291, %294 : vector<2x24x24xf32>
    "tpu.trace_start"() <{level = 10 : i32, message = "bqk,bkd->bqd"}> : () -> ()
    %cst_136 = arith.constant dense<0.000000e+00> : vector<2x24x64xf32>
    %296 = tpu.matmul %295, %282, %cst_136 {dimension_numbers = #tpu.dot_dimension_numbers<[2], [1], [1], [2], [0, 0, 0, 1, 1, 2], [0], [0]>} : vector<2x24x24xf32>, vector<2x24x64xf32>, vector<2x24x64xf32> -> vector<2x24x64xf32>
    "tpu.trace_stop"() : () -> ()
    %297 = vector.extract_strided_slice %279 {offsets = [0, 0, 64], sizes = [2, 24, 64], strides = [1, 1, 1]} : vector<2x24x768xf32> to vector<2x24x64xf32>
    %298 = vector.extract_strided_slice %279 {offsets = [0, 0, 320], sizes = [2, 24, 64], strides = [1, 1, 1]} : vector<2x24x768xf32> to vector<2x24x64xf32>
    %299 = vector.extract_strided_slice %279 {offsets = [0, 0, 576], sizes = [2, 24, 64], strides = [1, 1, 1]} : vector<2x24x768xf32> to vector<2x24x64xf32>
    "tpu.trace_start"() <{level = 10 : i32, message = "bqd,bkd->bqk"}> : () -> ()
    %cst_137 = arith.constant dense<0.000000e+00> : vector<2x24x24xf32>
    %300 = tpu.matmul %297, %298, %cst_137 {dimension_numbers = #tpu.dot_dimension_numbers<[2], [2], [1], [1], [0, 0, 0, 1, 1, 1], [0], [0]>} : vector<2x24x64xf32>, vector<2x24x64xf32>, vector<2x24x24xf32> -> vector<2x24x24xf32>
    "tpu.trace_stop"() : () -> ()
    %301 = vector.shape_cast %89 : vector<24x24xf32> to vector<1x24x24xf32>
    %302 = vector.broadcast %301 : vector<1x24x24xf32> to vector<2x24x24xf32>
    %303 = arith.addf %300, %302 : vector<2x24x24xf32>
    %cst_138 = arith.constant dense<0xFF800000> : vector<2x24xf32>
    %304 = vector.multi_reduction <maximumf>, %303, %cst_138 [2] : vector<2x24x24xf32> to vector<2x24xf32>
    %305 = vector.shape_cast %304 : vector<2x24xf32> to vector<2x24x1xf32>
    %306 = vector.broadcast %305 : vector<2x24x1xf32> to vector<2x24x24xf32>
    %307 = arith.subf %303, %306 : vector<2x24x24xf32>
    %308 = math.exp %307 : vector<2x24x24xf32>
    %cst_139 = arith.constant dense<0.000000e+00> : vector<2x24xf32>
    %309 = vector.multi_reduction <add>, %308, %cst_139 [2] : vector<2x24x24xf32> to vector<2x24xf32>
    %310 = vector.shape_cast %309 : vector<2x24xf32> to vector<2x24x1xf32>
    %311 = vector.broadcast %310 : vector<2x24x1xf32> to vector<2x24x24xf32>
    %312 = arith.divf %308, %311 : vector<2x24x24xf32>
    "tpu.trace_start"() <{level = 10 : i32, message = "bqk,bkd->bqd"}> : () -> ()
    %cst_140 = arith.constant dense<0.000000e+00> : vector<2x24x64xf32>
    %313 = tpu.matmul %312, %299, %cst_140 {dimension_numbers = #tpu.dot_dimension_numbers<[2], [1], [1], [2], [0, 0, 0, 1, 1, 2], [0], [0]>} : vector<2x24x24xf32>, vector<2x24x64xf32>, vector<2x24x64xf32> -> vector<2x24x64xf32>
    "tpu.trace_stop"() : () -> ()
    %314 = vector.extract_strided_slice %279 {offsets = [0, 0, 128], sizes = [2, 24, 64], strides = [1, 1, 1]} : vector<2x24x768xf32> to vector<2x24x64xf32>
    %315 = vector.extract_strided_slice %279 {offsets = [0, 0, 384], sizes = [2, 24, 64], strides = [1, 1, 1]} : vector<2x24x768xf32> to vector<2x24x64xf32>
    %316 = vector.extract_strided_slice %279 {offsets = [0, 0, 640], sizes = [2, 24, 64], strides = [1, 1, 1]} : vector<2x24x768xf32> to vector<2x24x64xf32>
    "tpu.trace_start"() <{level = 10 : i32, message = "bqd,bkd->bqk"}> : () -> ()
    %cst_141 = arith.constant dense<0.000000e+00> : vector<2x24x24xf32>
    %317 = tpu.matmul %314, %315, %cst_141 {dimension_numbers = #tpu.dot_dimension_numbers<[2], [2], [1], [1], [0, 0, 0, 1, 1, 1], [0], [0]>} : vector<2x24x64xf32>, vector<2x24x64xf32>, vector<2x24x24xf32> -> vector<2x24x24xf32>
    "tpu.trace_stop"() : () -> ()
    %318 = vector.shape_cast %89 : vector<24x24xf32> to vector<1x24x24xf32>
    %319 = vector.broadcast %318 : vector<1x24x24xf32> to vector<2x24x24xf32>
    %320 = arith.addf %317, %319 : vector<2x24x24xf32>
    %cst_142 = arith.constant dense<0xFF800000> : vector<2x24xf32>
    %321 = vector.multi_reduction <maximumf>, %320, %cst_142 [2] : vector<2x24x24xf32> to vector<2x24xf32>
    %322 = vector.shape_cast %321 : vector<2x24xf32> to vector<2x24x1xf32>
    %323 = vector.broadcast %322 : vector<2x24x1xf32> to vector<2x24x24xf32>
    %324 = arith.subf %320, %323 : vector<2x24x24xf32>
    %325 = math.exp %324 : vector<2x24x24xf32>
    %cst_143 = arith.constant dense<0.000000e+00> : vector<2x24xf32>
    %326 = vector.multi_reduction <add>, %325, %cst_143 [2] : vector<2x24x24xf32> to vector<2x24xf32>
    %327 = vector.shape_cast %326 : vector<2x24xf32> to vector<2x24x1xf32>
    %328 = vector.broadcast %327 : vector<2x24x1xf32> to vector<2x24x24xf32>
    %329 = arith.divf %325, %328 : vector<2x24x24xf32>
    "tpu.trace_start"() <{level = 10 : i32, message = "bqk,bkd->bqd"}> : () -> ()
    %cst_144 = arith.constant dense<0.000000e+00> : vector<2x24x64xf32>
    %330 = tpu.matmul %329, %316, %cst_144 {dimension_numbers = #tpu.dot_dimension_numbers<[2], [1], [1], [2], [0, 0, 0, 1, 1, 2], [0], [0]>} : vector<2x24x24xf32>, vector<2x24x64xf32>, vector<2x24x64xf32> -> vector<2x24x64xf32>
    "tpu.trace_stop"() : () -> ()
    %331 = vector.extract_strided_slice %279 {offsets = [0, 0, 192], sizes = [2, 24, 64], strides = [1, 1, 1]} : vector<2x24x768xf32> to vector<2x24x64xf32>
    %332 = vector.extract_strided_slice %279 {offsets = [0, 0, 448], sizes = [2, 24, 64], strides = [1, 1, 1]} : vector<2x24x768xf32> to vector<2x24x64xf32>
    %333 = vector.extract_strided_slice %279 {offsets = [0, 0, 704], sizes = [2, 24, 64], strides = [1, 1, 1]} : vector<2x24x768xf32> to vector<2x24x64xf32>
    "tpu.trace_start"() <{level = 10 : i32, message = "bqd,bkd->bqk"}> : () -> ()
    %cst_145 = arith.constant dense<0.000000e+00> : vector<2x24x24xf32>
    %334 = tpu.matmul %331, %332, %cst_145 {dimension_numbers = #tpu.dot_dimension_numbers<[2], [2], [1], [1], [0, 0, 0, 1, 1, 1], [0], [0]>} : vector<2x24x64xf32>, vector<2x24x64xf32>, vector<2x24x24xf32> -> vector<2x24x24xf32>
    "tpu.trace_stop"() : () -> ()
    %335 = vector.shape_cast %89 : vector<24x24xf32> to vector<1x24x24xf32>
    %336 = vector.broadcast %335 : vector<1x24x24xf32> to vector<2x24x24xf32>
    %337 = arith.addf %334, %336 : vector<2x24x24xf32>
    %cst_146 = arith.constant dense<0xFF800000> : vector<2x24xf32>
    %338 = vector.multi_reduction <maximumf>, %337, %cst_146 [2] : vector<2x24x24xf32> to vector<2x24xf32>
    %339 = vector.shape_cast %338 : vector<2x24xf32> to vector<2x24x1xf32>
    %340 = vector.broadcast %339 : vector<2x24x1xf32> to vector<2x24x24xf32>
    %341 = arith.subf %337, %340 : vector<2x24x24xf32>
    %342 = math.exp %341 : vector<2x24x24xf32>
    %cst_147 = arith.constant dense<0.000000e+00> : vector<2x24xf32>
    %343 = vector.multi_reduction <add>, %342, %cst_147 [2] : vector<2x24x24xf32> to vector<2x24xf32>
    %344 = vector.shape_cast %343 : vector<2x24xf32> to vector<2x24x1xf32>
    %345 = vector.broadcast %344 : vector<2x24x1xf32> to vector<2x24x24xf32>
    %346 = arith.divf %342, %345 : vector<2x24x24xf32>
    "tpu.trace_start"() <{level = 10 : i32, message = "bqk,bkd->bqd"}> : () -> ()
    %cst_148 = arith.constant dense<0.000000e+00> : vector<2x24x64xf32>
    %347 = tpu.matmul %346, %333, %cst_148 {dimension_numbers = #tpu.dot_dimension_numbers<[2], [1], [1], [2], [0, 0, 0, 1, 1, 2], [0], [0]>} : vector<2x24x24xf32>, vector<2x24x64xf32>, vector<2x24x64xf32> -> vector<2x24x64xf32>
    "tpu.trace_stop"() : () -> ()
    %348 = tpu.concatenate %296, %313, %330, %347 in 2 : vector<2x24x64xf32>, vector<2x24x64xf32>, vector<2x24x64xf32>, vector<2x24x64xf32> -> vector<2x24x256xf32>
    %349 = vector.shape_cast %348 : vector<2x24x256xf32> to vector<48x256xf32>
    %c1_149 = arith.constant 1 : index
    %c0_150 = arith.constant 0 : index
    %c0_151 = arith.constant 0 : index
    %350 = vector.load %arg14[%c1_149, %c0_150, %c0_151] : memref<2x256x32xf32, #tpu.memory_space<vmem>>, vector<1x256x32xf32>
    %351 = vector.shape_cast %350 : vector<1x256x32xf32> to vector<256x32xf32>
    %cst_152 = arith.constant dense<0.000000e+00> : vector<48x32xf32>
    %352 = tpu.matmul %349, %351, %cst_152 {dimension_numbers = #tpu.dot_dimension_numbers<[1], [0], [0], [1], [0, 0, 1, 1], [], []>} : vector<48x256xf32>, vector<256x32xf32>, vector<48x32xf32> -> vector<48x32xf32>
    %c1_153 = arith.constant 1 : index
    %c0_154 = arith.constant 0 : index
    %c0_155 = arith.constant 0 : index
    %353 = vector.load %arg15[%c1_153, %c0_154, %c0_155] : memref<2x1x32xf32, #tpu.memory_space<vmem>>, vector<1x1x32xf32>
    %354 = vector.shape_cast %353 : vector<1x1x32xf32> to vector<1x32xf32>
    %355 = vector.broadcast %354 : vector<1x32xf32> to vector<48x32xf32>
    %356 = arith.addf %352, %355 : vector<48x32xf32>
    %357 = arith.addf %356, %275 : vector<48x32xf32>
    %c1_156 = arith.constant 1 : index
    %c0_157 = arith.constant 0 : index
    %c0_158 = arith.constant 0 : index
    %358 = vector.load %arg16[%c1_156, %c0_157, %c0_158] : memref<2x1x32xf32, #tpu.memory_space<vmem>>, vector<1x1x32xf32>
    %359 = vector.shape_cast %358 : vector<1x1x32xf32> to vector<1x32xf32>
    %c1_159 = arith.constant 1 : index
    %c0_160 = arith.constant 0 : index
    %c0_161 = arith.constant 0 : index
    %360 = vector.load %arg17[%c1_159, %c0_160, %c0_161] : memref<2x1x32xf32, #tpu.memory_space<vmem>>, vector<1x1x32xf32>
    %361 = vector.shape_cast %360 : vector<1x1x32xf32> to vector<1x32xf32>
    %cst_162 = arith.constant dense<0.000000e+00> : vector<48xf32>
    %362 = vector.multi_reduction <add>, %357, %cst_162 [1] : vector<48x32xf32> to vector<48xf32>
    %363 = vector.shape_cast %362 : vector<48xf32> to vector<48x1xf32>
    %cst_163 = arith.constant 3.200000e+01 : f32
    %364 = vector.broadcast %cst_163 : f32 to vector<48x1xf32>
    %365 = arith.divf %363, %364 : vector<48x1xf32>
    %366 = vector.broadcast %365 : vector<48x1xf32> to vector<48x32xf32>
    %367 = arith.subf %357, %366 : vector<48x32xf32>
    %368 = arith.mulf %367, %367 : vector<48x32xf32>
    %cst_164 = arith.constant dense<0.000000e+00> : vector<48xf32>
    %369 = vector.multi_reduction <add>, %368, %cst_164 [1] : vector<48x32xf32> to vector<48xf32>
    %370 = vector.shape_cast %369 : vector<48xf32> to vector<48x1xf32>
    %cst_165 = arith.constant 3.200000e+01 : f32
    %371 = vector.broadcast %cst_165 : f32 to vector<48x1xf32>
    %372 = arith.divf %370, %371 : vector<48x1xf32>
    %cst_166 = arith.constant 9.99999997E-7 : f32
    %373 = vector.broadcast %cst_166 : f32 to vector<48x1xf32>
    %374 = arith.addf %372, %373 : vector<48x1xf32>
    %375 = math.rsqrt %374 : vector<48x1xf32>
    %376 = vector.broadcast %375 : vector<48x1xf32> to vector<48x32xf32>
    %377 = arith.mulf %367, %376 : vector<48x32xf32>
    %378 = vector.broadcast %359 : vector<1x32xf32> to vector<48x32xf32>
    %379 = arith.mulf %377, %378 : vector<48x32xf32>
    %380 = vector.broadcast %361 : vector<1x32xf32> to vector<48x32xf32>
    %381 = arith.addf %379, %380 : vector<48x32xf32>
    %c1_167 = arith.constant 1 : index
    %c0_168 = arith.constant 0 : index
    %c0_169 = arith.constant 0 : index
    %382 = vector.load %arg18[%c1_167, %c0_168, %c0_169] : memref<2x32x32xf32, #tpu.memory_space<vmem>>, vector<1x32x32xf32>
    %383 = vector.shape_cast %382 : vector<1x32x32xf32> to vector<32x32xf32>
    %cst_170 = arith.constant dense<0.000000e+00> : vector<48x32xf32>
    %384 = tpu.matmul %381, %383, %cst_170 {dimension_numbers = #tpu.dot_dimension_numbers<[1], [0], [0], [1], [0, 0, 1, 1], [], []>} : vector<48x32xf32>, vector<32x32xf32>, vector<48x32xf32> -> vector<48x32xf32>
    %c1_171 = arith.constant 1 : index
    %c0_172 = arith.constant 0 : index
    %c0_173 = arith.constant 0 : index
    %385 = vector.load %arg19[%c1_171, %c0_172, %c0_173] : memref<2x1x32xf32, #tpu.memory_space<vmem>>, vector<1x1x32xf32>
    %386 = vector.shape_cast %385 : vector<1x1x32xf32> to vector<1x32xf32>
    %387 = vector.broadcast %386 : vector<1x32xf32> to vector<48x32xf32>
    %388 = arith.addf %384, %387 : vector<48x32xf32>
    %cst_174 = arith.constant 5.000000e-01 : f32
    %389 = vector.broadcast %cst_174 : f32 to vector<48x32xf32>
    %390 = arith.mulf %389, %388 : vector<48x32xf32>
    %cst_175 = arith.constant 0.707106769 : f32
    %391 = vector.broadcast %cst_175 : f32 to vector<48x32xf32>
    %392 = arith.mulf %388, %391 : vector<48x32xf32>
    %cst_176 = arith.constant 0.000000e+00 : f32
    %393 = vector.broadcast %cst_176 : f32 to vector<48x32xf32>
    %394 = arith.cmpf oge, %392, %393 : vector<48x32xf32>
    %cst_177 = arith.constant 1.000000e+00 : f32
    %cst_178 = arith.constant -1.000000e+00 : f32
    %395 = vector.broadcast %cst_177 : f32 to vector<48x32xf32>
    %396 = vector.broadcast %cst_178 : f32 to vector<48x32xf32>
    %397 = arith.select %394, %395, %396 : vector<48x32xi1>, vector<48x32xf32>
    %398 = math.absf %392 : vector<48x32xf32>
    %cst_179 = arith.constant 0.327591091 : f32
    %399 = vector.broadcast %cst_179 : f32 to vector<48x32xf32>
    %400 = arith.mulf %399, %398 : vector<48x32xf32>
    %cst_180 = arith.constant 1.000000e+00 : f32
    %401 = vector.broadcast %cst_180 : f32 to vector<48x32xf32>
    %402 = arith.addf %401, %400 : vector<48x32xf32>
    %cst_181 = arith.constant 1.000000e+00 : f32
    %403 = vector.broadcast %cst_181 : f32 to vector<48x32xf32>
    %404 = arith.divf %403, %402 : vector<48x32xf32>
    %cst_182 = arith.constant 1.06140542 : f32
    %405 = vector.broadcast %cst_182 : f32 to vector<48x32xf32>
    %406 = arith.mulf %405, %404 : vector<48x32xf32>
    %cst_183 = arith.constant -1.45315206 : f32
    %407 = vector.broadcast %cst_183 : f32 to vector<48x32xf32>
    %408 = arith.addf %406, %407 : vector<48x32xf32>
    %409 = arith.mulf %408, %404 : vector<48x32xf32>
    %cst_184 = arith.constant 1.42141378 : f32
    %410 = vector.broadcast %cst_184 : f32 to vector<48x32xf32>
    %411 = arith.addf %409, %410 : vector<48x32xf32>
    %412 = arith.mulf %411, %404 : vector<48x32xf32>
    %cst_185 = arith.constant -0.284496725 : f32
    %413 = vector.broadcast %cst_185 : f32 to vector<48x32xf32>
    %414 = arith.addf %412, %413 : vector<48x32xf32>
    %415 = arith.mulf %414, %404 : vector<48x32xf32>
    %cst_186 = arith.constant 0.254829586 : f32
    %416 = vector.broadcast %cst_186 : f32 to vector<48x32xf32>
    %417 = arith.addf %415, %416 : vector<48x32xf32>
    %418 = arith.mulf %417, %404 : vector<48x32xf32>
    %cst_187 = arith.constant 0.000000e+00 : f32
    %419 = vector.broadcast %cst_187 : f32 to vector<48x32xf32>
    %420 = arith.subf %419, %398 : vector<48x32xf32>
    %421 = arith.mulf %420, %398 : vector<48x32xf32>
    %422 = math.exp %421 : vector<48x32xf32>
    %423 = arith.mulf %418, %422 : vector<48x32xf32>
    %cst_188 = arith.constant 1.000000e+00 : f32
    %424 = vector.broadcast %cst_188 : f32 to vector<48x32xf32>
    %425 = arith.subf %424, %423 : vector<48x32xf32>
    %426 = arith.mulf %397, %425 : vector<48x32xf32>
    %cst_189 = arith.constant 1.000000e+00 : f32
    %427 = vector.broadcast %cst_189 : f32 to vector<48x32xf32>
    %428 = arith.addf %427, %426 : vector<48x32xf32>
    %429 = arith.mulf %390, %428 : vector<48x32xf32>
    %c1_190 = arith.constant 1 : index
    %c0_191 = arith.constant 0 : index
    %c0_192 = arith.constant 0 : index
    %430 = vector.load %arg20[%c1_190, %c0_191, %c0_192] : memref<2x32x32xf32, #tpu.memory_space<vmem>>, vector<1x32x32xf32>
    %431 = vector.shape_cast %430 : vector<1x32x32xf32> to vector<32x32xf32>
    %cst_193 = arith.constant dense<0.000000e+00> : vector<48x32xf32>
    %432 = tpu.matmul %429, %431, %cst_193 {dimension_numbers = #tpu.dot_dimension_numbers<[1], [0], [0], [1], [0, 0, 1, 1], [], []>} : vector<48x32xf32>, vector<32x32xf32>, vector<48x32xf32> -> vector<48x32xf32>
    %c1_194 = arith.constant 1 : index
    %c0_195 = arith.constant 0 : index
    %c0_196 = arith.constant 0 : index
    %433 = vector.load %arg21[%c1_194, %c0_195, %c0_196] : memref<2x1x32xf32, #tpu.memory_space<vmem>>, vector<1x1x32xf32>
    %434 = vector.shape_cast %433 : vector<1x1x32xf32> to vector<1x32xf32>
    %435 = vector.broadcast %434 : vector<1x32xf32> to vector<48x32xf32>
    %436 = arith.addf %432, %435 : vector<48x32xf32>
    %437 = arith.addf %436, %381 : vector<48x32xf32>
    %c1_197 = arith.constant 1 : index
    %c0_198 = arith.constant 0 : index
    %c0_199 = arith.constant 0 : index
    %438 = vector.load %arg22[%c1_197, %c0_198, %c0_199] : memref<2x1x32xf32, #tpu.memory_space<vmem>>, vector<1x1x32xf32>
    %439 = vector.shape_cast %438 : vector<1x1x32xf32> to vector<1x32xf32>
    %c1_200 = arith.constant 1 : index
    %c0_201 = arith.constant 0 : index
    %c0_202 = arith.constant 0 : index
    %440 = vector.load %arg23[%c1_200, %c0_201, %c0_202] : memref<2x1x32xf32, #tpu.memory_space<vmem>>, vector<1x1x32xf32>
    %441 = vector.shape_cast %440 : vector<1x1x32xf32> to vector<1x32xf32>
    %cst_203 = arith.constant dense<0.000000e+00> : vector<48xf32>
    %442 = vector.multi_reduction <add>, %437, %cst_203 [1] : vector<48x32xf32> to vector<48xf32>
    %443 = vector.shape_cast %442 : vector<48xf32> to vector<48x1xf32>
    %cst_204 = arith.constant 3.200000e+01 : f32
    %444 = vector.broadcast %cst_204 : f32 to vector<48x1xf32>
    %445 = arith.divf %443, %444 : vector<48x1xf32>
    %446 = vector.broadcast %445 : vector<48x1xf32> to vector<48x32xf32>
    %447 = arith.subf %437, %446 : vector<48x32xf32>
    %448 = arith.mulf %447, %447 : vector<48x32xf32>
    %cst_205 = arith.constant dense<0.000000e+00> : vector<48xf32>
    %449 = vector.multi_reduction <add>, %448, %cst_205 [1] : vector<48x32xf32> to vector<48xf32>
    %450 = vector.shape_cast %449 : vector<48xf32> to vector<48x1xf32>
    %cst_206 = arith.constant 3.200000e+01 : f32
    %451 = vector.broadcast %cst_206 : f32 to vector<48x1xf32>
    %452 = arith.divf %450, %451 : vector<48x1xf32>
    %cst_207 = arith.constant 9.99999997E-7 : f32
    %453 = vector.broadcast %cst_207 : f32 to vector<48x1xf32>
    %454 = arith.addf %452, %453 : vector<48x1xf32>
    %455 = math.rsqrt %454 : vector<48x1xf32>
    %456 = vector.broadcast %455 : vector<48x1xf32> to vector<48x32xf32>
    %457 = arith.mulf %447, %456 : vector<48x32xf32>
    %458 = vector.broadcast %439 : vector<1x32xf32> to vector<48x32xf32>
    %459 = arith.mulf %457, %458 : vector<48x32xf32>
    %460 = vector.broadcast %441 : vector<1x32xf32> to vector<48x32xf32>
    %461 = arith.addf %459, %460 : vector<48x32xf32>
    %462 = vector.extract_strided_slice %461 {offsets = [0, 0], sizes = [16, 32], strides = [1, 1]} : vector<48x32xf32> to vector<16x32xf32>
    %463 = vector.extract_strided_slice %461 {offsets = [16, 0], sizes = [8, 32], strides = [1, 1]} : vector<48x32xf32> to vector<8x32xf32>
    %c0_208 = arith.constant 0 : index
    %c0_209 = arith.constant 0 : index
    %464 = vector.load %arg26[%c0_208, %c0_209] : memref<16x8xf32, #tpu.memory_space<vmem>>, vector<16x8xf32>
    %cst_210 = arith.constant dense<0.000000e+00> : vector<16x32xf32>
    %465 = tpu.matmul %464, %463, %cst_210 {dimension_numbers = #tpu.dot_dimension_numbers<[1], [0], [0], [1], [0, 0, 1, 1], [], []>} : vector<16x8xf32>, vector<8x32xf32>, vector<16x32xf32> -> vector<16x32xf32>
    %466 = tpu.concatenate %462, %465 in 1 : vector<16x32xf32>, vector<16x32xf32> -> vector<16x64xf32>
    %c0_211 = arith.constant 0 : index
    %c0_212 = arith.constant 0 : index
    %c0_213 = arith.constant 0 : index
    %467 = vector.load %arg27[%c0_211, %c0_212, %c0_213] : memref<2x16x64xf32, #tpu.memory_space<vmem>>, vector<1x16x64xf32>
    %468 = vector.shape_cast %467 : vector<1x16x64xf32> to vector<16x64xf32>
    %469 = vector.shape_cast %466 : vector<16x64xf32> to vector<1x16x64xf32>
    tpu.vector_store %arg27[%c0_211, %c0_212, %c0_213], %469 {strides = array<i32>} : memref<2x16x64xf32, #tpu.memory_space<vmem>>, vector<1x16x64xf32>,
    %470 = vector.extract_strided_slice %461 {offsets = [24, 0], sizes = [16, 32], strides = [1, 1]} : vector<48x32xf32> to vector<16x32xf32>
    %471 = vector.extract_strided_slice %461 {offsets = [40, 0], sizes = [8, 32], strides = [1, 1]} : vector<48x32xf32> to vector<8x32xf32>
    %c0_214 = arith.constant 0 : index
    %c0_215 = arith.constant 0 : index
    %472 = vector.load %arg26[%c0_214, %c0_215] : memref<16x8xf32, #tpu.memory_space<vmem>>, vector<16x8xf32>
    %cst_216 = arith.constant dense<0.000000e+00> : vector<16x32xf32>
    %473 = tpu.matmul %472, %471, %cst_216 {dimension_numbers = #tpu.dot_dimension_numbers<[1], [0], [0], [1], [0, 0, 1, 1], [], []>} : vector<16x8xf32>, vector<8x32xf32>, vector<16x32xf32> -> vector<16x32xf32>
    %474 = tpu.concatenate %470, %473 in 1 : vector<16x32xf32>, vector<16x32xf32> -> vector<16x64xf32>
    %c1_217 = arith.constant 1 : index
    %c0_218 = arith.constant 0 : index
    %c0_219 = arith.constant 0 : index
    %475 = vector.load %arg27[%c1_217, %c0_218, %c0_219] : memref<2x16x64xf32, #tpu.memory_space<vmem>>, vector<1x16x64xf32>
    %476 = vector.shape_cast %475 : vector<1x16x64xf32> to vector<16x64xf32>
    %477 = vector.shape_cast %474 : vector<16x64xf32> to vector<1x16x64xf32>
    tpu.vector_store %arg27[%c1_217, %c0_218, %c0_219], %477 {strides = array<i32>} : memref<2x16x64xf32, #tpu.memory_space<vmem>>, vector<1x16x64xf32>,
    return
  }
  func.func @transform_0(%arg0: i32) -> (i32, i32, i32) {
    %c0_i32 = arith.constant 0 : i32
    %c0_i32_0 = arith.constant 0 : i32
    %c0_i32_1 = arith.constant 0 : i32
    %c0_i32_2 = arith.constant 0 : i32
    return %c0_i32, %c0_i32_0, %c0_i32_1 : i32, i32, i32
  }
  func.func @transform_1(%arg0: i32) -> (i32, i32, i32) {
    %c0_i32 = arith.constant 0 : i32
    %c0_i32_0 = arith.constant 0 : i32
    %c0_i32_1 = arith.constant 0 : i32
    %c0_i32_2 = arith.constant 0 : i32
    return %c0_i32, %c0_i32_0, %c0_i32_1 : i32, i32, i32
  }
  func.func @transform_2(%arg0: i32) -> (i32, i32) {
    %c0_i32 = arith.constant 0 : i32
    %c0_i32_0 = arith.constant 0 : i32
    %c0_i32_1 = arith.constant 0 : i32
    return %c0_i32, %c0_i32_0 : i32, i32
  }
  func.func @transform_3(%arg0: i32) -> (i32, i32) {
    %c0_i32 = arith.constant 0 : i32
    %c0_i32_0 = arith.constant 0 : i32
    %c0_i32_1 = arith.constant 0 : i32
    return %c0_i32, %c0_i32_0 : i32, i32
  }
  func.func @transform_4(%arg0: i32) -> (i32, i32) {
    %c0_i32 = arith.constant 0 : i32
    %c0_i32_0 = arith.constant 0 : i32
    %c0_i32_1 = arith.constant 0 : i32
    return %c0_i32, %c0_i32_0 : i32, i32
  }
  func.func @transform_5(%arg0: i32) -> (i32, i32) {
    %c0_i32 = arith.constant 0 : i32
    %c0_i32_0 = arith.constant 0 : i32
    %c0_i32_1 = arith.constant 0 : i32
    return %c0_i32, %c0_i32_0 : i32, i32
  }
  func.func @transform_6(%arg0: i32) -> (i32, i32) {
    %c0_i32 = arith.constant 0 : i32
    %c0_i32_0 = arith.constant 0 : i32
    %c0_i32_1 = arith.constant 0 : i32
    return %c0_i32, %c0_i32_0 : i32, i32
  }
  func.func @transform_7(%arg0: i32) -> (i32, i32) {
    %c0_i32 = arith.constant 0 : i32
    %c0_i32_0 = arith.constant 0 : i32
    %c0_i32_1 = arith.constant 0 : i32
    return %c0_i32, %c0_i32_0 : i32, i32
  }
  func.func @transform_8(%arg0: i32) -> (i32, i32) {
    %c0_i32 = arith.constant 0 : i32
    %c0_i32_0 = arith.constant 0 : i32
    %c0_i32_1 = arith.constant 0 : i32
    return %c0_i32, %c0_i32_0 : i32, i32
  }
  func.func @transform_9(%arg0: i32) -> (i32, i32) {
    %c0_i32 = arith.constant 0 : i32
    %c0_i32_0 = arith.constant 0 : i32
    %c0_i32_1 = arith.constant 0 : i32
    return %c0_i32, %c0_i32_0 : i32, i32
  }
  func.func @transform_10(%arg0: i32) -> (i32, i32) {
    %c0_i32 = arith.constant 0 : i32
    %c0_i32_0 = arith.constant 0 : i32
    %c0_i32_1 = arith.constant 0 : i32
    return %c0_i32, %c0_i32_0 : i32, i32
  }
  func.func @transform_11(%arg0: i32) -> (i32, i32) {
    %c0_i32 = arith.constant 0 : i32
    %c0_i32_0 = arith.constant 0 : i32
    %c0_i32_1 = arith.constant 0 : i32
    return %c0_i32, %c0_i32_0 : i32, i32
  }
  func.func @transform_12(%arg0: i32) -> (i32, i32, i32) {
    %c0_i32 = arith.constant 0 : i32
    %c0_i32_0 = arith.constant 0 : i32
    %c0_i32_1 = arith.constant 0 : i32
    %c0_i32_2 = arith.constant 0 : i32
    return %c0_i32, %c0_i32_0, %c0_i32_1 : i32, i32, i32
  }
  func.func @transform_13(%arg0: i32) -> (i32, i32, i32) {
    %c0_i32 = arith.constant 0 : i32
    %c0_i32_0 = arith.constant 0 : i32
    %c0_i32_1 = arith.constant 0 : i32
    %c0_i32_2 = arith.constant 0 : i32
    return %c0_i32, %c0_i32_0, %c0_i32_1 : i32, i32, i32
  }
  func.func @transform_14(%arg0: i32) -> (i32, i32, i32) {
    %c0_i32 = arith.constant 0 : i32
    %c0_i32_0 = arith.constant 0 : i32
    %c0_i32_1 = arith.constant 0 : i32
    %c0_i32_2 = arith.constant 0 : i32
    return %c0_i32, %c0_i32_0, %c0_i32_1 : i32, i32, i32
  }
  func.func @transform_15(%arg0: i32) -> (i32, i32, i32) {
    %c0_i32 = arith.constant 0 : i32
    %c0_i32_0 = arith.constant 0 : i32
    %c0_i32_1 = arith.constant 0 : i32
    %c0_i32_2 = arith.constant 0 : i32
    return %c0_i32, %c0_i32_0, %c0_i32_1 : i32, i32, i32
  }
  func.func @transform_16(%arg0: i32) -> (i32, i32, i32) {
    %c0_i32 = arith.constant 0 : i32
    %c0_i32_0 = arith.constant 0 : i32
    %c0_i32_1 = arith.constant 0 : i32
    %c0_i32_2 = arith.constant 0 : i32
    return %c0_i32, %c0_i32_0, %c0_i32_1 : i32, i32, i32
  }
  func.func @transform_17(%arg0: i32) -> (i32, i32, i32) {
    %c0_i32 = arith.constant 0 : i32
    %c0_i32_0 = arith.constant 0 : i32
    %c0_i32_1 = arith.constant 0 : i32
    %c0_i32_2 = arith.constant 0 : i32
    return %c0_i32, %c0_i32_0, %c0_i32_1 : i32, i32, i32
  }
  func.func @transform_18(%arg0: i32) -> (i32, i32, i32) {
    %c0_i32 = arith.constant 0 : i32
    %c0_i32_0 = arith.constant 0 : i32
    %c0_i32_1 = arith.constant 0 : i32
    %c0_i32_2 = arith.constant 0 : i32
    return %c0_i32, %c0_i32_0, %c0_i32_1 : i32, i32, i32
  }
  func.func @transform_19(%arg0: i32) -> (i32, i32, i32) {
    %c0_i32 = arith.constant 0 : i32
    %c0_i32_0 = arith.constant 0 : i32
    %c0_i32_1 = arith.constant 0 : i32
    %c0_i32_2 = arith.constant 0 : i32
    return %c0_i32, %c0_i32_0, %c0_i32_1 : i32, i32, i32
  }
  func.func @transform_20(%arg0: i32) -> (i32, i32, i32) {
    %c0_i32 = arith.constant 0 : i32
    %c0_i32_0 = arith.constant 0 : i32
    %c0_i32_1 = arith.constant 0 : i32
    %c0_i32_2 = arith.constant 0 : i32
    return %c0_i32, %c0_i32_0, %c0_i32_1 : i32, i32, i32
  }
  func.func @transform_21(%arg0: i32) -> (i32, i32, i32) {
    %c0_i32 = arith.constant 0 : i32
    %c0_i32_0 = arith.constant 0 : i32
    %c0_i32_1 = arith.constant 0 : i32
    %c0_i32_2 = arith.constant 0 : i32
    return %c0_i32, %c0_i32_0, %c0_i32_1 : i32, i32, i32
  }
  func.func @transform_22(%arg0: i32) -> (i32, i32, i32) {
    %c0_i32 = arith.constant 0 : i32
    %c0_i32_0 = arith.constant 0 : i32
    %c0_i32_1 = arith.constant 0 : i32
    %c0_i32_2 = arith.constant 0 : i32
    return %c0_i32, %c0_i32_0, %c0_i32_1 : i32, i32, i32
  }
  func.func @transform_23(%arg0: i32) -> (i32, i32, i32) {
    %c0_i32 = arith.constant 0 : i32
    %c0_i32_0 = arith.constant 0 : i32
    %c0_i32_1 = arith.constant 0 : i32
    %c0_i32_2 = arith.constant 0 : i32
    return %c0_i32, %c0_i32_0, %c0_i32_1 : i32, i32, i32
  }
  func.func @transform_24(%arg0: i32) -> (i32, i32) {
    %c0_i32 = arith.constant 0 : i32
    %c0_i32_0 = arith.constant 0 : i32
    %c0_i32_1 = arith.constant 0 : i32
    return %c0_i32, %c0_i32_0 : i32, i32
  }
  func.func @transform_25(%arg0: i32) -> (i32, i32) {
    %c0_i32 = arith.constant 0 : i32
    %c0_i32_0 = arith.constant 0 : i32
    %c0_i32_1 = arith.constant 0 : i32
    return %c0_i32, %c0_i32_0 : i32, i32
  }
  func.func @transform_26(%arg0: i32) -> (i32, i32, i32) {
    %c0_i32 = arith.constant 0 : i32
    %c0_i32_0 = arith.constant 0 : i32
    %c0_i32_1 = arith.constant 0 : i32
    %c0_i32_2 = arith.constant 0 : i32
    return %c0_i32, %c0_i32_0, %c0_i32_1 : i32, i32, i32
  }
}

</mosaic_0001>

<llo_original>
// kernel: tpu_custom_call.1
$region0: #{tpu_custom_call.1}
  #allocation0 [shape = 'u32[]', space=smem, size = 0x4, offset = 0x4, fixed_abs, tag = 'smem constant byte address 0x4 - core index']
  #allocation1 [shape = 'u32[144,128]{1,0:T(1,128)}', space=vmem, size = 0x12000, scoped, tag = 'internal scratch']
  #allocation2 [shape = 'f32[32,64]{1,0:T(8,128)}', space=vmem, size = 0x4000, scoped, tag = 'scratch operand']
  %s0 = inlined_call_operand.vmem [shape: f32[2,16,4], index: 0, kind: input, shape index: {}]
  %s1 = inlined_call_operand.vmem [shape: f32[2,16,4], index: 1, kind: input, shape index: {}]
  %s2 = inlined_call_operand.vmem [shape: f32[32,32], index: 2, kind: input, shape index: {}]
  %s3 = inlined_call_operand.vmem [shape: f32[24,24], index: 3, kind: input, shape index: {}]
  %s4 = inlined_call_operand.vmem [shape: f32[16,32], index: 4, kind: input, shape index: {}]
  %s5 = inlined_call_operand.vmem [shape: f32[1,32], index: 5, kind: input, shape index: {}]
  %s6 = inlined_call_operand.vmem [shape: f32[32,64], index: 6, kind: input, shape index: {}]
  %s7 = inlined_call_operand.hbm [shape: f32[1,64], index: 7, kind: input, shape index: {}]
  %s8 = inlined_call_operand.vmem [shape: f32[64,32], index: 8, kind: input, shape index: {}]
  %s9 = inlined_call_operand.hbm [shape: f32[1,32], index: 9, kind: input, shape index: {}]
  %s10 = inlined_call_operand.hbm [shape: f32[1,32], index: 10, kind: input, shape index: {}]
  %s11 = inlined_call_operand.hbm [shape: f32[1,32], index: 11, kind: input, shape index: {}]
  %s12 = inlined_call_operand.vmem [shape: f32[2,32,768], index: 12, kind: input, shape index: {}]
  %s13 = inlined_call_operand.vmem [shape: f32[2,256,32], index: 13, kind: input, shape index: {}]
  %s14 = inlined_call_operand.vmem [shape: f32[2,1,32], index: 14, kind: input, shape index: {}]
  %s15 = inlined_call_operand.vmem [shape: f32[2,1,32], index: 15, kind: input, shape index: {}]
  %s16 = inlined_call_operand.vmem [shape: f32[2,1,32], index: 16, kind: input, shape index: {}]
  %s17 = inlined_call_operand.vmem [shape: f32[2,32,32], index: 17, kind: input, shape index: {}]
  %s18 = inlined_call_operand.vmem [shape: f32[2,1,32], index: 18, kind: input, shape index: {}]
  %s19 = inlined_call_operand.vmem [shape: f32[2,32,32], index: 19, kind: input, shape index: {}]
  %s20 = inlined_call_operand.vmem [shape: f32[2,1,32], index: 20, kind: input, shape index: {}]
  %s21 = inlined_call_operand.vmem [shape: f32[2,1,32], index: 21, kind: input, shape index: {}]
  %s22 = inlined_call_operand.vmem [shape: f32[2,1,32], index: 22, kind: input, shape index: {}]
  %s23 = inlined_call_operand.vmem [shape: f32[2,64,64], index: 23, kind: input, shape index: {}]
  %s24 = inlined_call_operand.vmem [shape: f32[1,64], index: 24, kind: input, shape index: {}]
  %s25 = inlined_call_operand.vmem [shape: f32[16,8], index: 25, kind: input, shape index: {}]
  %s26 = inlined_call_operand.hbm [shape: f32[2,16,64], index: 26, kind: output, shape index: {}]
  %s27 = sld [smem:[#allocation0]]
  $region130: #{tpu_custom_call.1} parent=0
    _
  %s29 = ssub.s32 1, %s27
  %s30 = scalar_select 0, %s29, %s27
  $region1: #{tpu_custom_call.1} parent=0
    #allocation3 [shape = 'u8[512]{0}', space=vmem, size = 0x400, scoped, tag = 'input window, operand 7, single buffered']
    #allocation4 [shape = 's32[1]{0}', space=sflag, size = 0x4, scoped, tag = 'scoped memory for tpu_custom_call.1']
    #allocation5 [shape = 's32[1]{0}', space=sflag, size = 0x4, scoped, tag = 'scoped memory for tpu_custom_call.1']
    #allocation6 [shape = 'u8[512]{0}', space=vmem, size = 0x400, scoped, tag = 'input window, operand 9, single buffered']
    #allocation7 [shape = 's32[1]{0}', space=sflag, size = 0x4, scoped, tag = 'scoped memory for tpu_custom_call.1']
    #allocation8 [shape = 'u8[512]{0}', space=vmem, size = 0x400, scoped, tag = 'input window, operand 10, single buffered']
    #allocation9 [shape = 'u8[512]{0}', space=vmem, size = 0x400, scoped, tag = 'input window, operand 11, single buffered']
    #allocation10 [shape = 's32[1]{0}', space=sflag, size = 0x4, scoped, tag = 'scoped memory for tpu_custom_call.1']
    #allocation11 [shape = 'u8[16384]{0}', space=vmem, size = 0x4000, scoped, tag = 'output window, operand 0, single buffered']
    %31 = vsyncpa [#allocation4], 0
    %32 = vsyncpa [#allocation7], 0
    %33 = vsyncpa [#allocation10], 0
    %34 = vsyncpa [#allocation5], 0
    // Predicated region
    $region2: #{tpu_custom_call.1} parent=1 // pred_check
      _
    $region3: #{tpu_custom_call.1} parent=1 // pred_check_branch
      %36 = sbr.rel (0) target = $region5
    $region4: #{tpu_custom_call.1} parent=1 // pred_region
      _
    $region5: #{tpu_custom_call.1} parent=1 // pred_fallthru
      _
    // Predicated region
    $region6: #{tpu_custom_call.1} parent=1 // pred_check
      _
    $region7: #{tpu_custom_call.1} parent=1 // pred_check_branch
      %38 = sbr.rel (0) target = $region9
    $region8: #{tpu_custom_call.1} parent=1 // pred_region
      _
    $region9: #{tpu_custom_call.1} parent=1 // pred_fallthru
      _
    // Predicated region
    $region10: #{tpu_custom_call.1} parent=1 // pred_check
      _
    $region11: #{tpu_custom_call.1} parent=1 // pred_check_branch
      %40 = sbr.rel (0) target = $region13
    $region12: #{tpu_custom_call.1} parent=1 // pred_region
      _
    $region13: #{tpu_custom_call.1} parent=1 // pred_fallthru
      _
    // Predicated region
    $region14: #{tpu_custom_call.1} parent=1 // pred_check
      _
    $region15: #{tpu_custom_call.1} parent=1 // pred_check_branch
      %42 = sbr.rel (0) target = $region17
    $region16: #{tpu_custom_call.1} parent=1 // pred_region
      _
    $region17: #{tpu_custom_call.1} parent=1 // pred_fallthru
      _
    // Predicated region
    $region18: #{tpu_custom_call.1} parent=1 // pred_check
      _
    $region19: #{tpu_custom_call.1} parent=1 // pred_check_branch
      %44 = sbr.rel (0) target = $region21
    $region20: #{tpu_custom_call.1} parent=1 // pred_region
      _
    $region21: #{tpu_custom_call.1} parent=1 // pred_fallthru
      _
    // Predicated region
    $region22: #{tpu_custom_call.1} parent=1 // pred_check
      _
    $region23: #{tpu_custom_call.1} parent=1 // pred_check_branch
      %46 = sbr.rel (0) target = $region25
    $region24: #{tpu_custom_call.1} parent=1 // pred_region
      _
    $region25: #{tpu_custom_call.1} parent=1 // pred_fallthru
      _
    // Predicated region
    $region26: #{tpu_custom_call.1} parent=1 // pred_check
      _
    $region27: #{tpu_custom_call.1} parent=1 // pred_check_branch
      %48 = sbr.rel (0) target = $region29
    $region28: #{tpu_custom_call.1} parent=1 // pred_region
      _
    $region29: #{tpu_custom_call.1} parent=1 // pred_fallthru
      _
    // Predicated region
    $region30: #{tpu_custom_call.1} parent=1 // pred_check
      _
    $region31: #{tpu_custom_call.1} parent=1 // pred_check_branch
      %50 = sbr.rel (0) target = $region33
    $region32: #{tpu_custom_call.1} parent=1 // pred_region
      %s52 = ssub.s32 16, 16
      %53 = vsyncadd [#allocation4], %s52
      %s55 = sshll.u32 [#allocation3], 4
      %s56 = int_to_ptr.vmem [resolvable:$true] %s55
      %58 = dma.hbm_to_vmem [thread:$0]  %s7, 16, %s56, [#allocation4]
    $region33: #{tpu_custom_call.1} parent=1 // pred_fallthru
      _
    // Predicated region
    $region34: #{tpu_custom_call.1} parent=1 // pred_check
      _
    $region35: #{tpu_custom_call.1} parent=1 // pred_check_branch
      %60 = sbr.rel (0) target = $region37
    $region36: #{tpu_custom_call.1} parent=1 // pred_region
      _
    $region37: #{tpu_custom_call.1} parent=1 // pred_fallthru
      _
    // Predicated region
    $region38: #{tpu_custom_call.1} parent=1 // pred_check
      _
    $region39: #{tpu_custom_call.1} parent=1 // pred_check_branch
      %62 = sbr.rel (0) target = $region41
    $region40: #{tpu_custom_call.1} parent=1 // pred_region
      %s64 = ssub.s32 16, 16
      %65 = vsyncadd [#allocation7], %s64
      %s67 = sshll.u32 [#allocation6], 4
      %s68 = int_to_ptr.vmem [resolvable:$true] %s67
      %70 = dma.hbm_to_vmem [thread:$0]  %s9, 16, %s68, [#allocation7]
    $region41: #{tpu_custom_call.1} parent=1 // pred_fallthru
      _
    // Predicated region
    $region42: #{tpu_custom_call.1} parent=1 // pred_check
      _
    $region43: #{tpu_custom_call.1} parent=1 // pred_check_branch
      %72 = sbr.rel (0) target = $region45
    $region44: #{tpu_custom_call.1} parent=1 // pred_region
      %s74 = ssub.s32 16, 16
      %75 = vsyncadd [#allocation7], %s74
      %s77 = sshll.u32 [#allocation8], 4
      %s78 = int_to_ptr.vmem [resolvable:$true] %s77
      %80 = dma.hbm_to_vmem [thread:$0]  %s10, 16, %s78, [#allocation7]
    $region45: #{tpu_custom_call.1} parent=1 // pred_fallthru
      _
    // Predicated region
    $region46: #{tpu_custom_call.1} parent=1 // pred_check
      _
    $region47: #{tpu_custom_call.1} parent=1 // pred_check_branch
      %82 = sbr.rel (0) target = $region49
    $region48: #{tpu_custom_call.1} parent=1 // pred_region
      %s84 = ssub.s32 16, 16
      %85 = vsyncadd [#allocation10], %s84
      %s87 = sshll.u32 [#allocation9], 4
      %s88 = int_to_ptr.vmem [resolvable:$true] %s87
      %90 = dma.hbm_to_vmem [thread:$0]  %s11, 16, %s88, [#allocation10]
    $region49: #{tpu_custom_call.1} parent=1 // pred_fallthru
      _
    // Predicated region
    $region50: #{tpu_custom_call.1} parent=1 // pred_check
      _
    $region51: #{tpu_custom_call.1} parent=1 // pred_check_branch
      %92 = sbr.rel (0) target = $region53
    $region52: #{tpu_custom_call.1} parent=1 // pred_region
      _
    $region53: #{tpu_custom_call.1} parent=1 // pred_fallthru
      _
    // Predicated region
    $region54: #{tpu_custom_call.1} parent=1 // pred_check
      _
    $region55: #{tpu_custom_call.1} parent=1 // pred_check_branch
      %94 = sbr.rel (0) target = $region57
    $region56: #{tpu_custom_call.1} parent=1 // pred_region
      _
    $region57: #{tpu_custom_call.1} parent=1 // pred_fallthru
      _
    // Predicated region
    $region58: #{tpu_custom_call.1} parent=1 // pred_check
      _
    $region59: #{tpu_custom_call.1} parent=1 // pred_check_branch
      %96 = sbr.rel (0) target = $region61
    $region60: #{tpu_custom_call.1} parent=1 // pred_region
      _
    $region61: #{tpu_custom_call.1} parent=1 // pred_fallthru
      _
    // Predicated region
    $region62: #{tpu_custom_call.1} parent=1 // pred_check
      _
    $region63: #{tpu_custom_call.1} parent=1 // pred_check_branch
      %98 = sbr.rel (0) target = $region65
    $region64: #{tpu_custom_call.1} parent=1 // pred_region
      _
    $region65: #{tpu_custom_call.1} parent=1 // pred_fallthru
      _
    // Predicated region
    $region66: #{tpu_custom_call.1} parent=1 // pred_check
      _
    $region67: #{tpu_custom_call.1} parent=1 // pred_check_branch
      %100 = sbr.rel (0) target = $region69
    $region68: #{tpu_custom_call.1} parent=1 // pred_region
      _
    $region69: #{tpu_custom_call.1} parent=1 // pred_fallthru
      _
    // Predicated region
    $region70: #{tpu_custom_call.1} parent=1 // pred_check
      _
    $region71: #{tpu_custom_call.1} parent=1 // pred_check_branch
      %102 = sbr.rel (0) target = $region73
    $region72: #{tpu_custom_call.1} parent=1 // pred_region
      _
    $region73: #{tpu_custom_call.1} parent=1 // pred_fallthru
      _
    // Predicated region
    $region74: #{tpu_custom_call.1} parent=1 // pred_check
      _
    $region75: #{tpu_custom_call.1} parent=1 // pred_check_branch
      %104 = sbr.rel (0) target = $region77
    $region76: #{tpu_custom_call.1} parent=1 // pred_region
      _
    $region77: #{tpu_custom_call.1} parent=1 // pred_fallthru
      _
    // Predicated region
    $region78: #{tpu_custom_call.1} parent=1 // pred_check
      _
    $region79: #{tpu_custom_call.1} parent=1 // pred_check_branch
      %106 = sbr.rel (0) target = $region81
    $region80: #{tpu_custom_call.1} parent=1 // pred_region
      _
    $region81: #{tpu_custom_call.1} parent=1 // pred_fallthru
      _
    // Predicated region
    $region82: #{tpu_custom_call.1} parent=1 // pred_check
      _
    $region83: #{tpu_custom_call.1} parent=1 // pred_check_branch
      %108 = sbr.rel (0) target = $region85
    $region84: #{tpu_custom_call.1} parent=1 // pred_region
      _
    $region85: #{tpu_custom_call.1} parent=1 // pred_fallthru
      _
    // Predicated region
    $region86: #{tpu_custom_call.1} parent=1 // pred_check
      _
    $region87: #{tpu_custom_call.1} parent=1 // pred_check_branch
      %110 = sbr.rel (0) target = $region89
    $region88: #{tpu_custom_call.1} parent=1 // pred_region
      _
    $region89: #{tpu_custom_call.1} parent=1 // pred_fallthru
      _
    // Predicated region
    $region90: #{tpu_custom_call.1} parent=1 // pred_check
      _
    $region91: #{tpu_custom_call.1} parent=1 // pred_check_branch
      %112 = sbr.rel (0) target = $region93
    $region92: #{tpu_custom_call.1} parent=1 // pred_region
      _
    $region93: #{tpu_custom_call.1} parent=1 // pred_fallthru
      _
    // Predicated region
    $region94: #{tpu_custom_call.1} parent=1 // pred_check
      _
    $region95: #{tpu_custom_call.1} parent=1 // pred_check_branch
      %114 = sbr.rel (0) target = $region97
    $region96: #{tpu_custom_call.1} parent=1 // pred_region
      _
    $region97: #{tpu_custom_call.1} parent=1 // pred_fallthru
      _
    // Predicated region
    $region98: #{tpu_custom_call.1} parent=1 // pred_check
      _
    $region99: #{tpu_custom_call.1} parent=1 // pred_check_branch
      %116 = sbr.rel (0) target = $region101
    $region100: #{tpu_custom_call.1} parent=1 // pred_region
      _
    $region101: #{tpu_custom_call.1} parent=1 // pred_fallthru
      _
    // Predicated region
    $region102: #{tpu_custom_call.1} parent=1 // pred_check
      _
    $region103: #{tpu_custom_call.1} parent=1 // pred_check_branch
      %118 = sbr.rel (0) target = $region105
    $region104: #{tpu_custom_call.1} parent=1 // pred_region
      _
    $region105: #{tpu_custom_call.1} parent=1 // pred_fallthru
      _
    // Predicated region
    $region106: #{tpu_custom_call.1} parent=1 // pred_check
      _
    $region107: #{tpu_custom_call.1} parent=1 // pred_check_branch
      %120 = sbr.rel (0) target = $region109
    $region108: #{tpu_custom_call.1} parent=1 // pred_region
      %121 = dma.done [#allocation4], 16
    $region109: #{tpu_custom_call.1} parent=1 // pred_fallthru
      _
    // Predicated region
    $region110: #{tpu_custom_call.1} parent=1 // pred_check
      _
    $region111: #{tpu_custom_call.1} parent=1 // pred_check_branch
      %123 = sbr.rel (0) target = $region113
    $region112: #{tpu_custom_call.1} parent=1 // pred_region
      %124 = dma.done [#allocation7], 16
    $region113: #{tpu_custom_call.1} parent=1 // pred_fallthru
      _
    // Predicated region
    $region114: #{tpu_custom_call.1} parent=1 // pred_check
      _
    $region115: #{tpu_custom_call.1} parent=1 // pred_check_branch
      %126 = sbr.rel (0) target = $region117
    $region116: #{tpu_custom_call.1} parent=1 // pred_region
      %127 = dma.done [#allocation7], 16
    $region117: #{tpu_custom_call.1} parent=1 // pred_fallthru
      _
    // Predicated region
    $region118: #{tpu_custom_call.1} parent=1 // pred_check
      _
    $region119: #{tpu_custom_call.1} parent=1 // pred_check_branch
      %129 = sbr.rel (0) target = $region121
    $region120: #{tpu_custom_call.1} parent=1 // pred_region
      %130 = dma.done [#allocation10], 16
    $region121: #{tpu_custom_call.1} parent=1 // pred_fallthru
      _
    %v131 = vld [vmem:[%s0] sm:$0xff]
    %v132 = vld [vmem:[%s0 + $0x8] sm:$0xff]
    %v133 = vld [vmem:[%s0 + $0x10] sm:$0xff]
    %v134 = vld [vmem:[%s0 + $0x18] sm:$0xff]
    %v135 = vld [vmem:[%s1] sm:$0xff]
    %v136 = vld [vmem:[%s1 + $0x8] sm:$0xff]
    %v137 = vld [vmem:[%s1 + $0x10] sm:$0xff]
    %v138 = vld [vmem:[%s1 + $0x18] sm:$0xff]
    %v140 = vrot.slane %v132, 7
    %vm143 = vcmask 1040384
    %v144 = vrot.slane %v131, 7
    %v145 = vsel %vm143, %v144, %v140
    %v148 = vsel %vm143, %v140, %v144
    %vm149 = vcmask 1046528
    %v150 = vrot.slane %v131, 1
    %v151 = vrot.slane %v132, 1
    %v152 = vsel %vm149, %v150, %v151
    %v155 = vsel %vm149, %v151, %v150
    %156 = vrot.lane.b32.xlu0 %v131, 4
    %v157 = vpop.permute.xlu0 %156
    %158 = vrot.lane.b32.xlu0 %v132, 4
    %v159 = vpop.permute.xlu0 %158
    %163 = vrot.lane.b32.xlu0 %v152, 8
    %v164 = vpop.permute.xlu0 %163
    %165 = vrot.lane.b32.xlu0 %v155, 8
    %v166 = vpop.permute.xlu0 %165
    %171 = vrot.lane.b32.xlu0 %v135, 12
    %v172 = vpop.permute.xlu0 %171
    %173 = vrot.lane.b32.xlu0 %v136, 12
    %v174 = vpop.permute.xlu0 %173
    %vm177 = vcmask 31744
    %v178 = vsel %vm177, %v148, %v157
    %v179 = vsel %vm177, %v145, %v159
    %vm180 = vcmask 64512
    %v181 = vsel %vm180, %v178, %v164
    %v182 = vsel %vm180, %v179, %v166
    %vm183 = vcmask 97280
    %v184 = vsel %vm183, %v181, %v172
    %v185 = vsel %vm183, %v182, %v174
    %v187 = vrot.slane %v134, 7
    %v190 = vrot.slane %v133, 7
    %v191 = vsel %vm143, %v190, %v187
    %v194 = vsel %vm143, %v187, %v190
    %v195 = vrot.slane %v133, 1
    %v196 = vrot.slane %v134, 1
    %v197 = vsel %vm149, %v195, %v196
    %v200 = vsel %vm149, %v196, %v195
    %201 = vrot.lane.b32.xlu0 %v133, 4
    %v202 = vpop.permute.xlu0 %201
    %203 = vrot.lane.b32.xlu0 %v134, 4
    %v204 = vpop.permute.xlu0 %203
    %208 = vrot.lane.b32.xlu0 %v197, 8
    %v209 = vpop.permute.xlu0 %208
    %210 = vrot.lane.b32.xlu0 %v200, 8
    %v211 = vpop.permute.xlu0 %210
    %216 = vrot.lane.b32.xlu0 %v137, 12
    %v217 = vpop.permute.xlu0 %216
    %218 = vrot.lane.b32.xlu0 %v138, 12
    %v219 = vpop.permute.xlu0 %218
    %v222 = vsel %vm177, %v194, %v202
    %v223 = vsel %vm177, %v191, %v204
    %v224 = vsel %vm180, %v222, %v209
    %v225 = vsel %vm180, %v223, %v211
    %v226 = vsel %vm183, %v224, %v217
    %v227 = vsel %vm183, %v225, %v219
    %v228 = vld [vmem:[%s4] sm:$0xff]
    %v229 = vld [vmem:[%s4 + $0x8] sm:$0xff]
    %v230 = vld [vmem:[%s5] sm:$0x1]
    %v232 = vlaneseq
    %v233 = vshrl.u32 %v232, 7
    %v234 = vsub.s32 0, %v233
    %v235 = vrot.slane %v230, %v234
    %vm237 = vcmask 130048
    %v239 = vsel %vm237, %v184, 0
    %v242 = vsel %vm237, %v185, 0
    %v245 = vsel %vm237, %v226, 0
    %v248 = vsel %vm237, %v227, 0
    %250 = vmatprep.subr.mxu0 0.0
    %251 = vmatpush1.msra.mxu0 %v228
    %252 = vmatprep.subr.mxu0 0.0
    %253 = vmatpush1.msra.mxu0 %v229
    %254 = vmatprep.subr.mxu0 0.0
    %255 = vmatpush1.msra.mxu0 0.0
    %256 = vmatprep.subr.mxu0 0.0
    %257 = vmatpush1.msra.mxu0 0.0
    %258 = vmatprep.subr.mxu0 0.0
    %259 = vmatpush1.msra.mxu0 0.0
    %260 = vmatprep.subr.mxu0 0.0
    %261 = vmatpush1.msra.mxu0 0.0
    %262 = vmatprep.subr.mxu0 0.0
    %263 = vmatpush1.msra.mxu0 0.0
    %264 = vmatprep.subr.mxu0 0.0
    %265 = vmatpush1.msra.mxu0 0.0
    %266 = vmatprep.subr.mxu0 0.0
    %267 = vmatpush1.msra.mxu0 0.0
    %268 = vmatprep.subr.mxu0 0.0
    %269 = vmatpush1.msra.mxu0 0.0
    %270 = vmatprep.subr.mxu0 0.0
    %271 = vmatpush1.msra.mxu0 0.0
    %272 = vmatprep.subr.mxu0 0.0
    %273 = vmatpush1.msra.mxu0 0.0
    %274 = vmatprep.subr.mxu0 0.0
    %275 = vmatpush1.msra.mxu0 0.0
    %276 = vmatprep.subr.mxu0 0.0
    %277 = vmatpush1.msra.mxu0 0.0
    %278 = vmatprep.subr.mxu0 0.0
    %279 = vmatpush1.msra.mxu0 0.0
    %280 = vmatprep.subr.mxu0 0.0
    %281 = vmatpush1.msra.mxu0 0.0
    %282 = vmatprep.subr.mxu0 0.0
    %283 = vmatpush1.msra.mxu0 0.0
    %284 = vmatprep.subr.mxu0 0.0
    %285 = vmatpush1.msra.mxu0 0.0
    %286 = vmatprep.subr.mxu0 0.0
    %287 = vmatpush1.msra.mxu0 0.0
    %288 = vmatprep.subr.mxu0 0.0
    %289 = vmatpush1.msra.mxu0 0.0
    %290 = vmatprep.subr.mxu0 0.0
    %291 = vmatpush1.msra.mxu0 0.0
    %292 = vmatprep.subr.mxu0 0.0
    %293 = vmatpush1.msra.mxu0 0.0
    %294 = vmatprep.subr.mxu0 0.0
    %295 = vmatpush1.msra.mxu0 0.0
    %296 = vmatprep.subr.mxu0 0.0
    %297 = vmatpush1.msra.mxu0 0.0
    %298 = vmatprep.subr.mxu0 0.0
    %299 = vmatpush1.msra.mxu0 0.0
    %300 = vmatprep.subr.mxu0 0.0
    %301 = vmatpush1.msra.mxu0 0.0
    %302 = vmatprep.subr.mxu0 0.0
    %303 = vmatpush1.msra.mxu0 0.0
    %304 = vmatprep.subr.mxu0 0.0
    %305 = vmatpush1.msra.mxu0 0.0
    %306 = vmatprep.subr.mxu0 0.0
    %307 = vmatpush1.msra.mxu0 0.0
    %308 = vmatprep.subr.mxu0 0.0
    %309 = vmatpush1.msra.mxu0 0.0
    %310 = vmatprep.subr.mxu0 0.0
    %311 = vmatpush1.msra.mxu0 0.0
    %312 = vmatprep.subr.mxu0 0.0
    %313 = vmatpush1.msra.mxu0 0.0
    %314 = vmatprep.mubr.f32.mxu0 0.0
    %315 = vmatmul.mubr.f32.gmra.mrb[0].mxu0 %v239
    %v316 = vpop.f32.mrb[0].mxu0
    %v317 = vadd.f32 %v235, %v316
    %v318 = vpop.f32.mrb[0].mxu0
    %319 = vmatprep.mubr.f32.mxu0 0.0
    %320 = vmatmul.mubr.f32.gmra.mrb[0].mxu0 %v242
    %v321 = vpop.f32.mrb[0].mxu0
    %v322 = vadd.f32 %v235, %v321
    %v323 = vpop.f32.mrb[0].mxu0
    %324 = vmatprep.mubr.f32.mxu0 0.0
    %325 = vmatmul.mubr.f32.gmra.mrb[0].mxu0 %v245
    %v326 = vpop.f32.mrb[0].mxu0
    %v327 = vadd.f32 %v235, %v326
    %v328 = vpop.f32.mrb[0].mxu0
    %329 = vmatprep.mubr.f32.mxu0 0.0
    %330 = vmatmul.mubr.f32.gmra.mrb[0].mxu0 %v248
    %v331 = vpop.f32.mrb[0].mxu0
    %v332 = vadd.f32 %v235, %v331
    %v333 = vpop.f32.mrb[0].mxu0
    %334 = vdwg.mxu0
    %v335 = vld [vmem:[%s2] sm:$0xff]
    %v336 = vld [vmem:[%s2 + $0x8] sm:$0xff]
    %v337 = vld [vmem:[%s2 + $0x10] sm:$0xff]
    %v338 = vld [vmem:[%s2 + $0x18] sm:$0xff]
    %v339 = vadd.f32 %v317, %v335
    %v340 = vadd.f32 %v322, %v336
    %v341 = vadd.f32 %v327, %v337
    %v342 = vadd.f32 %v332, %v338
    %v343 = vld [vmem:[%s6] sm:$0xff]
    %v344 = vld [vmem:[%s6 + $0x8] sm:$0xff]
    %v345 = vld [vmem:[%s6 + $0x10] sm:$0xff]
    %v346 = vld [vmem:[%s6 + $0x18] sm:$0xff]
    %v347 = vld [vmem:[#allocation3] sm:$0x1]
    %v349 = vlaneseq
    %v350 = vshrl.u32 %v349, 7
    %v351 = vsub.s32 0, %v350
    %v352 = vrot.slane %v347, %v351
    %vm354 = vcmask 261120
    %v356 = vsel %vm354, %v339, 0
    %v359 = vsel %vm354, %v340, 0
    %v362 = vsel %vm354, %v341, 0
    %v365 = vsel %vm354, %v342, 0
    %367 = vmatprep.subr.mxu0 0.0
    %368 = vmatpush1.msra.mxu0 %v343
    %369 = vmatprep.subr.mxu0 0.0
    %370 = vmatpush1.msra.mxu0 %v344
    %371 = vmatprep.subr.mxu0 0.0
    %372 = vmatpush1.msra.mxu0 %v345
    %373 = vmatprep.subr.mxu0 0.0
    %374 = vmatpush1.msra.mxu0 %v346
    %375 = vmatprep.subr.mxu0 0.0
    %376 = vmatpush1.msra.mxu0 0.0
    %377 = vmatprep.subr.mxu0 0.0
    %378 = vmatpush1.msra.mxu0 0.0
    %379 = vmatprep.subr.mxu0 0.0
    %380 = vmatpush1.msra.mxu0 0.0
    %381 = vmatprep.subr.mxu0 0.0
    %382 = vmatpush1.msra.mxu0 0.0
    %383 = vmatprep.subr.mxu0 0.0
    %384 = vmatpush1.msra.mxu0 0.0
    %385 = vmatprep.subr.mxu0 0.0
    %386 = vmatpush1.msra.mxu0 0.0
    %387 = vmatprep.subr.mxu0 0.0
    %388 = vmatpush1.msra.mxu0 0.0
    %389 = vmatprep.subr.mxu0 0.0
    %390 = vmatpush1.msra.mxu0 0.0
    %391 = vmatprep.subr.mxu0 0.0
    %392 = vmatpush1.msra.mxu0 0.0
    %393 = vmatprep.subr.mxu0 0.0
    %394 = vmatpush1.msra.mxu0 0.0
    %395 = vmatprep.subr.mxu0 0.0
    %396 = vmatpush1.msra.mxu0 0.0
    %397 = vmatprep.subr.mxu0 0.0
    %398 = vmatpush1.msra.mxu0 0.0
    %399 = vmatprep.subr.mxu0 0.0
    %400 = vmatpush1.msra.mxu0 0.0
    %401 = vmatprep.subr.mxu0 0.0
    %402 = vmatpush1.msra.mxu0 0.0
    %403 = vmatprep.subr.mxu0 0.0
    %404 = vmatpush1.msra.mxu0 0.0
    %405 = vmatprep.subr.mxu0 0.0
    %406 = vmatpush1.msra.mxu0 0.0
    %407 = vmatprep.subr.mxu0 0.0
    %408 = vmatpush1.msra.mxu0 0.0
    %409 = vmatprep.subr.mxu0 0.0
    %410 = vmatpush1.msra.mxu0 0.0
    %411 = vmatprep.subr.mxu0 0.0
    %412 = vmatpush1.msra.mxu0 0.0
    %413 = vmatprep.subr.mxu0 0.0
    %414 = vmatpush1.msra.mxu0 0.0
    %415 = vmatprep.subr.mxu0 0.0
    %416 = vmatpush1.msra.mxu0 0.0
    %417 = vmatprep.subr.mxu0 0.0
    %418 = vmatpush1.msra.mxu0 0.0
    %419 = vmatprep.subr.mxu0 0.0
    %420 = vmatpush1.msra.mxu0 0.0
    %421 = vmatprep.subr.mxu0 0.0
    %422 = vmatpush1.msra.mxu0 0.0
    %423 = vmatprep.subr.mxu0 0.0
    %424 = vmatpush1.msra.mxu0 0.0
    %425 = vmatprep.subr.mxu0 0.0
    %426 = vmatpush1.msra.mxu0 0.0
    %427 = vmatprep.subr.mxu0 0.0
    %428 = vmatpush1.msra.mxu0 0.0
    %429 = vmatprep.subr.mxu0 0.0
    %430 = vmatpush1.msra.mxu0 0.0
    %431 = vmatprep.mubr.f32.mxu0 0.0
    %432 = vmatmul.mubr.f32.gmra.mrb[0].mxu0 %v356
    %v433 = vpop.f32.mrb[0].mxu0
    %v434 = vadd.f32 %v352, %v433
    %v435 = vpop.f32.mrb[0].mxu0
    %436 = vmatprep.mubr.f32.mxu0 0.0
    %437 = vmatmul.mubr.f32.gmra.mrb[0].mxu0 %v359
    %v438 = vpop.f32.mrb[0].mxu0
    %v439 = vadd.f32 %v352, %v438
    %v440 = vpop.f32.mrb[0].mxu0
    %441 = vmatprep.mubr.f32.mxu0 0.0
    %442 = vmatmul.mubr.f32.gmra.mrb[0].mxu0 %v362
    %v443 = vpop.f32.mrb[0].mxu0
    %v444 = vadd.f32 %v352, %v443
    %v445 = vpop.f32.mrb[0].mxu0
    %446 = vmatprep.mubr.f32.mxu0 0.0
    %447 = vmatmul.mubr.f32.gmra.mrb[0].mxu0 %v365
    %v448 = vpop.f32.mrb[0].mxu0
    %v449 = vadd.f32 %v352, %v448
    %v450 = vpop.f32.mrb[0].mxu0
    %451 = vdwg.mxu0
    %vm452 = vcmask 523264
    %453 = vst.msk [vmem:[#allocation2] sm:$0xff] %vm452, %v434
    %454 = vst.msk [vmem:[#allocation2 + $0x8] sm:$0xff] %vm452, %v439
    %455 = vst.msk [vmem:[#allocation2 + $0x10] sm:$0xff] %vm452, %v444
    %456 = vst.msk [vmem:[#allocation2 + $0x18] sm:$0xff] %vm452, %v449
    %v457 = vld [vmem:[#allocation2] ss:$2 sm:$0xff]
    %s458 = scalar_lea.vmem [#allocation2], 16
    %v459 = vld [vmem:[%s458] ss:$2 sm:$0xff]
    %v460 = vld [vmem:[%s23] sm:$0xff]
    %v461 = vld [vmem:[%s23 + $0x8] sm:$0xff]
    %v462 = vld [vmem:[%s23 + $0x10] sm:$0xff]
    %v463 = vld [vmem:[%s23 + $0x18] sm:$0xff]
    %v464 = vld [vmem:[%s23 + $0x20] sm:$0xff]
    %v465 = vld [vmem:[%s23 + $0x28] sm:$0xff]
    %v466 = vld [vmem:[%s23 + $0x30] sm:$0xff]
    %v467 = vld [vmem:[%s23 + $0x38] sm:$0xff]
    %s468 = scalar_lea.vmem [#allocation2], 1
    %v469 = vld [vmem:[%s468] ss:$2 sm:$0xff]
    %s470 = scalar_lea.vmem [#allocation2], 17
    %v471 = vld [vmem:[%s470] ss:$2 sm:$0xff]
    %s472 = scalar_lea.vmem %s23, 64
    %v473 = vld [vmem:[%s472] sm:$0xff]
    %v474 = vld [vmem:[%s472 + $0x8] sm:$0xff]
    %v475 = vld [vmem:[%s472 + $0x10] sm:$0xff]
    %v476 = vld [vmem:[%s472 + $0x18] sm:$0xff]
    %v477 = vld [vmem:[%s472 + $0x20] sm:$0xff]
    %v478 = vld [vmem:[%s472 + $0x28] sm:$0xff]
    %v479 = vld [vmem:[%s472 + $0x30] sm:$0xff]
    %v480 = vld [vmem:[%s472 + $0x38] sm:$0xff]
    %v482 = vsel %vm452, %v469, 0
    %v485 = vsel %vm452, %v471, 0
    %487 = vmatprep.subr.mxu0 0.0
    %488 = vmatpush1.msra.mxu0 %v473
    %489 = vmatprep.subr.mxu0 0.0
    %490 = vmatpush1.msra.mxu0 %v474
    %491 = vmatprep.subr.mxu0 0.0
    %492 = vmatpush1.msra.mxu0 %v475
    %493 = vmatprep.subr.mxu0 0.0
    %494 = vmatpush1.msra.mxu0 %v476
    %495 = vmatprep.subr.mxu0 0.0
    %496 = vmatpush1.msra.mxu0 %v477
    %497 = vmatprep.subr.mxu0 0.0
    %498 = vmatpush1.msra.mxu0 %v478
    %499 = vmatprep.subr.mxu0 0.0
    %500 = vmatpush1.msra.mxu0 %v479
    %501 = vmatprep.subr.mxu0 0.0
    %502 = vmatpush1.msra.mxu0 %v480
    %503 = vmatprep.subr.mxu0 0.0
    %504 = vmatpush1.msra.mxu0 0.0
    %505 = vmatprep.subr.mxu0 0.0
    %506 = vmatpush1.msra.mxu0 0.0
    %507 = vmatprep.subr.mxu0 0.0
    %508 = vmatpush1.msra.mxu0 0.0
    %509 = vmatprep.subr.mxu0 0.0
    %510 = vmatpush1.msra.mxu0 0.0
    %511 = vmatprep.subr.mxu0 0.0
    %512 = vmatpush1.msra.mxu0 0.0
    %513 = vmatprep.subr.mxu0 0.0
    %514 = vmatpush1.msra.mxu0 0.0
    %515 = vmatprep.subr.mxu0 0.0
    %516 = vmatpush1.msra.mxu0 0.0
    %517 = vmatprep.subr.mxu0 0.0
    %518 = vmatpush1.msra.mxu0 0.0
    %519 = vmatprep.subr.mxu0 0.0
    %520 = vmatpush1.msra.mxu0 0.0
    %521 = vmatprep.subr.mxu0 0.0
    %522 = vmatpush1.msra.mxu0 0.0
    %523 = vmatprep.subr.mxu0 0.0
    %524 = vmatpush1.msra.mxu0 0.0
    %525 = vmatprep.subr.mxu0 0.0
    %526 = vmatpush1.msra.mxu0 0.0
    %527 = vmatprep.subr.mxu0 0.0
    %528 = vmatpush1.msra.mxu0 0.0
    %529 = vmatprep.subr.mxu0 0.0
    %530 = vmatpush1.msra.mxu0 0.0
    %531 = vmatprep.subr.mxu0 0.0
    %532 = vmatpush1.msra.mxu0 0.0
    %533 = vmatprep.subr.mxu0 0.0
    %534 = vmatpush1.msra.mxu0 0.0
    %535 = vmatprep.subr.mxu0 0.0
    %536 = vmatpush1.msra.mxu0 0.0
    %537 = vmatprep.subr.mxu0 0.0
    %538 = vmatpush1.msra.mxu0 0.0
    %539 = vmatprep.subr.mxu0 0.0
    %540 = vmatpush1.msra.mxu0 0.0
    %541 = vmatprep.subr.mxu0 0.0
    %542 = vmatpush1.msra.mxu0 0.0
    %543 = vmatprep.subr.mxu0 0.0
    %544 = vmatpush1.msra.mxu0 0.0
    %545 = vmatprep.subr.mxu0 0.0
    %546 = vmatpush1.msra.mxu0 0.0
    %547 = vmatprep.subr.mxu0 0.0
    %548 = vmatpush1.msra.mxu0 0.0
    %549 = vmatprep.subr.mxu0 0.0
    %550 = vmatpush1.msra.mxu0 0.0
    %551 = vmatprep.mubr.f32.mxu0 0.0
    %552 = vmatmul.mubr.f32.gmra.mrb[0].mxu0 %v482
    %v553 = vpop.f32.mrb[0].mxu0
    %v554 = vadd.f32 0.0, %v553
    %v555 = vpop.f32.mrb[0].mxu0
    %556 = vmatprep.mubr.f32.mxu0 0.0
    %557 = vmatmul.mubr.f32.gmra.mrb[0].mxu0 %v485
    %v558 = vpop.f32.mrb[0].mxu0
    %v559 = vadd.f32 0.0, %v558
    %v560 = vpop.f32.mrb[0].mxu0
    %561 = vdwg.mxu0
    %v563 = vsel %vm452, %v457, 0
    %v566 = vsel %vm452, %v459, 0
    %568 = vmatprep.subr.mxu0 0.0
    %569 = vmatpush1.msra.mxu0 %v460
    %570 = vmatprep.subr.mxu0 0.0
    %571 = vmatpush1.msra.mxu0 %v461
    %572 = vmatprep.subr.mxu0 0.0
    %573 = vmatpush1.msra.mxu0 %v462
    %574 = vmatprep.subr.mxu0 0.0
    %575 = vmatpush1.msra.mxu0 %v463
    %576 = vmatprep.subr.mxu0 0.0
    %577 = vmatpush1.msra.mxu0 %v464
    %578 = vmatprep.subr.mxu0 0.0
    %579 = vmatpush1.msra.mxu0 %v465
    %580 = vmatprep.subr.mxu0 0.0
    %581 = vmatpush1.msra.mxu0 %v466
    %582 = vmatprep.subr.mxu0 0.0
    %583 = vmatpush1.msra.mxu0 %v467
    %584 = vmatprep.subr.mxu0 0.0
    %585 = vmatpush1.msra.mxu0 0.0
    %586 = vmatprep.subr.mxu0 0.0
    %587 = vmatpush1.msra.mxu0 0.0
    %588 = vmatprep.subr.mxu0 0.0
    %589 = vmatpush1.msra.mxu0 0.0
    %590 = vmatprep.subr.mxu0 0.0
    %591 = vmatpush1.msra.mxu0 0.0
    %592 = vmatprep.subr.mxu0 0.0
    %593 = vmatpush1.msra.mxu0 0.0
    %594 = vmatprep.subr.mxu0 0.0
    %595 = vmatpush1.msra.mxu0 0.0
    %596 = vmatprep.subr.mxu0 0.0
    %597 = vmatpush1.msra.mxu0 0.0
    %598 = vmatprep.subr.mxu0 0.0
    %599 = vmatpush1.msra.mxu0 0.0
    %600 = vmatprep.subr.mxu0 0.0
    %601 = vmatpush1.msra.mxu0 0.0
    %602 = vmatprep.subr.mxu0 0.0
    %603 = vmatpush1.msra.mxu0 0.0
    %604 = vmatprep.subr.mxu0 0.0
    %605 = vmatpush1.msra.mxu0 0.0
    %606 = vmatprep.subr.mxu0 0.0
    %607 = vmatpush1.msra.mxu0 0.0
    %608 = vmatprep.subr.mxu0 0.0
    %609 = vmatpush1.msra.mxu0 0.0
    %610 = vmatprep.subr.mxu0 0.0
    %611 = vmatpush1.msra.mxu0 0.0
    %612 = vmatprep.subr.mxu0 0.0
    %613 = vmatpush1.msra.mxu0 0.0
    %614 = vmatprep.subr.mxu0 0.0
    %615 = vmatpush1.msra.mxu0 0.0
    %616 = vmatprep.subr.mxu0 0.0
    %617 = vmatpush1.msra.mxu0 0.0
    %618 = vmatprep.subr.mxu0 0.0
    %619 = vmatpush1.msra.mxu0 0.0
    %620 = vmatprep.subr.mxu0 0.0
    %621 = vmatpush1.msra.mxu0 0.0
    %622 = vmatprep.subr.mxu0 0.0
    %623 = vmatpush1.msra.mxu0 0.0
    %624 = vmatprep.subr.mxu0 0.0
    %625 = vmatpush1.msra.mxu0 0.0
    %626 = vmatprep.subr.mxu0 0.0
    %627 = vmatpush1.msra.mxu0 0.0
    %628 = vmatprep.subr.mxu0 0.0
    %629 = vmatpush1.msra.mxu0 0.0
    %630 = vmatprep.subr.mxu0 0.0
    %631 = vmatpush1.msra.mxu0 0.0
    %632 = vmatprep.mubr.f32.mxu0 0.0
    %633 = vmatmul.mubr.f32.gmra.mrb[0].mxu0 %v563
    %v634 = vpop.f32.mrb[0].mxu0
    %v635 = vadd.f32 %v554, %v634
    %v636 = vpop.f32.mrb[0].mxu0
    %637 = vmatprep.mubr.f32.mxu0 0.0
    %638 = vmatmul.mubr.f32.gmra.mrb[0].mxu0 %v566
    %v639 = vpop.f32.mrb[0].mxu0
    %v640 = vadd.f32 %v559, %v639
    %v641 = vpop.f32.mrb[0].mxu0
    %642 = vdwg.mxu0
    %v643 = vld [vmem:[%s24] sm:$0x1]
    %v645 = vlaneseq
    %v646 = vshrl.u32 %v645, 7
    %v647 = vsub.s32 0, %v646
    %v648 = vrot.slane %v643, %v647
    %v650 = vadd.f32 %v635, %v648
    %v651 = vadd.f32 %v640, %v648
    %vm652 = vcmp.gt.f32.partialorder %v650, 0.0
    %vm653 = vcmp.gt.f32.partialorder %v651, 0.0
    %v654 = vmin.f32 %v650, 0.0
    %v655 = vmin.f32 %v651, 0.0
    %v656 = vmul.f32 %v654, 1.442695
    %v657 = vpow.pop %v656
    %v658 = vmul.f32 %v655, 1.442695
    %v659 = vpow.pop %v658
    %v660 = vsub.f32 %v657, 1.0
    %v661 = vsub.f32 %v659, 1.0
    %v662 = vsel %vm652, %v650, %v660
    %v663 = vsel %vm653, %v651, %v661
    %v664 = vld [vmem:[%s8] sm:$0xff]
    %v665 = vld [vmem:[%s8 + $0x8] sm:$0xff]
    %v666 = vld [vmem:[%s8 + $0x10] sm:$0xff]
    %v667 = vld [vmem:[%s8 + $0x18] sm:$0xff]
    %v668 = vld [vmem:[%s8 + $0x20] sm:$0xff]
    %v669 = vld [vmem:[%s8 + $0x28] sm:$0xff]
    %v670 = vld [vmem:[%s8 + $0x30] sm:$0xff]
    %v671 = vld [vmem:[%s8 + $0x38] sm:$0xff]
    %v672 = vld [vmem:[#allocation6] sm:$0x1]
    %v674 = vlaneseq
    %v675 = vshrl.u32 %v674, 7
    %v676 = vsub.s32 0, %v675
    %v677 = vrot.slane %v672, %v676
    %v680 = vsel %vm452, %v662, 0
    %v683 = vsel %vm452, %v663, 0
    %685 = vmatprep.subr.mxu0 0.0
    %686 = vmatpush1.msra.mxu0 %v664
    %687 = vmatprep.subr.mxu0 0.0
    %688 = vmatpush1.msra.mxu0 %v665
    %689 = vmatprep.subr.mxu0 0.0
    %690 = vmatpush1.msra.mxu0 %v666
    %691 = vmatprep.subr.mxu0 0.0
    %692 = vmatpush1.msra.mxu0 %v667
    %693 = vmatprep.subr.mxu0 0.0
    %694 = vmatpush1.msra.mxu0 %v668
    %695 = vmatprep.subr.mxu0 0.0
    %696 = vmatpush1.msra.mxu0 %v669
    %697 = vmatprep.subr.mxu0 0.0
    %698 = vmatpush1.msra.mxu0 %v670
    %699 = vmatprep.subr.mxu0 0.0
    %700 = vmatpush1.msra.mxu0 %v671
    %701 = vmatprep.subr.mxu0 0.0
    %702 = vmatpush1.msra.mxu0 0.0
    %703 = vmatprep.subr.mxu0 0.0
    %704 = vmatpush1.msra.mxu0 0.0
    %705 = vmatprep.subr.mxu0 0.0
    %706 = vmatpush1.msra.mxu0 0.0
    %707 = vmatprep.subr.mxu0 0.0
    %708 = vmatpush1.msra.mxu0 0.0
    %709 = vmatprep.subr.mxu0 0.0
    %710 = vmatpush1.msra.mxu0 0.0
    %711 = vmatprep.subr.mxu0 0.0
    %712 = vmatpush1.msra.mxu0 0.0
    %713 = vmatprep.subr.mxu0 0.0
    %714 = vmatpush1.msra.mxu0 0.0
    %715 = vmatprep.subr.mxu0 0.0
    %716 = vmatpush1.msra.mxu0 0.0
    %717 = vmatprep.subr.mxu0 0.0
    %718 = vmatpush1.msra.mxu0 0.0
    %719 = vmatprep.subr.mxu0 0.0
    %720 = vmatpush1.msra.mxu0 0.0
    %721 = vmatprep.subr.mxu0 0.0
    %722 = vmatpush1.msra.mxu0 0.0
    %723 = vmatprep.subr.mxu0 0.0
    %724 = vmatpush1.msra.mxu0 0.0
    %725 = vmatprep.subr.mxu0 0.0
    %726 = vmatpush1.msra.mxu0 0.0
    %727 = vmatprep.subr.mxu0 0.0
    %728 = vmatpush1.msra.mxu0 0.0
    %729 = vmatprep.subr.mxu0 0.0
    %730 = vmatpush1.msra.mxu0 0.0
    %731 = vmatprep.subr.mxu0 0.0
    %732 = vmatpush1.msra.mxu0 0.0
    %733 = vmatprep.subr.mxu0 0.0
    %734 = vmatpush1.msra.mxu0 0.0
    %735 = vmatprep.subr.mxu0 0.0
    %736 = vmatpush1.msra.mxu0 0.0
    %737 = vmatprep.subr.mxu0 0.0
    %738 = vmatpush1.msra.mxu0 0.0
    %739 = vmatprep.subr.mxu0 0.0
    %740 = vmatpush1.msra.mxu0 0.0
    %741 = vmatprep.subr.mxu0 0.0
    %742 = vmatpush1.msra.mxu0 0.0
    %743 = vmatprep.subr.mxu0 0.0
    %744 = vmatpush1.msra.mxu0 0.0
    %745 = vmatprep.subr.mxu0 0.0
    %746 = vmatpush1.msra.mxu0 0.0
    %747 = vmatprep.subr.mxu0 0.0
    %748 = vmatpush1.msra.mxu0 0.0
    %749 = vmatprep.mubr.f32.mxu0 0.0
    %750 = vmatmul.mubr.f32.gmra.mrb[0].mxu0 %v680
    %v751 = vpop.f32.mrb[0].mxu0
    %v752 = vadd.f32 %v677, %v751
    %v753 = vpop.f32.mrb[0].mxu0
    %754 = vmatprep.mubr.f32.mxu0 0.0
    %755 = vmatmul.mubr.f32.gmra.mrb[0].mxu0 %v683
    %v756 = vpop.f32.mrb[0].mxu0
    %v757 = vadd.f32 %v677, %v756
    %v758 = vpop.f32.mrb[0].mxu0
    %759 = vdwg.mxu0
    %v760 = vld [vmem:[#allocation8] sm:$0x1]
    %v761 = vld [vmem:[#allocation9] sm:$0x1]
    %v762 = vsel %vm354, %v339, 0.0
    %763 = vadd.xlane.f32.xlu0 %v762
    %v764 = vpop.xlane.xlu0 %763
    %v765 = vsel %vm354, %v340, 0.0
    %766 = vadd.xlane.f32.xlu0 %v765
    %v767 = vpop.xlane.xlu0 %766
    %v768 = vsel %vm354, %v752, 0.0
    %769 = vadd.xlane.f32.xlu0 %v768
    %v770 = vpop.xlane.xlu0 %769
    %v771 = vsel %vm354, %v341, 0.0
    %772 = vadd.xlane.f32.xlu0 %v771
    %v773 = vpop.xlane.xlu0 %772
    %v774 = vsel %vm354, %v342, 0.0
    %775 = vadd.xlane.f32.xlu0 %v774
    %v776 = vpop.xlane.xlu0 %775
    %v777 = vsel %vm354, %v757, 0.0
    %778 = vadd.xlane.f32.xlu0 %v777
    %v779 = vpop.xlane.xlu0 %778
    %v780 = vrcp.pop 32.0
    %v781 = vmul.f32 %v764, %v780
    %v782 = vmul.f32 %v767, %v780
    %v783 = vmul.f32 %v770, %v780
    %v784 = vmul.f32 %v773, %v780
    %v785 = vmul.f32 %v776, %v780
    %v786 = vmul.f32 %v779, %v780
    %v787 = vsub.f32 %v339, %v781
    %v788 = vsub.f32 %v340, %v782
    %v789 = vsub.f32 %v752, %v783
    %v790 = vsub.f32 %v341, %v784
    %v791 = vsub.f32 %v342, %v785
    %v792 = vsub.f32 %v757, %v786
    %v793 = vmul.f32 %v787, %v787
    %v794 = vmul.f32 %v788, %v788
    %v795 = vmul.f32 %v789, %v789
    %v796 = vmul.f32 %v790, %v790
    %v797 = vmul.f32 %v791, %v791
    %v798 = vmul.f32 %v792, %v792
    %v799 = vsel %vm354, %v793, 0.0
    %800 = vadd.xlane.f32.xlu0 %v799
    %v801 = vpop.xlane.xlu0 %800
    %v802 = vsel %vm354, %v794, 0.0
    %803 = vadd.xlane.f32.xlu0 %v802
    %v804 = vpop.xlane.xlu0 %803
    %v805 = vsel %vm354, %v795, 0.0
    %806 = vadd.xlane.f32.xlu0 %v805
    %v807 = vpop.xlane.xlu0 %806
    %v808 = vsel %vm354, %v796, 0.0
    %809 = vadd.xlane.f32.xlu0 %v808
    %v810 = vpop.xlane.xlu0 %809
    %v811 = vsel %vm354, %v797, 0.0
    %812 = vadd.xlane.f32.xlu0 %v811
    %v813 = vpop.xlane.xlu0 %812
    %v814 = vsel %vm354, %v798, 0.0
    %815 = vadd.xlane.f32.xlu0 %v814
    %v816 = vpop.xlane.xlu0 %815
    %v817 = vmul.f32 %v801, %v780
    %v818 = vmul.f32 %v804, %v780
    %v819 = vmul.f32 %v807, %v780
    %v820 = vmul.f32 %v810, %v780
    %v821 = vmul.f32 %v813, %v780
    %v822 = vmul.f32 %v816, %v780
    %v823 = vadd.f32 %v817, 1e-05
    %v824 = vadd.f32 %v818, 1e-05
    %v825 = vadd.f32 %v819, 1e-05
    %v826 = vadd.f32 %v820, 1e-05
    %v827 = vadd.f32 %v821, 1e-05
    %v828 = vadd.f32 %v822, 1e-05
    %v829 = vrsqrt.pop %v823
    %v830 = vrsqrt.pop %v824
    %v831 = vrsqrt.pop %v825
    %v832 = vrsqrt.pop %v826
    %v833 = vrsqrt.pop %v827
    %v834 = vrsqrt.pop %v828
    %v835 = vmul.f32 %v787, %v829
    %v836 = vmul.f32 %v788, %v830
    %v837 = vmul.f32 %v789, %v831
    %v838 = vmul.f32 %v790, %v832
    %v839 = vmul.f32 %v791, %v833
    %v840 = vmul.f32 %v792, %v834
    %v842 = vlaneseq
    %v843 = vshrl.u32 %v842, 7
    %v844 = vsub.s32 0, %v843
    %v845 = vrot.slane %v760, %v844
    %v847 = vmul.f32 %v835, %v845
    %v848 = vmul.f32 %v836, %v845
    %v849 = vmul.f32 %v837, %v845
    %v850 = vmul.f32 %v838, %v845
    %v851 = vmul.f32 %v839, %v845
    %v852 = vmul.f32 %v840, %v845
    %v854 = vlaneseq
    %v855 = vshrl.u32 %v854, 7
    %v856 = vsub.s32 0, %v855
    %v857 = vrot.slane %v761, %v856
    %v859 = vadd.f32 %v847, %v857
    %v860 = vadd.f32 %v848, %v857
    %v861 = vadd.f32 %v849, %v857
    %v862 = vadd.f32 %v850, %v857
    %v863 = vadd.f32 %v851, %v857
    %v864 = vadd.f32 %v852, %v857
    %v865 = vld [vmem:[%s3] sm:$0xff]
    %v866 = vld [vmem:[%s3 + $0x8] sm:$0xff]
    %v867 = vld [vmem:[%s3 + $0x10] sm:$0xff]
    %v868 = vld [vmem:[%s12] sm:$0xff]
    %v869 = vld [vmem:[%s12 + $0x8] sm:$0xff]
    %v870 = vld [vmem:[%s12 + $0x10] sm:$0xff]
    %v871 = vld [vmem:[%s12 + $0x18] sm:$0xff]
    %v872 = vld [vmem:[%s12 + $0x20] sm:$0xff]
    %v873 = vld [vmem:[%s12 + $0x28] sm:$0xff]
    %v874 = vld [vmem:[%s12 + $0x30] sm:$0xff]
    %v875 = vld [vmem:[%s12 + $0x38] sm:$0xff]
    %v876 = vld [vmem:[%s12 + $0x40] sm:$0xff]
    %v877 = vld [vmem:[%s12 + $0x48] sm:$0xff]
    %v878 = vld [vmem:[%s12 + $0x50] sm:$0xff]
    %v879 = vld [vmem:[%s12 + $0x58] sm:$0xff]
    %v880 = vld [vmem:[%s12 + $0x60] sm:$0xff]
    %v881 = vld [vmem:[%s12 + $0x68] sm:$0xff]
    %v882 = vld [vmem:[%s12 + $0x70] sm:$0xff]
    %v883 = vld [vmem:[%s12 + $0x78] sm:$0xff]
    %v884 = vld [vmem:[%s12 + $0x80] sm:$0xff]
    %v885 = vld [vmem:[%s12 + $0x88] sm:$0xff]
    %v886 = vld [vmem:[%s12 + $0x90] sm:$0xff]
    %v887 = vld [vmem:[%s12 + $0x98] sm:$0xff]
    %v888 = vld [vmem:[%s12 + $0xa0] sm:$0xff]
    %v889 = vld [vmem:[%s12 + $0xa8] sm:$0xff]
    %v890 = vld [vmem:[%s12 + $0xb0] sm:$0xff]
    %v891 = vld [vmem:[%s12 + $0xb8] sm:$0xff]
    %v893 = vsel %vm354, %v859, 0
    %v896 = vsel %vm354, %v860, 0
    %v899 = vsel %vm354, %v861, 0
    %v902 = vsel %vm354, %v862, 0
    %v905 = vsel %vm354, %v863, 0
    %v908 = vsel %vm354, %v864, 0
    %910 = vmatprep.subr.mxu0 %v869
    %911 = vmatpush1.msra.mxu0 %v868
    %912 = vmatprep.subr.mxu0 %v875
    %913 = vmatpush1.msra.mxu0 %v874
    %914 = vmatprep.subr.mxu0 %v881
    %915 = vmatpush1.msra.mxu0 %v880
    %916 = vmatprep.subr.mxu0 %v887
    %917 = vmatpush1.msra.mxu0 %v886
    %918 = vmatprep.subr.mxu0 0.0
    %919 = vmatpush1.msra.mxu0 0.0
    %920 = vmatprep.subr.mxu0 0.0
    %921 = vmatpush1.msra.mxu0 0.0
    %922 = vmatprep.subr.mxu0 0.0
    %923 = vmatpush1.msra.mxu0 0.0
    %924 = vmatprep.subr.mxu0 0.0
    %925 = vmatpush1.msra.mxu0 0.0
    %926 = vmatprep.subr.mxu0 0.0
    %927 = vmatpush1.msra.mxu0 0.0
    %928 = vmatprep.subr.mxu0 0.0
    %929 = vmatpush1.msra.mxu0 0.0
    %930 = vmatprep.subr.mxu0 0.0
    %931 = vmatpush1.msra.mxu0 0.0
    %932 = vmatprep.subr.mxu0 0.0
    %933 = vmatpush1.msra.mxu0 0.0
    %934 = vmatprep.subr.mxu0 0.0
    %935 = vmatpush1.msra.mxu0 0.0
    %936 = vmatprep.subr.mxu0 0.0
    %937 = vmatpush1.msra.mxu0 0.0
    %938 = vmatprep.subr.mxu0 0.0
    %939 = vmatpush1.msra.mxu0 0.0
    %940 = vmatprep.subr.mxu0 0.0
    %941 = vmatpush1.msra.mxu0 0.0
    %942 = vmatprep.subr.mxu0 0.0
    %943 = vmatpush1.msra.mxu0 0.0
    %944 = vmatprep.subr.mxu0 0.0
    %945 = vmatpush1.msra.mxu0 0.0
    %946 = vmatprep.subr.mxu0 0.0
    %947 = vmatpush1.msra.mxu0 0.0
    %948 = vmatprep.subr.mxu0 0.0
    %949 = vmatpush1.msra.mxu0 0.0
    %950 = vmatprep.subr.mxu0 0.0
    %951 = vmatpush1.msra.mxu0 0.0
    %952 = vmatprep.subr.mxu0 0.0
    %953 = vmatpush1.msra.mxu0 0.0
    %954 = vmatprep.subr.mxu0 0.0
    %955 = vmatpush1.msra.mxu0 0.0
    %956 = vmatprep.subr.mxu0 0.0
    %957 = vmatpush1.msra.mxu0 0.0
    %958 = vmatprep.subr.mxu0 0.0
    %959 = vmatpush1.msra.mxu0 0.0
    %960 = vmatprep.subr.mxu0 0.0
    %961 = vmatpush1.msra.mxu0 0.0
    %962 = vmatprep.subr.mxu0 0.0
    %963 = vmatpush1.msra.mxu0 0.0
    %964 = vmatprep.subr.mxu0 0.0
    %965 = vmatpush1.msra.mxu0 0.0
    %966 = vmatprep.subr.mxu0 0.0
    %967 = vmatpush1.msra.mxu0 0.0
    %968 = vmatprep.subr.mxu0 0.0
    %969 = vmatpush1.msra.mxu0 0.0
    %970 = vmatprep.subr.mxu0 0.0
    %971 = vmatpush1.msra.mxu0 0.0
    %972 = vmatprep.subr.mxu0 0.0
    %973 = vmatpush1.msra.mxu0 0.0
    %974 = vmatprep.mubr.f32.mxu0 0.0
    %975 = vmatmul.mubr.f32.gmra.mrb[0].mxu0 %v893
    %v976 = vpop.f32.mrb[0].mxu0
    %v977 = vadd.f32 0.0, %v976
    %v978 = vpop.f32.mrb[0].mxu0
    %v979 = vadd.f32 0.0, %v978
    %980 = vmatprep.mubr.f32.mxu0 0.0
    %981 = vmatmul.mubr.f32.gmra.mrb[0].mxu0 %v896
    %v982 = vpop.f32.mrb[0].mxu0
    %v983 = vadd.f32 0.0, %v982
    %v984 = vpop.f32.mrb[0].mxu0
    %v985 = vadd.f32 0.0, %v984
    %986 = vmatprep.mubr.f32.mxu0 0.0
    %987 = vmatmul.mubr.f32.gmra.mrb[0].mxu0 %v899
    %v988 = vpop.f32.mrb[0].mxu0
    %v989 = vadd.f32 0.0, %v988
    %v990 = vpop.f32.mrb[0].mxu0
    %v991 = vadd.f32 0.0, %v990
    %992 = vmatprep.mubr.f32.mxu0 0.0
    %993 = vmatmul.mubr.f32.gmra.mrb[0].mxu0 %v902
    %v994 = vpop.f32.mrb[0].mxu0
    %v995 = vadd.f32 0.0, %v994
    %v996 = vpop.f32.mrb[0].mxu0
    %v997 = vadd.f32 0.0, %v996
    %998 = vmatprep.mubr.f32.mxu0 0.0
    %999 = vmatmul.mubr.f32.gmra.mrb[0].mxu0 %v905
    %v1000 = vpop.f32.mrb[0].mxu0
    %v1001 = vadd.f32 0.0, %v1000
    %v1002 = vpop.f32.mrb[0].mxu0
    %v1003 = vadd.f32 0.0, %v1002
    %1004 = vmatprep.mubr.f32.mxu0 0.0
    %1005 = vmatmul.mubr.f32.gmra.mrb[0].mxu0 %v908
    %v1006 = vpop.f32.mrb[0].mxu0
    %v1007 = vadd.f32 0.0, %v1006
    %v1008 = vpop.f32.mrb[0].mxu0
    %v1009 = vadd.f32 0.0, %v1008
    %1010 = vdwg.mxu0
    %1011 = vmatprep.subr.mxu0 %v871
    %1012 = vmatpush1.msra.mxu0 %v870
    %1013 = vmatprep.subr.mxu0 %v877
    %1014 = vmatpush1.msra.mxu0 %v876
    %1015 = vmatprep.subr.mxu0 %v883
    %1016 = vmatpush1.msra.mxu0 %v882
    %1017 = vmatprep.subr.mxu0 %v889
    %1018 = vmatpush1.msra.mxu0 %v888
    %1019 = vmatprep.subr.mxu0 0.0
    %1020 = vmatpush1.msra.mxu0 0.0
    %1021 = vmatprep.subr.mxu0 0.0
    %1022 = vmatpush1.msra.mxu0 0.0
    %1023 = vmatprep.subr.mxu0 0.0
    %1024 = vmatpush1.msra.mxu0 0.0
    %1025 = vmatprep.subr.mxu0 0.0
    %1026 = vmatpush1.msra.mxu0 0.0
    %1027 = vmatprep.subr.mxu0 0.0
    %1028 = vmatpush1.msra.mxu0 0.0
    %1029 = vmatprep.subr.mxu0 0.0
    %1030 = vmatpush1.msra.mxu0 0.0
    %1031 = vmatprep.subr.mxu0 0.0
    %1032 = vmatpush1.msra.mxu0 0.0
    %1033 = vmatprep.subr.mxu0 0.0
    %1034 = vmatpush1.msra.mxu0 0.0
    %1035 = vmatprep.subr.mxu0 0.0
    %1036 = vmatpush1.msra.mxu0 0.0
    %1037 = vmatprep.subr.mxu0 0.0
    %1038 = vmatpush1.msra.mxu0 0.0
    %1039 = vmatprep.subr.mxu0 0.0
    %1040 = vmatpush1.msra.mxu0 0.0
    %1041 = vmatprep.subr.mxu0 0.0
    %1042 = vmatpush1.msra.mxu0 0.0
    %1043 = vmatprep.subr.mxu0 0.0
    %1044 = vmatpush1.msra.mxu0 0.0
    %1045 = vmatprep.subr.mxu0 0.0
    %1046 = vmatpush1.msra.mxu0 0.0
    %1047 = vmatprep.subr.mxu0 0.0
    %1048 = vmatpush1.msra.mxu0 0.0
    %1049 = vmatprep.subr.mxu0 0.0
    %1050 = vmatpush1.msra.mxu0 0.0
    %1051 = vmatprep.subr.mxu0 0.0
    %1052 = vmatpush1.msra.mxu0 0.0
    %1053 = vmatprep.subr.mxu0 0.0
    %1054 = vmatpush1.msra.mxu0 0.0
    %1055 = vmatprep.subr.mxu0 0.0
    %1056 = vmatpush1.msra.mxu0 0.0
    %1057 = vmatprep.subr.mxu0 0.0
    %1058 = vmatpush1.msra.mxu0 0.0
    %1059 = vmatprep.subr.mxu0 0.0
    %1060 = vmatpush1.msra.mxu0 0.0
    %1061 = vmatprep.subr.mxu0 0.0
    %1062 = vmatpush1.msra.mxu0 0.0
    %1063 = vmatprep.subr.mxu0 0.0
    %1064 = vmatpush1.msra.mxu0 0.0
    %1065 = vmatprep.subr.mxu0 0.0
    %1066 = vmatpush1.msra.mxu0 0.0
    %1067 = vmatprep.subr.mxu0 0.0
    %1068 = vmatpush1.msra.mxu0 0.0
    %1069 = vmatprep.subr.mxu0 0.0
    %1070 = vmatpush1.msra.mxu0 0.0
    %1071 = vmatprep.subr.mxu0 0.0
    %1072 = vmatpush1.msra.mxu0 0.0
    %1073 = vmatprep.subr.mxu0 0.0
    %1074 = vmatpush1.msra.mxu0 0.0
    %1075 = vmatprep.mubr.f32.mxu0 0.0
    %1076 = vmatmul.mubr.f32.gmra.mrb[0].mxu0 %v893
    %v1077 = vpop.f32.mrb[0].mxu0
    %v1078 = vadd.f32 0.0, %v1077
    %v1079 = vpop.f32.mrb[0].mxu0
    %v1080 = vadd.f32 0.0, %v1079
    %1081 = vmatprep.mubr.f32.mxu0 0.0
    %1082 = vmatmul.mubr.f32.gmra.mrb[0].mxu0 %v896
    %v1083 = vpop.f32.mrb[0].mxu0
    %v1084 = vadd.f32 0.0, %v1083
    %v1085 = vpop.f32.mrb[0].mxu0
    %v1086 = vadd.f32 0.0, %v1085
    %1087 = vmatprep.mubr.f32.mxu0 0.0
    %1088 = vmatmul.mubr.f32.gmra.mrb[0].mxu0 %v899
    %v1089 = vpop.f32.mrb[0].mxu0
    %v1090 = vadd.f32 0.0, %v1089
    %v1091 = vpop.f32.mrb[0].mxu0
    %v1092 = vadd.f32 0.0, %v1091
    %1093 = vmatprep.mubr.f32.mxu0 0.0
    %1094 = vmatmul.mubr.f32.gmra.mrb[0].mxu0 %v902
    %v1095 = vpop.f32.mrb[0].mxu0
    %v1096 = vadd.f32 0.0, %v1095
    %v1097 = vpop.f32.mrb[0].mxu0
    %v1098 = vadd.f32 0.0, %v1097
    %1099 = vmatprep.mubr.f32.mxu0 0.0
    %1100 = vmatmul.mubr.f32.gmra.mrb[0].mxu0 %v905
    %v1101 = vpop.f32.mrb[0].mxu0
    %v1102 = vadd.f32 0.0, %v1101
    %v1103 = vpop.f32.mrb[0].mxu0
    %v1104 = vadd.f32 0.0, %v1103
    %1105 = vmatprep.mubr.f32.mxu0 0.0
    %1106 = vmatmul.mubr.f32.gmra.mrb[0].mxu0 %v908
    %v1107 = vpop.f32.mrb[0].mxu0
    %v1108 = vadd.f32 0.0, %v1107
    %v1109 = vpop.f32.mrb[0].mxu0
    %v1110 = vadd.f32 0.0, %v1109
    %1111 = vdwg.mxu0
    %1112 = vmatprep.subr.mxu0 %v873
    %1113 = vmatpush1.msra.mxu0 %v872
    %1114 = vmatprep.subr.mxu0 %v879
    %1115 = vmatpush1.msra.mxu0 %v878
    %1116 = vmatprep.subr.mxu0 %v885
    %1117 = vmatpush1.msra.mxu0 %v884
    %1118 = vmatprep.subr.mxu0 %v891
    %1119 = vmatpush1.msra.mxu0 %v890
    %1120 = vmatprep.subr.mxu0 0.0
    %1121 = vmatpush1.msra.mxu0 0.0
    %1122 = vmatprep.subr.mxu0 0.0
    %1123 = vmatpush1.msra.mxu0 0.0
    %1124 = vmatprep.subr.mxu0 0.0
    %1125 = vmatpush1.msra.mxu0 0.0
    %1126 = vmatprep.subr.mxu0 0.0
    %1127 = vmatpush1.msra.mxu0 0.0
    %1128 = vmatprep.subr.mxu0 0.0
    %1129 = vmatpush1.msra.mxu0 0.0
    %1130 = vmatprep.subr.mxu0 0.0
    %1131 = vmatpush1.msra.mxu0 0.0
    %1132 = vmatprep.subr.mxu0 0.0
    %1133 = vmatpush1.msra.mxu0 0.0
    %1134 = vmatprep.subr.mxu0 0.0
    %1135 = vmatpush1.msra.mxu0 0.0
    %1136 = vmatprep.subr.mxu0 0.0
    %1137 = vmatpush1.msra.mxu0 0.0
    %1138 = vmatprep.subr.mxu0 0.0
    %1139 = vmatpush1.msra.mxu0 0.0
    %1140 = vmatprep.subr.mxu0 0.0
    %1141 = vmatpush1.msra.mxu0 0.0
    %1142 = vmatprep.subr.mxu0 0.0
    %1143 = vmatpush1.msra.mxu0 0.0
    %1144 = vmatprep.subr.mxu0 0.0
    %1145 = vmatpush1.msra.mxu0 0.0
    %1146 = vmatprep.subr.mxu0 0.0
    %1147 = vmatpush1.msra.mxu0 0.0
    %1148 = vmatprep.subr.mxu0 0.0
    %1149 = vmatpush1.msra.mxu0 0.0
    %1150 = vmatprep.subr.mxu0 0.0
    %1151 = vmatpush1.msra.mxu0 0.0
    %1152 = vmatprep.subr.mxu0 0.0
    %1153 = vmatpush1.msra.mxu0 0.0
    %1154 = vmatprep.subr.mxu0 0.0
    %1155 = vmatpush1.msra.mxu0 0.0
    %1156 = vmatprep.subr.mxu0 0.0
    %1157 = vmatpush1.msra.mxu0 0.0
    %1158 = vmatprep.subr.mxu0 0.0
    %1159 = vmatpush1.msra.mxu0 0.0
    %1160 = vmatprep.subr.mxu0 0.0
    %1161 = vmatpush1.msra.mxu0 0.0
    %1162 = vmatprep.subr.mxu0 0.0
    %1163 = vmatpush1.msra.mxu0 0.0
    %1164 = vmatprep.subr.mxu0 0.0
    %1165 = vmatpush1.msra.mxu0 0.0
    %1166 = vmatprep.subr.mxu0 0.0
    %1167 = vmatpush1.msra.mxu0 0.0
    %1168 = vmatprep.subr.mxu0 0.0
    %1169 = vmatpush1.msra.mxu0 0.0
    %1170 = vmatprep.subr.mxu0 0.0
    %1171 = vmatpush1.msra.mxu0 0.0
    %1172 = vmatprep.subr.mxu0 0.0
    %1173 = vmatpush1.msra.mxu0 0.0
    %1174 = vmatprep.subr.mxu0 0.0
    %1175 = vmatpush1.msra.mxu0 0.0
    %1176 = vmatprep.mubr.f32.mxu0 0.0
    %1177 = vmatmul.mubr.f32.gmra.mrb[0].mxu0 %v893
    %v1178 = vpop.f32.mrb[0].mxu0
    %v1179 = vadd.f32 0.0, %v1178
    %v1180 = vpop.f32.mrb[0].mxu0
    %v1181 = vadd.f32 0.0, %v1180
    %1182 = vmatprep.mubr.f32.mxu0 0.0
    %1183 = vmatmul.mubr.f32.gmra.mrb[0].mxu0 %v896
    %v1184 = vpop.f32.mrb[0].mxu0
    %v1185 = vadd.f32 0.0, %v1184
    %v1186 = vpop.f32.mrb[0].mxu0
    %v1187 = vadd.f32 0.0, %v1186
    %1188 = vmatprep.mubr.f32.mxu0 0.0
    %1189 = vmatmul.mubr.f32.gmra.mrb[0].mxu0 %v899
    %v1190 = vpop.f32.mrb[0].mxu0
    %v1191 = vadd.f32 0.0, %v1190
    %v1192 = vpop.f32.mrb[0].mxu0
    %v1193 = vadd.f32 0.0, %v1192
    %1194 = vmatprep.mubr.f32.mxu0 0.0
    %1195 = vmatmul.mubr.f32.gmra.mrb[0].mxu0 %v902
    %v1196 = vpop.f32.mrb[0].mxu0
    %v1197 = vadd.f32 0.0, %v1196
    %v1198 = vpop.f32.mrb[0].mxu0
    %v1199 = vadd.f32 0.0, %v1198
    %1200 = vmatprep.mubr.f32.mxu0 0.0
    %1201 = vmatmul.mubr.f32.gmra.mrb[0].mxu0 %v905
    %v1202 = vpop.f32.mrb[0].mxu0
    %v1203 = vadd.f32 0.0, %v1202
    %v1204 = vpop.f32.mrb[0].mxu0
    %v1205 = vadd.f32 0.0, %v1204
    %1206 = vmatprep.mubr.f32.mxu0 0.0
    %1207 = vmatmul.mubr.f32.gmra.mrb[0].mxu0 %v908
    %v1208 = vpop.f32.mrb[0].mxu0
    %v1209 = vadd.f32 0.0, %v1208
    %v1210 = vpop.f32.mrb[0].mxu0
    %v1211 = vadd.f32 0.0, %v1210
    %1212 = vdwg.mxu0
    %v1214 = vsel %vm452, %v977, 0
    %v1217 = vsel %vm452, %v983, 0
    %v1220 = vsel %vm452, %v989, 0
    %v1223 = vsel %vm452, %v1078, 0
    %v1226 = vsel %vm452, %v1084, 0
    %v1229 = vsel %vm452, %v1090, 0
    %1231 = vmatprep.subr.mxu0 0.0
    %1232 = vmatpush1.xpose.msra.mxu0 %v1223
    %1233 = vmatprep.subr.mxu0 0.0
    %1234 = vmatpush1.xpose.msra.mxu0 %v1226
    %1235 = vmatprep.subr.mxu0 0.0
    %1236 = vmatpush1.xpose.msra.mxu0 %v1229
    %1237 = vmatprep.subr.mxu0 0.0
    %1238 = vmatpush1.xpose.msra.mxu0 0.0
    %1239 = vmatprep.subr.mxu0 0.0
    %1240 = vmatpush1.xpose.msra.mxu0 0.0
    %1241 = vmatprep.subr.mxu0 0.0
    %1242 = vmatpush1.xpose.msra.mxu0 0.0
    %1243 = vmatprep.subr.mxu0 0.0
    %1244 = vmatpush1.xpose.msra.mxu0 0.0
    %1245 = vmatprep.subr.mxu0 0.0
    %1246 = vmatpush1.xpose.msra.mxu0 0.0
    %1247 = vmatprep.subr.mxu0 0.0
    %1248 = vmatpush1.xpose.msra.mxu0 0.0
    %1249 = vmatprep.subr.mxu0 0.0
    %1250 = vmatpush1.xpose.msra.mxu0 0.0
    %1251 = vmatprep.subr.mxu0 0.0
    %1252 = vmatpush1.xpose.msra.mxu0 0.0
    %1253 = vmatprep.subr.mxu0 0.0
    %1254 = vmatpush1.xpose.msra.mxu0 0.0
    %1255 = vmatprep.subr.mxu0 0.0
    %1256 = vmatpush1.xpose.msra.mxu0 0.0
    %1257 = vmatprep.subr.mxu0 0.0
    %1258 = vmatpush1.xpose.msra.mxu0 0.0
    %1259 = vmatprep.subr.mxu0 0.0
    %1260 = vmatpush1.xpose.msra.mxu0 0.0
    %1261 = vmatprep.subr.mxu0 0.0
    %1262 = vmatpush1.xpose.msra.mxu0 0.0
    %1263 = vmatprep.subr.mxu0 0.0
    %1264 = vmatpush1.xpose.msra.mxu0 0.0
    %1265 = vmatprep.subr.mxu0 0.0
    %1266 = vmatpush1.xpose.msra.mxu0 0.0
    %1267 = vmatprep.subr.mxu0 0.0
    %1268 = vmatpush1.xpose.msra.mxu0 0.0
    %1269 = vmatprep.subr.mxu0 0.0
    %1270 = vmatpush1.xpose.msra.mxu0 0.0
    %1271 = vmatprep.subr.mxu0 0.0
    %1272 = vmatpush1.xpose.msra.mxu0 0.0
    %1273 = vmatprep.subr.mxu0 0.0
    %1274 = vmatpush1.xpose.msra.mxu0 0.0
    %1275 = vmatprep.subr.mxu0 0.0
    %1276 = vmatpush1.xpose.msra.mxu0 0.0
    %1277 = vmatprep.subr.mxu0 0.0
    %1278 = vmatpush1.xpose.msra.mxu0 0.0
    %1279 = vmatprep.subr.mxu0 0.0
    %1280 = vmatpush1.xpose.msra.mxu0 0.0
    %1281 = vmatprep.subr.mxu0 0.0
    %1282 = vmatpush1.xpose.msra.mxu0 0.0
    %1283 = vmatprep.subr.mxu0 0.0
    %1284 = vmatpush1.xpose.msra.mxu0 0.0
    %1285 = vmatprep.subr.mxu0 0.0
    %1286 = vmatpush1.xpose.msra.mxu0 0.0
    %1287 = vmatprep.subr.mxu0 0.0
    %1288 = vmatpush1.xpose.msra.mxu0 0.0
    %1289 = vmatprep.subr.mxu0 0.0
    %1290 = vmatpush1.xpose.msra.mxu0 0.0
    %1291 = vmatprep.subr.mxu0 0.0
    %1292 = vmatpush1.xpose.msra.mxu0 0.0
    %1293 = vmatprep.subr.mxu0 0.0
    %1294 = vmatpush1.xpose.msra.mxu0 0.0
    %1295 = vmatprep.mubr.f32.mxu0 0.0
    %1296 = vmatmul.mubr.f32.gmra.mrb[0].mxu0 %v1214
    %v1297 = vpop.f32.mrb[0].mxu0
    %v1298 = vadd.f32 %v865, %v1297
    %v1299 = vpop.f32.mrb[0].mxu0
    %1300 = vmatprep.mubr.f32.mxu0 0.0
    %1301 = vmatmul.mubr.f32.gmra.mrb[0].mxu0 %v1217
    %v1302 = vpop.f32.mrb[0].mxu0
    %v1303 = vadd.f32 %v866, %v1302
    %v1304 = vpop.f32.mrb[0].mxu0
    %1305 = vmatprep.mubr.f32.mxu0 0.0
    %1306 = vmatmul.mubr.f32.gmra.mrb[0].mxu0 %v1220
    %v1307 = vpop.f32.mrb[0].mxu0
    %v1308 = vadd.f32 %v867, %v1307
    %v1309 = vpop.f32.mrb[0].mxu0
    %1310 = vdwg.mxu0
    %v1312 = vsel %vm452, %v995, 0
    %v1315 = vsel %vm452, %v1001, 0
    %v1318 = vsel %vm452, %v1007, 0
    %v1321 = vsel %vm452, %v1096, 0
    %v1324 = vsel %vm452, %v1102, 0
    %v1327 = vsel %vm452, %v1108, 0
    %1329 = vmatprep.subr.mxu0 0.0
    %1330 = vmatpush1.xpose.msra.mxu0 %v1321
    %1331 = vmatprep.subr.mxu0 0.0
    %1332 = vmatpush1.xpose.msra.mxu0 %v1324
    %1333 = vmatprep.subr.mxu0 0.0
    %1334 = vmatpush1.xpose.msra.mxu0 %v1327
    %1335 = vmatprep.subr.mxu0 0.0
    %1336 = vmatpush1.xpose.msra.mxu0 0.0
    %1337 = vmatprep.subr.mxu0 0.0
    %1338 = vmatpush1.xpose.msra.mxu0 0.0
    %1339 = vmatprep.subr.mxu0 0.0
    %1340 = vmatpush1.xpose.msra.mxu0 0.0
    %1341 = vmatprep.subr.mxu0 0.0
    %1342 = vmatpush1.xpose.msra.mxu0 0.0
    %1343 = vmatprep.subr.mxu0 0.0
    %1344 = vmatpush1.xpose.msra.mxu0 0.0
    %1345 = vmatprep.subr.mxu0 0.0
    %1346 = vmatpush1.xpose.msra.mxu0 0.0
    %1347 = vmatprep.subr.mxu0 0.0
    %1348 = vmatpush1.xpose.msra.mxu0 0.0
    %1349 = vmatprep.subr.mxu0 0.0
    %1350 = vmatpush1.xpose.msra.mxu0 0.0
    %1351 = vmatprep.subr.mxu0 0.0
    %1352 = vmatpush1.xpose.msra.mxu0 0.0
    %1353 = vmatprep.subr.mxu0 0.0
    %1354 = vmatpush1.xpose.msra.mxu0 0.0
    %1355 = vmatprep.subr.mxu0 0.0
    %1356 = vmatpush1.xpose.msra.mxu0 0.0
    %1357 = vmatprep.subr.mxu0 0.0
    %1358 = vmatpush1.xpose.msra.mxu0 0.0
    %1359 = vmatprep.subr.mxu0 0.0
    %1360 = vmatpush1.xpose.msra.mxu0 0.0
    %1361 = vmatprep.subr.mxu0 0.0
    %1362 = vmatpush1.xpose.msra.mxu0 0.0
    %1363 = vmatprep.subr.mxu0 0.0
    %1364 = vmatpush1.xpose.msra.mxu0 0.0
    %1365 = vmatprep.subr.mxu0 0.0
    %1366 = vmatpush1.xpose.msra.mxu0 0.0
    %1367 = vmatprep.subr.mxu0 0.0
    %1368 = vmatpush1.xpose.msra.mxu0 0.0
    %1369 = vmatprep.subr.mxu0 0.0
    %1370 = vmatpush1.xpose.msra.mxu0 0.0
    %1371 = vmatprep.subr.mxu0 0.0
    %1372 = vmatpush1.xpose.msra.mxu0 0.0
    %1373 = vmatprep.subr.mxu0 0.0
    %1374 = vmatpush1.xpose.msra.mxu0 0.0
    %1375 = vmatprep.subr.mxu0 0.0
    %1376 = vmatpush1.xpose.msra.mxu0 0.0
    %1377 = vmatprep.subr.mxu0 0.0
    %1378 = vmatpush1.xpose.msra.mxu0 0.0
    %1379 = vmatprep.subr.mxu0 0.0
    %1380 = vmatpush1.xpose.msra.mxu0 0.0
    %1381 = vmatprep.subr.mxu0 0.0
    %1382 = vmatpush1.xpose.msra.mxu0 0.0
    %1383 = vmatprep.subr.mxu0 0.0
    %1384 = vmatpush1.xpose.msra.mxu0 0.0
    %1385 = vmatprep.subr.mxu0 0.0
    %1386 = vmatpush1.xpose.msra.mxu0 0.0
    %1387 = vmatprep.subr.mxu0 0.0
    %1388 = vmatpush1.xpose.msra.mxu0 0.0
    %1389 = vmatprep.subr.mxu0 0.0
    %1390 = vmatpush1.xpose.msra.mxu0 0.0
    %1391 = vmatprep.subr.mxu0 0.0
    %1392 = vmatpush1.xpose.msra.mxu0 0.0
    %1393 = vmatprep.mubr.f32.mxu0 0.0
    %1394 = vmatmul.mubr.f32.gmra.mrb[0].mxu0 %v1312
    %v1395 = vpop.f32.mrb[0].mxu0
    %v1396 = vadd.f32 %v865, %v1395
    %v1397 = vpop.f32.mrb[0].mxu0
    %1398 = vmatprep.mubr.f32.mxu0 0.0
    %1399 = vmatmul.mubr.f32.gmra.mrb[0].mxu0 %v1315
    %v1400 = vpop.f32.mrb[0].mxu0
    %v1401 = vadd.f32 %v866, %v1400
    %v1402 = vpop.f32.mrb[0].mxu0
    %1403 = vmatprep.mubr.f32.mxu0 0.0
    %1404 = vmatmul.mubr.f32.gmra.mrb[0].mxu0 %v1318
    %v1405 = vpop.f32.mrb[0].mxu0
    %v1406 = vadd.f32 %v867, %v1405
    %v1407 = vpop.f32.mrb[0].mxu0
    %1408 = vdwg.mxu0
    %vm1409 = vcmask 195584
    %v1410 = vsel %vm1409, %v1298, -inf
    %1411 = vmax.xlane.f32.xlu0 %v1410
    %v1412 = vpop.xlane.xlu0 %1411
    %v1413 = vsel %vm1409, %v1303, -inf
    %1414 = vmax.xlane.f32.xlu0 %v1413
    %v1415 = vpop.xlane.xlu0 %1414
    %v1416 = vsel %vm1409, %v1308, -inf
    %1417 = vmax.xlane.f32.xlu0 %v1416
    %v1418 = vpop.xlane.xlu0 %1417
    %v1419 = vsel %vm1409, %v1396, -inf
    %1420 = vmax.xlane.f32.xlu0 %v1419
    %v1421 = vpop.xlane.xlu0 %1420
    %v1422 = vsel %vm1409, %v1401, -inf
    %1423 = vmax.xlane.f32.xlu0 %v1422
    %v1424 = vpop.xlane.xlu0 %1423
    %v1425 = vsel %vm1409, %v1406, -inf
    %1426 = vmax.xlane.f32.xlu0 %v1425
    %v1427 = vpop.xlane.xlu0 %1426
    %v1428 = vsub.f32 %v1298, %v1412
    %v1429 = vsub.f32 %v1303, %v1415
    %v1430 = vsub.f32 %v1308, %v1418
    %v1431 = vsub.f32 %v1396, %v1421
    %v1432 = vsub.f32 %v1401, %v1424
    %v1433 = vsub.f32 %v1406, %v1427
    %v1434 = vmul.f32 %v1428, 1.442695
    %v1435 = vpow.pop %v1434
    %v1436 = vmul.f32 %v1429, 1.442695
    %v1437 = vpow.pop %v1436
    %v1438 = vmul.f32 %v1430, 1.442695
    %v1439 = vpow.pop %v1438
    %v1440 = vmul.f32 %v1431, 1.442695
    %v1441 = vpow.pop %v1440
    %v1442 = vmul.f32 %v1432, 1.442695
    %v1443 = vpow.pop %v1442
    %v1444 = vmul.f32 %v1433, 1.442695
    %v1445 = vpow.pop %v1444
    %v1446 = vsel %vm1409, %v1435, 0.0
    %1447 = vadd.xlane.f32.xlu0 %v1446
    %v1448 = vpop.xlane.xlu0 %1447
    %v1449 = vsel %vm1409, %v1437, 0.0
    %1450 = vadd.xlane.f32.xlu0 %v1449
    %v1451 = vpop.xlane.xlu0 %1450
    %v1452 = vsel %vm1409, %v1439, 0.0
    %1453 = vadd.xlane.f32.xlu0 %v1452
    %v1454 = vpop.xlane.xlu0 %1453
    %v1455 = vsel %vm1409, %v1441, 0.0
    %1456 = vadd.xlane.f32.xlu0 %v1455
    %v1457 = vpop.xlane.xlu0 %1456
    %v1458 = vsel %vm1409, %v1443, 0.0
    %1459 = vadd.xlane.f32.xlu0 %v1458
    %v1460 = vpop.xlane.xlu0 %1459
    %v1461 = vsel %vm1409, %v1445, 0.0
    %1462 = vadd.xlane.f32.xlu0 %v1461
    %v1463 = vpop.xlane.xlu0 %1462
    %v1464 = vrcp.pop %v1448
    %v1465 = vmul.f32 %v1435, %v1464
    %v1466 = vrcp.pop %v1451
    %v1467 = vmul.f32 %v1437, %v1466
    %v1468 = vrcp.pop %v1454
    %v1469 = vmul.f32 %v1439, %v1468
    %v1470 = vrcp.pop %v1457
    %v1471 = vmul.f32 %v1441, %v1470
    %v1472 = vrcp.pop %v1460
    %v1473 = vmul.f32 %v1443, %v1472
    %v1474 = vrcp.pop %v1463
    %v1475 = vmul.f32 %v1445, %v1474
    %v1477 = vsel %vm1409, %v1465, 0
    %v1480 = vsel %vm1409, %v1467, 0
    %v1483 = vsel %vm1409, %v1469, 0
    %1485 = vmatprep.subr.mxu0 0.0
    %1486 = vmatpush1.msra.mxu0 %v1179
    %1487 = vmatprep.subr.mxu0 0.0
    %1488 = vmatpush1.msra.mxu0 %v1185
    %1489 = vmatprep.subr.mxu0 0.0
    %1490 = vmatpush1.msra.mxu0 %v1191
    %1491 = vmatprep.subr.mxu0 0.0
    %1492 = vmatpush1.msra.mxu0 0.0
    %1493 = vmatprep.subr.mxu0 0.0
    %1494 = vmatpush1.msra.mxu0 0.0
    %1495 = vmatprep.subr.mxu0 0.0
    %1496 = vmatpush1.msra.mxu0 0.0
    %1497 = vmatprep.subr.mxu0 0.0
    %1498 = vmatpush1.msra.mxu0 0.0
    %1499 = vmatprep.subr.mxu0 0.0
    %1500 = vmatpush1.msra.mxu0 0.0
    %1501 = vmatprep.subr.mxu0 0.0
    %1502 = vmatpush1.msra.mxu0 0.0
    %1503 = vmatprep.subr.mxu0 0.0
    %1504 = vmatpush1.msra.mxu0 0.0
    %1505 = vmatprep.subr.mxu0 0.0
    %1506 = vmatpush1.msra.mxu0 0.0
    %1507 = vmatprep.subr.mxu0 0.0
    %1508 = vmatpush1.msra.mxu0 0.0
    %1509 = vmatprep.subr.mxu0 0.0
    %1510 = vmatpush1.msra.mxu0 0.0
    %1511 = vmatprep.subr.mxu0 0.0
    %1512 = vmatpush1.msra.mxu0 0.0
    %1513 = vmatprep.subr.mxu0 0.0
    %1514 = vmatpush1.msra.mxu0 0.0
    %1515 = vmatprep.subr.mxu0 0.0
    %1516 = vmatpush1.msra.mxu0 0.0
    %1517 = vmatprep.subr.mxu0 0.0
    %1518 = vmatpush1.msra.mxu0 0.0
    %1519 = vmatprep.subr.mxu0 0.0
    %1520 = vmatpush1.msra.mxu0 0.0
    %1521 = vmatprep.subr.mxu0 0.0
    %1522 = vmatpush1.msra.mxu0 0.0
    %1523 = vmatprep.subr.mxu0 0.0
    %1524 = vmatpush1.msra.mxu0 0.0
    %1525 = vmatprep.subr.mxu0 0.0
    %1526 = vmatpush1.msra.mxu0 0.0
    %1527 = vmatprep.subr.mxu0 0.0
    %1528 = vmatpush1.msra.mxu0 0.0
    %1529 = vmatprep.subr.mxu0 0.0
    %1530 = vmatpush1.msra.mxu0 0.0
    %1531 = vmatprep.subr.mxu0 0.0
    %1532 = vmatpush1.msra.mxu0 0.0
    %1533 = vmatprep.subr.mxu0 0.0
    %1534 = vmatpush1.msra.mxu0 0.0
    %1535 = vmatprep.subr.mxu0 0.0
    %1536 = vmatpush1.msra.mxu0 0.0
    %1537 = vmatprep.subr.mxu0 0.0
    %1538 = vmatpush1.msra.mxu0 0.0
    %1539 = vmatprep.subr.mxu0 0.0
    %1540 = vmatpush1.msra.mxu0 0.0
    %1541 = vmatprep.subr.mxu0 0.0
    %1542 = vmatpush1.msra.mxu0 0.0
    %1543 = vmatprep.subr.mxu0 0.0
    %1544 = vmatpush1.msra.mxu0 0.0
    %1545 = vmatprep.subr.mxu0 0.0
    %1546 = vmatpush1.msra.mxu0 0.0
    %1547 = vmatprep.subr.mxu0 0.0
    %1548 = vmatpush1.msra.mxu0 0.0
    %1549 = vmatprep.mubr.f32.mxu0 0.0
    %1550 = vmatmul.mubr.f32.gmra.mrb[0].mxu0 %v1477
    %v1551 = vpop.f32.mrb[0].mxu0
    %v1552 = vadd.f32 0.0, %v1551
    %v1553 = vpop.f32.mrb[0].mxu0
    %1554 = vmatprep.mubr.f32.mxu0 0.0
    %1555 = vmatmul.mubr.f32.gmra.mrb[0].mxu0 %v1480
    %v1556 = vpop.f32.mrb[0].mxu0
    %v1557 = vadd.f32 0.0, %v1556
    %v1558 = vpop.f32.mrb[0].mxu0
    %1559 = vmatprep.mubr.f32.mxu0 0.0
    %1560 = vmatmul.mubr.f32.gmra.mrb[0].mxu0 %v1483
    %v1561 = vpop.f32.mrb[0].mxu0
    %v1562 = vadd.f32 0.0, %v1561
    %v1563 = vpop.f32.mrb[0].mxu0
    %1564 = vdwg.mxu0
    %v1566 = vsel %vm1409, %v1471, 0
    %v1569 = vsel %vm1409, %v1473, 0
    %v1572 = vsel %vm1409, %v1475, 0
    %1574 = vmatprep.subr.mxu0 0.0
    %1575 = vmatpush1.msra.mxu0 %v1197
    %1576 = vmatprep.subr.mxu0 0.0
    %1577 = vmatpush1.msra.mxu0 %v1203
    %1578 = vmatprep.subr.mxu0 0.0
    %1579 = vmatpush1.msra.mxu0 %v1209
    %1580 = vmatprep.subr.mxu0 0.0
    %1581 = vmatpush1.msra.mxu0 0.0
    %1582 = vmatprep.subr.mxu0 0.0
    %1583 = vmatpush1.msra.mxu0 0.0
    %1584 = vmatprep.subr.mxu0 0.0
    %1585 = vmatpush1.msra.mxu0 0.0
    %1586 = vmatprep.subr.mxu0 0.0
    %1587 = vmatpush1.msra.mxu0 0.0
    %1588 = vmatprep.subr.mxu0 0.0
    %1589 = vmatpush1.msra.mxu0 0.0
    %1590 = vmatprep.subr.mxu0 0.0
    %1591 = vmatpush1.msra.mxu0 0.0
    %1592 = vmatprep.subr.mxu0 0.0
    %1593 = vmatpush1.msra.mxu0 0.0
    %1594 = vmatprep.subr.mxu0 0.0
    %1595 = vmatpush1.msra.mxu0 0.0
    %1596 = vmatprep.subr.mxu0 0.0
    %1597 = vmatpush1.msra.mxu0 0.0
    %1598 = vmatprep.subr.mxu0 0.0
    %1599 = vmatpush1.msra.mxu0 0.0
    %1600 = vmatprep.subr.mxu0 0.0
    %1601 = vmatpush1.msra.mxu0 0.0
    %1602 = vmatprep.subr.mxu0 0.0
    %1603 = vmatpush1.msra.mxu0 0.0
    %1604 = vmatprep.subr.mxu0 0.0
    %1605 = vmatpush1.msra.mxu0 0.0
    %1606 = vmatprep.subr.mxu0 0.0
    %1607 = vmatpush1.msra.mxu0 0.0
    %1608 = vmatprep.subr.mxu0 0.0
    %1609 = vmatpush1.msra.mxu0 0.0
    %1610 = vmatprep.subr.mxu0 0.0
    %1611 = vmatpush1.msra.mxu0 0.0
    %1612 = vmatprep.subr.mxu0 0.0
    %1613 = vmatpush1.msra.mxu0 0.0
    %1614 = vmatprep.subr.mxu0 0.0
    %1615 = vmatpush1.msra.mxu0 0.0
    %1616 = vmatprep.subr.mxu0 0.0
    %1617 = vmatpush1.msra.mxu0 0.0
    %1618 = vmatprep.subr.mxu0 0.0
    %1619 = vmatpush1.msra.mxu0 0.0
    %1620 = vmatprep.subr.mxu0 0.0
    %1621 = vmatpush1.msra.mxu0 0.0
    %1622 = vmatprep.subr.mxu0 0.0
    %1623 = vmatpush1.msra.mxu0 0.0
    %1624 = vmatprep.subr.mxu0 0.0
    %1625 = vmatpush1.msra.mxu0 0.0
    %1626 = vmatprep.subr.mxu0 0.0
    %1627 = vmatpush1.msra.mxu0 0.0
    %1628 = vmatprep.subr.mxu0 0.0
    %1629 = vmatpush1.msra.mxu0 0.0
    %1630 = vmatprep.subr.mxu0 0.0
    %1631 = vmatpush1.msra.mxu0 0.0
    %1632 = vmatprep.subr.mxu0 0.0
    %1633 = vmatpush1.msra.mxu0 0.0
    %1634 = vmatprep.subr.mxu0 0.0
    %1635 = vmatpush1.msra.mxu0 0.0
    %1636 = vmatprep.subr.mxu0 0.0
    %1637 = vmatpush1.msra.mxu0 0.0
    %1638 = vmatprep.mubr.f32.mxu0 0.0
    %1639 = vmatmul.mubr.f32.gmra.mrb[0].mxu0 %v1566
    %v1640 = vpop.f32.mrb[0].mxu0
    %v1641 = vadd.f32 0.0, %v1640
    %v1642 = vpop.f32.mrb[0].mxu0
    %1643 = vmatprep.mubr.f32.mxu0 0.0
    %1644 = vmatmul.mubr.f32.gmra.mrb[0].mxu0 %v1569
    %v1645 = vpop.f32.mrb[0].mxu0
    %v1646 = vadd.f32 0.0, %v1645
    %v1647 = vpop.f32.mrb[0].mxu0
    %1648 = vmatprep.mubr.f32.mxu0 0.0
    %1649 = vmatmul.mubr.f32.gmra.mrb[0].mxu0 %v1572
    %v1650 = vpop.f32.mrb[0].mxu0
    %v1651 = vadd.f32 0.0, %v1650
    %v1652 = vpop.f32.mrb[0].mxu0
    %1653 = vdwg.mxu0
    %1654 = vrot.lane.b32.xlu0 %v977, 64
    %v1655 = vpop.permute.xlu0 %1654
    %1656 = vrot.lane.b32.xlu0 %v983, 64
    %v1657 = vpop.permute.xlu0 %1656
    %1658 = vrot.lane.b32.xlu0 %v989, 64
    %v1659 = vpop.permute.xlu0 %1658
    %1660 = vrot.lane.b32.xlu0 %v1078, 64
    %v1661 = vpop.permute.xlu0 %1660
    %1662 = vrot.lane.b32.xlu0 %v1084, 64
    %v1663 = vpop.permute.xlu0 %1662
    %1664 = vrot.lane.b32.xlu0 %v1090, 64
    %v1665 = vpop.permute.xlu0 %1664
    %v1666 = vsel %vm452, %v1655, 0
    %v1668 = vsel %vm452, %v1657, 0
    %v1670 = vsel %vm452, %v1659, 0
    %v1672 = vsel %vm452, %v1661, 0
    %v1674 = vsel %vm452, %v1663, 0
    %v1676 = vsel %vm452, %v1665, 0
    %1678 = vmatprep.subr.mxu0 0.0
    %1679 = vmatpush1.xpose.msra.mxu0 %v1672
    %1680 = vmatprep.subr.mxu0 0.0
    %1681 = vmatpush1.xpose.msra.mxu0 %v1674
    %1682 = vmatprep.subr.mxu0 0.0
    %1683 = vmatpush1.xpose.msra.mxu0 %v1676
    %1684 = vmatprep.subr.mxu0 0.0
    %1685 = vmatpush1.xpose.msra.mxu0 0.0
    %1686 = vmatprep.subr.mxu0 0.0
    %1687 = vmatpush1.xpose.msra.mxu0 0.0
    %1688 = vmatprep.subr.mxu0 0.0
    %1689 = vmatpush1.xpose.msra.mxu0 0.0
    %1690 = vmatprep.subr.mxu0 0.0
    %1691 = vmatpush1.xpose.msra.mxu0 0.0
    %1692 = vmatprep.subr.mxu0 0.0
    %1693 = vmatpush1.xpose.msra.mxu0 0.0
    %1694 = vmatprep.subr.mxu0 0.0
    %1695 = vmatpush1.xpose.msra.mxu0 0.0
    %1696 = vmatprep.subr.mxu0 0.0
    %1697 = vmatpush1.xpose.msra.mxu0 0.0
    %1698 = vmatprep.subr.mxu0 0.0
    %1699 = vmatpush1.xpose.msra.mxu0 0.0
    %1700 = vmatprep.subr.mxu0 0.0
    %1701 = vmatpush1.xpose.msra.mxu0 0.0
    %1702 = vmatprep.subr.mxu0 0.0
    %1703 = vmatpush1.xpose.msra.mxu0 0.0
    %1704 = vmatprep.subr.mxu0 0.0
    %1705 = vmatpush1.xpose.msra.mxu0 0.0
    %1706 = vmatprep.subr.mxu0 0.0
    %1707 = vmatpush1.xpose.msra.mxu0 0.0
    %1708 = vmatprep.subr.mxu0 0.0
    %1709 = vmatpush1.xpose.msra.mxu0 0.0
    %1710 = vmatprep.subr.mxu0 0.0
    %1711 = vmatpush1.xpose.msra.mxu0 0.0
    %1712 = vmatprep.subr.mxu0 0.0
    %1713 = vmatpush1.xpose.msra.mxu0 0.0
    %1714 = vmatprep.subr.mxu0 0.0
    %1715 = vmatpush1.xpose.msra.mxu0 0.0
    %1716 = vmatprep.subr.mxu0 0.0
    %1717 = vmatpush1.xpose.msra.mxu0 0.0
    %1718 = vmatprep.subr.mxu0 0.0
    %1719 = vmatpush1.xpose.msra.mxu0 0.0
    %1720 = vmatprep.subr.mxu0 0.0
    %1721 = vmatpush1.xpose.msra.mxu0 0.0
    %1722 = vmatprep.subr.mxu0 0.0
    %1723 = vmatpush1.xpose.msra.mxu0 0.0
    %1724 = vmatprep.subr.mxu0 0.0
    %1725 = vmatpush1.xpose.msra.mxu0 0.0
    %1726 = vmatprep.subr.mxu0 0.0
    %1727 = vmatpush1.xpose.msra.mxu0 0.0
    %1728 = vmatprep.subr.mxu0 0.0
    %1729 = vmatpush1.xpose.msra.mxu0 0.0
    %1730 = vmatprep.subr.mxu0 0.0
    %1731 = vmatpush1.xpose.msra.mxu0 0.0
    %1732 = vmatprep.subr.mxu0 0.0
    %1733 = vmatpush1.xpose.msra.mxu0 0.0
    %1734 = vmatprep.subr.mxu0 0.0
    %1735 = vmatpush1.xpose.msra.mxu0 0.0
    %1736 = vmatprep.subr.mxu0 0.0
    %1737 = vmatpush1.xpose.msra.mxu0 0.0
    %1738 = vmatprep.subr.mxu0 0.0
    %1739 = vmatpush1.xpose.msra.mxu0 0.0
    %1740 = vmatprep.subr.mxu0 0.0
    %1741 = vmatpush1.xpose.msra.mxu0 0.0
    %1742 = vmatprep.mubr.f32.mxu0 0.0
    %1743 = vmatmul.mubr.f32.gmra.mrb[0].mxu0 %v1666
    %v1744 = vpop.f32.mrb[0].mxu0
    %v1745 = vadd.f32 %v865, %v1744
    %v1746 = vpop.f32.mrb[0].mxu0
    %1747 = vmatprep.mubr.f32.mxu0 0.0
    %1748 = vmatmul.mubr.f32.gmra.mrb[0].mxu0 %v1668
    %v1749 = vpop.f32.mrb[0].mxu0
    %v1750 = vadd.f32 %v866, %v1749
    %v1751 = vpop.f32.mrb[0].mxu0
    %1752 = vmatprep.mubr.f32.mxu0 0.0
    %1753 = vmatmul.mubr.f32.gmra.mrb[0].mxu0 %v1670
    %v1754 = vpop.f32.mrb[0].mxu0
    %v1755 = vadd.f32 %v867, %v1754
    %v1756 = vpop.f32.mrb[0].mxu0
    %1757 = vdwg.mxu0
    %1758 = vrot.lane.b32.xlu0 %v995, 64
    %v1759 = vpop.permute.xlu0 %1758
    %1760 = vrot.lane.b32.xlu0 %v1001, 64
    %v1761 = vpop.permute.xlu0 %1760
    %1762 = vrot.lane.b32.xlu0 %v1007, 64
    %v1763 = vpop.permute.xlu0 %1762
    %1764 = vrot.lane.b32.xlu0 %v1096, 64
    %v1765 = vpop.permute.xlu0 %1764
    %1766 = vrot.lane.b32.xlu0 %v1102, 64
    %v1767 = vpop.permute.xlu0 %1766
    %1768 = vrot.lane.b32.xlu0 %v1108, 64
    %v1769 = vpop.permute.xlu0 %1768
    %v1770 = vsel %vm452, %v1759, 0
    %v1772 = vsel %vm452, %v1761, 0
    %v1774 = vsel %vm452, %v1763, 0
    %v1776 = vsel %vm452, %v1765, 0
    %v1778 = vsel %vm452, %v1767, 0
    %v1780 = vsel %vm452, %v1769, 0
    %1782 = vmatprep.subr.mxu0 0.0
    %1783 = vmatpush1.xpose.msra.mxu0 %v1776
    %1784 = vmatprep.subr.mxu0 0.0
    %1785 = vmatpush1.xpose.msra.mxu0 %v1778
    %1786 = vmatprep.subr.mxu0 0.0
    %1787 = vmatpush1.xpose.msra.mxu0 %v1780
    %1788 = vmatprep.subr.mxu0 0.0
    %1789 = vmatpush1.xpose.msra.mxu0 0.0
    %1790 = vmatprep.subr.mxu0 0.0
    %1791 = vmatpush1.xpose.msra.mxu0 0.0
    %1792 = vmatprep.subr.mxu0 0.0
    %1793 = vmatpush1.xpose.msra.mxu0 0.0
    %1794 = vmatprep.subr.mxu0 0.0
    %1795 = vmatpush1.xpose.msra.mxu0 0.0
    %1796 = vmatprep.subr.mxu0 0.0
    %1797 = vmatpush1.xpose.msra.mxu0 0.0
    %1798 = vmatprep.subr.mxu0 0.0
    %1799 = vmatpush1.xpose.msra.mxu0 0.0
    %1800 = vmatprep.subr.mxu0 0.0
    %1801 = vmatpush1.xpose.msra.mxu0 0.0
    %1802 = vmatprep.subr.mxu0 0.0
    %1803 = vmatpush1.xpose.msra.mxu0 0.0
    %1804 = vmatprep.subr.mxu0 0.0
    %1805 = vmatpush1.xpose.msra.mxu0 0.0
    %1806 = vmatprep.subr.mxu0 0.0
    %1807 = vmatpush1.xpose.msra.mxu0 0.0
    %1808 = vmatprep.subr.mxu0 0.0
    %1809 = vmatpush1.xpose.msra.mxu0 0.0
    %1810 = vmatprep.subr.mxu0 0.0
    %1811 = vmatpush1.xpose.msra.mxu0 0.0
    %1812 = vmatprep.subr.mxu0 0.0
    %1813 = vmatpush1.xpose.msra.mxu0 0.0
    %1814 = vmatprep.subr.mxu0 0.0
    %1815 = vmatpush1.xpose.msra.mxu0 0.0
    %1816 = vmatprep.subr.mxu0 0.0
    %1817 = vmatpush1.xpose.msra.mxu0 0.0
    %1818 = vmatprep.subr.mxu0 0.0
    %1819 = vmatpush1.xpose.msra.mxu0 0.0
    %1820 = vmatprep.subr.mxu0 0.0
    %1821 = vmatpush1.xpose.msra.mxu0 0.0
    %1822 = vmatprep.subr.mxu0 0.0
    %1823 = vmatpush1.xpose.msra.mxu0 0.0
    %1824 = vmatprep.subr.mxu0 0.0
    %1825 = vmatpush1.xpose.msra.mxu0 0.0
    %1826 = vmatprep.subr.mxu0 0.0
    %1827 = vmatpush1.xpose.msra.mxu0 0.0
    %1828 = vmatprep.subr.mxu0 0.0
    %1829 = vmatpush1.xpose.msra.mxu0 0.0
    %1830 = vmatprep.subr.mxu0 0.0
    %1831 = vmatpush1.xpose.msra.mxu0 0.0
    %1832 = vmatprep.subr.mxu0 0.0
    %1833 = vmatpush1.xpose.msra.mxu0 0.0
    %1834 = vmatprep.subr.mxu0 0.0
    %1835 = vmatpush1.xpose.msra.mxu0 0.0
    %1836 = vmatprep.subr.mxu0 0.0
    %1837 = vmatpush1.xpose.msra.mxu0 0.0
    %1838 = vmatprep.subr.mxu0 0.0
    %1839 = vmatpush1.xpose.msra.mxu0 0.0
    %1840 = vmatprep.subr.mxu0 0.0
    %1841 = vmatpush1.xpose.msra.mxu0 0.0
    %1842 = vmatprep.subr.mxu0 0.0
    %1843 = vmatpush1.xpose.msra.mxu0 0.0
    %1844 = vmatprep.subr.mxu0 0.0
    %1845 = vmatpush1.xpose.msra.mxu0 0.0
    %1846 = vmatprep.mubr.f32.mxu0 0.0
    %1847 = vmatmul.mubr.f32.gmra.mrb[0].mxu0 %v1770
    %v1848 = vpop.f32.mrb[0].mxu0
    %v1849 = vadd.f32 %v865, %v1848
    %v1850 = vpop.f32.mrb[0].mxu0
    %1851 = vmatprep.mubr.f32.mxu0 0.0
    %1852 = vmatmul.mubr.f32.gmra.mrb[0].mxu0 %v1772
    %v1853 = vpop.f32.mrb[0].mxu0
    %v1854 = vadd.f32 %v866, %v1853
    %v1855 = vpop.f32.mrb[0].mxu0
    %1856 = vmatprep.mubr.f32.mxu0 0.0
    %1857 = vmatmul.mubr.f32.gmra.mrb[0].mxu0 %v1774
    %v1858 = vpop.f32.mrb[0].mxu0
    %v1859 = vadd.f32 %v867, %v1858
    %v1860 = vpop.f32.mrb[0].mxu0
    %1861 = vdwg.mxu0
    %v1862 = vsel %vm1409, %v1745, -inf
    %1863 = vmax.xlane.f32.xlu0 %v1862
    %v1864 = vpop.xlane.xlu0 %1863
    %v1865 = vsel %vm1409, %v1750, -inf
    %1866 = vmax.xlane.f32.xlu0 %v1865
    %v1867 = vpop.xlane.xlu0 %1866
    %v1868 = vsel %vm1409, %v1755, -inf
    %1869 = vmax.xlane.f32.xlu0 %v1868
    %v1870 = vpop.xlane.xlu0 %1869
    %v1871 = vsel %vm1409, %v1849, -inf
    %1872 = vmax.xlane.f32.xlu0 %v1871
    %v1873 = vpop.xlane.xlu0 %1872
    %v1874 = vsel %vm1409, %v1854, -inf
    %1875 = vmax.xlane.f32.xlu0 %v1874
    %v1876 = vpop.xlane.xlu0 %1875
    %v1877 = vsel %vm1409, %v1859, -inf
    %1878 = vmax.xlane.f32.xlu0 %v1877
    %v1879 = vpop.xlane.xlu0 %1878
    %v1880 = vsub.f32 %v1745, %v1864
    %v1881 = vsub.f32 %v1750, %v1867
    %v1882 = vsub.f32 %v1755, %v1870
    %v1883 = vsub.f32 %v1849, %v1873
    %v1884 = vsub.f32 %v1854, %v1876
    %v1885 = vsub.f32 %v1859, %v1879
    %v1886 = vmul.f32 %v1880, 1.442695
    %v1887 = vpow.pop %v1886
    %v1888 = vmul.f32 %v1881, 1.442695
    %v1889 = vpow.pop %v1888
    %v1890 = vmul.f32 %v1882, 1.442695
    %v1891 = vpow.pop %v1890
    %v1892 = vmul.f32 %v1883, 1.442695
    %v1893 = vpow.pop %v1892
    %v1894 = vmul.f32 %v1884, 1.442695
    %v1895 = vpow.pop %v1894
    %v1896 = vmul.f32 %v1885, 1.442695
    %v1897 = vpow.pop %v1896
    %v1898 = vsel %vm1409, %v1887, 0.0
    %1899 = vadd.xlane.f32.xlu0 %v1898
    %v1900 = vpop.xlane.xlu0 %1899
    %v1901 = vsel %vm1409, %v1889, 0.0
    %1902 = vadd.xlane.f32.xlu0 %v1901
    %v1903 = vpop.xlane.xlu0 %1902
    %v1904 = vsel %vm1409, %v1891, 0.0
    %1905 = vadd.xlane.f32.xlu0 %v1904
    %v1906 = vpop.xlane.xlu0 %1905
    %v1907 = vsel %vm1409, %v1893, 0.0
    %1908 = vadd.xlane.f32.xlu0 %v1907
    %v1909 = vpop.xlane.xlu0 %1908
    %v1910 = vsel %vm1409, %v1895, 0.0
    %1911 = vadd.xlane.f32.xlu0 %v1910
    %v1912 = vpop.xlane.xlu0 %1911
    %v1913 = vsel %vm1409, %v1897, 0.0
    %1914 = vadd.xlane.f32.xlu0 %v1913
    %v1915 = vpop.xlane.xlu0 %1914
    %v1916 = vrcp.pop %v1900
    %v1917 = vmul.f32 %v1887, %v1916
    %v1918 = vrcp.pop %v1903
    %v1919 = vmul.f32 %v1889, %v1918
    %v1920 = vrcp.pop %v1906
    %v1921 = vmul.f32 %v1891, %v1920
    %v1922 = vrcp.pop %v1909
    %v1923 = vmul.f32 %v1893, %v1922
    %v1924 = vrcp.pop %v1912
    %v1925 = vmul.f32 %v1895, %v1924
    %v1926 = vrcp.pop %v1915
    %v1927 = vmul.f32 %v1897, %v1926
    %1931 = vrot.lane.b32.xlu0 %v1179, 64
    %v1932 = vpop.permute.xlu0 %1931
    %1933 = vrot.lane.b32.xlu0 %v1185, 64
    %v1934 = vpop.permute.xlu0 %1933
    %1935 = vrot.lane.b32.xlu0 %v1191, 64
    %v1936 = vpop.permute.xlu0 %1935
    %v1941 = vsel %vm1409, %v1917, 0
    %v1944 = vsel %vm1409, %v1919, 0
    %v1947 = vsel %vm1409, %v1921, 0
    %1949 = vmatprep.subr.mxu0 0.0
    %1950 = vmatpush1.msra.mxu0 %v1932
    %1951 = vmatprep.subr.mxu0 0.0
    %1952 = vmatpush1.msra.mxu0 %v1934
    %1953 = vmatprep.subr.mxu0 0.0
    %1954 = vmatpush1.msra.mxu0 %v1936
    %1955 = vmatprep.subr.mxu0 0.0
    %1956 = vmatpush1.msra.mxu0 0.0
    %1957 = vmatprep.subr.mxu0 0.0
    %1958 = vmatpush1.msra.mxu0 0.0
    %1959 = vmatprep.subr.mxu0 0.0
    %1960 = vmatpush1.msra.mxu0 0.0
    %1961 = vmatprep.subr.mxu0 0.0
    %1962 = vmatpush1.msra.mxu0 0.0
    %1963 = vmatprep.subr.mxu0 0.0
    %1964 = vmatpush1.msra.mxu0 0.0
    %1965 = vmatprep.subr.mxu0 0.0
    %1966 = vmatpush1.msra.mxu0 0.0
    %1967 = vmatprep.subr.mxu0 0.0
    %1968 = vmatpush1.msra.mxu0 0.0
    %1969 = vmatprep.subr.mxu0 0.0
    %1970 = vmatpush1.msra.mxu0 0.0
    %1971 = vmatprep.subr.mxu0 0.0
    %1972 = vmatpush1.msra.mxu0 0.0
    %1973 = vmatprep.subr.mxu0 0.0
    %1974 = vmatpush1.msra.mxu0 0.0
    %1975 = vmatprep.subr.mxu0 0.0
    %1976 = vmatpush1.msra.mxu0 0.0
    %1977 = vmatprep.subr.mxu0 0.0
    %1978 = vmatpush1.msra.mxu0 0.0
    %1979 = vmatprep.subr.mxu0 0.0
    %1980 = vmatpush1.msra.mxu0 0.0
    %1981 = vmatprep.subr.mxu0 0.0
    %1982 = vmatpush1.msra.mxu0 0.0
    %1983 = vmatprep.subr.mxu0 0.0
    %1984 = vmatpush1.msra.mxu0 0.0
    %1985 = vmatprep.subr.mxu0 0.0
    %1986 = vmatpush1.msra.mxu0 0.0
    %1987 = vmatprep.subr.mxu0 0.0
    %1988 = vmatpush1.msra.mxu0 0.0
    %1989 = vmatprep.subr.mxu0 0.0
    %1990 = vmatpush1.msra.mxu0 0.0
    %1991 = vmatprep.subr.mxu0 0.0
    %1992 = vmatpush1.msra.mxu0 0.0
    %1993 = vmatprep.subr.mxu0 0.0
    %1994 = vmatpush1.msra.mxu0 0.0
    %1995 = vmatprep.subr.mxu0 0.0
    %1996 = vmatpush1.msra.mxu0 0.0
    %1997 = vmatprep.subr.mxu0 0.0
    %1998 = vmatpush1.msra.mxu0 0.0
    %1999 = vmatprep.subr.mxu0 0.0
    %2000 = vmatpush1.msra.mxu0 0.0
    %2001 = vmatprep.subr.mxu0 0.0
    %2002 = vmatpush1.msra.mxu0 0.0
    %2003 = vmatprep.subr.mxu0 0.0
    %2004 = vmatpush1.msra.mxu0 0.0
    %2005 = vmatprep.subr.mxu0 0.0
    %2006 = vmatpush1.msra.mxu0 0.0
    %2007 = vmatprep.subr.mxu0 0.0
    %2008 = vmatpush1.msra.mxu0 0.0
    %2009 = vmatprep.subr.mxu0 0.0
    %2010 = vmatpush1.msra.mxu0 0.0
    %2011 = vmatprep.subr.mxu0 0.0
    %2012 = vmatpush1.msra.mxu0 0.0
    %2013 = vmatprep.mubr.f32.mxu0 0.0
    %2014 = vmatmul.mubr.f32.gmra.mrb[0].mxu0 %v1941
    %v2015 = vpop.f32.mrb[0].mxu0
    %v2016 = vadd.f32 0.0, %v2015
    %v2017 = vpop.f32.mrb[0].mxu0
    %2018 = vmatprep.mubr.f32.mxu0 0.0
    %2019 = vmatmul.mubr.f32.gmra.mrb[0].mxu0 %v1944
    %v2020 = vpop.f32.mrb[0].mxu0
    %v2021 = vadd.f32 0.0, %v2020
    %v2022 = vpop.f32.mrb[0].mxu0
    %2023 = vmatprep.mubr.f32.mxu0 0.0
    %2024 = vmatmul.mubr.f32.gmra.mrb[0].mxu0 %v1947
    %v2025 = vpop.f32.mrb[0].mxu0
    %v2026 = vadd.f32 0.0, %v2025
    %v2027 = vpop.f32.mrb[0].mxu0
    %2028 = vdwg.mxu0
    %2032 = vrot.lane.b32.xlu0 %v1197, 64
    %v2033 = vpop.permute.xlu0 %2032
    %2034 = vrot.lane.b32.xlu0 %v1203, 64
    %v2035 = vpop.permute.xlu0 %2034
    %2036 = vrot.lane.b32.xlu0 %v1209, 64
    %v2037 = vpop.permute.xlu0 %2036
    %v2042 = vsel %vm1409, %v1923, 0
    %v2045 = vsel %vm1409, %v1925, 0
    %v2048 = vsel %vm1409, %v1927, 0
    %2050 = vmatprep.subr.mxu0 0.0
    %2051 = vmatpush1.msra.mxu0 %v2033
    %2052 = vmatprep.subr.mxu0 0.0
    %2053 = vmatpush1.msra.mxu0 %v2035
    %2054 = vmatprep.subr.mxu0 0.0
    %2055 = vmatpush1.msra.mxu0 %v2037
    %2056 = vmatprep.subr.mxu0 0.0
    %2057 = vmatpush1.msra.mxu0 0.0
    %2058 = vmatprep.subr.mxu0 0.0
    %2059 = vmatpush1.msra.mxu0 0.0
    %2060 = vmatprep.subr.mxu0 0.0
    %2061 = vmatpush1.msra.mxu0 0.0
    %2062 = vmatprep.subr.mxu0 0.0
    %2063 = vmatpush1.msra.mxu0 0.0
    %2064 = vmatprep.subr.mxu0 0.0
    %2065 = vmatpush1.msra.mxu0 0.0
    %2066 = vmatprep.subr.mxu0 0.0
    %2067 = vmatpush1.msra.mxu0 0.0
    %2068 = vmatprep.subr.mxu0 0.0
    %2069 = vmatpush1.msra.mxu0 0.0
    %2070 = vmatprep.subr.mxu0 0.0
    %2071 = vmatpush1.msra.mxu0 0.0
    %2072 = vmatprep.subr.mxu0 0.0
    %2073 = vmatpush1.msra.mxu0 0.0
    %2074 = vmatprep.subr.mxu0 0.0
    %2075 = vmatpush1.msra.mxu0 0.0
    %2076 = vmatprep.subr.mxu0 0.0
    %2077 = vmatpush1.msra.mxu0 0.0
    %2078 = vmatprep.subr.mxu0 0.0
    %2079 = vmatpush1.msra.mxu0 0.0
    %2080 = vmatprep.subr.mxu0 0.0
    %2081 = vmatpush1.msra.mxu0 0.0
    %2082 = vmatprep.subr.mxu0 0.0
    %2083 = vmatpush1.msra.mxu0 0.0
    %2084 = vmatprep.subr.mxu0 0.0
    %2085 = vmatpush1.msra.mxu0 0.0
    %2086 = vmatprep.subr.mxu0 0.0
    %2087 = vmatpush1.msra.mxu0 0.0
    %2088 = vmatprep.subr.mxu0 0.0
    %2089 = vmatpush1.msra.mxu0 0.0
    %2090 = vmatprep.subr.mxu0 0.0
    %2091 = vmatpush1.msra.mxu0 0.0
    %2092 = vmatprep.subr.mxu0 0.0
    %2093 = vmatpush1.msra.mxu0 0.0
    %2094 = vmatprep.subr.mxu0 0.0
    %2095 = vmatpush1.msra.mxu0 0.0
    %2096 = vmatprep.subr.mxu0 0.0
    %2097 = vmatpush1.msra.mxu0 0.0
    %2098 = vmatprep.subr.mxu0 0.0
    %2099 = vmatpush1.msra.mxu0 0.0
    %2100 = vmatprep.subr.mxu0 0.0
    %2101 = vmatpush1.msra.mxu0 0.0
    %2102 = vmatprep.subr.mxu0 0.0
    %2103 = vmatpush1.msra.mxu0 0.0
    %2104 = vmatprep.subr.mxu0 0.0
    %2105 = vmatpush1.msra.mxu0 0.0
    %2106 = vmatprep.subr.mxu0 0.0
    %2107 = vmatpush1.msra.mxu0 0.0
    %2108 = vmatprep.subr.mxu0 0.0
    %2109 = vmatpush1.msra.mxu0 0.0
    %2110 = vmatprep.subr.mxu0 0.0
    %2111 = vmatpush1.msra.mxu0 0.0
    %2112 = vmatprep.subr.mxu0 0.0
    %2113 = vmatpush1.msra.mxu0 0.0
    %2114 = vmatprep.mubr.f32.mxu0 0.0
    %2115 = vmatmul.mubr.f32.gmra.mrb[0].mxu0 %v2042
    %v2116 = vpop.f32.mrb[0].mxu0
    %v2117 = vadd.f32 0.0, %v2116
    %v2118 = vpop.f32.mrb[0].mxu0
    %2119 = vmatprep.mubr.f32.mxu0 0.0
    %2120 = vmatmul.mubr.f32.gmra.mrb[0].mxu0 %v2045
    %v2121 = vpop.f32.mrb[0].mxu0
    %v2122 = vadd.f32 0.0, %v2121
    %v2123 = vpop.f32.mrb[0].mxu0
    %2124 = vmatprep.mubr.f32.mxu0 0.0
    %2125 = vmatmul.mubr.f32.gmra.mrb[0].mxu0 %v2048
    %v2126 = vpop.f32.mrb[0].mxu0
    %v2127 = vadd.f32 0.0, %v2126
    %v2128 = vpop.f32.mrb[0].mxu0
    %2129 = vdwg.mxu0
    %v2131 = vsel %vm452, %v979, 0
    %v2134 = vsel %vm452, %v985, 0
    %v2137 = vsel %vm452, %v991, 0
    %v2140 = vsel %vm452, %v1080, 0
    %v2143 = vsel %vm452, %v1086, 0
    %v2146 = vsel %vm452, %v1092, 0
    %2148 = vmatprep.subr.mxu0 0.0
    %2149 = vmatpush1.xpose.msra.mxu0 %v2140
    %2150 = vmatprep.subr.mxu0 0.0
    %2151 = vmatpush1.xpose.msra.mxu0 %v2143
    %2152 = vmatprep.subr.mxu0 0.0
    %2153 = vmatpush1.xpose.msra.mxu0 %v2146
    %2154 = vmatprep.subr.mxu0 0.0
    %2155 = vmatpush1.xpose.msra.mxu0 0.0
    %2156 = vmatprep.subr.mxu0 0.0
    %2157 = vmatpush1.xpose.msra.mxu0 0.0
    %2158 = vmatprep.subr.mxu0 0.0
    %2159 = vmatpush1.xpose.msra.mxu0 0.0
    %2160 = vmatprep.subr.mxu0 0.0
    %2161 = vmatpush1.xpose.msra.mxu0 0.0
    %2162 = vmatprep.subr.mxu0 0.0
    %2163 = vmatpush1.xpose.msra.mxu0 0.0
    %2164 = vmatprep.subr.mxu0 0.0
    %2165 = vmatpush1.xpose.msra.mxu0 0.0
    %2166 = vmatprep.subr.mxu0 0.0
    %2167 = vmatpush1.xpose.msra.mxu0 0.0
    %2168 = vmatprep.subr.mxu0 0.0
    %2169 = vmatpush1.xpose.msra.mxu0 0.0
    %2170 = vmatprep.subr.mxu0 0.0
    %2171 = vmatpush1.xpose.msra.mxu0 0.0
    %2172 = vmatprep.subr.mxu0 0.0
    %2173 = vmatpush1.xpose.msra.mxu0 0.0
    %2174 = vmatprep.subr.mxu0 0.0
    %2175 = vmatpush1.xpose.msra.mxu0 0.0
    %2176 = vmatprep.subr.mxu0 0.0
    %2177 = vmatpush1.xpose.msra.mxu0 0.0
    %2178 = vmatprep.subr.mxu0 0.0
    %2179 = vmatpush1.xpose.msra.mxu0 0.0
    %2180 = vmatprep.subr.mxu0 0.0
    %2181 = vmatpush1.xpose.msra.mxu0 0.0
    %2182 = vmatprep.subr.mxu0 0.0
    %2183 = vmatpush1.xpose.msra.mxu0 0.0
    %2184 = vmatprep.subr.mxu0 0.0
    %2185 = vmatpush1.xpose.msra.mxu0 0.0
    %2186 = vmatprep.subr.mxu0 0.0
    %2187 = vmatpush1.xpose.msra.mxu0 0.0
    %2188 = vmatprep.subr.mxu0 0.0
    %2189 = vmatpush1.xpose.msra.mxu0 0.0
    %2190 = vmatprep.subr.mxu0 0.0
    %2191 = vmatpush1.xpose.msra.mxu0 0.0
    %2192 = vmatprep.subr.mxu0 0.0
    %2193 = vmatpush1.xpose.msra.mxu0 0.0
    %2194 = vmatprep.subr.mxu0 0.0
    %2195 = vmatpush1.xpose.msra.mxu0 0.0
    %2196 = vmatprep.subr.mxu0 0.0
    %2197 = vmatpush1.xpose.msra.mxu0 0.0
    %2198 = vmatprep.subr.mxu0 0.0
    %2199 = vmatpush1.xpose.msra.mxu0 0.0
    %2200 = vmatprep.subr.mxu0 0.0
    %2201 = vmatpush1.xpose.msra.mxu0 0.0
    %2202 = vmatprep.subr.mxu0 0.0
    %2203 = vmatpush1.xpose.msra.mxu0 0.0
    %2204 = vmatprep.subr.mxu0 0.0
    %2205 = vmatpush1.xpose.msra.mxu0 0.0
    %2206 = vmatprep.subr.mxu0 0.0
    %2207 = vmatpush1.xpose.msra.mxu0 0.0
    %2208 = vmatprep.subr.mxu0 0.0
    %2209 = vmatpush1.xpose.msra.mxu0 0.0
    %2210 = vmatprep.subr.mxu0 0.0
    %2211 = vmatpush1.xpose.msra.mxu0 0.0
    %2212 = vmatprep.mubr.f32.mxu0 0.0
    %2213 = vmatmul.mubr.f32.gmra.mrb[0].mxu0 %v2131
    %v2214 = vpop.f32.mrb[0].mxu0
    %v2215 = vadd.f32 %v865, %v2214
    %v2216 = vpop.f32.mrb[0].mxu0
    %2217 = vmatprep.mubr.f32.mxu0 0.0
    %2218 = vmatmul.mubr.f32.gmra.mrb[0].mxu0 %v2134
    %v2219 = vpop.f32.mrb[0].mxu0
    %v2220 = vadd.f32 %v866, %v2219
    %v2221 = vpop.f32.mrb[0].mxu0
    %2222 = vmatprep.mubr.f32.mxu0 0.0
    %2223 = vmatmul.mubr.f32.gmra.mrb[0].mxu0 %v2137
    %v2224 = vpop.f32.mrb[0].mxu0
    %v2225 = vadd.f32 %v867, %v2224
    %v2226 = vpop.f32.mrb[0].mxu0
    %2227 = vdwg.mxu0
    %v2229 = vsel %vm452, %v997, 0
    %v2232 = vsel %vm452, %v1003, 0
    %v2235 = vsel %vm452, %v1009, 0
    %v2238 = vsel %vm452, %v1098, 0
    %v2241 = vsel %vm452, %v1104, 0
    %v2244 = vsel %vm452, %v1110, 0
    %2246 = vmatprep.subr.mxu0 0.0
    %2247 = vmatpush1.xpose.msra.mxu0 %v2238
    %2248 = vmatprep.subr.mxu0 0.0
    %2249 = vmatpush1.xpose.msra.mxu0 %v2241
    %2250 = vmatprep.subr.mxu0 0.0
    %2251 = vmatpush1.xpose.msra.mxu0 %v2244
    %2252 = vmatprep.subr.mxu0 0.0
    %2253 = vmatpush1.xpose.msra.mxu0 0.0
    %2254 = vmatprep.subr.mxu0 0.0
    %2255 = vmatpush1.xpose.msra.mxu0 0.0
    %2256 = vmatprep.subr.mxu0 0.0
    %2257 = vmatpush1.xpose.msra.mxu0 0.0
    %2258 = vmatprep.subr.mxu0 0.0
    %2259 = vmatpush1.xpose.msra.mxu0 0.0
    %2260 = vmatprep.subr.mxu0 0.0
    %2261 = vmatpush1.xpose.msra.mxu0 0.0
    %2262 = vmatprep.subr.mxu0 0.0
    %2263 = vmatpush1.xpose.msra.mxu0 0.0
    %2264 = vmatprep.subr.mxu0 0.0
    %2265 = vmatpush1.xpose.msra.mxu0 0.0
    %2266 = vmatprep.subr.mxu0 0.0
    %2267 = vmatpush1.xpose.msra.mxu0 0.0
    %2268 = vmatprep.subr.mxu0 0.0
    %2269 = vmatpush1.xpose.msra.mxu0 0.0
    %2270 = vmatprep.subr.mxu0 0.0
    %2271 = vmatpush1.xpose.msra.mxu0 0.0
    %2272 = vmatprep.subr.mxu0 0.0
    %2273 = vmatpush1.xpose.msra.mxu0 0.0
    %2274 = vmatprep.subr.mxu0 0.0
    %2275 = vmatpush1.xpose.msra.mxu0 0.0
    %2276 = vmatprep.subr.mxu0 0.0
    %2277 = vmatpush1.xpose.msra.mxu0 0.0
    %2278 = vmatprep.subr.mxu0 0.0
    %2279 = vmatpush1.xpose.msra.mxu0 0.0
    %2280 = vmatprep.subr.mxu0 0.0
    %2281 = vmatpush1.xpose.msra.mxu0 0.0
    %2282 = vmatprep.subr.mxu0 0.0
    %2283 = vmatpush1.xpose.msra.mxu0 0.0
    %2284 = vmatprep.subr.mxu0 0.0
    %2285 = vmatpush1.xpose.msra.mxu0 0.0
    %2286 = vmatprep.subr.mxu0 0.0
    %2287 = vmatpush1.xpose.msra.mxu0 0.0
    %2288 = vmatprep.subr.mxu0 0.0
    %2289 = vmatpush1.xpose.msra.mxu0 0.0
    %2290 = vmatprep.subr.mxu0 0.0
    %2291 = vmatpush1.xpose.msra.mxu0 0.0
    %2292 = vmatprep.subr.mxu0 0.0
    %2293 = vmatpush1.xpose.msra.mxu0 0.0
    %2294 = vmatprep.subr.mxu0 0.0
    %2295 = vmatpush1.xpose.msra.mxu0 0.0
    %2296 = vmatprep.subr.mxu0 0.0
    %2297 = vmatpush1.xpose.msra.mxu0 0.0
    %2298 = vmatprep.subr.mxu0 0.0
    %2299 = vmatpush1.xpose.msra.mxu0 0.0
    %2300 = vmatprep.subr.mxu0 0.0
    %2301 = vmatpush1.xpose.msra.mxu0 0.0
    %2302 = vmatprep.subr.mxu0 0.0
    %2303 = vmatpush1.xpose.msra.mxu0 0.0
    %2304 = vmatprep.subr.mxu0 0.0
    %2305 = vmatpush1.xpose.msra.mxu0 0.0
    %2306 = vmatprep.subr.mxu0 0.0
    %2307 = vmatpush1.xpose.msra.mxu0 0.0
    %2308 = vmatprep.subr.mxu0 0.0
    %2309 = vmatpush1.xpose.msra.mxu0 0.0
    %2310 = vmatprep.mubr.f32.mxu0 0.0
    %2311 = vmatmul.mubr.f32.gmra.mrb[0].mxu0 %v2229
    %v2312 = vpop.f32.mrb[0].mxu0
    %v2313 = vadd.f32 %v865, %v2312
    %v2314 = vpop.f32.mrb[0].mxu0
    %2315 = vmatprep.mubr.f32.mxu0 0.0
    %2316 = vmatmul.mubr.f32.gmra.mrb[0].mxu0 %v2232
    %v2317 = vpop.f32.mrb[0].mxu0
    %v2318 = vadd.f32 %v866, %v2317
    %v2319 = vpop.f32.mrb[0].mxu0
    %2320 = vmatprep.mubr.f32.mxu0 0.0
    %2321 = vmatmul.mubr.f32.gmra.mrb[0].mxu0 %v2235
    %v2322 = vpop.f32.mrb[0].mxu0
    %v2323 = vadd.f32 %v867, %v2322
    %v2324 = vpop.f32.mrb[0].mxu0
    %2325 = vdwg.mxu0
    %v2326 = vsel %vm1409, %v2215, -inf
    %2327 = vmax.xlane.f32.xlu0 %v2326
    %v2328 = vpop.xlane.xlu0 %2327
    %v2329 = vsel %vm1409, %v2220, -inf
    %2330 = vmax.xlane.f32.xlu0 %v2329
    %v2331 = vpop.xlane.xlu0 %2330
    %v2332 = vsel %vm1409, %v2225, -inf
    %2333 = vmax.xlane.f32.xlu0 %v2332
    %v2334 = vpop.xlane.xlu0 %2333
    %v2335 = vsel %vm1409, %v2313, -inf
    %2336 = vmax.xlane.f32.xlu0 %v2335
    %v2337 = vpop.xlane.xlu0 %2336
    %v2338 = vsel %vm1409, %v2318, -inf
    %2339 = vmax.xlane.f32.xlu0 %v2338
    %v2340 = vpop.xlane.xlu0 %2339
    %v2341 = vsel %vm1409, %v2323, -inf
    %2342 = vmax.xlane.f32.xlu0 %v2341
    %v2343 = vpop.xlane.xlu0 %2342
    %v2344 = vsub.f32 %v2215, %v2328
    %v2345 = vsub.f32 %v2220, %v2331
    %v2346 = vsub.f32 %v2225, %v2334
    %v2347 = vsub.f32 %v2313, %v2337
    %v2348 = vsub.f32 %v2318, %v2340
    %v2349 = vsub.f32 %v2323, %v2343
    %v2350 = vmul.f32 %v2344, 1.442695
    %v2351 = vpow.pop %v2350
    %v2352 = vmul.f32 %v2345, 1.442695
    %v2353 = vpow.pop %v2352
    %v2354 = vmul.f32 %v2346, 1.442695
    %v2355 = vpow.pop %v2354
    %v2356 = vmul.f32 %v2347, 1.442695
    %v2357 = vpow.pop %v2356
    %v2358 = vmul.f32 %v2348, 1.442695
    %v2359 = vpow.pop %v2358
    %v2360 = vmul.f32 %v2349, 1.442695
    %v2361 = vpow.pop %v2360
    %v2362 = vsel %vm1409, %v2351, 0.0
    %2363 = vadd.xlane.f32.xlu0 %v2362
    %v2364 = vpop.xlane.xlu0 %2363
    %v2365 = vsel %vm1409, %v2353, 0.0
    %2366 = vadd.xlane.f32.xlu0 %v2365
    %v2367 = vpop.xlane.xlu0 %2366
    %v2368 = vsel %vm1409, %v2355, 0.0
    %2369 = vadd.xlane.f32.xlu0 %v2368
    %v2370 = vpop.xlane.xlu0 %2369
    %v2371 = vsel %vm1409, %v2357, 0.0
    %2372 = vadd.xlane.f32.xlu0 %v2371
    %v2373 = vpop.xlane.xlu0 %2372
    %v2374 = vsel %vm1409, %v2359, 0.0
    %2375 = vadd.xlane.f32.xlu0 %v2374
    %v2376 = vpop.xlane.xlu0 %2375
    %v2377 = vsel %vm1409, %v2361, 0.0
    %2378 = vadd.xlane.f32.xlu0 %v2377
    %v2379 = vpop.xlane.xlu0 %2378
    %v2380 = vrcp.pop %v2364
    %v2381 = vmul.f32 %v2351, %v2380
    %v2382 = vrcp.pop %v2367
    %v2383 = vmul.f32 %v2353, %v2382
    %v2384 = vrcp.pop %v2370
    %v2385 = vmul.f32 %v2355, %v2384
    %v2386 = vrcp.pop %v2373
    %v2387 = vmul.f32 %v2357, %v2386
    %v2388 = vrcp.pop %v2376
    %v2389 = vmul.f32 %v2359, %v2388
    %v2390 = vrcp.pop %v2379
    %v2391 = vmul.f32 %v2361, %v2390
    %v2393 = vsel %vm1409, %v2381, 0
    %v2396 = vsel %vm1409, %v2383, 0
    %v2399 = vsel %vm1409, %v2385, 0
    %2401 = vmatprep.subr.mxu0 0.0
    %2402 = vmatpush1.msra.mxu0 %v1181
    %2403 = vmatprep.subr.mxu0 0.0
    %2404 = vmatpush1.msra.mxu0 %v1187
    %2405 = vmatprep.subr.mxu0 0.0
    %2406 = vmatpush1.msra.mxu0 %v1193
    %2407 = vmatprep.subr.mxu0 0.0
    %2408 = vmatpush1.msra.mxu0 0.0
    %2409 = vmatprep.subr.mxu0 0.0
    %2410 = vmatpush1.msra.mxu0 0.0
    %2411 = vmatprep.subr.mxu0 0.0
    %2412 = vmatpush1.msra.mxu0 0.0
    %2413 = vmatprep.subr.mxu0 0.0
    %2414 = vmatpush1.msra.mxu0 0.0
    %2415 = vmatprep.subr.mxu0 0.0
    %2416 = vmatpush1.msra.mxu0 0.0
    %2417 = vmatprep.subr.mxu0 0.0
    %2418 = vmatpush1.msra.mxu0 0.0
    %2419 = vmatprep.subr.mxu0 0.0
    %2420 = vmatpush1.msra.mxu0 0.0
    %2421 = vmatprep.subr.mxu0 0.0
    %2422 = vmatpush1.msra.mxu0 0.0
    %2423 = vmatprep.subr.mxu0 0.0
    %2424 = vmatpush1.msra.mxu0 0.0
    %2425 = vmatprep.subr.mxu0 0.0
    %2426 = vmatpush1.msra.mxu0 0.0
    %2427 = vmatprep.subr.mxu0 0.0
    %2428 = vmatpush1.msra.mxu0 0.0
    %2429 = vmatprep.subr.mxu0 0.0
    %2430 = vmatpush1.msra.mxu0 0.0
    %2431 = vmatprep.subr.mxu0 0.0
    %2432 = vmatpush1.msra.mxu0 0.0
    %2433 = vmatprep.subr.mxu0 0.0
    %2434 = vmatpush1.msra.mxu0 0.0
    %2435 = vmatprep.subr.mxu0 0.0
    %2436 = vmatpush1.msra.mxu0 0.0
    %2437 = vmatprep.subr.mxu0 0.0
    %2438 = vmatpush1.msra.mxu0 0.0
    %2439 = vmatprep.subr.mxu0 0.0
    %2440 = vmatpush1.msra.mxu0 0.0
    %2441 = vmatprep.subr.mxu0 0.0
    %2442 = vmatpush1.msra.mxu0 0.0
    %2443 = vmatprep.subr.mxu0 0.0
    %2444 = vmatpush1.msra.mxu0 0.0
    %2445 = vmatprep.subr.mxu0 0.0
    %2446 = vmatpush1.msra.mxu0 0.0
    %2447 = vmatprep.subr.mxu0 0.0
    %2448 = vmatpush1.msra.mxu0 0.0
    %2449 = vmatprep.subr.mxu0 0.0
    %2450 = vmatpush1.msra.mxu0 0.0
    %2451 = vmatprep.subr.mxu0 0.0
    %2452 = vmatpush1.msra.mxu0 0.0
    %2453 = vmatprep.subr.mxu0 0.0
    %2454 = vmatpush1.msra.mxu0 0.0
    %2455 = vmatprep.subr.mxu0 0.0
    %2456 = vmatpush1.msra.mxu0 0.0
    %2457 = vmatprep.subr.mxu0 0.0
    %2458 = vmatpush1.msra.mxu0 0.0
    %2459 = vmatprep.subr.mxu0 0.0
    %2460 = vmatpush1.msra.mxu0 0.0
    %2461 = vmatprep.subr.mxu0 0.0
    %2462 = vmatpush1.msra.mxu0 0.0
    %2463 = vmatprep.subr.mxu0 0.0
    %2464 = vmatpush1.msra.mxu0 0.0
    %2465 = vmatprep.mubr.f32.mxu0 0.0
    %2466 = vmatmul.mubr.f32.gmra.mrb[0].mxu0 %v2393
    %v2467 = vpop.f32.mrb[0].mxu0
    %v2468 = vadd.f32 0.0, %v2467
    %v2469 = vpop.f32.mrb[0].mxu0
    %2470 = vmatprep.mubr.f32.mxu0 0.0
    %2471 = vmatmul.mubr.f32.gmra.mrb[0].mxu0 %v2396
    %v2472 = vpop.f32.mrb[0].mxu0
    %v2473 = vadd.f32 0.0, %v2472
    %v2474 = vpop.f32.mrb[0].mxu0
    %2475 = vmatprep.mubr.f32.mxu0 0.0
    %2476 = vmatmul.mubr.f32.gmra.mrb[0].mxu0 %v2399
    %v2477 = vpop.f32.mrb[0].mxu0
    %v2478 = vadd.f32 0.0, %v2477
    %v2479 = vpop.f32.mrb[0].mxu0
    %2480 = vdwg.mxu0
    %v2482 = vsel %vm1409, %v2387, 0
    %v2485 = vsel %vm1409, %v2389, 0
    %v2488 = vsel %vm1409, %v2391, 0
    %2490 = vmatprep.subr.mxu0 0.0
    %2491 = vmatpush1.msra.mxu0 %v1199
    %2492 = vmatprep.subr.mxu0 0.0
    %2493 = vmatpush1.msra.mxu0 %v1205
    %2494 = vmatprep.subr.mxu0 0.0
    %2495 = vmatpush1.msra.mxu0 %v1211
    %2496 = vmatprep.subr.mxu0 0.0
    %2497 = vmatpush1.msra.mxu0 0.0
    %2498 = vmatprep.subr.mxu0 0.0
    %2499 = vmatpush1.msra.mxu0 0.0
    %2500 = vmatprep.subr.mxu0 0.0
    %2501 = vmatpush1.msra.mxu0 0.0
    %2502 = vmatprep.subr.mxu0 0.0
    %2503 = vmatpush1.msra.mxu0 0.0
    %2504 = vmatprep.subr.mxu0 0.0
    %2505 = vmatpush1.msra.mxu0 0.0
    %2506 = vmatprep.subr.mxu0 0.0
    %2507 = vmatpush1.msra.mxu0 0.0
    %2508 = vmatprep.subr.mxu0 0.0
    %2509 = vmatpush1.msra.mxu0 0.0
    %2510 = vmatprep.subr.mxu0 0.0
    %2511 = vmatpush1.msra.mxu0 0.0
    %2512 = vmatprep.subr.mxu0 0.0
    %2513 = vmatpush1.msra.mxu0 0.0
    %2514 = vmatprep.subr.mxu0 0.0
    %2515 = vmatpush1.msra.mxu0 0.0
    %2516 = vmatprep.subr.mxu0 0.0
    %2517 = vmatpush1.msra.mxu0 0.0
    %2518 = vmatprep.subr.mxu0 0.0
    %2519 = vmatpush1.msra.mxu0 0.0
    %2520 = vmatprep.subr.mxu0 0.0
    %2521 = vmatpush1.msra.mxu0 0.0
    %2522 = vmatprep.subr.mxu0 0.0
    %2523 = vmatpush1.msra.mxu0 0.0
    %2524 = vmatprep.subr.mxu0 0.0
    %2525 = vmatpush1.msra.mxu0 0.0
    %2526 = vmatprep.subr.mxu0 0.0
    %2527 = vmatpush1.msra.mxu0 0.0
    %2528 = vmatprep.subr.mxu0 0.0
    %2529 = vmatpush1.msra.mxu0 0.0
    %2530 = vmatprep.subr.mxu0 0.0
    %2531 = vmatpush1.msra.mxu0 0.0
    %2532 = vmatprep.subr.mxu0 0.0
    %2533 = vmatpush1.msra.mxu0 0.0
    %2534 = vmatprep.subr.mxu0 0.0
    %2535 = vmatpush1.msra.mxu0 0.0
    %2536 = vmatprep.subr.mxu0 0.0
    %2537 = vmatpush1.msra.mxu0 0.0
    %2538 = vmatprep.subr.mxu0 0.0
    %2539 = vmatpush1.msra.mxu0 0.0
    %2540 = vmatprep.subr.mxu0 0.0
    %2541 = vmatpush1.msra.mxu0 0.0
    %2542 = vmatprep.subr.mxu0 0.0
    %2543 = vmatpush1.msra.mxu0 0.0
    %2544 = vmatprep.subr.mxu0 0.0
    %2545 = vmatpush1.msra.mxu0 0.0
    %2546 = vmatprep.subr.mxu0 0.0
    %2547 = vmatpush1.msra.mxu0 0.0
    %2548 = vmatprep.subr.mxu0 0.0
    %2549 = vmatpush1.msra.mxu0 0.0
    %2550 = vmatprep.subr.mxu0 0.0
    %2551 = vmatpush1.msra.mxu0 0.0
    %2552 = vmatprep.subr.mxu0 0.0
    %2553 = vmatpush1.msra.mxu0 0.0
    %2554 = vmatprep.mubr.f32.mxu0 0.0
    %2555 = vmatmul.mubr.f32.gmra.mrb[0].mxu0 %v2482
    %v2556 = vpop.f32.mrb[0].mxu0
    %v2557 = vadd.f32 0.0, %v2556
    %v2558 = vpop.f32.mrb[0].mxu0
    %2559 = vmatprep.mubr.f32.mxu0 0.0
    %2560 = vmatmul.mubr.f32.gmra.mrb[0].mxu0 %v2485
    %v2561 = vpop.f32.mrb[0].mxu0
    %v2562 = vadd.f32 0.0, %v2561
    %v2563 = vpop.f32.mrb[0].mxu0
    %2564 = vmatprep.mubr.f32.mxu0 0.0
    %2565 = vmatmul.mubr.f32.gmra.mrb[0].mxu0 %v2488
    %v2566 = vpop.f32.mrb[0].mxu0
    %v2567 = vadd.f32 0.0, %v2566
    %v2568 = vpop.f32.mrb[0].mxu0
    %2569 = vdwg.mxu0
    %2570 = vrot.lane.b32.xlu0 %v979, 64
    %v2571 = vpop.permute.xlu0 %2570
    %2572 = vrot.lane.b32.xlu0 %v985, 64
    %v2573 = vpop.permute.xlu0 %2572
    %2574 = vrot.lane.b32.xlu0 %v991, 64
    %v2575 = vpop.permute.xlu0 %2574
    %2576 = vrot.lane.b32.xlu0 %v1080, 64
    %v2577 = vpop.permute.xlu0 %2576
    %2578 = vrot.lane.b32.xlu0 %v1086, 64
    %v2579 = vpop.permute.xlu0 %2578
    %2580 = vrot.lane.b32.xlu0 %v1092, 64
    %v2581 = vpop.permute.xlu0 %2580
    %v2582 = vsel %vm452, %v2571, 0
    %v2584 = vsel %vm452, %v2573, 0
    %v2586 = vsel %vm452, %v2575, 0
    %v2588 = vsel %vm452, %v2577, 0
    %v2590 = vsel %vm452, %v2579, 0
    %v2592 = vsel %vm452, %v2581, 0
    %2594 = vmatprep.subr.mxu0 0.0
    %2595 = vmatpush1.xpose.msra.mxu0 %v2588
    %2596 = vmatprep.subr.mxu0 0.0
    %2597 = vmatpush1.xpose.msra.mxu0 %v2590
    %2598 = vmatprep.subr.mxu0 0.0
    %2599 = vmatpush1.xpose.msra.mxu0 %v2592
    %2600 = vmatprep.subr.mxu0 0.0
    %2601 = vmatpush1.xpose.msra.mxu0 0.0
    %2602 = vmatprep.subr.mxu0 0.0
    %2603 = vmatpush1.xpose.msra.mxu0 0.0
    %2604 = vmatprep.subr.mxu0 0.0
    %2605 = vmatpush1.xpose.msra.mxu0 0.0
    %2606 = vmatprep.subr.mxu0 0.0
    %2607 = vmatpush1.xpose.msra.mxu0 0.0
    %2608 = vmatprep.subr.mxu0 0.0
    %2609 = vmatpush1.xpose.msra.mxu0 0.0
    %2610 = vmatprep.subr.mxu0 0.0
    %2611 = vmatpush1.xpose.msra.mxu0 0.0
    %2612 = vmatprep.subr.mxu0 0.0
    %2613 = vmatpush1.xpose.msra.mxu0 0.0
    %2614 = vmatprep.subr.mxu0 0.0
    %2615 = vmatpush1.xpose.msra.mxu0 0.0
    %2616 = vmatprep.subr.mxu0 0.0
    %2617 = vmatpush1.xpose.msra.mxu0 0.0
    %2618 = vmatprep.subr.mxu0 0.0
    %2619 = vmatpush1.xpose.msra.mxu0 0.0
    %2620 = vmatprep.subr.mxu0 0.0
    %2621 = vmatpush1.xpose.msra.mxu0 0.0
    %2622 = vmatprep.subr.mxu0 0.0
    %2623 = vmatpush1.xpose.msra.mxu0 0.0
    %2624 = vmatprep.subr.mxu0 0.0
    %2625 = vmatpush1.xpose.msra.mxu0 0.0
    %2626 = vmatprep.subr.mxu0 0.0
    %2627 = vmatpush1.xpose.msra.mxu0 0.0
    %2628 = vmatprep.subr.mxu0 0.0
    %2629 = vmatpush1.xpose.msra.mxu0 0.0
    %2630 = vmatprep.subr.mxu0 0.0
    %2631 = vmatpush1.xpose.msra.mxu0 0.0
    %2632 = vmatprep.subr.mxu0 0.0
    %2633 = vmatpush1.xpose.msra.mxu0 0.0
    %2634 = vmatprep.subr.mxu0 0.0
    %2635 = vmatpush1.xpose.msra.mxu0 0.0
    %2636 = vmatprep.subr.mxu0 0.0
    %2637 = vmatpush1.xpose.msra.mxu0 0.0
    %2638 = vmatprep.subr.mxu0 0.0
    %2639 = vmatpush1.xpose.msra.mxu0 0.0
    %2640 = vmatprep.subr.mxu0 0.0
    %2641 = vmatpush1.xpose.msra.mxu0 0.0
    %2642 = vmatprep.subr.mxu0 0.0
    %2643 = vmatpush1.xpose.msra.mxu0 0.0
    %2644 = vmatprep.subr.mxu0 0.0
    %2645 = vmatpush1.xpose.msra.mxu0 0.0
    %2646 = vmatprep.subr.mxu0 0.0
    %2647 = vmatpush1.xpose.msra.mxu0 0.0
    %2648 = vmatprep.subr.mxu0 0.0
    %2649 = vmatpush1.xpose.msra.mxu0 0.0
    %2650 = vmatprep.subr.mxu0 0.0
    %2651 = vmatpush1.xpose.msra.mxu0 0.0
    %2652 = vmatprep.subr.mxu0 0.0
    %2653 = vmatpush1.xpose.msra.mxu0 0.0
    %2654 = vmatprep.subr.mxu0 0.0
    %2655 = vmatpush1.xpose.msra.mxu0 0.0
    %2656 = vmatprep.subr.mxu0 0.0
    %2657 = vmatpush1.xpose.msra.mxu0 0.0
    %2658 = vmatprep.mubr.f32.mxu0 0.0
    %2659 = vmatmul.mubr.f32.gmra.mrb[0].mxu0 %v2582
    %v2660 = vpop.f32.mrb[0].mxu0
    %v2661 = vadd.f32 %v865, %v2660
    %v2662 = vpop.f32.mrb[0].mxu0
    %2663 = vmatprep.mubr.f32.mxu0 0.0
    %2664 = vmatmul.mubr.f32.gmra.mrb[0].mxu0 %v2584
    %v2665 = vpop.f32.mrb[0].mxu0
    %v2666 = vadd.f32 %v866, %v2665
    %v2667 = vpop.f32.mrb[0].mxu0
    %2668 = vmatprep.mubr.f32.mxu0 0.0
    %2669 = vmatmul.mubr.f32.gmra.mrb[0].mxu0 %v2586
    %v2670 = vpop.f32.mrb[0].mxu0
    %v2671 = vadd.f32 %v867, %v2670
    %v2672 = vpop.f32.mrb[0].mxu0
    %2673 = vdwg.mxu0
    %2674 = vrot.lane.b32.xlu0 %v997, 64
    %v2675 = vpop.permute.xlu0 %2674
    %2676 = vrot.lane.b32.xlu0 %v1003, 64
    %v2677 = vpop.permute.xlu0 %2676
    %2678 = vrot.lane.b32.xlu0 %v1009, 64
    %v2679 = vpop.permute.xlu0 %2678
    %2680 = vrot.lane.b32.xlu0 %v1098, 64
    %v2681 = vpop.permute.xlu0 %2680
    %2682 = vrot.lane.b32.xlu0 %v1104, 64
    %v2683 = vpop.permute.xlu0 %2682
    %2684 = vrot.lane.b32.xlu0 %v1110, 64
    %v2685 = vpop.permute.xlu0 %2684
    %v2686 = vsel %vm452, %v2675, 0
    %v2688 = vsel %vm452, %v2677, 0
    %v2690 = vsel %vm452, %v2679, 0
    %v2692 = vsel %vm452, %v2681, 0
    %v2694 = vsel %vm452, %v2683, 0
    %v2696 = vsel %vm452, %v2685, 0
    %2698 = vmatprep.subr.mxu0 0.0
    %2699 = vmatpush1.xpose.msra.mxu0 %v2692
    %2700 = vmatprep.subr.mxu0 0.0
    %2701 = vmatpush1.xpose.msra.mxu0 %v2694
    %2702 = vmatprep.subr.mxu0 0.0
    %2703 = vmatpush1.xpose.msra.mxu0 %v2696
    %2704 = vmatprep.subr.mxu0 0.0
    %2705 = vmatpush1.xpose.msra.mxu0 0.0
    %2706 = vmatprep.subr.mxu0 0.0
    %2707 = vmatpush1.xpose.msra.mxu0 0.0
    %2708 = vmatprep.subr.mxu0 0.0
    %2709 = vmatpush1.xpose.msra.mxu0 0.0
    %2710 = vmatprep.subr.mxu0 0.0
    %2711 = vmatpush1.xpose.msra.mxu0 0.0
    %2712 = vmatprep.subr.mxu0 0.0
    %2713 = vmatpush1.xpose.msra.mxu0 0.0
    %2714 = vmatprep.subr.mxu0 0.0
    %2715 = vmatpush1.xpose.msra.mxu0 0.0
    %2716 = vmatprep.subr.mxu0 0.0
    %2717 = vmatpush1.xpose.msra.mxu0 0.0
    %2718 = vmatprep.subr.mxu0 0.0
    %2719 = vmatpush1.xpose.msra.mxu0 0.0
    %2720 = vmatprep.subr.mxu0 0.0
    %2721 = vmatpush1.xpose.msra.mxu0 0.0
    %2722 = vmatprep.subr.mxu0 0.0
    %2723 = vmatpush1.xpose.msra.mxu0 0.0
    %2724 = vmatprep.subr.mxu0 0.0
    %2725 = vmatpush1.xpose.msra.mxu0 0.0
    %2726 = vmatprep.subr.mxu0 0.0
    %2727 = vmatpush1.xpose.msra.mxu0 0.0
    %2728 = vmatprep.subr.mxu0 0.0
    %2729 = vmatpush1.xpose.msra.mxu0 0.0
    %2730 = vmatprep.subr.mxu0 0.0
    %2731 = vmatpush1.xpose.msra.mxu0 0.0
    %2732 = vmatprep.subr.mxu0 0.0
    %2733 = vmatpush1.xpose.msra.mxu0 0.0
    %2734 = vmatprep.subr.mxu0 0.0
    %2735 = vmatpush1.xpose.msra.mxu0 0.0
    %2736 = vmatprep.subr.mxu0 0.0
    %2737 = vmatpush1.xpose.msra.mxu0 0.0
    %2738 = vmatprep.subr.mxu0 0.0
    %2739 = vmatpush1.xpose.msra.mxu0 0.0
    %2740 = vmatprep.subr.mxu0 0.0
    %2741 = vmatpush1.xpose.msra.mxu0 0.0
    %2742 = vmatprep.subr.mxu0 0.0
    %2743 = vmatpush1.xpose.msra.mxu0 0.0
    %2744 = vmatprep.subr.mxu0 0.0
    %2745 = vmatpush1.xpose.msra.mxu0 0.0
    %2746 = vmatprep.subr.mxu0 0.0
    %2747 = vmatpush1.xpose.msra.mxu0 0.0
    %2748 = vmatprep.subr.mxu0 0.0
    %2749 = vmatpush1.xpose.msra.mxu0 0.0
    %2750 = vmatprep.subr.mxu0 0.0
    %2751 = vmatpush1.xpose.msra.mxu0 0.0
    %2752 = vmatprep.subr.mxu0 0.0
    %2753 = vmatpush1.xpose.msra.mxu0 0.0
    %2754 = vmatprep.subr.mxu0 0.0
    %2755 = vmatpush1.xpose.msra.mxu0 0.0
    %2756 = vmatprep.subr.mxu0 0.0
    %2757 = vmatpush1.xpose.msra.mxu0 0.0
    %2758 = vmatprep.subr.mxu0 0.0
    %2759 = vmatpush1.xpose.msra.mxu0 0.0
    %2760 = vmatprep.subr.mxu0 0.0
    %2761 = vmatpush1.xpose.msra.mxu0 0.0
    %2762 = vmatprep.mubr.f32.mxu0 0.0
    %2763 = vmatmul.mubr.f32.gmra.mrb[0].mxu0 %v2686
    %v2764 = vpop.f32.mrb[0].mxu0
    %v2765 = vadd.f32 %v865, %v2764
    %v2766 = vpop.f32.mrb[0].mxu0
    %2767 = vmatprep.mubr.f32.mxu0 0.0
    %2768 = vmatmul.mubr.f32.gmra.mrb[0].mxu0 %v2688
    %v2769 = vpop.f32.mrb[0].mxu0
    %v2770 = vadd.f32 %v866, %v2769
    %v2771 = vpop.f32.mrb[0].mxu0
    %2772 = vmatprep.mubr.f32.mxu0 0.0
    %2773 = vmatmul.mubr.f32.gmra.mrb[0].mxu0 %v2690
    %v2774 = vpop.f32.mrb[0].mxu0
    %v2775 = vadd.f32 %v867, %v2774
    %v2776 = vpop.f32.mrb[0].mxu0
    %2777 = vdwg.mxu0
    %v2778 = vsel %vm1409, %v2661, -inf
    %2779 = vmax.xlane.f32.xlu0 %v2778
    %v2780 = vpop.xlane.xlu0 %2779
    %v2781 = vsel %vm1409, %v2666, -inf
    %2782 = vmax.xlane.f32.xlu0 %v2781
    %v2783 = vpop.xlane.xlu0 %2782
    %v2784 = vsel %vm1409, %v2671, -inf
    %2785 = vmax.xlane.f32.xlu0 %v2784
    %v2786 = vpop.xlane.xlu0 %2785
    %v2787 = vsel %vm1409, %v2765, -inf
    %2788 = vmax.xlane.f32.xlu0 %v2787
    %v2789 = vpop.xlane.xlu0 %2788
    %v2790 = vsel %vm1409, %v2770, -inf
    %2791 = vmax.xlane.f32.xlu0 %v2790
    %v2792 = vpop.xlane.xlu0 %2791
    %v2793 = vsel %vm1409, %v2775, -inf
    %2794 = vmax.xlane.f32.xlu0 %v2793
    %v2795 = vpop.xlane.xlu0 %2794
    %v2796 = vsub.f32 %v2661, %v2780
    %v2797 = vsub.f32 %v2666, %v2783
    %v2798 = vsub.f32 %v2671, %v2786
    %v2799 = vsub.f32 %v2765, %v2789
    %v2800 = vsub.f32 %v2770, %v2792
    %v2801 = vsub.f32 %v2775, %v2795
    %v2802 = vmul.f32 %v2796, 1.442695
    %v2803 = vpow.pop %v2802
    %v2804 = vmul.f32 %v2797, 1.442695
    %v2805 = vpow.pop %v2804
    %v2806 = vmul.f32 %v2798, 1.442695
    %v2807 = vpow.pop %v2806
    %v2808 = vmul.f32 %v2799, 1.442695
    %v2809 = vpow.pop %v2808
    %v2810 = vmul.f32 %v2800, 1.442695
    %v2811 = vpow.pop %v2810
    %v2812 = vmul.f32 %v2801, 1.442695
    %v2813 = vpow.pop %v2812
    %v2814 = vsel %vm1409, %v2803, 0.0
    %2815 = vadd.xlane.f32.xlu0 %v2814
    %v2816 = vpop.xlane.xlu0 %2815
    %v2817 = vsel %vm1409, %v2805, 0.0
    %2818 = vadd.xlane.f32.xlu0 %v2817
    %v2819 = vpop.xlane.xlu0 %2818
    %v2820 = vsel %vm1409, %v2807, 0.0
    %2821 = vadd.xlane.f32.xlu0 %v2820
    %v2822 = vpop.xlane.xlu0 %2821
    %v2823 = vsel %vm1409, %v2809, 0.0
    %2824 = vadd.xlane.f32.xlu0 %v2823
    %v2825 = vpop.xlane.xlu0 %2824
    %v2826 = vsel %vm1409, %v2811, 0.0
    %2827 = vadd.xlane.f32.xlu0 %v2826
    %v2828 = vpop.xlane.xlu0 %2827
    %v2829 = vsel %vm1409, %v2813, 0.0
    %2830 = vadd.xlane.f32.xlu0 %v2829
    %v2831 = vpop.xlane.xlu0 %2830
    %v2832 = vrcp.pop %v2816
    %v2833 = vmul.f32 %v2803, %v2832
    %v2834 = vrcp.pop %v2819
    %v2835 = vmul.f32 %v2805, %v2834
    %v2836 = vrcp.pop %v2822
    %v2837 = vmul.f32 %v2807, %v2836
    %v2838 = vrcp.pop %v2825
    %v2839 = vmul.f32 %v2809, %v2838
    %v2840 = vrcp.pop %v2828
    %v2841 = vmul.f32 %v2811, %v2840
    %v2842 = vrcp.pop %v2831
    %v2843 = vmul.f32 %v2813, %v2842
    %2847 = vrot.lane.b32.xlu0 %v1181, 64
    %v2848 = vpop.permute.xlu0 %2847
    %2849 = vrot.lane.b32.xlu0 %v1187, 64
    %v2850 = vpop.permute.xlu0 %2849
    %2851 = vrot.lane.b32.xlu0 %v1193, 64
    %v2852 = vpop.permute.xlu0 %2851
    %v2857 = vsel %vm1409, %v2833, 0
    %v2860 = vsel %vm1409, %v2835, 0
    %v2863 = vsel %vm1409, %v2837, 0
    %2865 = vmatprep.subr.mxu0 0.0
    %2866 = vmatpush1.msra.mxu0 %v2848
    %2867 = vmatprep.subr.mxu0 0.0
    %2868 = vmatpush1.msra.mxu0 %v2850
    %2869 = vmatprep.subr.mxu0 0.0
    %2870 = vmatpush1.msra.mxu0 %v2852
    %2871 = vmatprep.subr.mxu0 0.0
    %2872 = vmatpush1.msra.mxu0 0.0
    %2873 = vmatprep.subr.mxu0 0.0
    %2874 = vmatpush1.msra.mxu0 0.0
    %2875 = vmatprep.subr.mxu0 0.0
    %2876 = vmatpush1.msra.mxu0 0.0
    %2877 = vmatprep.subr.mxu0 0.0
    %2878 = vmatpush1.msra.mxu0 0.0
    %2879 = vmatprep.subr.mxu0 0.0
    %2880 = vmatpush1.msra.mxu0 0.0
    %2881 = vmatprep.subr.mxu0 0.0
    %2882 = vmatpush1.msra.mxu0 0.0
    %2883 = vmatprep.subr.mxu0 0.0
    %2884 = vmatpush1.msra.mxu0 0.0
    %2885 = vmatprep.subr.mxu0 0.0
    %2886 = vmatpush1.msra.mxu0 0.0
    %2887 = vmatprep.subr.mxu0 0.0
    %2888 = vmatpush1.msra.mxu0 0.0
    %2889 = vmatprep.subr.mxu0 0.0
    %2890 = vmatpush1.msra.mxu0 0.0
    %2891 = vmatprep.subr.mxu0 0.0
    %2892 = vmatpush1.msra.mxu0 0.0
    %2893 = vmatprep.subr.mxu0 0.0
    %2894 = vmatpush1.msra.mxu0 0.0
    %2895 = vmatprep.subr.mxu0 0.0
    %2896 = vmatpush1.msra.mxu0 0.0
    %2897 = vmatprep.subr.mxu0 0.0
    %2898 = vmatpush1.msra.mxu0 0.0
    %2899 = vmatprep.subr.mxu0 0.0
    %2900 = vmatpush1.msra.mxu0 0.0
    %2901 = vmatprep.subr.mxu0 0.0
    %2902 = vmatpush1.msra.mxu0 0.0
    %2903 = vmatprep.subr.mxu0 0.0
    %2904 = vmatpush1.msra.mxu0 0.0
    %2905 = vmatprep.subr.mxu0 0.0
    %2906 = vmatpush1.msra.mxu0 0.0
    %2907 = vmatprep.subr.mxu0 0.0
    %2908 = vmatpush1.msra.mxu0 0.0
    %2909 = vmatprep.subr.mxu0 0.0
    %2910 = vmatpush1.msra.mxu0 0.0
    %2911 = vmatprep.subr.mxu0 0.0
    %2912 = vmatpush1.msra.mxu0 0.0
    %2913 = vmatprep.subr.mxu0 0.0
    %2914 = vmatpush1.msra.mxu0 0.0
    %2915 = vmatprep.subr.mxu0 0.0
    %2916 = vmatpush1.msra.mxu0 0.0
    %2917 = vmatprep.subr.mxu0 0.0
    %2918 = vmatpush1.msra.mxu0 0.0
    %2919 = vmatprep.subr.mxu0 0.0
    %2920 = vmatpush1.msra.mxu0 0.0
    %2921 = vmatprep.subr.mxu0 0.0
    %2922 = vmatpush1.msra.mxu0 0.0
    %2923 = vmatprep.subr.mxu0 0.0
    %2924 = vmatpush1.msra.mxu0 0.0
    %2925 = vmatprep.subr.mxu0 0.0
    %2926 = vmatpush1.msra.mxu0 0.0
    %2927 = vmatprep.subr.mxu0 0.0
    %2928 = vmatpush1.msra.mxu0 0.0
    %2929 = vmatprep.mubr.f32.mxu0 0.0
    %2930 = vmatmul.mubr.f32.gmra.mrb[0].mxu0 %v2857
    %v2931 = vpop.f32.mrb[0].mxu0
    %v2932 = vadd.f32 0.0, %v2931
    %v2933 = vpop.f32.mrb[0].mxu0
    %2934 = vmatprep.mubr.f32.mxu0 0.0
    %2935 = vmatmul.mubr.f32.gmra.mrb[0].mxu0 %v2860
    %v2936 = vpop.f32.mrb[0].mxu0
    %v2937 = vadd.f32 0.0, %v2936
    %v2938 = vpop.f32.mrb[0].mxu0
    %2939 = vmatprep.mubr.f32.mxu0 0.0
    %2940 = vmatmul.mubr.f32.gmra.mrb[0].mxu0 %v2863
    %v2941 = vpop.f32.mrb[0].mxu0
    %v2942 = vadd.f32 0.0, %v2941
    %v2943 = vpop.f32.mrb[0].mxu0
    %2944 = vdwg.mxu0
    %2948 = vrot.lane.b32.xlu0 %v1199, 64
    %v2949 = vpop.permute.xlu0 %2948
    %2950 = vrot.lane.b32.xlu0 %v1205, 64
    %v2951 = vpop.permute.xlu0 %2950
    %2952 = vrot.lane.b32.xlu0 %v1211, 64
    %v2953 = vpop.permute.xlu0 %2952
    %v2958 = vsel %vm1409, %v2839, 0
    %v2961 = vsel %vm1409, %v2841, 0
    %v2964 = vsel %vm1409, %v2843, 0
    %2966 = vmatprep.subr.mxu0 0.0
    %2967 = vmatpush1.msra.mxu0 %v2949
    %2968 = vmatprep.subr.mxu0 0.0
    %2969 = vmatpush1.msra.mxu0 %v2951
    %2970 = vmatprep.subr.mxu0 0.0
    %2971 = vmatpush1.msra.mxu0 %v2953
    %2972 = vmatprep.subr.mxu0 0.0
    %2973 = vmatpush1.msra.mxu0 0.0
    %2974 = vmatprep.subr.mxu0 0.0
    %2975 = vmatpush1.msra.mxu0 0.0
    %2976 = vmatprep.subr.mxu0 0.0
    %2977 = vmatpush1.msra.mxu0 0.0
    %2978 = vmatprep.subr.mxu0 0.0
    %2979 = vmatpush1.msra.mxu0 0.0
    %2980 = vmatprep.subr.mxu0 0.0
    %2981 = vmatpush1.msra.mxu0 0.0
    %2982 = vmatprep.subr.mxu0 0.0
    %2983 = vmatpush1.msra.mxu0 0.0
    %2984 = vmatprep.subr.mxu0 0.0
    %2985 = vmatpush1.msra.mxu0 0.0
    %2986 = vmatprep.subr.mxu0 0.0
    %2987 = vmatpush1.msra.mxu0 0.0
    %2988 = vmatprep.subr.mxu0 0.0
    %2989 = vmatpush1.msra.mxu0 0.0
    %2990 = vmatprep.subr.mxu0 0.0
    %2991 = vmatpush1.msra.mxu0 0.0
    %2992 = vmatprep.subr.mxu0 0.0
    %2993 = vmatpush1.msra.mxu0 0.0
    %2994 = vmatprep.subr.mxu0 0.0
    %2995 = vmatpush1.msra.mxu0 0.0
    %2996 = vmatprep.subr.mxu0 0.0
    %2997 = vmatpush1.msra.mxu0 0.0
    %2998 = vmatprep.subr.mxu0 0.0
    %2999 = vmatpush1.msra.mxu0 0.0
    %3000 = vmatprep.subr.mxu0 0.0
    %3001 = vmatpush1.msra.mxu0 0.0
    %3002 = vmatprep.subr.mxu0 0.0
    %3003 = vmatpush1.msra.mxu0 0.0
    %3004 = vmatprep.subr.mxu0 0.0
    %3005 = vmatpush1.msra.mxu0 0.0
    %3006 = vmatprep.subr.mxu0 0.0
    %3007 = vmatpush1.msra.mxu0 0.0
    %3008 = vmatprep.subr.mxu0 0.0
    %3009 = vmatpush1.msra.mxu0 0.0
    %3010 = vmatprep.subr.mxu0 0.0
    %3011 = vmatpush1.msra.mxu0 0.0
    %3012 = vmatprep.subr.mxu0 0.0
    %3013 = vmatpush1.msra.mxu0 0.0
    %3014 = vmatprep.subr.mxu0 0.0
    %3015 = vmatpush1.msra.mxu0 0.0
    %3016 = vmatprep.subr.mxu0 0.0
    %3017 = vmatpush1.msra.mxu0 0.0
    %3018 = vmatprep.subr.mxu0 0.0
    %3019 = vmatpush1.msra.mxu0 0.0
    %3020 = vmatprep.subr.mxu0 0.0
    %3021 = vmatpush1.msra.mxu0 0.0
    %3022 = vmatprep.subr.mxu0 0.0
    %3023 = vmatpush1.msra.mxu0 0.0
    %3024 = vmatprep.subr.mxu0 0.0
    %3025 = vmatpush1.msra.mxu0 0.0
    %3026 = vmatprep.subr.mxu0 0.0
    %3027 = vmatpush1.msra.mxu0 0.0
    %3028 = vmatprep.subr.mxu0 0.0
    %3029 = vmatpush1.msra.mxu0 0.0
    %3030 = vmatprep.mubr.f32.mxu0 0.0
    %3031 = vmatmul.mubr.f32.gmra.mrb[0].mxu0 %v2958
    %v3032 = vpop.f32.mrb[0].mxu0
    %v3033 = vadd.f32 0.0, %v3032
    %v3034 = vpop.f32.mrb[0].mxu0
    %3035 = vmatprep.mubr.f32.mxu0 0.0
    %3036 = vmatmul.mubr.f32.gmra.mrb[0].mxu0 %v2961
    %v3037 = vpop.f32.mrb[0].mxu0
    %v3038 = vadd.f32 0.0, %v3037
    %v3039 = vpop.f32.mrb[0].mxu0
    %3040 = vmatprep.mubr.f32.mxu0 0.0
    %3041 = vmatmul.mubr.f32.gmra.mrb[0].mxu0 %v2964
    %v3042 = vpop.f32.mrb[0].mxu0
    %v3043 = vadd.f32 0.0, %v3042
    %v3044 = vpop.f32.mrb[0].mxu0
    %3045 = vdwg.mxu0
    %3052 = vrot.lane.b32.xlu0 %v2016, 64
    %v3053 = vpop.permute.xlu0 %3052
    %3054 = vrot.lane.b32.xlu0 %v2021, 64
    %v3055 = vpop.permute.xlu0 %3054
    %3056 = vrot.lane.b32.xlu0 %v2026, 64
    %v3057 = vpop.permute.xlu0 %3056
    %3058 = vrot.lane.b32.xlu0 %v2117, 64
    %v3059 = vpop.permute.xlu0 %3058
    %3060 = vrot.lane.b32.xlu0 %v2122, 64
    %v3061 = vpop.permute.xlu0 %3060
    %3062 = vrot.lane.b32.xlu0 %v2127, 64
    %v3063 = vpop.permute.xlu0 %3062
    %3076 = vrot.lane.b32.xlu0 %v2932, 64
    %v3077 = vpop.permute.xlu0 %3076
    %3078 = vrot.lane.b32.xlu0 %v2937, 64
    %v3079 = vpop.permute.xlu0 %3078
    %3080 = vrot.lane.b32.xlu0 %v2942, 64
    %v3081 = vpop.permute.xlu0 %3080
    %3082 = vrot.lane.b32.xlu0 %v3033, 64
    %v3083 = vpop.permute.xlu0 %3082
    %3084 = vrot.lane.b32.xlu0 %v3038, 64
    %v3085 = vpop.permute.xlu0 %3084
    %3086 = vrot.lane.b32.xlu0 %v3043, 64
    %v3087 = vpop.permute.xlu0 %3086
    %v3094 = vsel %vm452, %v1552, %v3053
    %v3095 = vsel %vm452, %v1557, %v3055
    %v3096 = vsel %vm452, %v1562, %v3057
    %v3097 = vsel %vm452, %v1641, %v3059
    %v3098 = vsel %vm452, %v1646, %v3061
    %v3099 = vsel %vm452, %v1651, %v3063
    %v3100 = vsel %vm452, %v2468, %v3077
    %v3101 = vsel %vm452, %v2473, %v3079
    %v3102 = vsel %vm452, %v2478, %v3081
    %v3103 = vsel %vm452, %v2557, %v3083
    %v3104 = vsel %vm452, %v2562, %v3085
    %v3105 = vsel %vm452, %v2567, %v3087
    %v3106 = vld [vmem:[%s13] sm:$0xff]
    %v3107 = vld [vmem:[%s13 + $0x8] sm:$0xff]
    %v3108 = vld [vmem:[%s13 + $0x10] sm:$0xff]
    %v3109 = vld [vmem:[%s13 + $0x18] sm:$0xff]
    %v3110 = vld [vmem:[%s13 + $0x20] sm:$0xff]
    %v3111 = vld [vmem:[%s13 + $0x28] sm:$0xff]
    %v3112 = vld [vmem:[%s13 + $0x30] sm:$0xff]
    %v3113 = vld [vmem:[%s13 + $0x38] sm:$0xff]
    %v3114 = vld [vmem:[%s13 + $0x40] sm:$0xff]
    %v3115 = vld [vmem:[%s13 + $0x48] sm:$0xff]
    %v3116 = vld [vmem:[%s13 + $0x50] sm:$0xff]
    %v3117 = vld [vmem:[%s13 + $0x58] sm:$0xff]
    %v3118 = vld [vmem:[%s13 + $0x60] sm:$0xff]
    %v3119 = vld [vmem:[%s13 + $0x68] sm:$0xff]
    %v3120 = vld [vmem:[%s13 + $0x70] sm:$0xff]
    %v3121 = vld [vmem:[%s13 + $0x78] sm:$0xff]
    %v3122 = vld [vmem:[%s13 + $0x80] sm:$0xff]
    %v3123 = vld [vmem:[%s13 + $0x88] sm:$0xff]
    %v3124 = vld [vmem:[%s13 + $0x90] sm:$0xff]
    %v3125 = vld [vmem:[%s13 + $0x98] sm:$0xff]
    %v3126 = vld [vmem:[%s13 + $0xa0] sm:$0xff]
    %v3127 = vld [vmem:[%s13 + $0xa8] sm:$0xff]
    %v3128 = vld [vmem:[%s13 + $0xb0] sm:$0xff]
    %v3129 = vld [vmem:[%s13 + $0xb8] sm:$0xff]
    %v3130 = vld [vmem:[%s13 + $0xc0] sm:$0xff]
    %v3131 = vld [vmem:[%s13 + $0xc8] sm:$0xff]
    %v3132 = vld [vmem:[%s13 + $0xd0] sm:$0xff]
    %v3133 = vld [vmem:[%s13 + $0xd8] sm:$0xff]
    %v3134 = vld [vmem:[%s13 + $0xe0] sm:$0xff]
    %v3135 = vld [vmem:[%s13 + $0xe8] sm:$0xff]
    %v3136 = vld [vmem:[%s13 + $0xf0] sm:$0xff]
    %v3137 = vld [vmem:[%s13 + $0xf8] sm:$0xff]
    %v3138 = vld [vmem:[%s14] sm:$0x1]
    %v3140 = vlaneseq
    %v3141 = vshrl.u32 %v3140, 7
    %v3142 = vsub.s32 0, %v3141
    %v3143 = vrot.slane %v3138, %v3142
    %3145 = vmatprep.subr.mxu0 0.0
    %3146 = vmatpush1.msra.mxu0 %v3106
    %3147 = vmatprep.subr.mxu0 0.0
    %3148 = vmatpush1.msra.mxu0 %v3107
    %3149 = vmatprep.subr.mxu0 0.0
    %3150 = vmatpush1.msra.mxu0 %v3108
    %3151 = vmatprep.subr.mxu0 0.0
    %3152 = vmatpush1.msra.mxu0 %v3109
    %3153 = vmatprep.subr.mxu0 0.0
    %3154 = vmatpush1.msra.mxu0 %v3110
    %3155 = vmatprep.subr.mxu0 0.0
    %3156 = vmatpush1.msra.mxu0 %v3111
    %3157 = vmatprep.subr.mxu0 0.0
    %3158 = vmatpush1.msra.mxu0 %v3112
    %3159 = vmatprep.subr.mxu0 0.0
    %3160 = vmatpush1.msra.mxu0 %v3113
    %3161 = vmatprep.subr.mxu0 0.0
    %3162 = vmatpush1.msra.mxu0 %v3114
    %3163 = vmatprep.subr.mxu0 0.0
    %3164 = vmatpush1.msra.mxu0 %v3115
    %3165 = vmatprep.subr.mxu0 0.0
    %3166 = vmatpush1.msra.mxu0 %v3116
    %3167 = vmatprep.subr.mxu0 0.0
    %3168 = vmatpush1.msra.mxu0 %v3117
    %3169 = vmatprep.subr.mxu0 0.0
    %3170 = vmatpush1.msra.mxu0 %v3118
    %3171 = vmatprep.subr.mxu0 0.0
    %3172 = vmatpush1.msra.mxu0 %v3119
    %3173 = vmatprep.subr.mxu0 0.0
    %3174 = vmatpush1.msra.mxu0 %v3120
    %3175 = vmatprep.subr.mxu0 0.0
    %3176 = vmatpush1.msra.mxu0 %v3121
    %3177 = vmatprep.subr.mxu0 0.0
    %3178 = vmatpush1.msra.mxu0 %v3122
    %3179 = vmatprep.subr.mxu0 0.0
    %3180 = vmatpush1.msra.mxu0 %v3123
    %3181 = vmatprep.subr.mxu0 0.0
    %3182 = vmatpush1.msra.mxu0 %v3124
    %3183 = vmatprep.subr.mxu0 0.0
    %3184 = vmatpush1.msra.mxu0 %v3125
    %3185 = vmatprep.subr.mxu0 0.0
    %3186 = vmatpush1.msra.mxu0 %v3126
    %3187 = vmatprep.subr.mxu0 0.0
    %3188 = vmatpush1.msra.mxu0 %v3127
    %3189 = vmatprep.subr.mxu0 0.0
    %3190 = vmatpush1.msra.mxu0 %v3128
    %3191 = vmatprep.subr.mxu0 0.0
    %3192 = vmatpush1.msra.mxu0 %v3129
    %3193 = vmatprep.subr.mxu0 0.0
    %3194 = vmatpush1.msra.mxu0 %v3130
    %3195 = vmatprep.subr.mxu0 0.0
    %3196 = vmatpush1.msra.mxu0 %v3131
    %3197 = vmatprep.subr.mxu0 0.0
    %3198 = vmatpush1.msra.mxu0 %v3132
    %3199 = vmatprep.subr.mxu0 0.0
    %3200 = vmatpush1.msra.mxu0 %v3133
    %3201 = vmatprep.subr.mxu0 0.0
    %3202 = vmatpush1.msra.mxu0 %v3134
    %3203 = vmatprep.subr.mxu0 0.0
    %3204 = vmatpush1.msra.mxu0 %v3135
    %3205 = vmatprep.subr.mxu0 0.0
    %3206 = vmatpush1.msra.mxu0 %v3136
    %3207 = vmatprep.subr.mxu0 0.0
    %3208 = vmatpush1.msra.mxu0 %v3137
    %3209 = vmatprep.mubr.f32.mxu0 %v3100
    %3210 = vmatmul.mubr.f32.gmra.mrb[0].mxu0 %v3094
    %v3211 = vpop.f32.mrb[0].mxu0
    %v3212 = vadd.f32 %v3143, %v3211
    %v3213 = vpop.f32.mrb[0].mxu0
    %3214 = vmatprep.mubr.f32.mxu0 %v3101
    %3215 = vmatmul.mubr.f32.gmra.mrb[0].mxu0 %v3095
    %v3216 = vpop.f32.mrb[0].mxu0
    %v3217 = vadd.f32 %v3143, %v3216
    %v3218 = vpop.f32.mrb[0].mxu0
    %3219 = vmatprep.mubr.f32.mxu0 %v3102
    %3220 = vmatmul.mubr.f32.gmra.mrb[0].mxu0 %v3096
    %v3221 = vpop.f32.mrb[0].mxu0
    %v3222 = vadd.f32 %v3143, %v3221
    %v3223 = vpop.f32.mrb[0].mxu0
    %3224 = vmatprep.mubr.f32.mxu0 %v3103
    %3225 = vmatmul.mubr.f32.gmra.mrb[0].mxu0 %v3097
    %v3226 = vpop.f32.mrb[0].mxu0
    %v3227 = vadd.f32 %v3143, %v3226
    %v3228 = vpop.f32.mrb[0].mxu0
    %3229 = vmatprep.mubr.f32.mxu0 %v3104
    %3230 = vmatmul.mubr.f32.gmra.mrb[0].mxu0 %v3098
    %v3231 = vpop.f32.mrb[0].mxu0
    %v3232 = vadd.f32 %v3143, %v3231
    %v3233 = vpop.f32.mrb[0].mxu0
    %3234 = vmatprep.mubr.f32.mxu0 %v3105
    %3235 = vmatmul.mubr.f32.gmra.mrb[0].mxu0 %v3099
    %v3236 = vpop.f32.mrb[0].mxu0
    %v3237 = vadd.f32 %v3143, %v3236
    %v3238 = vpop.f32.mrb[0].mxu0
    %3239 = vdwg.mxu0
    %v3240 = vadd.f32 %v3212, %v859
    %v3241 = vadd.f32 %v3217, %v860
    %v3242 = vadd.f32 %v3222, %v861
    %v3243 = vadd.f32 %v3227, %v862
    %v3244 = vadd.f32 %v3232, %v863
    %v3245 = vadd.f32 %v3237, %v864
    %v3246 = vld [vmem:[%s15] sm:$0x1]
    %v3247 = vld [vmem:[%s16] sm:$0x1]
    %v3248 = vsel %vm354, %v3240, 0.0
    %3249 = vadd.xlane.f32.xlu0 %v3248
    %v3250 = vpop.xlane.xlu0 %3249
    %v3251 = vsel %vm354, %v3241, 0.0
    %3252 = vadd.xlane.f32.xlu0 %v3251
    %v3253 = vpop.xlane.xlu0 %3252
    %v3254 = vsel %vm354, %v3242, 0.0
    %3255 = vadd.xlane.f32.xlu0 %v3254
    %v3256 = vpop.xlane.xlu0 %3255
    %v3257 = vsel %vm354, %v3243, 0.0
    %3258 = vadd.xlane.f32.xlu0 %v3257
    %v3259 = vpop.xlane.xlu0 %3258
    %v3260 = vsel %vm354, %v3244, 0.0
    %3261 = vadd.xlane.f32.xlu0 %v3260
    %v3262 = vpop.xlane.xlu0 %3261
    %v3263 = vsel %vm354, %v3245, 0.0
    %3264 = vadd.xlane.f32.xlu0 %v3263
    %v3265 = vpop.xlane.xlu0 %3264
    %v3266 = vmul.f32 %v3250, %v780
    %v3267 = vmul.f32 %v3253, %v780
    %v3268 = vmul.f32 %v3256, %v780
    %v3269 = vmul.f32 %v3259, %v780
    %v3270 = vmul.f32 %v3262, %v780
    %v3271 = vmul.f32 %v3265, %v780
    %v3272 = vsub.f32 %v3240, %v3266
    %v3273 = vsub.f32 %v3241, %v3267
    %v3274 = vsub.f32 %v3242, %v3268
    %v3275 = vsub.f32 %v3243, %v3269
    %v3276 = vsub.f32 %v3244, %v3270
    %v3277 = vsub.f32 %v3245, %v3271
    %v3278 = vmul.f32 %v3272, %v3272
    %v3279 = vmul.f32 %v3273, %v3273
    %v3280 = vmul.f32 %v3274, %v3274
    %v3281 = vmul.f32 %v3275, %v3275
    %v3282 = vmul.f32 %v3276, %v3276
    %v3283 = vmul.f32 %v3277, %v3277
    %v3284 = vsel %vm354, %v3278, 0.0
    %3285 = vadd.xlane.f32.xlu0 %v3284
    %v3286 = vpop.xlane.xlu0 %3285
    %v3287 = vsel %vm354, %v3279, 0.0
    %3288 = vadd.xlane.f32.xlu0 %v3287
    %v3289 = vpop.xlane.xlu0 %3288
    %v3290 = vsel %vm354, %v3280, 0.0
    %3291 = vadd.xlane.f32.xlu0 %v3290
    %v3292 = vpop.xlane.xlu0 %3291
    %v3293 = vsel %vm354, %v3281, 0.0
    %3294 = vadd.xlane.f32.xlu0 %v3293
    %v3295 = vpop.xlane.xlu0 %3294
    %v3296 = vsel %vm354, %v3282, 0.0
    %3297 = vadd.xlane.f32.xlu0 %v3296
    %v3298 = vpop.xlane.xlu0 %3297
    %v3299 = vsel %vm354, %v3283, 0.0
    %3300 = vadd.xlane.f32.xlu0 %v3299
    %v3301 = vpop.xlane.xlu0 %3300
    %v3302 = vmul.f32 %v3286, %v780
    %v3303 = vmul.f32 %v3289, %v780
    %v3304 = vmul.f32 %v3292, %v780
    %v3305 = vmul.f32 %v3295, %v780
    %v3306 = vmul.f32 %v3298, %v780
    %v3307 = vmul.f32 %v3301, %v780
    %v3308 = vadd.f32 %v3302, 1e-06
    %v3309 = vadd.f32 %v3303, 1e-06
    %v3310 = vadd.f32 %v3304, 1e-06
    %v3311 = vadd.f32 %v3305, 1e-06
    %v3312 = vadd.f32 %v3306, 1e-06
    %v3313 = vadd.f32 %v3307, 1e-06
    %v3314 = vrsqrt.pop %v3308
    %v3315 = vrsqrt.pop %v3309
    %v3316 = vrsqrt.pop %v3310
    %v3317 = vrsqrt.pop %v3311
    %v3318 = vrsqrt.pop %v3312
    %v3319 = vrsqrt.pop %v3313
    %v3320 = vmul.f32 %v3272, %v3314
    %v3321 = vmul.f32 %v3273, %v3315
    %v3322 = vmul.f32 %v3274, %v3316
    %v3323 = vmul.f32 %v3275, %v3317
    %v3324 = vmul.f32 %v3276, %v3318
    %v3325 = vmul.f32 %v3277, %v3319
    %v3327 = vlaneseq
    %v3328 = vshrl.u32 %v3327, 7
    %v3329 = vsub.s32 0, %v3328
    %v3330 = vrot.slane %v3246, %v3329
    %v3332 = vmul.f32 %v3320, %v3330
    %v3333 = vmul.f32 %v3321, %v3330
    %v3334 = vmul.f32 %v3322, %v3330
    %v3335 = vmul.f32 %v3323, %v3330
    %v3336 = vmul.f32 %v3324, %v3330
    %v3337 = vmul.f32 %v3325, %v3330
    %v3339 = vlaneseq
    %v3340 = vshrl.u32 %v3339, 7
    %v3341 = vsub.s32 0, %v3340
    %v3342 = vrot.slane %v3247, %v3341
    %v3344 = vadd.f32 %v3332, %v3342
    %v3345 = vadd.f32 %v3333, %v3342
    %v3346 = vadd.f32 %v3334, %v3342
    %v3347 = vadd.f32 %v3335, %v3342
    %v3348 = vadd.f32 %v3336, %v3342
    %v3349 = vadd.f32 %v3337, %v3342
    %v3350 = vld [vmem:[%s17] sm:$0xff]
    %v3351 = vld [vmem:[%s17 + $0x8] sm:$0xff]
    %v3352 = vld [vmem:[%s17 + $0x10] sm:$0xff]
    %v3353 = vld [vmem:[%s17 + $0x18] sm:$0xff]
    %v3354 = vld [vmem:[%s18] sm:$0x1]
    %v3356 = vlaneseq
    %v3357 = vshrl.u32 %v3356, 7
    %v3358 = vsub.s32 0, %v3357
    %v3359 = vrot.slane %v3354, %v3358
    %v3362 = vsel %vm354, %v3344, 0
    %v3365 = vsel %vm354, %v3345, 0
    %v3368 = vsel %vm354, %v3346, 0
    %v3371 = vsel %vm354, %v3347, 0
    %v3374 = vsel %vm354, %v3348, 0
    %v3377 = vsel %vm354, %v3349, 0
    %3379 = vmatprep.subr.mxu0 0.0
    %3380 = vmatpush1.msra.mxu0 %v3350
    %3381 = vmatprep.subr.mxu0 0.0
    %3382 = vmatpush1.msra.mxu0 %v3351
    %3383 = vmatprep.subr.mxu0 0.0
    %3384 = vmatpush1.msra.mxu0 %v3352
    %3385 = vmatprep.subr.mxu0 0.0
    %3386 = vmatpush1.msra.mxu0 %v3353
    %3387 = vmatprep.subr.mxu0 0.0
    %3388 = vmatpush1.msra.mxu0 0.0
    %3389 = vmatprep.subr.mxu0 0.0
    %3390 = vmatpush1.msra.mxu0 0.0
    %3391 = vmatprep.subr.mxu0 0.0
    %3392 = vmatpush1.msra.mxu0 0.0
    %3393 = vmatprep.subr.mxu0 0.0
    %3394 = vmatpush1.msra.mxu0 0.0
    %3395 = vmatprep.subr.mxu0 0.0
    %3396 = vmatpush1.msra.mxu0 0.0
    %3397 = vmatprep.subr.mxu0 0.0
    %3398 = vmatpush1.msra.mxu0 0.0
    %3399 = vmatprep.subr.mxu0 0.0
    %3400 = vmatpush1.msra.mxu0 0.0
    %3401 = vmatprep.subr.mxu0 0.0
    %3402 = vmatpush1.msra.mxu0 0.0
    %3403 = vmatprep.subr.mxu0 0.0
    %3404 = vmatpush1.msra.mxu0 0.0
    %3405 = vmatprep.subr.mxu0 0.0
    %3406 = vmatpush1.msra.mxu0 0.0
    %3407 = vmatprep.subr.mxu0 0.0
    %3408 = vmatpush1.msra.mxu0 0.0
    %3409 = vmatprep.subr.mxu0 0.0
    %3410 = vmatpush1.msra.mxu0 0.0
    %3411 = vmatprep.subr.mxu0 0.0
    %3412 = vmatpush1.msra.mxu0 0.0
    %3413 = vmatprep.subr.mxu0 0.0
    %3414 = vmatpush1.msra.mxu0 0.0
    %3415 = vmatprep.subr.mxu0 0.0
    %3416 = vmatpush1.msra.mxu0 0.0
    %3417 = vmatprep.subr.mxu0 0.0
    %3418 = vmatpush1.msra.mxu0 0.0
    %3419 = vmatprep.subr.mxu0 0.0
    %3420 = vmatpush1.msra.mxu0 0.0
    %3421 = vmatprep.subr.mxu0 0.0
    %3422 = vmatpush1.msra.mxu0 0.0
    %3423 = vmatprep.subr.mxu0 0.0
    %3424 = vmatpush1.msra.mxu0 0.0
    %3425 = vmatprep.subr.mxu0 0.0
    %3426 = vmatpush1.msra.mxu0 0.0
    %3427 = vmatprep.subr.mxu0 0.0
    %3428 = vmatpush1.msra.mxu0 0.0
    %3429 = vmatprep.subr.mxu0 0.0
    %3430 = vmatpush1.msra.mxu0 0.0
    %3431 = vmatprep.subr.mxu0 0.0
    %3432 = vmatpush1.msra.mxu0 0.0
    %3433 = vmatprep.subr.mxu0 0.0
    %3434 = vmatpush1.msra.mxu0 0.0
    %3435 = vmatprep.subr.mxu0 0.0
    %3436 = vmatpush1.msra.mxu0 0.0
    %3437 = vmatprep.subr.mxu0 0.0
    %3438 = vmatpush1.msra.mxu0 0.0
    %3439 = vmatprep.subr.mxu0 0.0
    %3440 = vmatpush1.msra.mxu0 0.0
    %3441 = vmatprep.subr.mxu0 0.0
    %3442 = vmatpush1.msra.mxu0 0.0
    %3443 = vmatprep.mubr.f32.mxu0 0.0
    %3444 = vmatmul.mubr.f32.gmra.mrb[0].mxu0 %v3362
    %v3445 = vpop.f32.mrb[0].mxu0
    %v3446 = vadd.f32 %v3359, %v3445
    %v3447 = vpop.f32.mrb[0].mxu0
    %3448 = vmatprep.mubr.f32.mxu0 0.0
    %3449 = vmatmul.mubr.f32.gmra.mrb[0].mxu0 %v3365
    %v3450 = vpop.f32.mrb[0].mxu0
    %v3451 = vadd.f32 %v3359, %v3450
    %v3452 = vpop.f32.mrb[0].mxu0
    %3453 = vmatprep.mubr.f32.mxu0 0.0
    %3454 = vmatmul.mubr.f32.gmra.mrb[0].mxu0 %v3368
    %v3455 = vpop.f32.mrb[0].mxu0
    %v3456 = vadd.f32 %v3359, %v3455
    %v3457 = vpop.f32.mrb[0].mxu0
    %3458 = vmatprep.mubr.f32.mxu0 0.0
    %3459 = vmatmul.mubr.f32.gmra.mrb[0].mxu0 %v3371
    %v3460 = vpop.f32.mrb[0].mxu0
    %v3461 = vadd.f32 %v3359, %v3460
    %v3462 = vpop.f32.mrb[0].mxu0
    %3463 = vmatprep.mubr.f32.mxu0 0.0
    %3464 = vmatmul.mubr.f32.gmra.mrb[0].mxu0 %v3374
    %v3465 = vpop.f32.mrb[0].mxu0
    %v3466 = vadd.f32 %v3359, %v3465
    %v3467 = vpop.f32.mrb[0].mxu0
    %3468 = vmatprep.mubr.f32.mxu0 0.0
    %3469 = vmatmul.mubr.f32.gmra.mrb[0].mxu0 %v3377
    %v3470 = vpop.f32.mrb[0].mxu0
    %v3471 = vadd.f32 %v3359, %v3470
    %v3472 = vpop.f32.mrb[0].mxu0
    %3473 = vdwg.mxu0
    %v3474 = vmul.f32 %v3446, 0.5
    %v3475 = vmul.f32 %v3451, 0.5
    %v3476 = vmul.f32 %v3456, 0.5
    %v3477 = vmul.f32 %v3461, 0.5
    %v3478 = vmul.f32 %v3466, 0.5
    %v3479 = vmul.f32 %v3471, 0.5
    %v3480 = vmul.f32 %v3446, 0.70710677
    %v3481 = vmul.f32 %v3451, 0.70710677
    %v3482 = vmul.f32 %v3456, 0.70710677
    %v3483 = vmul.f32 %v3461, 0.70710677
    %v3484 = vmul.f32 %v3466, 0.70710677
    %v3485 = vmul.f32 %v3471, 0.70710677
    %vm3486 = vcmp.ge.f32.partialorder %v3480, 0.0
    %vm3487 = vcmp.ge.f32.partialorder %v3481, 0.0
    %vm3488 = vcmp.ge.f32.partialorder %v3482, 0.0
    %vm3489 = vcmp.ge.f32.partialorder %v3483, 0.0
    %vm3490 = vcmp.ge.f32.partialorder %v3484, 0.0
    %vm3491 = vcmp.ge.f32.partialorder %v3485, 0.0
    %v3492 = vsel %vm3486, 1.0, -1.0
    %v3493 = vsel %vm3487, 1.0, -1.0
    %v3494 = vsel %vm3488, 1.0, -1.0
    %v3495 = vsel %vm3489, 1.0, -1.0
    %v3496 = vsel %vm3490, 1.0, -1.0
    %v3497 = vsel %vm3491, 1.0, -1.0
    %v3498 = vand.u32 2147483647, %v3480
    %v3499 = vand.u32 2147483647, %v3481
    %v3500 = vand.u32 2147483647, %v3482
    %v3501 = vand.u32 2147483647, %v3483
    %v3502 = vand.u32 2147483647, %v3484
    %v3503 = vand.u32 2147483647, %v3485
    %v3504 = vmul.f32 %v3498, 0.3275911
    %v3505 = vmul.f32 %v3499, 0.3275911
    %v3506 = vmul.f32 %v3500, 0.3275911
    %v3507 = vmul.f32 %v3501, 0.3275911
    %v3508 = vmul.f32 %v3502, 0.3275911
    %v3509 = vmul.f32 %v3503, 0.3275911
    %v3510 = vadd.f32 %v3504, 1.0
    %v3511 = vadd.f32 %v3505, 1.0
    %v3512 = vadd.f32 %v3506, 1.0
    %v3513 = vadd.f32 %v3507, 1.0
    %v3514 = vadd.f32 %v3508, 1.0
    %v3515 = vadd.f32 %v3509, 1.0
    %v3516 = vrcp.pop %v3510
    %v3517 = vmul.f32 1.0, %v3516
    %v3518 = vrcp.pop %v3511
    %v3519 = vmul.f32 1.0, %v3518
    %v3520 = vrcp.pop %v3512
    %v3521 = vmul.f32 1.0, %v3520
    %v3522 = vrcp.pop %v3513
    %v3523 = vmul.f32 1.0, %v3522
    %v3524 = vrcp.pop %v3514
    %v3525 = vmul.f32 1.0, %v3524
    %v3526 = vrcp.pop %v3515
    %v3527 = vmul.f32 1.0, %v3526
    %v3528 = vmul.f32 %v3517, 1.0614054
    %v3529 = vmul.f32 %v3519, 1.0614054
    %v3530 = vmul.f32 %v3521, 1.0614054
    %v3531 = vmul.f32 %v3523, 1.0614054
    %v3532 = vmul.f32 %v3525, 1.0614054
    %v3533 = vmul.f32 %v3527, 1.0614054
    %v3534 = vadd.f32 %v3528, -1.4531521
    %v3535 = vadd.f32 %v3529, -1.4531521
    %v3536 = vadd.f32 %v3530, -1.4531521
    %v3537 = vadd.f32 %v3531, -1.4531521
    %v3538 = vadd.f32 %v3532, -1.4531521
    %v3539 = vadd.f32 %v3533, -1.4531521
    %v3540 = vmul.f32 %v3534, %v3517
    %v3541 = vmul.f32 %v3535, %v3519
    %v3542 = vmul.f32 %v3536, %v3521
    %v3543 = vmul.f32 %v3537, %v3523
    %v3544 = vmul.f32 %v3538, %v3525
    %v3545 = vmul.f32 %v3539, %v3527
    %v3546 = vadd.f32 %v3540, 1.4214138
    %v3547 = vadd.f32 %v3541, 1.4214138
    %v3548 = vadd.f32 %v3542, 1.4214138
    %v3549 = vadd.f32 %v3543, 1.4214138
    %v3550 = vadd.f32 %v3544, 1.4214138
    %v3551 = vadd.f32 %v3545, 1.4214138
    %v3552 = vmul.f32 %v3546, %v3517
    %v3553 = vmul.f32 %v3547, %v3519
    %v3554 = vmul.f32 %v3548, %v3521
    %v3555 = vmul.f32 %v3549, %v3523
    %v3556 = vmul.f32 %v3550, %v3525
    %v3557 = vmul.f32 %v3551, %v3527
    %v3558 = vadd.f32 %v3552, -0.28449672
    %v3559 = vadd.f32 %v3553, -0.28449672
    %v3560 = vadd.f32 %v3554, -0.28449672
    %v3561 = vadd.f32 %v3555, -0.28449672
    %v3562 = vadd.f32 %v3556, -0.28449672
    %v3563 = vadd.f32 %v3557, -0.28449672
    %v3564 = vmul.f32 %v3558, %v3517
    %v3565 = vmul.f32 %v3559, %v3519
    %v3566 = vmul.f32 %v3560, %v3521
    %v3567 = vmul.f32 %v3561, %v3523
    %v3568 = vmul.f32 %v3562, %v3525
    %v3569 = vmul.f32 %v3563, %v3527
    %v3570 = vadd.f32 %v3564, 0.2548296
    %v3571 = vadd.f32 %v3565, 0.2548296
    %v3572 = vadd.f32 %v3566, 0.2548296
    %v3573 = vadd.f32 %v3567, 0.2548296
    %v3574 = vadd.f32 %v3568, 0.2548296
    %v3575 = vadd.f32 %v3569, 0.2548296
    %v3576 = vmul.f32 %v3570, %v3517
    %v3577 = vmul.f32 %v3571, %v3519
    %v3578 = vmul.f32 %v3572, %v3521
    %v3579 = vmul.f32 %v3573, %v3523
    %v3580 = vmul.f32 %v3574, %v3525
    %v3581 = vmul.f32 %v3575, %v3527
    %v3582 = vsub.f32 0.0, %v3498
    %v3583 = vsub.f32 0.0, %v3499
    %v3584 = vsub.f32 0.0, %v3500
    %v3585 = vsub.f32 0.0, %v3501
    %v3586 = vsub.f32 0.0, %v3502
    %v3587 = vsub.f32 0.0, %v3503
    %v3588 = vmul.f32 %v3582, %v3498
    %v3589 = vmul.f32 %v3583, %v3499
    %v3590 = vmul.f32 %v3584, %v3500
    %v3591 = vmul.f32 %v3585, %v3501
    %v3592 = vmul.f32 %v3586, %v3502
    %v3593 = vmul.f32 %v3587, %v3503
    %v3594 = vmul.f32 %v3588, 1.442695
    %v3595 = vpow.pop %v3594
    %v3596 = vmul.f32 %v3589, 1.442695
    %v3597 = vpow.pop %v3596
    %v3598 = vmul.f32 %v3590, 1.442695
    %v3599 = vpow.pop %v3598
    %v3600 = vmul.f32 %v3591, 1.442695
    %v3601 = vpow.pop %v3600
    %v3602 = vmul.f32 %v3592, 1.442695
    %v3603 = vpow.pop %v3602
    %v3604 = vmul.f32 %v3593, 1.442695
    %v3605 = vpow.pop %v3604
    %v3606 = vmul.f32 %v3576, %v3595
    %v3607 = vmul.f32 %v3577, %v3597
    %v3608 = vmul.f32 %v3578, %v3599
    %v3609 = vmul.f32 %v3579, %v3601
    %v3610 = vmul.f32 %v3580, %v3603
    %v3611 = vmul.f32 %v3581, %v3605
    %v3612 = vsub.f32 1.0, %v3606
    %v3613 = vsub.f32 1.0, %v3607
    %v3614 = vsub.f32 1.0, %v3608
    %v3615 = vsub.f32 1.0, %v3609
    %v3616 = vsub.f32 1.0, %v3610
    %v3617 = vsub.f32 1.0, %v3611
    %v3618 = vmul.f32 %v3492, %v3612
    %v3619 = vmul.f32 %v3493, %v3613
    %v3620 = vmul.f32 %v3494, %v3614
    %v3621 = vmul.f32 %v3495, %v3615
    %v3622 = vmul.f32 %v3496, %v3616
    %v3623 = vmul.f32 %v3497, %v3617
    %v3624 = vadd.f32 %v3618, 1.0
    %v3625 = vadd.f32 %v3619, 1.0
    %v3626 = vadd.f32 %v3620, 1.0
    %v3627 = vadd.f32 %v3621, 1.0
    %v3628 = vadd.f32 %v3622, 1.0
    %v3629 = vadd.f32 %v3623, 1.0
    %v3630 = vmul.f32 %v3474, %v3624
    %v3631 = vmul.f32 %v3475, %v3625
    %v3632 = vmul.f32 %v3476, %v3626
    %v3633 = vmul.f32 %v3477, %v3627
    %v3634 = vmul.f32 %v3478, %v3628
    %v3635 = vmul.f32 %v3479, %v3629
    %v3636 = vld [vmem:[%s19] sm:$0xff]
    %v3637 = vld [vmem:[%s19 + $0x8] sm:$0xff]
    %v3638 = vld [vmem:[%s19 + $0x10] sm:$0xff]
    %v3639 = vld [vmem:[%s19 + $0x18] sm:$0xff]
    %v3640 = vld [vmem:[%s20] sm:$0x1]
    %v3642 = vlaneseq
    %v3643 = vshrl.u32 %v3642, 7
    %v3644 = vsub.s32 0, %v3643
    %v3645 = vrot.slane %v3640, %v3644
    %v3648 = vsel %vm354, %v3630, 0
    %v3651 = vsel %vm354, %v3631, 0
    %v3654 = vsel %vm354, %v3632, 0
    %v3657 = vsel %vm354, %v3633, 0
    %v3660 = vsel %vm354, %v3634, 0
    %v3663 = vsel %vm354, %v3635, 0
    %3665 = vmatprep.subr.mxu0 0.0
    %3666 = vmatpush1.msra.mxu0 %v3636
    %3667 = vmatprep.subr.mxu0 0.0
    %3668 = vmatpush1.msra.mxu0 %v3637
    %3669 = vmatprep.subr.mxu0 0.0
    %3670 = vmatpush1.msra.mxu0 %v3638
    %3671 = vmatprep.subr.mxu0 0.0
    %3672 = vmatpush1.msra.mxu0 %v3639
    %3673 = vmatprep.subr.mxu0 0.0
    %3674 = vmatpush1.msra.mxu0 0.0
    %3675 = vmatprep.subr.mxu0 0.0
    %3676 = vmatpush1.msra.mxu0 0.0
    %3677 = vmatprep.subr.mxu0 0.0
    %3678 = vmatpush1.msra.mxu0 0.0
    %3679 = vmatprep.subr.mxu0 0.0
    %3680 = vmatpush1.msra.mxu0 0.0
    %3681 = vmatprep.subr.mxu0 0.0
    %3682 = vmatpush1.msra.mxu0 0.0
    %3683 = vmatprep.subr.mxu0 0.0
    %3684 = vmatpush1.msra.mxu0 0.0
    %3685 = vmatprep.subr.mxu0 0.0
    %3686 = vmatpush1.msra.mxu0 0.0
    %3687 = vmatprep.subr.mxu0 0.0
    %3688 = vmatpush1.msra.mxu0 0.0
    %3689 = vmatprep.subr.mxu0 0.0
    %3690 = vmatpush1.msra.mxu0 0.0
    %3691 = vmatprep.subr.mxu0 0.0
    %3692 = vmatpush1.msra.mxu0 0.0
    %3693 = vmatprep.subr.mxu0 0.0
    %3694 = vmatpush1.msra.mxu0 0.0
    %3695 = vmatprep.subr.mxu0 0.0
    %3696 = vmatpush1.msra.mxu0 0.0
    %3697 = vmatprep.subr.mxu0 0.0
    %3698 = vmatpush1.msra.mxu0 0.0
    %3699 = vmatprep.subr.mxu0 0.0
    %3700 = vmatpush1.msra.mxu0 0.0
    %3701 = vmatprep.subr.mxu0 0.0
    %3702 = vmatpush1.msra.mxu0 0.0
    %3703 = vmatprep.subr.mxu0 0.0
    %3704 = vmatpush1.msra.mxu0 0.0
    %3705 = vmatprep.subr.mxu0 0.0
    %3706 = vmatpush1.msra.mxu0 0.0
    %3707 = vmatprep.subr.mxu0 0.0
    %3708 = vmatpush1.msra.mxu0 0.0
    %3709 = vmatprep.subr.mxu0 0.0
    %3710 = vmatpush1.msra.mxu0 0.0
    %3711 = vmatprep.subr.mxu0 0.0
    %3712 = vmatpush1.msra.mxu0 0.0
    %3713 = vmatprep.subr.mxu0 0.0
    %3714 = vmatpush1.msra.mxu0 0.0
    %3715 = vmatprep.subr.mxu0 0.0
    %3716 = vmatpush1.msra.mxu0 0.0
    %3717 = vmatprep.subr.mxu0 0.0
    %3718 = vmatpush1.msra.mxu0 0.0
    %3719 = vmatprep.subr.mxu0 0.0
    %3720 = vmatpush1.msra.mxu0 0.0
    %3721 = vmatprep.subr.mxu0 0.0
    %3722 = vmatpush1.msra.mxu0 0.0
    %3723 = vmatprep.subr.mxu0 0.0
    %3724 = vmatpush1.msra.mxu0 0.0
    %3725 = vmatprep.subr.mxu0 0.0
    %3726 = vmatpush1.msra.mxu0 0.0
    %3727 = vmatprep.subr.mxu0 0.0
    %3728 = vmatpush1.msra.mxu0 0.0
    %3729 = vmatprep.mubr.f32.mxu0 0.0
    %3730 = vmatmul.mubr.f32.gmra.mrb[0].mxu0 %v3648
    %v3731 = vpop.f32.mrb[0].mxu0
    %v3732 = vadd.f32 %v3645, %v3731
    %v3733 = vpop.f32.mrb[0].mxu0
    %3734 = vmatprep.mubr.f32.mxu0 0.0
    %3735 = vmatmul.mubr.f32.gmra.mrb[0].mxu0 %v3651
    %v3736 = vpop.f32.mrb[0].mxu0
    %v3737 = vadd.f32 %v3645, %v3736
    %v3738 = vpop.f32.mrb[0].mxu0
    %3739 = vmatprep.mubr.f32.mxu0 0.0
    %3740 = vmatmul.mubr.f32.gmra.mrb[0].mxu0 %v3654
    %v3741 = vpop.f32.mrb[0].mxu0
    %v3742 = vadd.f32 %v3645, %v3741
    %v3743 = vpop.f32.mrb[0].mxu0
    %3744 = vmatprep.mubr.f32.mxu0 0.0
    %3745 = vmatmul.mubr.f32.gmra.mrb[0].mxu0 %v3657
    %v3746 = vpop.f32.mrb[0].mxu0
    %v3747 = vadd.f32 %v3645, %v3746
    %v3748 = vpop.f32.mrb[0].mxu0
    %3749 = vmatprep.mubr.f32.mxu0 0.0
    %3750 = vmatmul.mubr.f32.gmra.mrb[0].mxu0 %v3660
    %v3751 = vpop.f32.mrb[0].mxu0
    %v3752 = vadd.f32 %v3645, %v3751
    %v3753 = vpop.f32.mrb[0].mxu0
    %3754 = vmatprep.mubr.f32.mxu0 0.0
    %3755 = vmatmul.mubr.f32.gmra.mrb[0].mxu0 %v3663
    %v3756 = vpop.f32.mrb[0].mxu0
    %v3757 = vadd.f32 %v3645, %v3756
    %v3758 = vpop.f32.mrb[0].mxu0
    %3759 = vdwg.mxu0
    %v3760 = vadd.f32 %v3732, %v3344
    %v3761 = vadd.f32 %v3737, %v3345
    %v3762 = vadd.f32 %v3742, %v3346
    %v3763 = vadd.f32 %v3747, %v3347
    %v3764 = vadd.f32 %v3752, %v3348
    %v3765 = vadd.f32 %v3757, %v3349
    %v3766 = vld [vmem:[%s21] sm:$0x1]
    %v3767 = vld [vmem:[%s22] sm:$0x1]
    %v3768 = vsel %vm354, %v3760, 0.0
    %3769 = vadd.xlane.f32.xlu0 %v3768
    %v3770 = vpop.xlane.xlu0 %3769
    %v3771 = vsel %vm354, %v3761, 0.0
    %3772 = vadd.xlane.f32.xlu0 %v3771
    %v3773 = vpop.xlane.xlu0 %3772
    %v3774 = vsel %vm354, %v3762, 0.0
    %3775 = vadd.xlane.f32.xlu0 %v3774
    %v3776 = vpop.xlane.xlu0 %3775
    %v3777 = vsel %vm354, %v3763, 0.0
    %3778 = vadd.xlane.f32.xlu0 %v3777
    %v3779 = vpop.xlane.xlu0 %3778
    %v3780 = vsel %vm354, %v3764, 0.0
    %3781 = vadd.xlane.f32.xlu0 %v3780
    %v3782 = vpop.xlane.xlu0 %3781
    %v3783 = vsel %vm354, %v3765, 0.0
    %3784 = vadd.xlane.f32.xlu0 %v3783
    %v3785 = vpop.xlane.xlu0 %3784
    %v3786 = vmul.f32 %v3770, %v780
    %v3787 = vmul.f32 %v3773, %v780
    %v3788 = vmul.f32 %v3776, %v780
    %v3789 = vmul.f32 %v3779, %v780
    %v3790 = vmul.f32 %v3782, %v780
    %v3791 = vmul.f32 %v3785, %v780
    %v3792 = vsub.f32 %v3760, %v3786
    %v3793 = vsub.f32 %v3761, %v3787
    %v3794 = vsub.f32 %v3762, %v3788
    %v3795 = vsub.f32 %v3763, %v3789
    %v3796 = vsub.f32 %v3764, %v3790
    %v3797 = vsub.f32 %v3765, %v3791
    %v3798 = vmul.f32 %v3792, %v3792
    %v3799 = vmul.f32 %v3793, %v3793
    %v3800 = vmul.f32 %v3794, %v3794
    %v3801 = vmul.f32 %v3795, %v3795
    %v3802 = vmul.f32 %v3796, %v3796
    %v3803 = vmul.f32 %v3797, %v3797
    %v3804 = vsel %vm354, %v3798, 0.0
    %3805 = vadd.xlane.f32.xlu0 %v3804
    %v3806 = vpop.xlane.xlu0 %3805
    %v3807 = vsel %vm354, %v3799, 0.0
    %3808 = vadd.xlane.f32.xlu0 %v3807
    %v3809 = vpop.xlane.xlu0 %3808
    %v3810 = vsel %vm354, %v3800, 0.0
    %3811 = vadd.xlane.f32.xlu0 %v3810
    %v3812 = vpop.xlane.xlu0 %3811
    %v3813 = vsel %vm354, %v3801, 0.0
    %3814 = vadd.xlane.f32.xlu0 %v3813
    %v3815 = vpop.xlane.xlu0 %3814
    %v3816 = vsel %vm354, %v3802, 0.0
    %3817 = vadd.xlane.f32.xlu0 %v3816
    %v3818 = vpop.xlane.xlu0 %3817
    %v3819 = vsel %vm354, %v3803, 0.0
    %3820 = vadd.xlane.f32.xlu0 %v3819
    %v3821 = vpop.xlane.xlu0 %3820
    %v3822 = vmul.f32 %v3806, %v780
    %v3823 = vmul.f32 %v3809, %v780
    %v3824 = vmul.f32 %v3812, %v780
    %v3825 = vmul.f32 %v3815, %v780
    %v3826 = vmul.f32 %v3818, %v780
    %v3827 = vmul.f32 %v3821, %v780
    %v3828 = vadd.f32 %v3822, 1e-06
    %v3829 = vadd.f32 %v3823, 1e-06
    %v3830 = vadd.f32 %v3824, 1e-06
    %v3831 = vadd.f32 %v3825, 1e-06
    %v3832 = vadd.f32 %v3826, 1e-06
    %v3833 = vadd.f32 %v3827, 1e-06
    %v3834 = vrsqrt.pop %v3828
    %v3835 = vrsqrt.pop %v3829
    %v3836 = vrsqrt.pop %v3830
    %v3837 = vrsqrt.pop %v3831
    %v3838 = vrsqrt.pop %v3832
    %v3839 = vrsqrt.pop %v3833
    %v3840 = vmul.f32 %v3792, %v3834
    %v3841 = vmul.f32 %v3793, %v3835
    %v3842 = vmul.f32 %v3794, %v3836
    %v3843 = vmul.f32 %v3795, %v3837
    %v3844 = vmul.f32 %v3796, %v3838
    %v3845 = vmul.f32 %v3797, %v3839
    %v3847 = vlaneseq
    %v3848 = vshrl.u32 %v3847, 7
    %v3849 = vsub.s32 0, %v3848
    %v3850 = vrot.slane %v3766, %v3849
    %v3852 = vmul.f32 %v3840, %v3850
    %v3853 = vmul.f32 %v3841, %v3850
    %v3854 = vmul.f32 %v3842, %v3850
    %v3855 = vmul.f32 %v3843, %v3850
    %v3856 = vmul.f32 %v3844, %v3850
    %v3857 = vmul.f32 %v3845, %v3850
    %v3859 = vlaneseq
    %v3860 = vshrl.u32 %v3859, 7
    %v3861 = vsub.s32 0, %v3860
    %v3862 = vrot.slane %v3767, %v3861
    %v3864 = vadd.f32 %v3852, %v3862
    %v3865 = vadd.f32 %v3853, %v3862
    %v3866 = vadd.f32 %v3854, %v3862
    %v3867 = vadd.f32 %v3855, %v3862
    %v3868 = vadd.f32 %v3856, %v3862
    %v3869 = vadd.f32 %v3857, %v3862
    %s3870 = scalar_lea.vmem %s12, 192
    %v3871 = vld [vmem:[%s3870] sm:$0xff]
    %v3872 = vld [vmem:[%s3870 + $0x8] sm:$0xff]
    %v3873 = vld [vmem:[%s3870 + $0x10] sm:$0xff]
    %v3874 = vld [vmem:[%s3870 + $0x18] sm:$0xff]
    %v3875 = vld [vmem:[%s3870 + $0x20] sm:$0xff]
    %v3876 = vld [vmem:[%s3870 + $0x28] sm:$0xff]
    %v3877 = vld [vmem:[%s3870 + $0x30] sm:$0xff]
    %v3878 = vld [vmem:[%s3870 + $0x38] sm:$0xff]
    %v3879 = vld [vmem:[%s3870 + $0x40] sm:$0xff]
    %v3880 = vld [vmem:[%s3870 + $0x48] sm:$0xff]
    %v3881 = vld [vmem:[%s3870 + $0x50] sm:$0xff]
    %v3882 = vld [vmem:[%s3870 + $0x58] sm:$0xff]
    %v3883 = vld [vmem:[%s3870 + $0x60] sm:$0xff]
    %v3884 = vld [vmem:[%s3870 + $0x68] sm:$0xff]
    %v3885 = vld [vmem:[%s3870 + $0x70] sm:$0xff]
    %v3886 = vld [vmem:[%s3870 + $0x78] sm:$0xff]
    %v3887 = vld [vmem:[%s3870 + $0x80] sm:$0xff]
    %v3888 = vld [vmem:[%s3870 + $0x88] sm:$0xff]
    %v3889 = vld [vmem:[%s3870 + $0x90] sm:$0xff]
    %v3890 = vld [vmem:[%s3870 + $0x98] sm:$0xff]
    %v3891 = vld [vmem:[%s3870 + $0xa0] sm:$0xff]
    %v3892 = vld [vmem:[%s3870 + $0xa8] sm:$0xff]
    %v3893 = vld [vmem:[%s3870 + $0xb0] sm:$0xff]
    %v3894 = vld [vmem:[%s3870 + $0xb8] sm:$0xff]
    %v3896 = vsel %vm354, %v3864, 0
    %v3899 = vsel %vm354, %v3865, 0
    %v3902 = vsel %vm354, %v3866, 0
    %v3905 = vsel %vm354, %v3867, 0
    %v3908 = vsel %vm354, %v3868, 0
    %v3911 = vsel %vm354, %v3869, 0
    %3913 = vmatprep.subr.mxu0 %v3872
    %3914 = vmatpush1.msra.mxu0 %v3871
    %3915 = vmatprep.subr.mxu0 %v3878
    %3916 = vmatpush1.msra.mxu0 %v3877
    %3917 = vmatprep.subr.mxu0 %v3884
    %3918 = vmatpush1.msra.mxu0 %v3883
    %3919 = vmatprep.subr.mxu0 %v3890
    %3920 = vmatpush1.msra.mxu0 %v3889
    %3921 = vmatprep.subr.mxu0 0.0
    %3922 = vmatpush1.msra.mxu0 0.0
    %3923 = vmatprep.subr.mxu0 0.0
    %3924 = vmatpush1.msra.mxu0 0.0
    %3925 = vmatprep.subr.mxu0 0.0
    %3926 = vmatpush1.msra.mxu0 0.0
    %3927 = vmatprep.subr.mxu0 0.0
    %3928 = vmatpush1.msra.mxu0 0.0
    %3929 = vmatprep.subr.mxu0 0.0
    %3930 = vmatpush1.msra.mxu0 0.0
    %3931 = vmatprep.subr.mxu0 0.0
    %3932 = vmatpush1.msra.mxu0 0.0
    %3933 = vmatprep.subr.mxu0 0.0
    %3934 = vmatpush1.msra.mxu0 0.0
    %3935 = vmatprep.subr.mxu0 0.0
    %3936 = vmatpush1.msra.mxu0 0.0
    %3937 = vmatprep.subr.mxu0 0.0
    %3938 = vmatpush1.msra.mxu0 0.0
    %3939 = vmatprep.subr.mxu0 0.0
    %3940 = vmatpush1.msra.mxu0 0.0
    %3941 = vmatprep.subr.mxu0 0.0
    %3942 = vmatpush1.msra.mxu0 0.0
    %3943 = vmatprep.subr.mxu0 0.0
    %3944 = vmatpush1.msra.mxu0 0.0
    %3945 = vmatprep.subr.mxu0 0.0
    %3946 = vmatpush1.msra.mxu0 0.0
    %3947 = vmatprep.subr.mxu0 0.0
    %3948 = vmatpush1.msra.mxu0 0.0
    %3949 = vmatprep.subr.mxu0 0.0
    %3950 = vmatpush1.msra.mxu0 0.0
    %3951 = vmatprep.subr.mxu0 0.0
    %3952 = vmatpush1.msra.mxu0 0.0
    %3953 = vmatprep.subr.mxu0 0.0
    %3954 = vmatpush1.msra.mxu0 0.0
    %3955 = vmatprep.subr.mxu0 0.0
    %3956 = vmatpush1.msra.mxu0 0.0
    %3957 = vmatprep.subr.mxu0 0.0
    %3958 = vmatpush1.msra.mxu0 0.0
    %3959 = vmatprep.subr.mxu0 0.0
    %3960 = vmatpush1.msra.mxu0 0.0
    %3961 = vmatprep.subr.mxu0 0.0
    %3962 = vmatpush1.msra.mxu0 0.0
    %3963 = vmatprep.subr.mxu0 0.0
    %3964 = vmatpush1.msra.mxu0 0.0
    %3965 = vmatprep.subr.mxu0 0.0
    %3966 = vmatpush1.msra.mxu0 0.0
    %3967 = vmatprep.subr.mxu0 0.0
    %3968 = vmatpush1.msra.mxu0 0.0
    %3969 = vmatprep.subr.mxu0 0.0
    %3970 = vmatpush1.msra.mxu0 0.0
    %3971 = vmatprep.subr.mxu0 0.0
    %3972 = vmatpush1.msra.mxu0 0.0
    %3973 = vmatprep.subr.mxu0 0.0
    %3974 = vmatpush1.msra.mxu0 0.0
    %3975 = vmatprep.subr.mxu0 0.0
    %3976 = vmatpush1.msra.mxu0 0.0
    %3977 = vmatprep.mubr.f32.mxu0 0.0
    %3978 = vmatmul.mubr.f32.gmra.mrb[0].mxu0 %v3896
    %v3979 = vpop.f32.mrb[0].mxu0
    %v3980 = vadd.f32 0.0, %v3979
    %v3981 = vpop.f32.mrb[0].mxu0
    %v3982 = vadd.f32 0.0, %v3981
    %3983 = vmatprep.mubr.f32.mxu0 0.0
    %3984 = vmatmul.mubr.f32.gmra.mrb[0].mxu0 %v3899
    %v3985 = vpop.f32.mrb[0].mxu0
    %v3986 = vadd.f32 0.0, %v3985
    %v3987 = vpop.f32.mrb[0].mxu0
    %v3988 = vadd.f32 0.0, %v3987
    %3989 = vmatprep.mubr.f32.mxu0 0.0
    %3990 = vmatmul.mubr.f32.gmra.mrb[0].mxu0 %v3902
    %v3991 = vpop.f32.mrb[0].mxu0
    %v3992 = vadd.f32 0.0, %v3991
    %v3993 = vpop.f32.mrb[0].mxu0
    %v3994 = vadd.f32 0.0, %v3993
    %3995 = vmatprep.mubr.f32.mxu0 0.0
    %3996 = vmatmul.mubr.f32.gmra.mrb[0].mxu0 %v3905
    %v3997 = vpop.f32.mrb[0].mxu0
    %v3998 = vadd.f32 0.0, %v3997
    %v3999 = vpop.f32.mrb[0].mxu0
    %v4000 = vadd.f32 0.0, %v3999
    %4001 = vmatprep.mubr.f32.mxu0 0.0
    %4002 = vmatmul.mubr.f32.gmra.mrb[0].mxu0 %v3908
    %v4003 = vpop.f32.mrb[0].mxu0
    %v4004 = vadd.f32 0.0, %v4003
    %v4005 = vpop.f32.mrb[0].mxu0
    %v4006 = vadd.f32 0.0, %v4005
    %4007 = vmatprep.mubr.f32.mxu0 0.0
    %4008 = vmatmul.mubr.f32.gmra.mrb[0].mxu0 %v3911
    %v4009 = vpop.f32.mrb[0].mxu0
    %v4010 = vadd.f32 0.0, %v4009
    %v4011 = vpop.f32.mrb[0].mxu0
    %v4012 = vadd.f32 0.0, %v4011
    %4013 = vdwg.mxu0
    %4014 = vmatprep.subr.mxu0 %v3874
    %4015 = vmatpush1.msra.mxu0 %v3873
    %4016 = vmatprep.subr.mxu0 %v3880
    %4017 = vmatpush1.msra.mxu0 %v3879
    %4018 = vmatprep.subr.mxu0 %v3886
    %4019 = vmatpush1.msra.mxu0 %v3885
    %4020 = vmatprep.subr.mxu0 %v3892
    %4021 = vmatpush1.msra.mxu0 %v3891
    %4022 = vmatprep.subr.mxu0 0.0
    %4023 = vmatpush1.msra.mxu0 0.0
    %4024 = vmatprep.subr.mxu0 0.0
    %4025 = vmatpush1.msra.mxu0 0.0
    %4026 = vmatprep.subr.mxu0 0.0
    %4027 = vmatpush1.msra.mxu0 0.0
    %4028 = vmatprep.subr.mxu0 0.0
    %4029 = vmatpush1.msra.mxu0 0.0
    %4030 = vmatprep.subr.mxu0 0.0
    %4031 = vmatpush1.msra.mxu0 0.0
    %4032 = vmatprep.subr.mxu0 0.0
    %4033 = vmatpush1.msra.mxu0 0.0
    %4034 = vmatprep.subr.mxu0 0.0
    %4035 = vmatpush1.msra.mxu0 0.0
    %4036 = vmatprep.subr.mxu0 0.0
    %4037 = vmatpush1.msra.mxu0 0.0
    %4038 = vmatprep.subr.mxu0 0.0
    %4039 = vmatpush1.msra.mxu0 0.0
    %4040 = vmatprep.subr.mxu0 0.0
    %4041 = vmatpush1.msra.mxu0 0.0
    %4042 = vmatprep.subr.mxu0 0.0
    %4043 = vmatpush1.msra.mxu0 0.0
    %4044 = vmatprep.subr.mxu0 0.0
    %4045 = vmatpush1.msra.mxu0 0.0
    %4046 = vmatprep.subr.mxu0 0.0
    %4047 = vmatpush1.msra.mxu0 0.0
    %4048 = vmatprep.subr.mxu0 0.0
    %4049 = vmatpush1.msra.mxu0 0.0
    %4050 = vmatprep.subr.mxu0 0.0
    %4051 = vmatpush1.msra.mxu0 0.0
    %4052 = vmatprep.subr.mxu0 0.0
    %4053 = vmatpush1.msra.mxu0 0.0
    %4054 = vmatprep.subr.mxu0 0.0
    %4055 = vmatpush1.msra.mxu0 0.0
    %4056 = vmatprep.subr.mxu0 0.0
    %4057 = vmatpush1.msra.mxu0 0.0
    %4058 = vmatprep.subr.mxu0 0.0
    %4059 = vmatpush1.msra.mxu0 0.0
    %4060 = vmatprep.subr.mxu0 0.0
    %4061 = vmatpush1.msra.mxu0 0.0
    %4062 = vmatprep.subr.mxu0 0.0
    %4063 = vmatpush1.msra.mxu0 0.0
    %4064 = vmatprep.subr.mxu0 0.0
    %4065 = vmatpush1.msra.mxu0 0.0
    %4066 = vmatprep.subr.mxu0 0.0
    %4067 = vmatpush1.msra.mxu0 0.0
    %4068 = vmatprep.subr.mxu0 0.0
    %4069 = vmatpush1.msra.mxu0 0.0
    %4070 = vmatprep.subr.mxu0 0.0
    %4071 = vmatpush1.msra.mxu0 0.0
    %4072 = vmatprep.subr.mxu0 0.0
    %4073 = vmatpush1.msra.mxu0 0.0
    %4074 = vmatprep.subr.mxu0 0.0
    %4075 = vmatpush1.msra.mxu0 0.0
    %4076 = vmatprep.subr.mxu0 0.0
    %4077 = vmatpush1.msra.mxu0 0.0
    %4078 = vmatprep.mubr.f32.mxu0 0.0
    %4079 = vmatmul.mubr.f32.gmra.mrb[0].mxu0 %v3896
    %v4080 = vpop.f32.mrb[0].mxu0
    %v4081 = vadd.f32 0.0, %v4080
    %v4082 = vpop.f32.mrb[0].mxu0
    %v4083 = vadd.f32 0.0, %v4082
    %4084 = vmatprep.mubr.f32.mxu0 0.0
    %4085 = vmatmul.mubr.f32.gmra.mrb[0].mxu0 %v3899
    %v4086 = vpop.f32.mrb[0].mxu0
    %v4087 = vadd.f32 0.0, %v4086
    %v4088 = vpop.f32.mrb[0].mxu0
    %v4089 = vadd.f32 0.0, %v4088
    %4090 = vmatprep.mubr.f32.mxu0 0.0
    %4091 = vmatmul.mubr.f32.gmra.mrb[0].mxu0 %v3902
    %v4092 = vpop.f32.mrb[0].mxu0
    %v4093 = vadd.f32 0.0, %v4092
    %v4094 = vpop.f32.mrb[0].mxu0
    %v4095 = vadd.f32 0.0, %v4094
    %4096 = vmatprep.mubr.f32.mxu0 0.0
    %4097 = vmatmul.mubr.f32.gmra.mrb[0].mxu0 %v3905
    %v4098 = vpop.f32.mrb[0].mxu0
    %v4099 = vadd.f32 0.0, %v4098
    %v4100 = vpop.f32.mrb[0].mxu0
    %v4101 = vadd.f32 0.0, %v4100
    %4102 = vmatprep.mubr.f32.mxu0 0.0
    %4103 = vmatmul.mubr.f32.gmra.mrb[0].mxu0 %v3908
    %v4104 = vpop.f32.mrb[0].mxu0
    %v4105 = vadd.f32 0.0, %v4104
    %v4106 = vpop.f32.mrb[0].mxu0
    %v4107 = vadd.f32 0.0, %v4106
    %4108 = vmatprep.mubr.f32.mxu0 0.0
    %4109 = vmatmul.mubr.f32.gmra.mrb[0].mxu0 %v3911
    %v4110 = vpop.f32.mrb[0].mxu0
    %v4111 = vadd.f32 0.0, %v4110
    %v4112 = vpop.f32.mrb[0].mxu0
    %v4113 = vadd.f32 0.0, %v4112
    %4114 = vdwg.mxu0
    %4115 = vmatprep.subr.mxu0 %v3876
    %4116 = vmatpush1.msra.mxu0 %v3875
    %4117 = vmatprep.subr.mxu0 %v3882
    %4118 = vmatpush1.msra.mxu0 %v3881
    %4119 = vmatprep.subr.mxu0 %v3888
    %4120 = vmatpush1.msra.mxu0 %v3887
    %4121 = vmatprep.subr.mxu0 %v3894
    %4122 = vmatpush1.msra.mxu0 %v3893
    %4123 = vmatprep.subr.mxu0 0.0
    %4124 = vmatpush1.msra.mxu0 0.0
    %4125 = vmatprep.subr.mxu0 0.0
    %4126 = vmatpush1.msra.mxu0 0.0
    %4127 = vmatprep.subr.mxu0 0.0
    %4128 = vmatpush1.msra.mxu0 0.0
    %4129 = vmatprep.subr.mxu0 0.0
    %4130 = vmatpush1.msra.mxu0 0.0
    %4131 = vmatprep.subr.mxu0 0.0
    %4132 = vmatpush1.msra.mxu0 0.0
    %4133 = vmatprep.subr.mxu0 0.0
    %4134 = vmatpush1.msra.mxu0 0.0
    %4135 = vmatprep.subr.mxu0 0.0
    %4136 = vmatpush1.msra.mxu0 0.0
    %4137 = vmatprep.subr.mxu0 0.0
    %4138 = vmatpush1.msra.mxu0 0.0
    %4139 = vmatprep.subr.mxu0 0.0
    %4140 = vmatpush1.msra.mxu0 0.0
    %4141 = vmatprep.subr.mxu0 0.0
    %4142 = vmatpush1.msra.mxu0 0.0
    %4143 = vmatprep.subr.mxu0 0.0
    %4144 = vmatpush1.msra.mxu0 0.0
    %4145 = vmatprep.subr.mxu0 0.0
    %4146 = vmatpush1.msra.mxu0 0.0
    %4147 = vmatprep.subr.mxu0 0.0
    %4148 = vmatpush1.msra.mxu0 0.0
    %4149 = vmatprep.subr.mxu0 0.0
    %4150 = vmatpush1.msra.mxu0 0.0
    %4151 = vmatprep.subr.mxu0 0.0
    %4152 = vmatpush1.msra.mxu0 0.0
    %4153 = vmatprep.subr.mxu0 0.0
    %4154 = vmatpush1.msra.mxu0 0.0
    %4155 = vmatprep.subr.mxu0 0.0
    %4156 = vmatpush1.msra.mxu0 0.0
    %4157 = vmatprep.subr.mxu0 0.0
    %4158 = vmatpush1.msra.mxu0 0.0
    %4159 = vmatprep.subr.mxu0 0.0
    %4160 = vmatpush1.msra.mxu0 0.0
    %4161 = vmatprep.subr.mxu0 0.0
    %4162 = vmatpush1.msra.mxu0 0.0
    %4163 = vmatprep.subr.mxu0 0.0
    %4164 = vmatpush1.msra.mxu0 0.0
    %4165 = vmatprep.subr.mxu0 0.0
    %4166 = vmatpush1.msra.mxu0 0.0
    %4167 = vmatprep.subr.mxu0 0.0
    %4168 = vmatpush1.msra.mxu0 0.0
    %4169 = vmatprep.subr.mxu0 0.0
    %4170 = vmatpush1.msra.mxu0 0.0
    %4171 = vmatprep.subr.mxu0 0.0
    %4172 = vmatpush1.msra.mxu0 0.0
    %4173 = vmatprep.subr.mxu0 0.0
    %4174 = vmatpush1.msra.mxu0 0.0
    %4175 = vmatprep.subr.mxu0 0.0
    %4176 = vmatpush1.msra.mxu0 0.0
    %4177 = vmatprep.subr.mxu0 0.0
    %4178 = vmatpush1.msra.mxu0 0.0
    %4179 = vmatprep.mubr.f32.mxu0 0.0
    %4180 = vmatmul.mubr.f32.gmra.mrb[0].mxu0 %v3896
    %v4181 = vpop.f32.mrb[0].mxu0
    %v4182 = vadd.f32 0.0, %v4181
    %v4183 = vpop.f32.mrb[0].mxu0
    %v4184 = vadd.f32 0.0, %v4183
    %4185 = vmatprep.mubr.f32.mxu0 0.0
    %4186 = vmatmul.mubr.f32.gmra.mrb[0].mxu0 %v3899
    %v4187 = vpop.f32.mrb[0].mxu0
    %v4188 = vadd.f32 0.0, %v4187
    %v4189 = vpop.f32.mrb[0].mxu0
    %v4190 = vadd.f32 0.0, %v4189
    %4191 = vmatprep.mubr.f32.mxu0 0.0
    %4192 = vmatmul.mubr.f32.gmra.mrb[0].mxu0 %v3902
    %v4193 = vpop.f32.mrb[0].mxu0
    %v4194 = vadd.f32 0.0, %v4193
    %v4195 = vpop.f32.mrb[0].mxu0
    %v4196 = vadd.f32 0.0, %v4195
    %4197 = vmatprep.mubr.f32.mxu0 0.0
    %4198 = vmatmul.mubr.f32.gmra.mrb[0].mxu0 %v3905
    %v4199 = vpop.f32.mrb[0].mxu0
    %v4200 = vadd.f32 0.0, %v4199
    %v4201 = vpop.f32.mrb[0].mxu0
    %v4202 = vadd.f32 0.0, %v4201
    %4203 = vmatprep.mubr.f32.mxu0 0.0
    %4204 = vmatmul.mubr.f32.gmra.mrb[0].mxu0 %v3908
    %v4205 = vpop.f32.mrb[0].mxu0
    %v4206 = vadd.f32 0.0, %v4205
    %v4207 = vpop.f32.mrb[0].mxu0
    %v4208 = vadd.f32 0.0, %v4207
    %4209 = vmatprep.mubr.f32.mxu0 0.0
    %4210 = vmatmul.mubr.f32.gmra.mrb[0].mxu0 %v3911
    %v4211 = vpop.f32.mrb[0].mxu0
    %v4212 = vadd.f32 0.0, %v4211
    %v4213 = vpop.f32.mrb[0].mxu0
    %v4214 = vadd.f32 0.0, %v4213
    %4215 = vdwg.mxu0
    %v4217 = vsel %vm452, %v3980, 0
    %v4220 = vsel %vm452, %v3986, 0
    %v4223 = vsel %vm452, %v3992, 0
    %v4226 = vsel %vm452, %v4081, 0
    %v4229 = vsel %vm452, %v4087, 0
    %v4232 = vsel %vm452, %v4093, 0
    %4234 = vmatprep.subr.mxu0 0.0
    %4235 = vmatpush1.xpose.msra.mxu0 %v4226
    %4236 = vmatprep.subr.mxu0 0.0
    %4237 = vmatpush1.xpose.msra.mxu0 %v4229
    %4238 = vmatprep.subr.mxu0 0.0
    %4239 = vmatpush1.xpose.msra.mxu0 %v4232
    %4240 = vmatprep.subr.mxu0 0.0
    %4241 = vmatpush1.xpose.msra.mxu0 0.0
    %4242 = vmatprep.subr.mxu0 0.0
    %4243 = vmatpush1.xpose.msra.mxu0 0.0
    %4244 = vmatprep.subr.mxu0 0.0
    %4245 = vmatpush1.xpose.msra.mxu0 0.0
    %4246 = vmatprep.subr.mxu0 0.0
    %4247 = vmatpush1.xpose.msra.mxu0 0.0
    %4248 = vmatprep.subr.mxu0 0.0
    %4249 = vmatpush1.xpose.msra.mxu0 0.0
    %4250 = vmatprep.subr.mxu0 0.0
    %4251 = vmatpush1.xpose.msra.mxu0 0.0
    %4252 = vmatprep.subr.mxu0 0.0
    %4253 = vmatpush1.xpose.msra.mxu0 0.0
    %4254 = vmatprep.subr.mxu0 0.0
    %4255 = vmatpush1.xpose.msra.mxu0 0.0
    %4256 = vmatprep.subr.mxu0 0.0
    %4257 = vmatpush1.xpose.msra.mxu0 0.0
    %4258 = vmatprep.subr.mxu0 0.0
    %4259 = vmatpush1.xpose.msra.mxu0 0.0
    %4260 = vmatprep.subr.mxu0 0.0
    %4261 = vmatpush1.xpose.msra.mxu0 0.0
    %4262 = vmatprep.subr.mxu0 0.0
    %4263 = vmatpush1.xpose.msra.mxu0 0.0
    %4264 = vmatprep.subr.mxu0 0.0
    %4265 = vmatpush1.xpose.msra.mxu0 0.0
    %4266 = vmatprep.subr.mxu0 0.0
    %4267 = vmatpush1.xpose.msra.mxu0 0.0
    %4268 = vmatprep.subr.mxu0 0.0
    %4269 = vmatpush1.xpose.msra.mxu0 0.0
    %4270 = vmatprep.subr.mxu0 0.0
    %4271 = vmatpush1.xpose.msra.mxu0 0.0
    %4272 = vmatprep.subr.mxu0 0.0
    %4273 = vmatpush1.xpose.msra.mxu0 0.0
    %4274 = vmatprep.subr.mxu0 0.0
    %4275 = vmatpush1.xpose.msra.mxu0 0.0
    %4276 = vmatprep.subr.mxu0 0.0
    %4277 = vmatpush1.xpose.msra.mxu0 0.0
    %4278 = vmatprep.subr.mxu0 0.0
    %4279 = vmatpush1.xpose.msra.mxu0 0.0
    %4280 = vmatprep.subr.mxu0 0.0
    %4281 = vmatpush1.xpose.msra.mxu0 0.0
    %4282 = vmatprep.subr.mxu0 0.0
    %4283 = vmatpush1.xpose.msra.mxu0 0.0
    %4284 = vmatprep.subr.mxu0 0.0
    %4285 = vmatpush1.xpose.msra.mxu0 0.0
    %4286 = vmatprep.subr.mxu0 0.0
    %4287 = vmatpush1.xpose.msra.mxu0 0.0
    %4288 = vmatprep.subr.mxu0 0.0
    %4289 = vmatpush1.xpose.msra.mxu0 0.0
    %4290 = vmatprep.subr.mxu0 0.0
    %4291 = vmatpush1.xpose.msra.mxu0 0.0
    %4292 = vmatprep.subr.mxu0 0.0
    %4293 = vmatpush1.xpose.msra.mxu0 0.0
    %4294 = vmatprep.subr.mxu0 0.0
    %4295 = vmatpush1.xpose.msra.mxu0 0.0
    %4296 = vmatprep.subr.mxu0 0.0
    %4297 = vmatpush1.xpose.msra.mxu0 0.0
    %4298 = vmatprep.mubr.f32.mxu0 0.0
    %4299 = vmatmul.mubr.f32.gmra.mrb[0].mxu0 %v4217
    %v4300 = vpop.f32.mrb[0].mxu0
    %v4301 = vadd.f32 %v865, %v4300
    %v4302 = vpop.f32.mrb[0].mxu0
    %4303 = vmatprep.mubr.f32.mxu0 0.0
    %4304 = vmatmul.mubr.f32.gmra.mrb[0].mxu0 %v4220
    %v4305 = vpop.f32.mrb[0].mxu0
    %v4306 = vadd.f32 %v866, %v4305
    %v4307 = vpop.f32.mrb[0].mxu0
    %4308 = vmatprep.mubr.f32.mxu0 0.0
    %4309 = vmatmul.mubr.f32.gmra.mrb[0].mxu0 %v4223
    %v4310 = vpop.f32.mrb[0].mxu0
    %v4311 = vadd.f32 %v867, %v4310
    %v4312 = vpop.f32.mrb[0].mxu0
    %4313 = vdwg.mxu0
    %v4315 = vsel %vm452, %v3998, 0
    %v4318 = vsel %vm452, %v4004, 0
    %v4321 = vsel %vm452, %v4010, 0
    %v4324 = vsel %vm452, %v4099, 0
    %v4327 = vsel %vm452, %v4105, 0
    %v4330 = vsel %vm452, %v4111, 0
    %4332 = vmatprep.subr.mxu0 0.0
    %4333 = vmatpush1.xpose.msra.mxu0 %v4324
    %4334 = vmatprep.subr.mxu0 0.0
    %4335 = vmatpush1.xpose.msra.mxu0 %v4327
    %4336 = vmatprep.subr.mxu0 0.0
    %4337 = vmatpush1.xpose.msra.mxu0 %v4330
    %4338 = vmatprep.subr.mxu0 0.0
    %4339 = vmatpush1.xpose.msra.mxu0 0.0
    %4340 = vmatprep.subr.mxu0 0.0
    %4341 = vmatpush1.xpose.msra.mxu0 0.0
    %4342 = vmatprep.subr.mxu0 0.0
    %4343 = vmatpush1.xpose.msra.mxu0 0.0
    %4344 = vmatprep.subr.mxu0 0.0
    %4345 = vmatpush1.xpose.msra.mxu0 0.0
    %4346 = vmatprep.subr.mxu0 0.0
    %4347 = vmatpush1.xpose.msra.mxu0 0.0
    %4348 = vmatprep.subr.mxu0 0.0
    %4349 = vmatpush1.xpose.msra.mxu0 0.0
    %4350 = vmatprep.subr.mxu0 0.0
    %4351 = vmatpush1.xpose.msra.mxu0 0.0
    %4352 = vmatprep.subr.mxu0 0.0
    %4353 = vmatpush1.xpose.msra.mxu0 0.0
    %4354 = vmatprep.subr.mxu0 0.0
    %4355 = vmatpush1.xpose.msra.mxu0 0.0
    %4356 = vmatprep.subr.mxu0 0.0
    %4357 = vmatpush1.xpose.msra.mxu0 0.0
    %4358 = vmatprep.subr.mxu0 0.0
    %4359 = vmatpush1.xpose.msra.mxu0 0.0
    %4360 = vmatprep.subr.mxu0 0.0
    %4361 = vmatpush1.xpose.msra.mxu0 0.0
    %4362 = vmatprep.subr.mxu0 0.0
    %4363 = vmatpush1.xpose.msra.mxu0 0.0
    %4364 = vmatprep.subr.mxu0 0.0
    %4365 = vmatpush1.xpose.msra.mxu0 0.0
    %4366 = vmatprep.subr.mxu0 0.0
    %4367 = vmatpush1.xpose.msra.mxu0 0.0
    %4368 = vmatprep.subr.mxu0 0.0
    %4369 = vmatpush1.xpose.msra.mxu0 0.0
    %4370 = vmatprep.subr.mxu0 0.0
    %4371 = vmatpush1.xpose.msra.mxu0 0.0
    %4372 = vmatprep.subr.mxu0 0.0
    %4373 = vmatpush1.xpose.msra.mxu0 0.0
    %4374 = vmatprep.subr.mxu0 0.0
    %4375 = vmatpush1.xpose.msra.mxu0 0.0
    %4376 = vmatprep.subr.mxu0 0.0
    %4377 = vmatpush1.xpose.msra.mxu0 0.0
    %4378 = vmatprep.subr.mxu0 0.0
    %4379 = vmatpush1.xpose.msra.mxu0 0.0
    %4380 = vmatprep.subr.mxu0 0.0
    %4381 = vmatpush1.xpose.msra.mxu0 0.0
    %4382 = vmatprep.subr.mxu0 0.0
    %4383 = vmatpush1.xpose.msra.mxu0 0.0
    %4384 = vmatprep.subr.mxu0 0.0
    %4385 = vmatpush1.xpose.msra.mxu0 0.0
    %4386 = vmatprep.subr.mxu0 0.0
    %4387 = vmatpush1.xpose.msra.mxu0 0.0
    %4388 = vmatprep.subr.mxu0 0.0
    %4389 = vmatpush1.xpose.msra.mxu0 0.0
    %4390 = vmatprep.subr.mxu0 0.0
    %4391 = vmatpush1.xpose.msra.mxu0 0.0
    %4392 = vmatprep.subr.mxu0 0.0
    %4393 = vmatpush1.xpose.msra.mxu0 0.0
    %4394 = vmatprep.subr.mxu0 0.0
    %4395 = vmatpush1.xpose.msra.mxu0 0.0
    %4396 = vmatprep.mubr.f32.mxu0 0.0
    %4397 = vmatmul.mubr.f32.gmra.mrb[0].mxu0 %v4315
    %v4398 = vpop.f32.mrb[0].mxu0
    %v4399 = vadd.f32 %v865, %v4398
    %v4400 = vpop.f32.mrb[0].mxu0
    %4401 = vmatprep.mubr.f32.mxu0 0.0
    %4402 = vmatmul.mubr.f32.gmra.mrb[0].mxu0 %v4318
    %v4403 = vpop.f32.mrb[0].mxu0
    %v4404 = vadd.f32 %v866, %v4403
    %v4405 = vpop.f32.mrb[0].mxu0
    %4406 = vmatprep.mubr.f32.mxu0 0.0
    %4407 = vmatmul.mubr.f32.gmra.mrb[0].mxu0 %v4321
    %v4408 = vpop.f32.mrb[0].mxu0
    %v4409 = vadd.f32 %v867, %v4408
    %v4410 = vpop.f32.mrb[0].mxu0
    %4411 = vdwg.mxu0
    %v4412 = vsel %vm1409, %v4301, -inf
    %4413 = vmax.xlane.f32.xlu0 %v4412
    %v4414 = vpop.xlane.xlu0 %4413
    %v4415 = vsel %vm1409, %v4306, -inf
    %4416 = vmax.xlane.f32.xlu0 %v4415
    %v4417 = vpop.xlane.xlu0 %4416
    %v4418 = vsel %vm1409, %v4311, -inf
    %4419 = vmax.xlane.f32.xlu0 %v4418
    %v4420 = vpop.xlane.xlu0 %4419
    %v4421 = vsel %vm1409, %v4399, -inf
    %4422 = vmax.xlane.f32.xlu0 %v4421
    %v4423 = vpop.xlane.xlu0 %4422
    %v4424 = vsel %vm1409, %v4404, -inf
    %4425 = vmax.xlane.f32.xlu0 %v4424
    %v4426 = vpop.xlane.xlu0 %4425
    %v4427 = vsel %vm1409, %v4409, -inf
    %4428 = vmax.xlane.f32.xlu0 %v4427
    %v4429 = vpop.xlane.xlu0 %4428
    %v4430 = vsub.f32 %v4301, %v4414
    %v4431 = vsub.f32 %v4306, %v4417
    %v4432 = vsub.f32 %v4311, %v4420
    %v4433 = vsub.f32 %v4399, %v4423
    %v4434 = vsub.f32 %v4404, %v4426
    %v4435 = vsub.f32 %v4409, %v4429
    %v4436 = vmul.f32 %v4430, 1.442695
    %v4437 = vpow.pop %v4436
    %v4438 = vmul.f32 %v4431, 1.442695
    %v4439 = vpow.pop %v4438
    %v4440 = vmul.f32 %v4432, 1.442695
    %v4441 = vpow.pop %v4440
    %v4442 = vmul.f32 %v4433, 1.442695
    %v4443 = vpow.pop %v4442
    %v4444 = vmul.f32 %v4434, 1.442695
    %v4445 = vpow.pop %v4444
    %v4446 = vmul.f32 %v4435, 1.442695
    %v4447 = vpow.pop %v4446
    %v4448 = vsel %vm1409, %v4437, 0.0
    %4449 = vadd.xlane.f32.xlu0 %v4448
    %v4450 = vpop.xlane.xlu0 %4449
    %v4451 = vsel %vm1409, %v4439, 0.0
    %4452 = vadd.xlane.f32.xlu0 %v4451
    %v4453 = vpop.xlane.xlu0 %4452
    %v4454 = vsel %vm1409, %v4441, 0.0
    %4455 = vadd.xlane.f32.xlu0 %v4454
    %v4456 = vpop.xlane.xlu0 %4455
    %v4457 = vsel %vm1409, %v4443, 0.0
    %4458 = vadd.xlane.f32.xlu0 %v4457
    %v4459 = vpop.xlane.xlu0 %4458
    %v4460 = vsel %vm1409, %v4445, 0.0
    %4461 = vadd.xlane.f32.xlu0 %v4460
    %v4462 = vpop.xlane.xlu0 %4461
    %v4463 = vsel %vm1409, %v4447, 0.0
    %4464 = vadd.xlane.f32.xlu0 %v4463
    %v4465 = vpop.xlane.xlu0 %4464
    %v4466 = vrcp.pop %v4450
    %v4467 = vmul.f32 %v4437, %v4466
    %v4468 = vrcp.pop %v4453
    %v4469 = vmul.f32 %v4439, %v4468
    %v4470 = vrcp.pop %v4456
    %v4471 = vmul.f32 %v4441, %v4470
    %v4472 = vrcp.pop %v4459
    %v4473 = vmul.f32 %v4443, %v4472
    %v4474 = vrcp.pop %v4462
    %v4475 = vmul.f32 %v4445, %v4474
    %v4476 = vrcp.pop %v4465
    %v4477 = vmul.f32 %v4447, %v4476
    %v4479 = vsel %vm1409, %v4467, 0
    %v4482 = vsel %vm1409, %v4469, 0
    %v4485 = vsel %vm1409, %v4471, 0
    %4487 = vmatprep.subr.mxu0 0.0
    %4488 = vmatpush1.msra.mxu0 %v4182
    %4489 = vmatprep.subr.mxu0 0.0
    %4490 = vmatpush1.msra.mxu0 %v4188
    %4491 = vmatprep.subr.mxu0 0.0
    %4492 = vmatpush1.msra.mxu0 %v4194
    %4493 = vmatprep.subr.mxu0 0.0
    %4494 = vmatpush1.msra.mxu0 0.0
    %4495 = vmatprep.subr.mxu0 0.0
    %4496 = vmatpush1.msra.mxu0 0.0
    %4497 = vmatprep.subr.mxu0 0.0
    %4498 = vmatpush1.msra.mxu0 0.0
    %4499 = vmatprep.subr.mxu0 0.0
    %4500 = vmatpush1.msra.mxu0 0.0
    %4501 = vmatprep.subr.mxu0 0.0
    %4502 = vmatpush1.msra.mxu0 0.0
    %4503 = vmatprep.subr.mxu0 0.0
    %4504 = vmatpush1.msra.mxu0 0.0
    %4505 = vmatprep.subr.mxu0 0.0
    %4506 = vmatpush1.msra.mxu0 0.0
    %4507 = vmatprep.subr.mxu0 0.0
    %4508 = vmatpush1.msra.mxu0 0.0
    %4509 = vmatprep.subr.mxu0 0.0
    %4510 = vmatpush1.msra.mxu0 0.0
    %4511 = vmatprep.subr.mxu0 0.0
    %4512 = vmatpush1.msra.mxu0 0.0
    %4513 = vmatprep.subr.mxu0 0.0
    %4514 = vmatpush1.msra.mxu0 0.0
    %4515 = vmatprep.subr.mxu0 0.0
    %4516 = vmatpush1.msra.mxu0 0.0
    %4517 = vmatprep.subr.mxu0 0.0
    %4518 = vmatpush1.msra.mxu0 0.0
    %4519 = vmatprep.subr.mxu0 0.0
    %4520 = vmatpush1.msra.mxu0 0.0
    %4521 = vmatprep.subr.mxu0 0.0
    %4522 = vmatpush1.msra.mxu0 0.0
    %4523 = vmatprep.subr.mxu0 0.0
    %4524 = vmatpush1.msra.mxu0 0.0
    %4525 = vmatprep.subr.mxu0 0.0
    %4526 = vmatpush1.msra.mxu0 0.0
    %4527 = vmatprep.subr.mxu0 0.0
    %4528 = vmatpush1.msra.mxu0 0.0
    %4529 = vmatprep.subr.mxu0 0.0
    %4530 = vmatpush1.msra.mxu0 0.0
    %4531 = vmatprep.subr.mxu0 0.0
    %4532 = vmatpush1.msra.mxu0 0.0
    %4533 = vmatprep.subr.mxu0 0.0
    %4534 = vmatpush1.msra.mxu0 0.0
    %4535 = vmatprep.subr.mxu0 0.0
    %4536 = vmatpush1.msra.mxu0 0.0
    %4537 = vmatprep.subr.mxu0 0.0
    %4538 = vmatpush1.msra.mxu0 0.0
    %4539 = vmatprep.subr.mxu0 0.0
    %4540 = vmatpush1.msra.mxu0 0.0
    %4541 = vmatprep.subr.mxu0 0.0
    %4542 = vmatpush1.msra.mxu0 0.0
    %4543 = vmatprep.subr.mxu0 0.0
    %4544 = vmatpush1.msra.mxu0 0.0
    %4545 = vmatprep.subr.mxu0 0.0
    %4546 = vmatpush1.msra.mxu0 0.0
    %4547 = vmatprep.subr.mxu0 0.0
    %4548 = vmatpush1.msra.mxu0 0.0
    %4549 = vmatprep.subr.mxu0 0.0
    %4550 = vmatpush1.msra.mxu0 0.0
    %4551 = vmatprep.mubr.f32.mxu0 0.0
    %4552 = vmatmul.mubr.f32.gmra.mrb[0].mxu0 %v4479
    %v4553 = vpop.f32.mrb[0].mxu0
    %v4554 = vadd.f32 0.0, %v4553
    %v4555 = vpop.f32.mrb[0].mxu0
    %4556 = vmatprep.mubr.f32.mxu0 0.0
    %4557 = vmatmul.mubr.f32.gmra.mrb[0].mxu0 %v4482
    %v4558 = vpop.f32.mrb[0].mxu0
    %v4559 = vadd.f32 0.0, %v4558
    %v4560 = vpop.f32.mrb[0].mxu0
    %4561 = vmatprep.mubr.f32.mxu0 0.0
    %4562 = vmatmul.mubr.f32.gmra.mrb[0].mxu0 %v4485
    %v4563 = vpop.f32.mrb[0].mxu0
    %v4564 = vadd.f32 0.0, %v4563
    %v4565 = vpop.f32.mrb[0].mxu0
    %4566 = vdwg.mxu0
    %v4568 = vsel %vm1409, %v4473, 0
    %v4571 = vsel %vm1409, %v4475, 0
    %v4574 = vsel %vm1409, %v4477, 0
    %4576 = vmatprep.subr.mxu0 0.0
    %4577 = vmatpush1.msra.mxu0 %v4200
    %4578 = vmatprep.subr.mxu0 0.0
    %4579 = vmatpush1.msra.mxu0 %v4206
    %4580 = vmatprep.subr.mxu0 0.0
    %4581 = vmatpush1.msra.mxu0 %v4212
    %4582 = vmatprep.subr.mxu0 0.0
    %4583 = vmatpush1.msra.mxu0 0.0
    %4584 = vmatprep.subr.mxu0 0.0
    %4585 = vmatpush1.msra.mxu0 0.0
    %4586 = vmatprep.subr.mxu0 0.0
    %4587 = vmatpush1.msra.mxu0 0.0
    %4588 = vmatprep.subr.mxu0 0.0
    %4589 = vmatpush1.msra.mxu0 0.0
    %4590 = vmatprep.subr.mxu0 0.0
    %4591 = vmatpush1.msra.mxu0 0.0
    %4592 = vmatprep.subr.mxu0 0.0
    %4593 = vmatpush1.msra.mxu0 0.0
    %4594 = vmatprep.subr.mxu0 0.0
    %4595 = vmatpush1.msra.mxu0 0.0
    %4596 = vmatprep.subr.mxu0 0.0
    %4597 = vmatpush1.msra.mxu0 0.0
    %4598 = vmatprep.subr.mxu0 0.0
    %4599 = vmatpush1.msra.mxu0 0.0
    %4600 = vmatprep.subr.mxu0 0.0
    %4601 = vmatpush1.msra.mxu0 0.0
    %4602 = vmatprep.subr.mxu0 0.0
    %4603 = vmatpush1.msra.mxu0 0.0
    %4604 = vmatprep.subr.mxu0 0.0
    %4605 = vmatpush1.msra.mxu0 0.0
    %4606 = vmatprep.subr.mxu0 0.0
    %4607 = vmatpush1.msra.mxu0 0.0
    %4608 = vmatprep.subr.mxu0 0.0
    %4609 = vmatpush1.msra.mxu0 0.0
    %4610 = vmatprep.subr.mxu0 0.0
    %4611 = vmatpush1.msra.mxu0 0.0
    %4612 = vmatprep.subr.mxu0 0.0
    %4613 = vmatpush1.msra.mxu0 0.0
    %4614 = vmatprep.subr.mxu0 0.0
    %4615 = vmatpush1.msra.mxu0 0.0
    %4616 = vmatprep.subr.mxu0 0.0
    %4617 = vmatpush1.msra.mxu0 0.0
    %4618 = vmatprep.subr.mxu0 0.0
    %4619 = vmatpush1.msra.mxu0 0.0
    %4620 = vmatprep.subr.mxu0 0.0
    %4621 = vmatpush1.msra.mxu0 0.0
    %4622 = vmatprep.subr.mxu0 0.0
    %4623 = vmatpush1.msra.mxu0 0.0
    %4624 = vmatprep.subr.mxu0 0.0
    %4625 = vmatpush1.msra.mxu0 0.0
    %4626 = vmatprep.subr.mxu0 0.0
    %4627 = vmatpush1.msra.mxu0 0.0
    %4628 = vmatprep.subr.mxu0 0.0
    %4629 = vmatpush1.msra.mxu0 0.0
    %4630 = vmatprep.subr.mxu0 0.0
    %4631 = vmatpush1.msra.mxu0 0.0
    %4632 = vmatprep.subr.mxu0 0.0
    %4633 = vmatpush1.msra.mxu0 0.0
    %4634 = vmatprep.subr.mxu0 0.0
    %4635 = vmatpush1.msra.mxu0 0.0
    %4636 = vmatprep.subr.mxu0 0.0
    %4637 = vmatpush1.msra.mxu0 0.0
    %4638 = vmatprep.subr.mxu0 0.0
    %4639 = vmatpush1.msra.mxu0 0.0
    %4640 = vmatprep.mubr.f32.mxu0 0.0
    %4641 = vmatmul.mubr.f32.gmra.mrb[0].mxu0 %v4568
    %v4642 = vpop.f32.mrb[0].mxu0
    %v4643 = vadd.f32 0.0, %v4642
    %v4644 = vpop.f32.mrb[0].mxu0
    %4645 = vmatprep.mubr.f32.mxu0 0.0
    %4646 = vmatmul.mubr.f32.gmra.mrb[0].mxu0 %v4571
    %v4647 = vpop.f32.mrb[0].mxu0
    %v4648 = vadd.f32 0.0, %v4647
    %v4649 = vpop.f32.mrb[0].mxu0
    %4650 = vmatprep.mubr.f32.mxu0 0.0
    %4651 = vmatmul.mubr.f32.gmra.mrb[0].mxu0 %v4574
    %v4652 = vpop.f32.mrb[0].mxu0
    %v4653 = vadd.f32 0.0, %v4652
    %v4654 = vpop.f32.mrb[0].mxu0
    %4655 = vdwg.mxu0
    %4656 = vrot.lane.b32.xlu0 %v3980, 64
    %v4657 = vpop.permute.xlu0 %4656
    %4658 = vrot.lane.b32.xlu0 %v3986, 64
    %v4659 = vpop.permute.xlu0 %4658
    %4660 = vrot.lane.b32.xlu0 %v3992, 64
    %v4661 = vpop.permute.xlu0 %4660
    %4662 = vrot.lane.b32.xlu0 %v4081, 64
    %v4663 = vpop.permute.xlu0 %4662
    %4664 = vrot.lane.b32.xlu0 %v4087, 64
    %v4665 = vpop.permute.xlu0 %4664
    %4666 = vrot.lane.b32.xlu0 %v4093, 64
    %v4667 = vpop.permute.xlu0 %4666
    %v4668 = vsel %vm452, %v4657, 0
    %v4670 = vsel %vm452, %v4659, 0
    %v4672 = vsel %vm452, %v4661, 0
    %v4674 = vsel %vm452, %v4663, 0
    %v4676 = vsel %vm452, %v4665, 0
    %v4678 = vsel %vm452, %v4667, 0
    %4680 = vmatprep.subr.mxu0 0.0
    %4681 = vmatpush1.xpose.msra.mxu0 %v4674
    %4682 = vmatprep.subr.mxu0 0.0
    %4683 = vmatpush1.xpose.msra.mxu0 %v4676
    %4684 = vmatprep.subr.mxu0 0.0
    %4685 = vmatpush1.xpose.msra.mxu0 %v4678
    %4686 = vmatprep.subr.mxu0 0.0
    %4687 = vmatpush1.xpose.msra.mxu0 0.0
    %4688 = vmatprep.subr.mxu0 0.0
    %4689 = vmatpush1.xpose.msra.mxu0 0.0
    %4690 = vmatprep.subr.mxu0 0.0
    %4691 = vmatpush1.xpose.msra.mxu0 0.0
    %4692 = vmatprep.subr.mxu0 0.0
    %4693 = vmatpush1.xpose.msra.mxu0 0.0
    %4694 = vmatprep.subr.mxu0 0.0
    %4695 = vmatpush1.xpose.msra.mxu0 0.0
    %4696 = vmatprep.subr.mxu0 0.0
    %4697 = vmatpush1.xpose.msra.mxu0 0.0
    %4698 = vmatprep.subr.mxu0 0.0
    %4699 = vmatpush1.xpose.msra.mxu0 0.0
    %4700 = vmatprep.subr.mxu0 0.0
    %4701 = vmatpush1.xpose.msra.mxu0 0.0
    %4702 = vmatprep.subr.mxu0 0.0
    %4703 = vmatpush1.xpose.msra.mxu0 0.0
    %4704 = vmatprep.subr.mxu0 0.0
    %4705 = vmatpush1.xpose.msra.mxu0 0.0
    %4706 = vmatprep.subr.mxu0 0.0
    %4707 = vmatpush1.xpose.msra.mxu0 0.0
    %4708 = vmatprep.subr.mxu0 0.0
    %4709 = vmatpush1.xpose.msra.mxu0 0.0
    %4710 = vmatprep.subr.mxu0 0.0
    %4711 = vmatpush1.xpose.msra.mxu0 0.0
    %4712 = vmatprep.subr.mxu0 0.0
    %4713 = vmatpush1.xpose.msra.mxu0 0.0
    %4714 = vmatprep.subr.mxu0 0.0
    %4715 = vmatpush1.xpose.msra.mxu0 0.0
    %4716 = vmatprep.subr.mxu0 0.0
    %4717 = vmatpush1.xpose.msra.mxu0 0.0
    %4718 = vmatprep.subr.mxu0 0.0
    %4719 = vmatpush1.xpose.msra.mxu0 0.0
    %4720 = vmatprep.subr.mxu0 0.0
    %4721 = vmatpush1.xpose.msra.mxu0 0.0
    %4722 = vmatprep.subr.mxu0 0.0
    %4723 = vmatpush1.xpose.msra.mxu0 0.0
    %4724 = vmatprep.subr.mxu0 0.0
    %4725 = vmatpush1.xpose.msra.mxu0 0.0
    %4726 = vmatprep.subr.mxu0 0.0
    %4727 = vmatpush1.xpose.msra.mxu0 0.0
    %4728 = vmatprep.subr.mxu0 0.0
    %4729 = vmatpush1.xpose.msra.mxu0 0.0
    %4730 = vmatprep.subr.mxu0 0.0
    %4731 = vmatpush1.xpose.msra.mxu0 0.0
    %4732 = vmatprep.subr.mxu0 0.0
    %4733 = vmatpush1.xpose.msra.mxu0 0.0
    %4734 = vmatprep.subr.mxu0 0.0
    %4735 = vmatpush1.xpose.msra.mxu0 0.0
    %4736 = vmatprep.subr.mxu0 0.0
    %4737 = vmatpush1.xpose.msra.mxu0 0.0
    %4738 = vmatprep.subr.mxu0 0.0
    %4739 = vmatpush1.xpose.msra.mxu0 0.0
    %4740 = vmatprep.subr.mxu0 0.0
    %4741 = vmatpush1.xpose.msra.mxu0 0.0
    %4742 = vmatprep.subr.mxu0 0.0
    %4743 = vmatpush1.xpose.msra.mxu0 0.0
    %4744 = vmatprep.mubr.f32.mxu0 0.0
    %4745 = vmatmul.mubr.f32.gmra.mrb[0].mxu0 %v4668
    %v4746 = vpop.f32.mrb[0].mxu0
    %v4747 = vadd.f32 %v865, %v4746
    %v4748 = vpop.f32.mrb[0].mxu0
    %4749 = vmatprep.mubr.f32.mxu0 0.0
    %4750 = vmatmul.mubr.f32.gmra.mrb[0].mxu0 %v4670
    %v4751 = vpop.f32.mrb[0].mxu0
    %v4752 = vadd.f32 %v866, %v4751
    %v4753 = vpop.f32.mrb[0].mxu0
    %4754 = vmatprep.mubr.f32.mxu0 0.0
    %4755 = vmatmul.mubr.f32.gmra.mrb[0].mxu0 %v4672
    %v4756 = vpop.f32.mrb[0].mxu0
    %v4757 = vadd.f32 %v867, %v4756
    %v4758 = vpop.f32.mrb[0].mxu0
    %4759 = vdwg.mxu0
    %4760 = vrot.lane.b32.xlu0 %v3998, 64
    %v4761 = vpop.permute.xlu0 %4760
    %4762 = vrot.lane.b32.xlu0 %v4004, 64
    %v4763 = vpop.permute.xlu0 %4762
    %4764 = vrot.lane.b32.xlu0 %v4010, 64
    %v4765 = vpop.permute.xlu0 %4764
    %4766 = vrot.lane.b32.xlu0 %v4099, 64
    %v4767 = vpop.permute.xlu0 %4766
    %4768 = vrot.lane.b32.xlu0 %v4105, 64
    %v4769 = vpop.permute.xlu0 %4768
    %4770 = vrot.lane.b32.xlu0 %v4111, 64
    %v4771 = vpop.permute.xlu0 %4770
    %v4772 = vsel %vm452, %v4761, 0
    %v4774 = vsel %vm452, %v4763, 0
    %v4776 = vsel %vm452, %v4765, 0
    %v4778 = vsel %vm452, %v4767, 0
    %v4780 = vsel %vm452, %v4769, 0
    %v4782 = vsel %vm452, %v4771, 0
    %4784 = vmatprep.subr.mxu0 0.0
    %4785 = vmatpush1.xpose.msra.mxu0 %v4778
    %4786 = vmatprep.subr.mxu0 0.0
    %4787 = vmatpush1.xpose.msra.mxu0 %v4780
    %4788 = vmatprep.subr.mxu0 0.0
    %4789 = vmatpush1.xpose.msra.mxu0 %v4782
    %4790 = vmatprep.subr.mxu0 0.0
    %4791 = vmatpush1.xpose.msra.mxu0 0.0
    %4792 = vmatprep.subr.mxu0 0.0
    %4793 = vmatpush1.xpose.msra.mxu0 0.0
    %4794 = vmatprep.subr.mxu0 0.0
    %4795 = vmatpush1.xpose.msra.mxu0 0.0
    %4796 = vmatprep.subr.mxu0 0.0
    %4797 = vmatpush1.xpose.msra.mxu0 0.0
    %4798 = vmatprep.subr.mxu0 0.0
    %4799 = vmatpush1.xpose.msra.mxu0 0.0
    %4800 = vmatprep.subr.mxu0 0.0
    %4801 = vmatpush1.xpose.msra.mxu0 0.0
    %4802 = vmatprep.subr.mxu0 0.0
    %4803 = vmatpush1.xpose.msra.mxu0 0.0
    %4804 = vmatprep.subr.mxu0 0.0
    %4805 = vmatpush1.xpose.msra.mxu0 0.0
    %4806 = vmatprep.subr.mxu0 0.0
    %4807 = vmatpush1.xpose.msra.mxu0 0.0
    %4808 = vmatprep.subr.mxu0 0.0
    %4809 = vmatpush1.xpose.msra.mxu0 0.0
    %4810 = vmatprep.subr.mxu0 0.0
    %4811 = vmatpush1.xpose.msra.mxu0 0.0
    %4812 = vmatprep.subr.mxu0 0.0
    %4813 = vmatpush1.xpose.msra.mxu0 0.0
    %4814 = vmatprep.subr.mxu0 0.0
    %4815 = vmatpush1.xpose.msra.mxu0 0.0
    %4816 = vmatprep.subr.mxu0 0.0
    %4817 = vmatpush1.xpose.msra.mxu0 0.0
    %4818 = vmatprep.subr.mxu0 0.0
    %4819 = vmatpush1.xpose.msra.mxu0 0.0
    %4820 = vmatprep.subr.mxu0 0.0
    %4821 = vmatpush1.xpose.msra.mxu0 0.0
    %4822 = vmatprep.subr.mxu0 0.0
    %4823 = vmatpush1.xpose.msra.mxu0 0.0
    %4824 = vmatprep.subr.mxu0 0.0
    %4825 = vmatpush1.xpose.msra.mxu0 0.0
    %4826 = vmatprep.subr.mxu0 0.0
    %4827 = vmatpush1.xpose.msra.mxu0 0.0
    %4828 = vmatprep.subr.mxu0 0.0
    %4829 = vmatpush1.xpose.msra.mxu0 0.0
    %4830 = vmatprep.subr.mxu0 0.0
    %4831 = vmatpush1.xpose.msra.mxu0 0.0
    %4832 = vmatprep.subr.mxu0 0.0
    %4833 = vmatpush1.xpose.msra.mxu0 0.0
    %4834 = vmatprep.subr.mxu0 0.0
    %4835 = vmatpush1.xpose.msra.mxu0 0.0
    %4836 = vmatprep.subr.mxu0 0.0
    %4837 = vmatpush1.xpose.msra.mxu0 0.0
    %4838 = vmatprep.subr.mxu0 0.0
    %4839 = vmatpush1.xpose.msra.mxu0 0.0
    %4840 = vmatprep.subr.mxu0 0.0
    %4841 = vmatpush1.xpose.msra.mxu0 0.0
    %4842 = vmatprep.subr.mxu0 0.0
    %4843 = vmatpush1.xpose.msra.mxu0 0.0
    %4844 = vmatprep.subr.mxu0 0.0
    %4845 = vmatpush1.xpose.msra.mxu0 0.0
    %4846 = vmatprep.subr.mxu0 0.0
    %4847 = vmatpush1.xpose.msra.mxu0 0.0
    %4848 = vmatprep.mubr.f32.mxu0 0.0
    %4849 = vmatmul.mubr.f32.gmra.mrb[0].mxu0 %v4772
    %v4850 = vpop.f32.mrb[0].mxu0
    %v4851 = vadd.f32 %v865, %v4850
    %v4852 = vpop.f32.mrb[0].mxu0
    %4853 = vmatprep.mubr.f32.mxu0 0.0
    %4854 = vmatmul.mubr.f32.gmra.mrb[0].mxu0 %v4774
    %v4855 = vpop.f32.mrb[0].mxu0
    %v4856 = vadd.f32 %v866, %v4855
    %v4857 = vpop.f32.mrb[0].mxu0
    %4858 = vmatprep.mubr.f32.mxu0 0.0
    %4859 = vmatmul.mubr.f32.gmra.mrb[0].mxu0 %v4776
    %v4860 = vpop.f32.mrb[0].mxu0
    %v4861 = vadd.f32 %v867, %v4860
    %v4862 = vpop.f32.mrb[0].mxu0
    %4863 = vdwg.mxu0
    %v4864 = vsel %vm1409, %v4747, -inf
    %4865 = vmax.xlane.f32.xlu0 %v4864
    %v4866 = vpop.xlane.xlu0 %4865
    %v4867 = vsel %vm1409, %v4752, -inf
    %4868 = vmax.xlane.f32.xlu0 %v4867
    %v4869 = vpop.xlane.xlu0 %4868
    %v4870 = vsel %vm1409, %v4757, -inf
    %4871 = vmax.xlane.f32.xlu0 %v4870
    %v4872 = vpop.xlane.xlu0 %4871
    %v4873 = vsel %vm1409, %v4851, -inf
    %4874 = vmax.xlane.f32.xlu0 %v4873
    %v4875 = vpop.xlane.xlu0 %4874
    %v4876 = vsel %vm1409, %v4856, -inf
    %4877 = vmax.xlane.f32.xlu0 %v4876
    %v4878 = vpop.xlane.xlu0 %4877
    %v4879 = vsel %vm1409, %v4861, -inf
    %4880 = vmax.xlane.f32.xlu0 %v4879
    %v4881 = vpop.xlane.xlu0 %4880
    %v4882 = vsub.f32 %v4747, %v4866
    %v4883 = vsub.f32 %v4752, %v4869
    %v4884 = vsub.f32 %v4757, %v4872
    %v4885 = vsub.f32 %v4851, %v4875
    %v4886 = vsub.f32 %v4856, %v4878
    %v4887 = vsub.f32 %v4861, %v4881
    %v4888 = vmul.f32 %v4882, 1.442695
    %v4889 = vpow.pop %v4888
    %v4890 = vmul.f32 %v4883, 1.442695
    %v4891 = vpow.pop %v4890
    %v4892 = vmul.f32 %v4884, 1.442695
    %v4893 = vpow.pop %v4892
    %v4894 = vmul.f32 %v4885, 1.442695
    %v4895 = vpow.pop %v4894
    %v4896 = vmul.f32 %v4886, 1.442695
    %v4897 = vpow.pop %v4896
    %v4898 = vmul.f32 %v4887, 1.442695
    %v4899 = vpow.pop %v4898
    %v4900 = vsel %vm1409, %v4889, 0.0
    %4901 = vadd.xlane.f32.xlu0 %v4900
    %v4902 = vpop.xlane.xlu0 %4901
    %v4903 = vsel %vm1409, %v4891, 0.0
    %4904 = vadd.xlane.f32.xlu0 %v4903
    %v4905 = vpop.xlane.xlu0 %4904
    %v4906 = vsel %vm1409, %v4893, 0.0
    %4907 = vadd.xlane.f32.xlu0 %v4906
    %v4908 = vpop.xlane.xlu0 %4907
    %v4909 = vsel %vm1409, %v4895, 0.0
    %4910 = vadd.xlane.f32.xlu0 %v4909
    %v4911 = vpop.xlane.xlu0 %4910
    %v4912 = vsel %vm1409, %v4897, 0.0
    %4913 = vadd.xlane.f32.xlu0 %v4912
    %v4914 = vpop.xlane.xlu0 %4913
    %v4915 = vsel %vm1409, %v4899, 0.0
    %4916 = vadd.xlane.f32.xlu0 %v4915
    %v4917 = vpop.xlane.xlu0 %4916
    %v4918 = vrcp.pop %v4902
    %v4919 = vmul.f32 %v4889, %v4918
    %v4920 = vrcp.pop %v4905
    %v4921 = vmul.f32 %v4891, %v4920
    %v4922 = vrcp.pop %v4908
    %v4923 = vmul.f32 %v4893, %v4922
    %v4924 = vrcp.pop %v4911
    %v4925 = vmul.f32 %v4895, %v4924
    %v4926 = vrcp.pop %v4914
    %v4927 = vmul.f32 %v4897, %v4926
    %v4928 = vrcp.pop %v4917
    %v4929 = vmul.f32 %v4899, %v4928
    %4933 = vrot.lane.b32.xlu0 %v4182, 64
    %v4934 = vpop.permute.xlu0 %4933
    %4935 = vrot.lane.b32.xlu0 %v4188, 64
    %v4936 = vpop.permute.xlu0 %4935
    %4937 = vrot.lane.b32.xlu0 %v4194, 64
    %v4938 = vpop.permute.xlu0 %4937
    %v4943 = vsel %vm1409, %v4919, 0
    %v4946 = vsel %vm1409, %v4921, 0
    %v4949 = vsel %vm1409, %v4923, 0
    %4951 = vmatprep.subr.mxu0 0.0
    %4952 = vmatpush1.msra.mxu0 %v4934
    %4953 = vmatprep.subr.mxu0 0.0
    %4954 = vmatpush1.msra.mxu0 %v4936
    %4955 = vmatprep.subr.mxu0 0.0
    %4956 = vmatpush1.msra.mxu0 %v4938
    %4957 = vmatprep.subr.mxu0 0.0
    %4958 = vmatpush1.msra.mxu0 0.0
    %4959 = vmatprep.subr.mxu0 0.0
    %4960 = vmatpush1.msra.mxu0 0.0
    %4961 = vmatprep.subr.mxu0 0.0
    %4962 = vmatpush1.msra.mxu0 0.0
    %4963 = vmatprep.subr.mxu0 0.0
    %4964 = vmatpush1.msra.mxu0 0.0
    %4965 = vmatprep.subr.mxu0 0.0
    %4966 = vmatpush1.msra.mxu0 0.0
    %4967 = vmatprep.subr.mxu0 0.0
    %4968 = vmatpush1.msra.mxu0 0.0
    %4969 = vmatprep.subr.mxu0 0.0
    %4970 = vmatpush1.msra.mxu0 0.0
    %4971 = vmatprep.subr.mxu0 0.0
    %4972 = vmatpush1.msra.mxu0 0.0
    %4973 = vmatprep.subr.mxu0 0.0
    %4974 = vmatpush1.msra.mxu0 0.0
    %4975 = vmatprep.subr.mxu0 0.0
    %4976 = vmatpush1.msra.mxu0 0.0
    %4977 = vmatprep.subr.mxu0 0.0
    %4978 = vmatpush1.msra.mxu0 0.0
    %4979 = vmatprep.subr.mxu0 0.0
    %4980 = vmatpush1.msra.mxu0 0.0
    %4981 = vmatprep.subr.mxu0 0.0
    %4982 = vmatpush1.msra.mxu0 0.0
    %4983 = vmatprep.subr.mxu0 0.0
    %4984 = vmatpush1.msra.mxu0 0.0
    %4985 = vmatprep.subr.mxu0 0.0
    %4986 = vmatpush1.msra.mxu0 0.0
    %4987 = vmatprep.subr.mxu0 0.0
    %4988 = vmatpush1.msra.mxu0 0.0
    %4989 = vmatprep.subr.mxu0 0.0
    %4990 = vmatpush1.msra.mxu0 0.0
    %4991 = vmatprep.subr.mxu0 0.0
    %4992 = vmatpush1.msra.mxu0 0.0
    %4993 = vmatprep.subr.mxu0 0.0
    %4994 = vmatpush1.msra.mxu0 0.0
    %4995 = vmatprep.subr.mxu0 0.0
    %4996 = vmatpush1.msra.mxu0 0.0
    %4997 = vmatprep.subr.mxu0 0.0
    %4998 = vmatpush1.msra.mxu0 0.0
    %4999 = vmatprep.subr.mxu0 0.0
    %5000 = vmatpush1.msra.mxu0 0.0
    %5001 = vmatprep.subr.mxu0 0.0
    %5002 = vmatpush1.msra.mxu0 0.0
    %5003 = vmatprep.subr.mxu0 0.0
    %5004 = vmatpush1.msra.mxu0 0.0
    %5005 = vmatprep.subr.mxu0 0.0
    %5006 = vmatpush1.msra.mxu0 0.0
    %5007 = vmatprep.subr.mxu0 0.0
    %5008 = vmatpush1.msra.mxu0 0.0
    %5009 = vmatprep.subr.mxu0 0.0
    %5010 = vmatpush1.msra.mxu0 0.0
    %5011 = vmatprep.subr.mxu0 0.0
    %5012 = vmatpush1.msra.mxu0 0.0
    %5013 = vmatprep.subr.mxu0 0.0
    %5014 = vmatpush1.msra.mxu0 0.0
    %5015 = vmatprep.mubr.f32.mxu0 0.0
    %5016 = vmatmul.mubr.f32.gmra.mrb[0].mxu0 %v4943
    %v5017 = vpop.f32.mrb[0].mxu0
    %v5018 = vadd.f32 0.0, %v5017
    %v5019 = vpop.f32.mrb[0].mxu0
    %5020 = vmatprep.mubr.f32.mxu0 0.0
    %5021 = vmatmul.mubr.f32.gmra.mrb[0].mxu0 %v4946
    %v5022 = vpop.f32.mrb[0].mxu0
    %v5023 = vadd.f32 0.0, %v5022
    %v5024 = vpop.f32.mrb[0].mxu0
    %5025 = vmatprep.mubr.f32.mxu0 0.0
    %5026 = vmatmul.mubr.f32.gmra.mrb[0].mxu0 %v4949
    %v5027 = vpop.f32.mrb[0].mxu0
    %v5028 = vadd.f32 0.0, %v5027
    %v5029 = vpop.f32.mrb[0].mxu0
    %5030 = vdwg.mxu0
    %5034 = vrot.lane.b32.xlu0 %v4200, 64
    %v5035 = vpop.permute.xlu0 %5034
    %5036 = vrot.lane.b32.xlu0 %v4206, 64
    %v5037 = vpop.permute.xlu0 %5036
    %5038 = vrot.lane.b32.xlu0 %v4212, 64
    %v5039 = vpop.permute.xlu0 %5038
    %v5044 = vsel %vm1409, %v4925, 0
    %v5047 = vsel %vm1409, %v4927, 0
    %v5050 = vsel %vm1409, %v4929, 0
    %5052 = vmatprep.subr.mxu0 0.0
    %5053 = vmatpush1.msra.mxu0 %v5035
    %5054 = vmatprep.subr.mxu0 0.0
    %5055 = vmatpush1.msra.mxu0 %v5037
    %5056 = vmatprep.subr.mxu0 0.0
    %5057 = vmatpush1.msra.mxu0 %v5039
    %5058 = vmatprep.subr.mxu0 0.0
    %5059 = vmatpush1.msra.mxu0 0.0
    %5060 = vmatprep.subr.mxu0 0.0
    %5061 = vmatpush1.msra.mxu0 0.0
    %5062 = vmatprep.subr.mxu0 0.0
    %5063 = vmatpush1.msra.mxu0 0.0
    %5064 = vmatprep.subr.mxu0 0.0
    %5065 = vmatpush1.msra.mxu0 0.0
    %5066 = vmatprep.subr.mxu0 0.0
    %5067 = vmatpush1.msra.mxu0 0.0
    %5068 = vmatprep.subr.mxu0 0.0
    %5069 = vmatpush1.msra.mxu0 0.0
    %5070 = vmatprep.subr.mxu0 0.0
    %5071 = vmatpush1.msra.mxu0 0.0
    %5072 = vmatprep.subr.mxu0 0.0
    %5073 = vmatpush1.msra.mxu0 0.0
    %5074 = vmatprep.subr.mxu0 0.0
    %5075 = vmatpush1.msra.mxu0 0.0
    %5076 = vmatprep.subr.mxu0 0.0
    %5077 = vmatpush1.msra.mxu0 0.0
    %5078 = vmatprep.subr.mxu0 0.0
    %5079 = vmatpush1.msra.mxu0 0.0
    %5080 = vmatprep.subr.mxu0 0.0
    %5081 = vmatpush1.msra.mxu0 0.0
    %5082 = vmatprep.subr.mxu0 0.0
    %5083 = vmatpush1.msra.mxu0 0.0
    %5084 = vmatprep.subr.mxu0 0.0
    %5085 = vmatpush1.msra.mxu0 0.0
    %5086 = vmatprep.subr.mxu0 0.0
    %5087 = vmatpush1.msra.mxu0 0.0
    %5088 = vmatprep.subr.mxu0 0.0
    %5089 = vmatpush1.msra.mxu0 0.0
    %5090 = vmatprep.subr.mxu0 0.0
    %5091 = vmatpush1.msra.mxu0 0.0
    %5092 = vmatprep.subr.mxu0 0.0
    %5093 = vmatpush1.msra.mxu0 0.0
    %5094 = vmatprep.subr.mxu0 0.0
    %5095 = vmatpush1.msra.mxu0 0.0
    %5096 = vmatprep.subr.mxu0 0.0
    %5097 = vmatpush1.msra.mxu0 0.0
    %5098 = vmatprep.subr.mxu0 0.0
    %5099 = vmatpush1.msra.mxu0 0.0
    %5100 = vmatprep.subr.mxu0 0.0
    %5101 = vmatpush1.msra.mxu0 0.0
    %5102 = vmatprep.subr.mxu0 0.0
    %5103 = vmatpush1.msra.mxu0 0.0
    %5104 = vmatprep.subr.mxu0 0.0
    %5105 = vmatpush1.msra.mxu0 0.0
    %5106 = vmatprep.subr.mxu0 0.0
    %5107 = vmatpush1.msra.mxu0 0.0
    %5108 = vmatprep.subr.mxu0 0.0
    %5109 = vmatpush1.msra.mxu0 0.0
    %5110 = vmatprep.subr.mxu0 0.0
    %5111 = vmatpush1.msra.mxu0 0.0
    %5112 = vmatprep.subr.mxu0 0.0
    %5113 = vmatpush1.msra.mxu0 0.0
    %5114 = vmatprep.subr.mxu0 0.0
    %5115 = vmatpush1.msra.mxu0 0.0
    %5116 = vmatprep.mubr.f32.mxu0 0.0
    %5117 = vmatmul.mubr.f32.gmra.mrb[0].mxu0 %v5044
    %v5118 = vpop.f32.mrb[0].mxu0
    %v5119 = vadd.f32 0.0, %v5118
    %v5120 = vpop.f32.mrb[0].mxu0
    %5121 = vmatprep.mubr.f32.mxu0 0.0
    %5122 = vmatmul.mubr.f32.gmra.mrb[0].mxu0 %v5047
    %v5123 = vpop.f32.mrb[0].mxu0
    %v5124 = vadd.f32 0.0, %v5123
    %v5125 = vpop.f32.mrb[0].mxu0
    %5126 = vmatprep.mubr.f32.mxu0 0.0
    %5127 = vmatmul.mubr.f32.gmra.mrb[0].mxu0 %v5050
    %v5128 = vpop.f32.mrb[0].mxu0
    %v5129 = vadd.f32 0.0, %v5128
    %v5130 = vpop.f32.mrb[0].mxu0
    %5131 = vdwg.mxu0
    %v5133 = vsel %vm452, %v3982, 0
    %v5136 = vsel %vm452, %v3988, 0
    %v5139 = vsel %vm452, %v3994, 0
    %v5142 = vsel %vm452, %v4083, 0
    %v5145 = vsel %vm452, %v4089, 0
    %v5148 = vsel %vm452, %v4095, 0
    %5150 = vmatprep.subr.mxu0 0.0
    %5151 = vmatpush1.xpose.msra.mxu0 %v5142
    %5152 = vmatprep.subr.mxu0 0.0
    %5153 = vmatpush1.xpose.msra.mxu0 %v5145
    %5154 = vmatprep.subr.mxu0 0.0
    %5155 = vmatpush1.xpose.msra.mxu0 %v5148
    %5156 = vmatprep.subr.mxu0 0.0
    %5157 = vmatpush1.xpose.msra.mxu0 0.0
    %5158 = vmatprep.subr.mxu0 0.0
    %5159 = vmatpush1.xpose.msra.mxu0 0.0
    %5160 = vmatprep.subr.mxu0 0.0
    %5161 = vmatpush1.xpose.msra.mxu0 0.0
    %5162 = vmatprep.subr.mxu0 0.0
    %5163 = vmatpush1.xpose.msra.mxu0 0.0
    %5164 = vmatprep.subr.mxu0 0.0
    %5165 = vmatpush1.xpose.msra.mxu0 0.0
    %5166 = vmatprep.subr.mxu0 0.0
    %5167 = vmatpush1.xpose.msra.mxu0 0.0
    %5168 = vmatprep.subr.mxu0 0.0
    %5169 = vmatpush1.xpose.msra.mxu0 0.0
    %5170 = vmatprep.subr.mxu0 0.0
    %5171 = vmatpush1.xpose.msra.mxu0 0.0
    %5172 = vmatprep.subr.mxu0 0.0
    %5173 = vmatpush1.xpose.msra.mxu0 0.0
    %5174 = vmatprep.subr.mxu0 0.0
    %5175 = vmatpush1.xpose.msra.mxu0 0.0
    %5176 = vmatprep.subr.mxu0 0.0
    %5177 = vmatpush1.xpose.msra.mxu0 0.0
    %5178 = vmatprep.subr.mxu0 0.0
    %5179 = vmatpush1.xpose.msra.mxu0 0.0
    %5180 = vmatprep.subr.mxu0 0.0
    %5181 = vmatpush1.xpose.msra.mxu0 0.0
    %5182 = vmatprep.subr.mxu0 0.0
    %5183 = vmatpush1.xpose.msra.mxu0 0.0
    %5184 = vmatprep.subr.mxu0 0.0
    %5185 = vmatpush1.xpose.msra.mxu0 0.0
    %5186 = vmatprep.subr.mxu0 0.0
    %5187 = vmatpush1.xpose.msra.mxu0 0.0
    %5188 = vmatprep.subr.mxu0 0.0
    %5189 = vmatpush1.xpose.msra.mxu0 0.0
    %5190 = vmatprep.subr.mxu0 0.0
    %5191 = vmatpush1.xpose.msra.mxu0 0.0
    %5192 = vmatprep.subr.mxu0 0.0
    %5193 = vmatpush1.xpose.msra.mxu0 0.0
    %5194 = vmatprep.subr.mxu0 0.0
    %5195 = vmatpush1.xpose.msra.mxu0 0.0
    %5196 = vmatprep.subr.mxu0 0.0
    %5197 = vmatpush1.xpose.msra.mxu0 0.0
    %5198 = vmatprep.subr.mxu0 0.0
    %5199 = vmatpush1.xpose.msra.mxu0 0.0
    %5200 = vmatprep.subr.mxu0 0.0
    %5201 = vmatpush1.xpose.msra.mxu0 0.0
    %5202 = vmatprep.subr.mxu0 0.0
    %5203 = vmatpush1.xpose.msra.mxu0 0.0
    %5204 = vmatprep.subr.mxu0 0.0
    %5205 = vmatpush1.xpose.msra.mxu0 0.0
    %5206 = vmatprep.subr.mxu0 0.0
    %5207 = vmatpush1.xpose.msra.mxu0 0.0
    %5208 = vmatprep.subr.mxu0 0.0
    %5209 = vmatpush1.xpose.msra.mxu0 0.0
    %5210 = vmatprep.subr.mxu0 0.0
    %5211 = vmatpush1.xpose.msra.mxu0 0.0
    %5212 = vmatprep.subr.mxu0 0.0
    %5213 = vmatpush1.xpose.msra.mxu0 0.0
    %5214 = vmatprep.mubr.f32.mxu0 0.0
    %5215 = vmatmul.mubr.f32.gmra.mrb[0].mxu0 %v5133
    %v5216 = vpop.f32.mrb[0].mxu0
    %v5217 = vadd.f32 %v865, %v5216
    %v5218 = vpop.f32.mrb[0].mxu0
    %5219 = vmatprep.mubr.f32.mxu0 0.0
    %5220 = vmatmul.mubr.f32.gmra.mrb[0].mxu0 %v5136
    %v5221 = vpop.f32.mrb[0].mxu0
    %v5222 = vadd.f32 %v866, %v5221
    %v5223 = vpop.f32.mrb[0].mxu0
    %5224 = vmatprep.mubr.f32.mxu0 0.0
    %5225 = vmatmul.mubr.f32.gmra.mrb[0].mxu0 %v5139
    %v5226 = vpop.f32.mrb[0].mxu0
    %v5227 = vadd.f32 %v867, %v5226
    %v5228 = vpop.f32.mrb[0].mxu0
    %5229 = vdwg.mxu0
    %v5231 = vsel %vm452, %v4000, 0
    %v5234 = vsel %vm452, %v4006, 0
    %v5237 = vsel %vm452, %v4012, 0
    %v5240 = vsel %vm452, %v4101, 0
    %v5243 = vsel %vm452, %v4107, 0
    %v5246 = vsel %vm452, %v4113, 0
    %5248 = vmatprep.subr.mxu0 0.0
    %5249 = vmatpush1.xpose.msra.mxu0 %v5240
    %5250 = vmatprep.subr.mxu0 0.0
    %5251 = vmatpush1.xpose.msra.mxu0 %v5243
    %5252 = vmatprep.subr.mxu0 0.0
    %5253 = vmatpush1.xpose.msra.mxu0 %v5246
    %5254 = vmatprep.subr.mxu0 0.0
    %5255 = vmatpush1.xpose.msra.mxu0 0.0
    %5256 = vmatprep.subr.mxu0 0.0
    %5257 = vmatpush1.xpose.msra.mxu0 0.0
    %5258 = vmatprep.subr.mxu0 0.0
    %5259 = vmatpush1.xpose.msra.mxu0 0.0
    %5260 = vmatprep.subr.mxu0 0.0
    %5261 = vmatpush1.xpose.msra.mxu0 0.0
    %5262 = vmatprep.subr.mxu0 0.0
    %5263 = vmatpush1.xpose.msra.mxu0 0.0
    %5264 = vmatprep.subr.mxu0 0.0
    %5265 = vmatpush1.xpose.msra.mxu0 0.0
    %5266 = vmatprep.subr.mxu0 0.0
    %5267 = vmatpush1.xpose.msra.mxu0 0.0
    %5268 = vmatprep.subr.mxu0 0.0
    %5269 = vmatpush1.xpose.msra.mxu0 0.0
    %5270 = vmatprep.subr.mxu0 0.0
    %5271 = vmatpush1.xpose.msra.mxu0 0.0
    %5272 = vmatprep.subr.mxu0 0.0
    %5273 = vmatpush1.xpose.msra.mxu0 0.0
    %5274 = vmatprep.subr.mxu0 0.0
    %5275 = vmatpush1.xpose.msra.mxu0 0.0
    %5276 = vmatprep.subr.mxu0 0.0
    %5277 = vmatpush1.xpose.msra.mxu0 0.0
    %5278 = vmatprep.subr.mxu0 0.0
    %5279 = vmatpush1.xpose.msra.mxu0 0.0
    %5280 = vmatprep.subr.mxu0 0.0
    %5281 = vmatpush1.xpose.msra.mxu0 0.0
    %5282 = vmatprep.subr.mxu0 0.0
    %5283 = vmatpush1.xpose.msra.mxu0 0.0
    %5284 = vmatprep.subr.mxu0 0.0
    %5285 = vmatpush1.xpose.msra.mxu0 0.0
    %5286 = vmatprep.subr.mxu0 0.0
    %5287 = vmatpush1.xpose.msra.mxu0 0.0
    %5288 = vmatprep.subr.mxu0 0.0
    %5289 = vmatpush1.xpose.msra.mxu0 0.0
    %5290 = vmatprep.subr.mxu0 0.0
    %5291 = vmatpush1.xpose.msra.mxu0 0.0
    %5292 = vmatprep.subr.mxu0 0.0
    %5293 = vmatpush1.xpose.msra.mxu0 0.0
    %5294 = vmatprep.subr.mxu0 0.0
    %5295 = vmatpush1.xpose.msra.mxu0 0.0
    %5296 = vmatprep.subr.mxu0 0.0
    %5297 = vmatpush1.xpose.msra.mxu0 0.0
    %5298 = vmatprep.subr.mxu0 0.0
    %5299 = vmatpush1.xpose.msra.mxu0 0.0
    %5300 = vmatprep.subr.mxu0 0.0
    %5301 = vmatpush1.xpose.msra.mxu0 0.0
    %5302 = vmatprep.subr.mxu0 0.0
    %5303 = vmatpush1.xpose.msra.mxu0 0.0
    %5304 = vmatprep.subr.mxu0 0.0
    %5305 = vmatpush1.xpose.msra.mxu0 0.0
    %5306 = vmatprep.subr.mxu0 0.0
    %5307 = vmatpush1.xpose.msra.mxu0 0.0
    %5308 = vmatprep.subr.mxu0 0.0
    %5309 = vmatpush1.xpose.msra.mxu0 0.0
    %5310 = vmatprep.subr.mxu0 0.0
    %5311 = vmatpush1.xpose.msra.mxu0 0.0
    %5312 = vmatprep.mubr.f32.mxu0 0.0
    %5313 = vmatmul.mubr.f32.gmra.mrb[0].mxu0 %v5231
    %v5314 = vpop.f32.mrb[0].mxu0
    %v5315 = vadd.f32 %v865, %v5314
    %v5316 = vpop.f32.mrb[0].mxu0
    %5317 = vmatprep.mubr.f32.mxu0 0.0
    %5318 = vmatmul.mubr.f32.gmra.mrb[0].mxu0 %v5234
    %v5319 = vpop.f32.mrb[0].mxu0
    %v5320 = vadd.f32 %v866, %v5319
    %v5321 = vpop.f32.mrb[0].mxu0
    %5322 = vmatprep.mubr.f32.mxu0 0.0
    %5323 = vmatmul.mubr.f32.gmra.mrb[0].mxu0 %v5237
    %v5324 = vpop.f32.mrb[0].mxu0
    %v5325 = vadd.f32 %v867, %v5324
    %v5326 = vpop.f32.mrb[0].mxu0
    %5327 = vdwg.mxu0
    %v5328 = vsel %vm1409, %v5217, -inf
    %5329 = vmax.xlane.f32.xlu0 %v5328
    %v5330 = vpop.xlane.xlu0 %5329
    %v5331 = vsel %vm1409, %v5222, -inf
    %5332 = vmax.xlane.f32.xlu0 %v5331
    %v5333 = vpop.xlane.xlu0 %5332
    %v5334 = vsel %vm1409, %v5227, -inf
    %5335 = vmax.xlane.f32.xlu0 %v5334
    %v5336 = vpop.xlane.xlu0 %5335
    %v5337 = vsel %vm1409, %v5315, -inf
    %5338 = vmax.xlane.f32.xlu0 %v5337
    %v5339 = vpop.xlane.xlu0 %5338
    %v5340 = vsel %vm1409, %v5320, -inf
    %5341 = vmax.xlane.f32.xlu0 %v5340
    %v5342 = vpop.xlane.xlu0 %5341
    %v5343 = vsel %vm1409, %v5325, -inf
    %5344 = vmax.xlane.f32.xlu0 %v5343
    %v5345 = vpop.xlane.xlu0 %5344
    %v5346 = vsub.f32 %v5217, %v5330
    %v5347 = vsub.f32 %v5222, %v5333
    %v5348 = vsub.f32 %v5227, %v5336
    %v5349 = vsub.f32 %v5315, %v5339
    %v5350 = vsub.f32 %v5320, %v5342
    %v5351 = vsub.f32 %v5325, %v5345
    %v5352 = vmul.f32 %v5346, 1.442695
    %v5353 = vpow.pop %v5352
    %v5354 = vmul.f32 %v5347, 1.442695
    %v5355 = vpow.pop %v5354
    %v5356 = vmul.f32 %v5348, 1.442695
    %v5357 = vpow.pop %v5356
    %v5358 = vmul.f32 %v5349, 1.442695
    %v5359 = vpow.pop %v5358
    %v5360 = vmul.f32 %v5350, 1.442695
    %v5361 = vpow.pop %v5360
    %v5362 = vmul.f32 %v5351, 1.442695
    %v5363 = vpow.pop %v5362
    %v5364 = vsel %vm1409, %v5353, 0.0
    %5365 = vadd.xlane.f32.xlu0 %v5364
    %v5366 = vpop.xlane.xlu0 %5365
    %v5367 = vsel %vm1409, %v5355, 0.0
    %5368 = vadd.xlane.f32.xlu0 %v5367
    %v5369 = vpop.xlane.xlu0 %5368
    %v5370 = vsel %vm1409, %v5357, 0.0
    %5371 = vadd.xlane.f32.xlu0 %v5370
    %v5372 = vpop.xlane.xlu0 %5371
    %v5373 = vsel %vm1409, %v5359, 0.0
    %5374 = vadd.xlane.f32.xlu0 %v5373
    %v5375 = vpop.xlane.xlu0 %5374
    %v5376 = vsel %vm1409, %v5361, 0.0
    %5377 = vadd.xlane.f32.xlu0 %v5376
    %v5378 = vpop.xlane.xlu0 %5377
    %v5379 = vsel %vm1409, %v5363, 0.0
    %5380 = vadd.xlane.f32.xlu0 %v5379
    %v5381 = vpop.xlane.xlu0 %5380
    %v5382 = vrcp.pop %v5366
    %v5383 = vmul.f32 %v5353, %v5382
    %v5384 = vrcp.pop %v5369
    %v5385 = vmul.f32 %v5355, %v5384
    %v5386 = vrcp.pop %v5372
    %v5387 = vmul.f32 %v5357, %v5386
    %v5388 = vrcp.pop %v5375
    %v5389 = vmul.f32 %v5359, %v5388
    %v5390 = vrcp.pop %v5378
    %v5391 = vmul.f32 %v5361, %v5390
    %v5392 = vrcp.pop %v5381
    %v5393 = vmul.f32 %v5363, %v5392
    %v5395 = vsel %vm1409, %v5383, 0
    %v5398 = vsel %vm1409, %v5385, 0
    %v5401 = vsel %vm1409, %v5387, 0
    %5403 = vmatprep.subr.mxu0 0.0
    %5404 = vmatpush1.msra.mxu0 %v4184
    %5405 = vmatprep.subr.mxu0 0.0
    %5406 = vmatpush1.msra.mxu0 %v4190
    %5407 = vmatprep.subr.mxu0 0.0
    %5408 = vmatpush1.msra.mxu0 %v4196
    %5409 = vmatprep.subr.mxu0 0.0
    %5410 = vmatpush1.msra.mxu0 0.0
    %5411 = vmatprep.subr.mxu0 0.0
    %5412 = vmatpush1.msra.mxu0 0.0
    %5413 = vmatprep.subr.mxu0 0.0
    %5414 = vmatpush1.msra.mxu0 0.0
    %5415 = vmatprep.subr.mxu0 0.0
    %5416 = vmatpush1.msra.mxu0 0.0
    %5417 = vmatprep.subr.mxu0 0.0
    %5418 = vmatpush1.msra.mxu0 0.0
    %5419 = vmatprep.subr.mxu0 0.0
    %5420 = vmatpush1.msra.mxu0 0.0
    %5421 = vmatprep.subr.mxu0 0.0
    %5422 = vmatpush1.msra.mxu0 0.0
    %5423 = vmatprep.subr.mxu0 0.0
    %5424 = vmatpush1.msra.mxu0 0.0
    %5425 = vmatprep.subr.mxu0 0.0
    %5426 = vmatpush1.msra.mxu0 0.0
    %5427 = vmatprep.subr.mxu0 0.0
    %5428 = vmatpush1.msra.mxu0 0.0
    %5429 = vmatprep.subr.mxu0 0.0
    %5430 = vmatpush1.msra.mxu0 0.0
    %5431 = vmatprep.subr.mxu0 0.0
    %5432 = vmatpush1.msra.mxu0 0.0
    %5433 = vmatprep.subr.mxu0 0.0
    %5434 = vmatpush1.msra.mxu0 0.0
    %5435 = vmatprep.subr.mxu0 0.0
    %5436 = vmatpush1.msra.mxu0 0.0
    %5437 = vmatprep.subr.mxu0 0.0
    %5438 = vmatpush1.msra.mxu0 0.0
    %5439 = vmatprep.subr.mxu0 0.0
    %5440 = vmatpush1.msra.mxu0 0.0
    %5441 = vmatprep.subr.mxu0 0.0
    %5442 = vmatpush1.msra.mxu0 0.0
    %5443 = vmatprep.subr.mxu0 0.0
    %5444 = vmatpush1.msra.mxu0 0.0
    %5445 = vmatprep.subr.mxu0 0.0
    %5446 = vmatpush1.msra.mxu0 0.0
    %5447 = vmatprep.subr.mxu0 0.0
    %5448 = vmatpush1.msra.mxu0 0.0
    %5449 = vmatprep.subr.mxu0 0.0
    %5450 = vmatpush1.msra.mxu0 0.0
    %5451 = vmatprep.subr.mxu0 0.0
    %5452 = vmatpush1.msra.mxu0 0.0
    %5453 = vmatprep.subr.mxu0 0.0
    %5454 = vmatpush1.msra.mxu0 0.0
    %5455 = vmatprep.subr.mxu0 0.0
    %5456 = vmatpush1.msra.mxu0 0.0
    %5457 = vmatprep.subr.mxu0 0.0
    %5458 = vmatpush1.msra.mxu0 0.0
    %5459 = vmatprep.subr.mxu0 0.0
    %5460 = vmatpush1.msra.mxu0 0.0
    %5461 = vmatprep.subr.mxu0 0.0
    %5462 = vmatpush1.msra.mxu0 0.0
    %5463 = vmatprep.subr.mxu0 0.0
    %5464 = vmatpush1.msra.mxu0 0.0
    %5465 = vmatprep.subr.mxu0 0.0
    %5466 = vmatpush1.msra.mxu0 0.0
    %5467 = vmatprep.mubr.f32.mxu0 0.0
    %5468 = vmatmul.mubr.f32.gmra.mrb[0].mxu0 %v5395
    %v5469 = vpop.f32.mrb[0].mxu0
    %v5470 = vadd.f32 0.0, %v5469
    %v5471 = vpop.f32.mrb[0].mxu0
    %5472 = vmatprep.mubr.f32.mxu0 0.0
    %5473 = vmatmul.mubr.f32.gmra.mrb[0].mxu0 %v5398
    %v5474 = vpop.f32.mrb[0].mxu0
    %v5475 = vadd.f32 0.0, %v5474
    %v5476 = vpop.f32.mrb[0].mxu0
    %5477 = vmatprep.mubr.f32.mxu0 0.0
    %5478 = vmatmul.mubr.f32.gmra.mrb[0].mxu0 %v5401
    %v5479 = vpop.f32.mrb[0].mxu0
    %v5480 = vadd.f32 0.0, %v5479
    %v5481 = vpop.f32.mrb[0].mxu0
    %5482 = vdwg.mxu0
    %v5484 = vsel %vm1409, %v5389, 0
    %v5487 = vsel %vm1409, %v5391, 0
    %v5490 = vsel %vm1409, %v5393, 0
    %5492 = vmatprep.subr.mxu0 0.0
    %5493 = vmatpush1.msra.mxu0 %v4202
    %5494 = vmatprep.subr.mxu0 0.0
    %5495 = vmatpush1.msra.mxu0 %v4208
    %5496 = vmatprep.subr.mxu0 0.0
    %5497 = vmatpush1.msra.mxu0 %v4214
    %5498 = vmatprep.subr.mxu0 0.0
    %5499 = vmatpush1.msra.mxu0 0.0
    %5500 = vmatprep.subr.mxu0 0.0
    %5501 = vmatpush1.msra.mxu0 0.0
    %5502 = vmatprep.subr.mxu0 0.0
    %5503 = vmatpush1.msra.mxu0 0.0
    %5504 = vmatprep.subr.mxu0 0.0
    %5505 = vmatpush1.msra.mxu0 0.0
    %5506 = vmatprep.subr.mxu0 0.0
    %5507 = vmatpush1.msra.mxu0 0.0
    %5508 = vmatprep.subr.mxu0 0.0
    %5509 = vmatpush1.msra.mxu0 0.0
    %5510 = vmatprep.subr.mxu0 0.0
    %5511 = vmatpush1.msra.mxu0 0.0
    %5512 = vmatprep.subr.mxu0 0.0
    %5513 = vmatpush1.msra.mxu0 0.0
    %5514 = vmatprep.subr.mxu0 0.0
    %5515 = vmatpush1.msra.mxu0 0.0
    %5516 = vmatprep.subr.mxu0 0.0
    %5517 = vmatpush1.msra.mxu0 0.0
    %5518 = vmatprep.subr.mxu0 0.0
    %5519 = vmatpush1.msra.mxu0 0.0
    %5520 = vmatprep.subr.mxu0 0.0
    %5521 = vmatpush1.msra.mxu0 0.0
    %5522 = vmatprep.subr.mxu0 0.0
    %5523 = vmatpush1.msra.mxu0 0.0
    %5524 = vmatprep.subr.mxu0 0.0
    %5525 = vmatpush1.msra.mxu0 0.0
    %5526 = vmatprep.subr.mxu0 0.0
    %5527 = vmatpush1.msra.mxu0 0.0
    %5528 = vmatprep.subr.mxu0 0.0
    %5529 = vmatpush1.msra.mxu0 0.0
    %5530 = vmatprep.subr.mxu0 0.0
    %5531 = vmatpush1.msra.mxu0 0.0
    %5532 = vmatprep.subr.mxu0 0.0
    %5533 = vmatpush1.msra.mxu0 0.0
    %5534 = vmatprep.subr.mxu0 0.0
    %5535 = vmatpush1.msra.mxu0 0.0
    %5536 = vmatprep.subr.mxu0 0.0
    %5537 = vmatpush1.msra.mxu0 0.0
    %5538 = vmatprep.subr.mxu0 0.0
    %5539 = vmatpush1.msra.mxu0 0.0
    %5540 = vmatprep.subr.mxu0 0.0
    %5541 = vmatpush1.msra.mxu0 0.0
    %5542 = vmatprep.subr.mxu0 0.0
    %5543 = vmatpush1.msra.mxu0 0.0
    %5544 = vmatprep.subr.mxu0 0.0
    %5545 = vmatpush1.msra.mxu0 0.0
    %5546 = vmatprep.subr.mxu0 0.0
    %5547 = vmatpush1.msra.mxu0 0.0
    %5548 = vmatprep.subr.mxu0 0.0
    %5549 = vmatpush1.msra.mxu0 0.0
    %5550 = vmatprep.subr.mxu0 0.0
    %5551 = vmatpush1.msra.mxu0 0.0
    %5552 = vmatprep.subr.mxu0 0.0
    %5553 = vmatpush1.msra.mxu0 0.0
    %5554 = vmatprep.subr.mxu0 0.0
    %5555 = vmatpush1.msra.mxu0 0.0
    %5556 = vmatprep.mubr.f32.mxu0 0.0
    %5557 = vmatmul.mubr.f32.gmra.mrb[0].mxu0 %v5484
    %v5558 = vpop.f32.mrb[0].mxu0
    %v5559 = vadd.f32 0.0, %v5558
    %v5560 = vpop.f32.mrb[0].mxu0
    %5561 = vmatprep.mubr.f32.mxu0 0.0
    %5562 = vmatmul.mubr.f32.gmra.mrb[0].mxu0 %v5487
    %v5563 = vpop.f32.mrb[0].mxu0
    %v5564 = vadd.f32 0.0, %v5563
    %v5565 = vpop.f32.mrb[0].mxu0
    %5566 = vmatprep.mubr.f32.mxu0 0.0
    %5567 = vmatmul.mubr.f32.gmra.mrb[0].mxu0 %v5490
    %v5568 = vpop.f32.mrb[0].mxu0
    %v5569 = vadd.f32 0.0, %v5568
    %v5570 = vpop.f32.mrb[0].mxu0
    %5571 = vdwg.mxu0
    %5572 = vrot.lane.b32.xlu0 %v3982, 64
    %v5573 = vpop.permute.xlu0 %5572
    %5574 = vrot.lane.b32.xlu0 %v3988, 64
    %v5575 = vpop.permute.xlu0 %5574
    %5576 = vrot.lane.b32.xlu0 %v3994, 64
    %v5577 = vpop.permute.xlu0 %5576
    %5578 = vrot.lane.b32.xlu0 %v4083, 64
    %v5579 = vpop.permute.xlu0 %5578
    %5580 = vrot.lane.b32.xlu0 %v4089, 64
    %v5581 = vpop.permute.xlu0 %5580
    %5582 = vrot.lane.b32.xlu0 %v4095, 64
    %v5583 = vpop.permute.xlu0 %5582
    %v5584 = vsel %vm452, %v5573, 0
    %v5586 = vsel %vm452, %v5575, 0
    %v5588 = vsel %vm452, %v5577, 0
    %v5590 = vsel %vm452, %v5579, 0
    %v5592 = vsel %vm452, %v5581, 0
    %v5594 = vsel %vm452, %v5583, 0
    %5596 = vmatprep.subr.mxu0 0.0
    %5597 = vmatpush1.xpose.msra.mxu0 %v5590
    %5598 = vmatprep.subr.mxu0 0.0
    %5599 = vmatpush1.xpose.msra.mxu0 %v5592
    %5600 = vmatprep.subr.mxu0 0.0
    %5601 = vmatpush1.xpose.msra.mxu0 %v5594
    %5602 = vmatprep.subr.mxu0 0.0
    %5603 = vmatpush1.xpose.msra.mxu0 0.0
    %5604 = vmatprep.subr.mxu0 0.0
    %5605 = vmatpush1.xpose.msra.mxu0 0.0
    %5606 = vmatprep.subr.mxu0 0.0
    %5607 = vmatpush1.xpose.msra.mxu0 0.0
    %5608 = vmatprep.subr.mxu0 0.0
    %5609 = vmatpush1.xpose.msra.mxu0 0.0
    %5610 = vmatprep.subr.mxu0 0.0
    %5611 = vmatpush1.xpose.msra.mxu0 0.0
    %5612 = vmatprep.subr.mxu0 0.0
    %5613 = vmatpush1.xpose.msra.mxu0 0.0
    %5614 = vmatprep.subr.mxu0 0.0
    %5615 = vmatpush1.xpose.msra.mxu0 0.0
    %5616 = vmatprep.subr.mxu0 0.0
    %5617 = vmatpush1.xpose.msra.mxu0 0.0
    %5618 = vmatprep.subr.mxu0 0.0
    %5619 = vmatpush1.xpose.msra.mxu0 0.0
    %5620 = vmatprep.subr.mxu0 0.0
    %5621 = vmatpush1.xpose.msra.mxu0 0.0
    %5622 = vmatprep.subr.mxu0 0.0
    %5623 = vmatpush1.xpose.msra.mxu0 0.0
    %5624 = vmatprep.subr.mxu0 0.0
    %5625 = vmatpush1.xpose.msra.mxu0 0.0
    %5626 = vmatprep.subr.mxu0 0.0
    %5627 = vmatpush1.xpose.msra.mxu0 0.0
    %5628 = vmatprep.subr.mxu0 0.0
    %5629 = vmatpush1.xpose.msra.mxu0 0.0
    %5630 = vmatprep.subr.mxu0 0.0
    %5631 = vmatpush1.xpose.msra.mxu0 0.0
    %5632 = vmatprep.subr.mxu0 0.0
    %5633 = vmatpush1.xpose.msra.mxu0 0.0
    %5634 = vmatprep.subr.mxu0 0.0
    %5635 = vmatpush1.xpose.msra.mxu0 0.0
    %5636 = vmatprep.subr.mxu0 0.0
    %5637 = vmatpush1.xpose.msra.mxu0 0.0
    %5638 = vmatprep.subr.mxu0 0.0
    %5639 = vmatpush1.xpose.msra.mxu0 0.0
    %5640 = vmatprep.subr.mxu0 0.0
    %5641 = vmatpush1.xpose.msra.mxu0 0.0
    %5642 = vmatprep.subr.mxu0 0.0
    %5643 = vmatpush1.xpose.msra.mxu0 0.0
    %5644 = vmatprep.subr.mxu0 0.0
    %5645 = vmatpush1.xpose.msra.mxu0 0.0
    %5646 = vmatprep.subr.mxu0 0.0
    %5647 = vmatpush1.xpose.msra.mxu0 0.0
    %5648 = vmatprep.subr.mxu0 0.0
    %5649 = vmatpush1.xpose.msra.mxu0 0.0
    %5650 = vmatprep.subr.mxu0 0.0
    %5651 = vmatpush1.xpose.msra.mxu0 0.0
    %5652 = vmatprep.subr.mxu0 0.0
    %5653 = vmatpush1.xpose.msra.mxu0 0.0
    %5654 = vmatprep.subr.mxu0 0.0
    %5655 = vmatpush1.xpose.msra.mxu0 0.0
    %5656 = vmatprep.subr.mxu0 0.0
    %5657 = vmatpush1.xpose.msra.mxu0 0.0
    %5658 = vmatprep.subr.mxu0 0.0
    %5659 = vmatpush1.xpose.msra.mxu0 0.0
    %5660 = vmatprep.mubr.f32.mxu0 0.0
    %5661 = vmatmul.mubr.f32.gmra.mrb[0].mxu0 %v5584
    %v5662 = vpop.f32.mrb[0].mxu0
    %v5663 = vadd.f32 %v865, %v5662
    %v5664 = vpop.f32.mrb[0].mxu0
    %5665 = vmatprep.mubr.f32.mxu0 0.0
    %5666 = vmatmul.mubr.f32.gmra.mrb[0].mxu0 %v5586
    %v5667 = vpop.f32.mrb[0].mxu0
    %v5668 = vadd.f32 %v866, %v5667
    %v5669 = vpop.f32.mrb[0].mxu0
    %5670 = vmatprep.mubr.f32.mxu0 0.0
    %5671 = vmatmul.mubr.f32.gmra.mrb[0].mxu0 %v5588
    %v5672 = vpop.f32.mrb[0].mxu0
    %v5673 = vadd.f32 %v867, %v5672
    %v5674 = vpop.f32.mrb[0].mxu0
    %5675 = vdwg.mxu0
    %5676 = vrot.lane.b32.xlu0 %v4000, 64
    %v5677 = vpop.permute.xlu0 %5676
    %5678 = vrot.lane.b32.xlu0 %v4006, 64
    %v5679 = vpop.permute.xlu0 %5678
    %5680 = vrot.lane.b32.xlu0 %v4012, 64
    %v5681 = vpop.permute.xlu0 %5680
    %5682 = vrot.lane.b32.xlu0 %v4101, 64
    %v5683 = vpop.permute.xlu0 %5682
    %5684 = vrot.lane.b32.xlu0 %v4107, 64
    %v5685 = vpop.permute.xlu0 %5684
    %5686 = vrot.lane.b32.xlu0 %v4113, 64
    %v5687 = vpop.permute.xlu0 %5686
    %v5688 = vsel %vm452, %v5677, 0
    %v5690 = vsel %vm452, %v5679, 0
    %v5692 = vsel %vm452, %v5681, 0
    %v5694 = vsel %vm452, %v5683, 0
    %v5696 = vsel %vm452, %v5685, 0
    %v5698 = vsel %vm452, %v5687, 0
    %5700 = vmatprep.subr.mxu0 0.0
    %5701 = vmatpush1.xpose.msra.mxu0 %v5694
    %5702 = vmatprep.subr.mxu0 0.0
    %5703 = vmatpush1.xpose.msra.mxu0 %v5696
    %5704 = vmatprep.subr.mxu0 0.0
    %5705 = vmatpush1.xpose.msra.mxu0 %v5698
    %5706 = vmatprep.subr.mxu0 0.0
    %5707 = vmatpush1.xpose.msra.mxu0 0.0
    %5708 = vmatprep.subr.mxu0 0.0
    %5709 = vmatpush1.xpose.msra.mxu0 0.0
    %5710 = vmatprep.subr.mxu0 0.0
    %5711 = vmatpush1.xpose.msra.mxu0 0.0
    %5712 = vmatprep.subr.mxu0 0.0
    %5713 = vmatpush1.xpose.msra.mxu0 0.0
    %5714 = vmatprep.subr.mxu0 0.0
    %5715 = vmatpush1.xpose.msra.mxu0 0.0
    %5716 = vmatprep.subr.mxu0 0.0
    %5717 = vmatpush1.xpose.msra.mxu0 0.0
    %5718 = vmatprep.subr.mxu0 0.0
    %5719 = vmatpush1.xpose.msra.mxu0 0.0
    %5720 = vmatprep.subr.mxu0 0.0
    %5721 = vmatpush1.xpose.msra.mxu0 0.0
    %5722 = vmatprep.subr.mxu0 0.0
    %5723 = vmatpush1.xpose.msra.mxu0 0.0
    %5724 = vmatprep.subr.mxu0 0.0
    %5725 = vmatpush1.xpose.msra.mxu0 0.0
    %5726 = vmatprep.subr.mxu0 0.0
    %5727 = vmatpush1.xpose.msra.mxu0 0.0
    %5728 = vmatprep.subr.mxu0 0.0
    %5729 = vmatpush1.xpose.msra.mxu0 0.0
    %5730 = vmatprep.subr.mxu0 0.0
    %5731 = vmatpush1.xpose.msra.mxu0 0.0
    %5732 = vmatprep.subr.mxu0 0.0
    %5733 = vmatpush1.xpose.msra.mxu0 0.0
    %5734 = vmatprep.subr.mxu0 0.0
    %5735 = vmatpush1.xpose.msra.mxu0 0.0
    %5736 = vmatprep.subr.mxu0 0.0
    %5737 = vmatpush1.xpose.msra.mxu0 0.0
    %5738 = vmatprep.subr.mxu0 0.0
    %5739 = vmatpush1.xpose.msra.mxu0 0.0
    %5740 = vmatprep.subr.mxu0 0.0
    %5741 = vmatpush1.xpose.msra.mxu0 0.0
    %5742 = vmatprep.subr.mxu0 0.0
    %5743 = vmatpush1.xpose.msra.mxu0 0.0
    %5744 = vmatprep.subr.mxu0 0.0
    %5745 = vmatpush1.xpose.msra.mxu0 0.0
    %5746 = vmatprep.subr.mxu0 0.0
    %5747 = vmatpush1.xpose.msra.mxu0 0.0
    %5748 = vmatprep.subr.mxu0 0.0
    %5749 = vmatpush1.xpose.msra.mxu0 0.0
    %5750 = vmatprep.subr.mxu0 0.0
    %5751 = vmatpush1.xpose.msra.mxu0 0.0
    %5752 = vmatprep.subr.mxu0 0.0
    %5753 = vmatpush1.xpose.msra.mxu0 0.0
    %5754 = vmatprep.subr.mxu0 0.0
    %5755 = vmatpush1.xpose.msra.mxu0 0.0
    %5756 = vmatprep.subr.mxu0 0.0
    %5757 = vmatpush1.xpose.msra.mxu0 0.0
    %5758 = vmatprep.subr.mxu0 0.0
    %5759 = vmatpush1.xpose.msra.mxu0 0.0
    %5760 = vmatprep.subr.mxu0 0.0
    %5761 = vmatpush1.xpose.msra.mxu0 0.0
    %5762 = vmatprep.subr.mxu0 0.0
    %5763 = vmatpush1.xpose.msra.mxu0 0.0
    %5764 = vmatprep.mubr.f32.mxu0 0.0
    %5765 = vmatmul.mubr.f32.gmra.mrb[0].mxu0 %v5688
    %v5766 = vpop.f32.mrb[0].mxu0
    %v5767 = vadd.f32 %v865, %v5766
    %v5768 = vpop.f32.mrb[0].mxu0
    %5769 = vmatprep.mubr.f32.mxu0 0.0
    %5770 = vmatmul.mubr.f32.gmra.mrb[0].mxu0 %v5690
    %v5771 = vpop.f32.mrb[0].mxu0
    %v5772 = vadd.f32 %v866, %v5771
    %v5773 = vpop.f32.mrb[0].mxu0
    %5774 = vmatprep.mubr.f32.mxu0 0.0
    %5775 = vmatmul.mubr.f32.gmra.mrb[0].mxu0 %v5692
    %v5776 = vpop.f32.mrb[0].mxu0
    %v5777 = vadd.f32 %v867, %v5776
    %v5778 = vpop.f32.mrb[0].mxu0
    %5779 = vdwg.mxu0
    %v5780 = vsel %vm1409, %v5663, -inf
    %5781 = vmax.xlane.f32.xlu0 %v5780
    %v5782 = vpop.xlane.xlu0 %5781
    %v5783 = vsel %vm1409, %v5668, -inf
    %5784 = vmax.xlane.f32.xlu0 %v5783
    %v5785 = vpop.xlane.xlu0 %5784
    %v5786 = vsel %vm1409, %v5673, -inf
    %5787 = vmax.xlane.f32.xlu0 %v5786
    %v5788 = vpop.xlane.xlu0 %5787
    %v5789 = vsel %vm1409, %v5767, -inf
    %5790 = vmax.xlane.f32.xlu0 %v5789
    %v5791 = vpop.xlane.xlu0 %5790
    %v5792 = vsel %vm1409, %v5772, -inf
    %5793 = vmax.xlane.f32.xlu0 %v5792
    %v5794 = vpop.xlane.xlu0 %5793
    %v5795 = vsel %vm1409, %v5777, -inf
    %5796 = vmax.xlane.f32.xlu0 %v5795
    %v5797 = vpop.xlane.xlu0 %5796
    %v5798 = vsub.f32 %v5663, %v5782
    %v5799 = vsub.f32 %v5668, %v5785
    %v5800 = vsub.f32 %v5673, %v5788
    %v5801 = vsub.f32 %v5767, %v5791
    %v5802 = vsub.f32 %v5772, %v5794
    %v5803 = vsub.f32 %v5777, %v5797
    %v5804 = vmul.f32 %v5798, 1.442695
    %v5805 = vpow.pop %v5804
    %v5806 = vmul.f32 %v5799, 1.442695
    %v5807 = vpow.pop %v5806
    %v5808 = vmul.f32 %v5800, 1.442695
    %v5809 = vpow.pop %v5808
    %v5810 = vmul.f32 %v5801, 1.442695
    %v5811 = vpow.pop %v5810
    %v5812 = vmul.f32 %v5802, 1.442695
    %v5813 = vpow.pop %v5812
    %v5814 = vmul.f32 %v5803, 1.442695
    %v5815 = vpow.pop %v5814
    %v5816 = vsel %vm1409, %v5805, 0.0
    %5817 = vadd.xlane.f32.xlu0 %v5816
    %v5818 = vpop.xlane.xlu0 %5817
    %v5819 = vsel %vm1409, %v5807, 0.0
    %5820 = vadd.xlane.f32.xlu0 %v5819
    %v5821 = vpop.xlane.xlu0 %5820
    %v5822 = vsel %vm1409, %v5809, 0.0
    %5823 = vadd.xlane.f32.xlu0 %v5822
    %v5824 = vpop.xlane.xlu0 %5823
    %v5825 = vsel %vm1409, %v5811, 0.0
    %5826 = vadd.xlane.f32.xlu0 %v5825
    %v5827 = vpop.xlane.xlu0 %5826
    %v5828 = vsel %vm1409, %v5813, 0.0
    %5829 = vadd.xlane.f32.xlu0 %v5828
    %v5830 = vpop.xlane.xlu0 %5829
    %v5831 = vsel %vm1409, %v5815, 0.0
    %5832 = vadd.xlane.f32.xlu0 %v5831
    %v5833 = vpop.xlane.xlu0 %5832
    %v5834 = vrcp.pop %v5818
    %v5835 = vmul.f32 %v5805, %v5834
    %v5836 = vrcp.pop %v5821
    %v5837 = vmul.f32 %v5807, %v5836
    %v5838 = vrcp.pop %v5824
    %v5839 = vmul.f32 %v5809, %v5838
    %v5840 = vrcp.pop %v5827
    %v5841 = vmul.f32 %v5811, %v5840
    %v5842 = vrcp.pop %v5830
    %v5843 = vmul.f32 %v5813, %v5842
    %v5844 = vrcp.pop %v5833
    %v5845 = vmul.f32 %v5815, %v5844
    %5849 = vrot.lane.b32.xlu0 %v4184, 64
    %v5850 = vpop.permute.xlu0 %5849
    %5851 = vrot.lane.b32.xlu0 %v4190, 64
    %v5852 = vpop.permute.xlu0 %5851
    %5853 = vrot.lane.b32.xlu0 %v4196, 64
    %v5854 = vpop.permute.xlu0 %5853
    %v5859 = vsel %vm1409, %v5835, 0
    %v5862 = vsel %vm1409, %v5837, 0
    %v5865 = vsel %vm1409, %v5839, 0
    %5867 = vmatprep.subr.mxu0 0.0
    %5868 = vmatpush1.msra.mxu0 %v5850
    %5869 = vmatprep.subr.mxu0 0.0
    %5870 = vmatpush1.msra.mxu0 %v5852
    %5871 = vmatprep.subr.mxu0 0.0
    %5872 = vmatpush1.msra.mxu0 %v5854
    %5873 = vmatprep.subr.mxu0 0.0
    %5874 = vmatpush1.msra.mxu0 0.0
    %5875 = vmatprep.subr.mxu0 0.0
    %5876 = vmatpush1.msra.mxu0 0.0
    %5877 = vmatprep.subr.mxu0 0.0
    %5878 = vmatpush1.msra.mxu0 0.0
    %5879 = vmatprep.subr.mxu0 0.0
    %5880 = vmatpush1.msra.mxu0 0.0
    %5881 = vmatprep.subr.mxu0 0.0
    %5882 = vmatpush1.msra.mxu0 0.0
    %5883 = vmatprep.subr.mxu0 0.0
    %5884 = vmatpush1.msra.mxu0 0.0
    %5885 = vmatprep.subr.mxu0 0.0
    %5886 = vmatpush1.msra.mxu0 0.0
    %5887 = vmatprep.subr.mxu0 0.0
    %5888 = vmatpush1.msra.mxu0 0.0
    %5889 = vmatprep.subr.mxu0 0.0
    %5890 = vmatpush1.msra.mxu0 0.0
    %5891 = vmatprep.subr.mxu0 0.0
    %5892 = vmatpush1.msra.mxu0 0.0
    %5893 = vmatprep.subr.mxu0 0.0
    %5894 = vmatpush1.msra.mxu0 0.0
    %5895 = vmatprep.subr.mxu0 0.0
    %5896 = vmatpush1.msra.mxu0 0.0
    %5897 = vmatprep.subr.mxu0 0.0
    %5898 = vmatpush1.msra.mxu0 0.0
    %5899 = vmatprep.subr.mxu0 0.0
    %5900 = vmatpush1.msra.mxu0 0.0
    %5901 = vmatprep.subr.mxu0 0.0
    %5902 = vmatpush1.msra.mxu0 0.0
    %5903 = vmatprep.subr.mxu0 0.0
    %5904 = vmatpush1.msra.mxu0 0.0
    %5905 = vmatprep.subr.mxu0 0.0
    %5906 = vmatpush1.msra.mxu0 0.0
    %5907 = vmatprep.subr.mxu0 0.0
    %5908 = vmatpush1.msra.mxu0 0.0
    %5909 = vmatprep.subr.mxu0 0.0
    %5910 = vmatpush1.msra.mxu0 0.0
    %5911 = vmatprep.subr.mxu0 0.0
    %5912 = vmatpush1.msra.mxu0 0.0
    %5913 = vmatprep.subr.mxu0 0.0
    %5914 = vmatpush1.msra.mxu0 0.0
    %5915 = vmatprep.subr.mxu0 0.0
    %5916 = vmatpush1.msra.mxu0 0.0
    %5917 = vmatprep.subr.mxu0 0.0
    %5918 = vmatpush1.msra.mxu0 0.0
    %5919 = vmatprep.subr.mxu0 0.0
    %5920 = vmatpush1.msra.mxu0 0.0
    %5921 = vmatprep.subr.mxu0 0.0
    %5922 = vmatpush1.msra.mxu0 0.0
    %5923 = vmatprep.subr.mxu0 0.0
    %5924 = vmatpush1.msra.mxu0 0.0
    %5925 = vmatprep.subr.mxu0 0.0
    %5926 = vmatpush1.msra.mxu0 0.0
    %5927 = vmatprep.subr.mxu0 0.0
    %5928 = vmatpush1.msra.mxu0 0.0
    %5929 = vmatprep.subr.mxu0 0.0
    %5930 = vmatpush1.msra.mxu0 0.0
    %5931 = vmatprep.mubr.f32.mxu0 0.0
    %5932 = vmatmul.mubr.f32.gmra.mrb[0].mxu0 %v5859
    %v5933 = vpop.f32.mrb[0].mxu0
    %v5934 = vadd.f32 0.0, %v5933
    %v5935 = vpop.f32.mrb[0].mxu0
    %5936 = vmatprep.mubr.f32.mxu0 0.0
    %5937 = vmatmul.mubr.f32.gmra.mrb[0].mxu0 %v5862
    %v5938 = vpop.f32.mrb[0].mxu0
    %v5939 = vadd.f32 0.0, %v5938
    %v5940 = vpop.f32.mrb[0].mxu0
    %5941 = vmatprep.mubr.f32.mxu0 0.0
    %5942 = vmatmul.mubr.f32.gmra.mrb[0].mxu0 %v5865
    %v5943 = vpop.f32.mrb[0].mxu0
    %v5944 = vadd.f32 0.0, %v5943
    %v5945 = vpop.f32.mrb[0].mxu0
    %5946 = vdwg.mxu0
    %5950 = vrot.lane.b32.xlu0 %v4202, 64
    %v5951 = vpop.permute.xlu0 %5950
    %5952 = vrot.lane.b32.xlu0 %v4208, 64
    %v5953 = vpop.permute.xlu0 %5952
    %5954 = vrot.lane.b32.xlu0 %v4214, 64
    %v5955 = vpop.permute.xlu0 %5954
    %v5960 = vsel %vm1409, %v5841, 0
    %v5963 = vsel %vm1409, %v5843, 0
    %v5966 = vsel %vm1409, %v5845, 0
    %5968 = vmatprep.subr.mxu0 0.0
    %5969 = vmatpush1.msra.mxu0 %v5951
    %5970 = vmatprep.subr.mxu0 0.0
    %5971 = vmatpush1.msra.mxu0 %v5953
    %5972 = vmatprep.subr.mxu0 0.0
    %5973 = vmatpush1.msra.mxu0 %v5955
    %5974 = vmatprep.subr.mxu0 0.0
    %5975 = vmatpush1.msra.mxu0 0.0
    %5976 = vmatprep.subr.mxu0 0.0
    %5977 = vmatpush1.msra.mxu0 0.0
    %5978 = vmatprep.subr.mxu0 0.0
    %5979 = vmatpush1.msra.mxu0 0.0
    %5980 = vmatprep.subr.mxu0 0.0
    %5981 = vmatpush1.msra.mxu0 0.0
    %5982 = vmatprep.subr.mxu0 0.0
    %5983 = vmatpush1.msra.mxu0 0.0
    %5984 = vmatprep.subr.mxu0 0.0
    %5985 = vmatpush1.msra.mxu0 0.0
    %5986 = vmatprep.subr.mxu0 0.0
    %5987 = vmatpush1.msra.mxu0 0.0
    %5988 = vmatprep.subr.mxu0 0.0
    %5989 = vmatpush1.msra.mxu0 0.0
    %5990 = vmatprep.subr.mxu0 0.0
    %5991 = vmatpush1.msra.mxu0 0.0
    %5992 = vmatprep.subr.mxu0 0.0
    %5993 = vmatpush1.msra.mxu0 0.0
    %5994 = vmatprep.subr.mxu0 0.0
    %5995 = vmatpush1.msra.mxu0 0.0
    %5996 = vmatprep.subr.mxu0 0.0
    %5997 = vmatpush1.msra.mxu0 0.0
    %5998 = vmatprep.subr.mxu0 0.0
    %5999 = vmatpush1.msra.mxu0 0.0
    %6000 = vmatprep.subr.mxu0 0.0
    %6001 = vmatpush1.msra.mxu0 0.0
    %6002 = vmatprep.subr.mxu0 0.0
    %6003 = vmatpush1.msra.mxu0 0.0
    %6004 = vmatprep.subr.mxu0 0.0
    %6005 = vmatpush1.msra.mxu0 0.0
    %6006 = vmatprep.subr.mxu0 0.0
    %6007 = vmatpush1.msra.mxu0 0.0
    %6008 = vmatprep.subr.mxu0 0.0
    %6009 = vmatpush1.msra.mxu0 0.0
    %6010 = vmatprep.subr.mxu0 0.0
    %6011 = vmatpush1.msra.mxu0 0.0
    %6012 = vmatprep.subr.mxu0 0.0
    %6013 = vmatpush1.msra.mxu0 0.0
    %6014 = vmatprep.subr.mxu0 0.0
    %6015 = vmatpush1.msra.mxu0 0.0
    %6016 = vmatprep.subr.mxu0 0.0
    %6017 = vmatpush1.msra.mxu0 0.0
    %6018 = vmatprep.subr.mxu0 0.0
    %6019 = vmatpush1.msra.mxu0 0.0
    %6020 = vmatprep.subr.mxu0 0.0
    %6021 = vmatpush1.msra.mxu0 0.0
    %6022 = vmatprep.subr.mxu0 0.0
    %6023 = vmatpush1.msra.mxu0 0.0
    %6024 = vmatprep.subr.mxu0 0.0
    %6025 = vmatpush1.msra.mxu0 0.0
    %6026 = vmatprep.subr.mxu0 0.0
    %6027 = vmatpush1.msra.mxu0 0.0
    %6028 = vmatprep.subr.mxu0 0.0
    %6029 = vmatpush1.msra.mxu0 0.0
    %6030 = vmatprep.subr.mxu0 0.0
    %6031 = vmatpush1.msra.mxu0 0.0
    %6032 = vmatprep.mubr.f32.mxu0 0.0
    %6033 = vmatmul.mubr.f32.gmra.mrb[0].mxu0 %v5960
    %v6034 = vpop.f32.mrb[0].mxu0
    %v6035 = vadd.f32 0.0, %v6034
    %v6036 = vpop.f32.mrb[0].mxu0
    %6037 = vmatprep.mubr.f32.mxu0 0.0
    %6038 = vmatmul.mubr.f32.gmra.mrb[0].mxu0 %v5963
    %v6039 = vpop.f32.mrb[0].mxu0
    %v6040 = vadd.f32 0.0, %v6039
    %v6041 = vpop.f32.mrb[0].mxu0
    %6042 = vmatprep.mubr.f32.mxu0 0.0
    %6043 = vmatmul.mubr.f32.gmra.mrb[0].mxu0 %v5966
    %v6044 = vpop.f32.mrb[0].mxu0
    %v6045 = vadd.f32 0.0, %v6044
    %v6046 = vpop.f32.mrb[0].mxu0
    %6047 = vdwg.mxu0
    %6054 = vrot.lane.b32.xlu0 %v5018, 64
    %v6055 = vpop.permute.xlu0 %6054
    %6056 = vrot.lane.b32.xlu0 %v5023, 64
    %v6057 = vpop.permute.xlu0 %6056
    %6058 = vrot.lane.b32.xlu0 %v5028, 64
    %v6059 = vpop.permute.xlu0 %6058
    %6060 = vrot.lane.b32.xlu0 %v5119, 64
    %v6061 = vpop.permute.xlu0 %6060
    %6062 = vrot.lane.b32.xlu0 %v5124, 64
    %v6063 = vpop.permute.xlu0 %6062
    %6064 = vrot.lane.b32.xlu0 %v5129, 64
    %v6065 = vpop.permute.xlu0 %6064
    %6078 = vrot.lane.b32.xlu0 %v5934, 64
    %v6079 = vpop.permute.xlu0 %6078
    %6080 = vrot.lane.b32.xlu0 %v5939, 64
    %v6081 = vpop.permute.xlu0 %6080
    %6082 = vrot.lane.b32.xlu0 %v5944, 64
    %v6083 = vpop.permute.xlu0 %6082
    %6084 = vrot.lane.b32.xlu0 %v6035, 64
    %v6085 = vpop.permute.xlu0 %6084
    %6086 = vrot.lane.b32.xlu0 %v6040, 64
    %v6087 = vpop.permute.xlu0 %6086
    %6088 = vrot.lane.b32.xlu0 %v6045, 64
    %v6089 = vpop.permute.xlu0 %6088
    %v6096 = vsel %vm452, %v4554, %v6055
    %v6097 = vsel %vm452, %v4559, %v6057
    %v6098 = vsel %vm452, %v4564, %v6059
    %v6099 = vsel %vm452, %v4643, %v6061
    %v6100 = vsel %vm452, %v4648, %v6063
    %v6101 = vsel %vm452, %v4653, %v6065
    %v6102 = vsel %vm452, %v5470, %v6079
    %v6103 = vsel %vm452, %v5475, %v6081
    %v6104 = vsel %vm452, %v5480, %v6083
    %v6105 = vsel %vm452, %v5559, %v6085
    %v6106 = vsel %vm452, %v5564, %v6087
    %v6107 = vsel %vm452, %v5569, %v6089
    %s6108 = scalar_lea.vmem %s13, 256
    %v6109 = vld [vmem:[%s6108] sm:$0xff]
    %v6110 = vld [vmem:[%s6108 + $0x8] sm:$0xff]
    %v6111 = vld [vmem:[%s6108 + $0x10] sm:$0xff]
    %v6112 = vld [vmem:[%s6108 + $0x18] sm:$0xff]
    %v6113 = vld [vmem:[%s6108 + $0x20] sm:$0xff]
    %v6114 = vld [vmem:[%s6108 + $0x28] sm:$0xff]
    %v6115 = vld [vmem:[%s6108 + $0x30] sm:$0xff]
    %v6116 = vld [vmem:[%s6108 + $0x38] sm:$0xff]
    %v6117 = vld [vmem:[%s6108 + $0x40] sm:$0xff]
    %v6118 = vld [vmem:[%s6108 + $0x48] sm:$0xff]
    %v6119 = vld [vmem:[%s6108 + $0x50] sm:$0xff]
    %v6120 = vld [vmem:[%s6108 + $0x58] sm:$0xff]
    %v6121 = vld [vmem:[%s6108 + $0x60] sm:$0xff]
    %v6122 = vld [vmem:[%s6108 + $0x68] sm:$0xff]
    %v6123 = vld [vmem:[%s6108 + $0x70] sm:$0xff]
    %v6124 = vld [vmem:[%s6108 + $0x78] sm:$0xff]
    %v6125 = vld [vmem:[%s6108 + $0x80] sm:$0xff]
    %v6126 = vld [vmem:[%s6108 + $0x88] sm:$0xff]
    %v6127 = vld [vmem:[%s6108 + $0x90] sm:$0xff]
    %v6128 = vld [vmem:[%s6108 + $0x98] sm:$0xff]
    %v6129 = vld [vmem:[%s6108 + $0xa0] sm:$0xff]
    %v6130 = vld [vmem:[%s6108 + $0xa8] sm:$0xff]
    %v6131 = vld [vmem:[%s6108 + $0xb0] sm:$0xff]
    %v6132 = vld [vmem:[%s6108 + $0xb8] sm:$0xff]
    %v6133 = vld [vmem:[%s6108 + $0xc0] sm:$0xff]
    %v6134 = vld [vmem:[%s6108 + $0xc8] sm:$0xff]
    %v6135 = vld [vmem:[%s6108 + $0xd0] sm:$0xff]
    %v6136 = vld [vmem:[%s6108 + $0xd8] sm:$0xff]
    %v6137 = vld [vmem:[%s6108 + $0xe0] sm:$0xff]
    %v6138 = vld [vmem:[%s6108 + $0xe8] sm:$0xff]
    %v6139 = vld [vmem:[%s6108 + $0xf0] sm:$0xff]
    %v6140 = vld [vmem:[%s6108 + $0xf8] sm:$0xff]
    %s6141 = scalar_lea.vmem %s14, 1
    %v6142 = vld [vmem:[%s6141] sm:$0x1]
    %v6144 = vlaneseq
    %v6145 = vshrl.u32 %v6144, 7
    %v6146 = vsub.s32 0, %v6145
    %v6147 = vrot.slane %v6142, %v6146
    %6149 = vmatprep.subr.mxu0 0.0
    %6150 = vmatpush1.msra.mxu0 %v6109
    %6151 = vmatprep.subr.mxu0 0.0
    %6152 = vmatpush1.msra.mxu0 %v6110
    %6153 = vmatprep.subr.mxu0 0.0
    %6154 = vmatpush1.msra.mxu0 %v6111
    %6155 = vmatprep.subr.mxu0 0.0
    %6156 = vmatpush1.msra.mxu0 %v6112
    %6157 = vmatprep.subr.mxu0 0.0
    %6158 = vmatpush1.msra.mxu0 %v6113
    %6159 = vmatprep.subr.mxu0 0.0
    %6160 = vmatpush1.msra.mxu0 %v6114
    %6161 = vmatprep.subr.mxu0 0.0
    %6162 = vmatpush1.msra.mxu0 %v6115
    %6163 = vmatprep.subr.mxu0 0.0
    %6164 = vmatpush1.msra.mxu0 %v6116
    %6165 = vmatprep.subr.mxu0 0.0
    %6166 = vmatpush1.msra.mxu0 %v6117
    %6167 = vmatprep.subr.mxu0 0.0
    %6168 = vmatpush1.msra.mxu0 %v6118
    %6169 = vmatprep.subr.mxu0 0.0
    %6170 = vmatpush1.msra.mxu0 %v6119
    %6171 = vmatprep.subr.mxu0 0.0
    %6172 = vmatpush1.msra.mxu0 %v6120
    %6173 = vmatprep.subr.mxu0 0.0
    %6174 = vmatpush1.msra.mxu0 %v6121
    %6175 = vmatprep.subr.mxu0 0.0
    %6176 = vmatpush1.msra.mxu0 %v6122
    %6177 = vmatprep.subr.mxu0 0.0
    %6178 = vmatpush1.msra.mxu0 %v6123
    %6179 = vmatprep.subr.mxu0 0.0
    %6180 = vmatpush1.msra.mxu0 %v6124
    %6181 = vmatprep.subr.mxu0 0.0
    %6182 = vmatpush1.msra.mxu0 %v6125
    %6183 = vmatprep.subr.mxu0 0.0
    %6184 = vmatpush1.msra.mxu0 %v6126
    %6185 = vmatprep.subr.mxu0 0.0
    %6186 = vmatpush1.msra.mxu0 %v6127
    %6187 = vmatprep.subr.mxu0 0.0
    %6188 = vmatpush1.msra.mxu0 %v6128
    %6189 = vmatprep.subr.mxu0 0.0
    %6190 = vmatpush1.msra.mxu0 %v6129
    %6191 = vmatprep.subr.mxu0 0.0
    %6192 = vmatpush1.msra.mxu0 %v6130
    %6193 = vmatprep.subr.mxu0 0.0
    %6194 = vmatpush1.msra.mxu0 %v6131
    %6195 = vmatprep.subr.mxu0 0.0
    %6196 = vmatpush1.msra.mxu0 %v6132
    %6197 = vmatprep.subr.mxu0 0.0
    %6198 = vmatpush1.msra.mxu0 %v6133
    %6199 = vmatprep.subr.mxu0 0.0
    %6200 = vmatpush1.msra.mxu0 %v6134
    %6201 = vmatprep.subr.mxu0 0.0
    %6202 = vmatpush1.msra.mxu0 %v6135
    %6203 = vmatprep.subr.mxu0 0.0
    %6204 = vmatpush1.msra.mxu0 %v6136
    %6205 = vmatprep.subr.mxu0 0.0
    %6206 = vmatpush1.msra.mxu0 %v6137
    %6207 = vmatprep.subr.mxu0 0.0
    %6208 = vmatpush1.msra.mxu0 %v6138
    %6209 = vmatprep.subr.mxu0 0.0
    %6210 = vmatpush1.msra.mxu0 %v6139
    %6211 = vmatprep.subr.mxu0 0.0
    %6212 = vmatpush1.msra.mxu0 %v6140
    %6213 = vmatprep.mubr.f32.mxu0 %v6102
    %6214 = vmatmul.mubr.f32.gmra.mrb[0].mxu0 %v6096
    %v6215 = vpop.f32.mrb[0].mxu0
    %v6216 = vadd.f32 %v6147, %v6215
    %v6217 = vpop.f32.mrb[0].mxu0
    %6218 = vmatprep.mubr.f32.mxu0 %v6103
    %6219 = vmatmul.mubr.f32.gmra.mrb[0].mxu0 %v6097
    %v6220 = vpop.f32.mrb[0].mxu0
    %v6221 = vadd.f32 %v6147, %v6220
    %v6222 = vpop.f32.mrb[0].mxu0
    %6223 = vmatprep.mubr.f32.mxu0 %v6104
    %6224 = vmatmul.mubr.f32.gmra.mrb[0].mxu0 %v6098
    %v6225 = vpop.f32.mrb[0].mxu0
    %v6226 = vadd.f32 %v6147, %v6225
    %v6227 = vpop.f32.mrb[0].mxu0
    %6228 = vmatprep.mubr.f32.mxu0 %v6105
    %6229 = vmatmul.mubr.f32.gmra.mrb[0].mxu0 %v6099
    %v6230 = vpop.f32.mrb[0].mxu0
    %v6231 = vadd.f32 %v6147, %v6230
    %v6232 = vpop.f32.mrb[0].mxu0
    %6233 = vmatprep.mubr.f32.mxu0 %v6106
    %6234 = vmatmul.mubr.f32.gmra.mrb[0].mxu0 %v6100
    %v6235 = vpop.f32.mrb[0].mxu0
    %v6236 = vadd.f32 %v6147, %v6235
    %v6237 = vpop.f32.mrb[0].mxu0
    %6238 = vmatprep.mubr.f32.mxu0 %v6107
    %6239 = vmatmul.mubr.f32.gmra.mrb[0].mxu0 %v6101
    %v6240 = vpop.f32.mrb[0].mxu0
    %v6241 = vadd.f32 %v6147, %v6240
    %v6242 = vpop.f32.mrb[0].mxu0
    %6243 = vdwg.mxu0
    %v6244 = vadd.f32 %v6216, %v3864
    %v6245 = vadd.f32 %v6221, %v3865
    %v6246 = vadd.f32 %v6226, %v3866
    %v6247 = vadd.f32 %v6231, %v3867
    %v6248 = vadd.f32 %v6236, %v3868
    %v6249 = vadd.f32 %v6241, %v3869
    %s6250 = scalar_lea.vmem %s15, 1
    %v6251 = vld [vmem:[%s6250] sm:$0x1]
    %s6252 = scalar_lea.vmem %s16, 1
    %v6253 = vld [vmem:[%s6252] sm:$0x1]
    %v6254 = vsel %vm354, %v6244, 0.0
    %6255 = vadd.xlane.f32.xlu0 %v6254
    %v6256 = vpop.xlane.xlu0 %6255
    %v6257 = vsel %vm354, %v6245, 0.0
    %6258 = vadd.xlane.f32.xlu0 %v6257
    %v6259 = vpop.xlane.xlu0 %6258
    %v6260 = vsel %vm354, %v6246, 0.0
    %6261 = vadd.xlane.f32.xlu0 %v6260
    %v6262 = vpop.xlane.xlu0 %6261
    %v6263 = vsel %vm354, %v6247, 0.0
    %6264 = vadd.xlane.f32.xlu0 %v6263
    %v6265 = vpop.xlane.xlu0 %6264
    %v6266 = vsel %vm354, %v6248, 0.0
    %6267 = vadd.xlane.f32.xlu0 %v6266
    %v6268 = vpop.xlane.xlu0 %6267
    %v6269 = vsel %vm354, %v6249, 0.0
    %6270 = vadd.xlane.f32.xlu0 %v6269
    %v6271 = vpop.xlane.xlu0 %6270
    %v6272 = vmul.f32 %v6256, %v780
    %v6273 = vmul.f32 %v6259, %v780
    %v6274 = vmul.f32 %v6262, %v780
    %v6275 = vmul.f32 %v6265, %v780
    %v6276 = vmul.f32 %v6268, %v780
    %v6277 = vmul.f32 %v6271, %v780
    %v6278 = vsub.f32 %v6244, %v6272
    %v6279 = vsub.f32 %v6245, %v6273
    %v6280 = vsub.f32 %v6246, %v6274
    %v6281 = vsub.f32 %v6247, %v6275
    %v6282 = vsub.f32 %v6248, %v6276
    %v6283 = vsub.f32 %v6249, %v6277
    %v6284 = vmul.f32 %v6278, %v6278
    %v6285 = vmul.f32 %v6279, %v6279
    %v6286 = vmul.f32 %v6280, %v6280
    %v6287 = vmul.f32 %v6281, %v6281
    %v6288 = vmul.f32 %v6282, %v6282
    %v6289 = vmul.f32 %v6283, %v6283
    %v6290 = vsel %vm354, %v6284, 0.0
    %6291 = vadd.xlane.f32.xlu0 %v6290
    %v6292 = vpop.xlane.xlu0 %6291
    %v6293 = vsel %vm354, %v6285, 0.0
    %6294 = vadd.xlane.f32.xlu0 %v6293
    %v6295 = vpop.xlane.xlu0 %6294
    %v6296 = vsel %vm354, %v6286, 0.0
    %6297 = vadd.xlane.f32.xlu0 %v6296
    %v6298 = vpop.xlane.xlu0 %6297
    %v6299 = vsel %vm354, %v6287, 0.0
    %6300 = vadd.xlane.f32.xlu0 %v6299
    %v6301 = vpop.xlane.xlu0 %6300
    %v6302 = vsel %vm354, %v6288, 0.0
    %6303 = vadd.xlane.f32.xlu0 %v6302
    %v6304 = vpop.xlane.xlu0 %6303
    %v6305 = vsel %vm354, %v6289, 0.0
    %6306 = vadd.xlane.f32.xlu0 %v6305
    %v6307 = vpop.xlane.xlu0 %6306
    %v6308 = vmul.f32 %v6292, %v780
    %v6309 = vmul.f32 %v6295, %v780
    %v6310 = vmul.f32 %v6298, %v780
    %v6311 = vmul.f32 %v6301, %v780
    %v6312 = vmul.f32 %v6304, %v780
    %v6313 = vmul.f32 %v6307, %v780
    %v6314 = vadd.f32 %v6308, 1e-06
    %v6315 = vadd.f32 %v6309, 1e-06
    %v6316 = vadd.f32 %v6310, 1e-06
    %v6317 = vadd.f32 %v6311, 1e-06
    %v6318 = vadd.f32 %v6312, 1e-06
    %v6319 = vadd.f32 %v6313, 1e-06
    %v6320 = vrsqrt.pop %v6314
    %v6321 = vrsqrt.pop %v6315
    %v6322 = vrsqrt.pop %v6316
    %v6323 = vrsqrt.pop %v6317
    %v6324 = vrsqrt.pop %v6318
    %v6325 = vrsqrt.pop %v6319
    %v6326 = vmul.f32 %v6278, %v6320
    %v6327 = vmul.f32 %v6279, %v6321
    %v6328 = vmul.f32 %v6280, %v6322
    %v6329 = vmul.f32 %v6281, %v6323
    %v6330 = vmul.f32 %v6282, %v6324
    %v6331 = vmul.f32 %v6283, %v6325
    %v6333 = vlaneseq
    %v6334 = vshrl.u32 %v6333, 7
    %v6335 = vsub.s32 0, %v6334
    %v6336 = vrot.slane %v6251, %v6335
    %v6338 = vmul.f32 %v6326, %v6336
    %v6339 = vmul.f32 %v6327, %v6336
    %v6340 = vmul.f32 %v6328, %v6336
    %v6341 = vmul.f32 %v6329, %v6336
    %v6342 = vmul.f32 %v6330, %v6336
    %v6343 = vmul.f32 %v6331, %v6336
    %v6345 = vlaneseq
    %v6346 = vshrl.u32 %v6345, 7
    %v6347 = vsub.s32 0, %v6346
    %v6348 = vrot.slane %v6253, %v6347
    %v6350 = vadd.f32 %v6338, %v6348
    %v6351 = vadd.f32 %v6339, %v6348
    %v6352 = vadd.f32 %v6340, %v6348
    %v6353 = vadd.f32 %v6341, %v6348
    %v6354 = vadd.f32 %v6342, %v6348
    %v6355 = vadd.f32 %v6343, %v6348
    %s6356 = scalar_lea.vmem %s17, 32
    %v6357 = vld [vmem:[%s6356] sm:$0xff]
    %v6358 = vld [vmem:[%s6356 + $0x8] sm:$0xff]
    %v6359 = vld [vmem:[%s6356 + $0x10] sm:$0xff]
    %v6360 = vld [vmem:[%s6356 + $0x18] sm:$0xff]
    %s6361 = scalar_lea.vmem %s18, 1
    %v6362 = vld [vmem:[%s6361] sm:$0x1]
    %v6364 = vlaneseq
    %v6365 = vshrl.u32 %v6364, 7
    %v6366 = vsub.s32 0, %v6365
    %v6367 = vrot.slane %v6362, %v6366
    %v6370 = vsel %vm354, %v6350, 0
    %v6373 = vsel %vm354, %v6351, 0
    %v6376 = vsel %vm354, %v6352, 0
    %v6379 = vsel %vm354, %v6353, 0
    %v6382 = vsel %vm354, %v6354, 0
    %v6385 = vsel %vm354, %v6355, 0
    %6387 = vmatprep.subr.mxu0 0.0
    %6388 = vmatpush1.msra.mxu0 %v6357
    %6389 = vmatprep.subr.mxu0 0.0
    %6390 = vmatpush1.msra.mxu0 %v6358
    %6391 = vmatprep.subr.mxu0 0.0
    %6392 = vmatpush1.msra.mxu0 %v6359
    %6393 = vmatprep.subr.mxu0 0.0
    %6394 = vmatpush1.msra.mxu0 %v6360
    %6395 = vmatprep.subr.mxu0 0.0
    %6396 = vmatpush1.msra.mxu0 0.0
    %6397 = vmatprep.subr.mxu0 0.0
    %6398 = vmatpush1.msra.mxu0 0.0
    %6399 = vmatprep.subr.mxu0 0.0
    %6400 = vmatpush1.msra.mxu0 0.0
    %6401 = vmatprep.subr.mxu0 0.0
    %6402 = vmatpush1.msra.mxu0 0.0
    %6403 = vmatprep.subr.mxu0 0.0
    %6404 = vmatpush1.msra.mxu0 0.0
    %6405 = vmatprep.subr.mxu0 0.0
    %6406 = vmatpush1.msra.mxu0 0.0
    %6407 = vmatprep.subr.mxu0 0.0
    %6408 = vmatpush1.msra.mxu0 0.0
    %6409 = vmatprep.subr.mxu0 0.0
    %6410 = vmatpush1.msra.mxu0 0.0
    %6411 = vmatprep.subr.mxu0 0.0
    %6412 = vmatpush1.msra.mxu0 0.0
    %6413 = vmatprep.subr.mxu0 0.0
    %6414 = vmatpush1.msra.mxu0 0.0
    %6415 = vmatprep.subr.mxu0 0.0
    %6416 = vmatpush1.msra.mxu0 0.0
    %6417 = vmatprep.subr.mxu0 0.0
    %6418 = vmatpush1.msra.mxu0 0.0
    %6419 = vmatprep.subr.mxu0 0.0
    %6420 = vmatpush1.msra.mxu0 0.0
    %6421 = vmatprep.subr.mxu0 0.0
    %6422 = vmatpush1.msra.mxu0 0.0
    %6423 = vmatprep.subr.mxu0 0.0
    %6424 = vmatpush1.msra.mxu0 0.0
    %6425 = vmatprep.subr.mxu0 0.0
    %6426 = vmatpush1.msra.mxu0 0.0
    %6427 = vmatprep.subr.mxu0 0.0
    %6428 = vmatpush1.msra.mxu0 0.0
    %6429 = vmatprep.subr.mxu0 0.0
    %6430 = vmatpush1.msra.mxu0 0.0
    %6431 = vmatprep.subr.mxu0 0.0
    %6432 = vmatpush1.msra.mxu0 0.0
    %6433 = vmatprep.subr.mxu0 0.0
    %6434 = vmatpush1.msra.mxu0 0.0
    %6435 = vmatprep.subr.mxu0 0.0
    %6436 = vmatpush1.msra.mxu0 0.0
    %6437 = vmatprep.subr.mxu0 0.0
    %6438 = vmatpush1.msra.mxu0 0.0
    %6439 = vmatprep.subr.mxu0 0.0
    %6440 = vmatpush1.msra.mxu0 0.0
    %6441 = vmatprep.subr.mxu0 0.0
    %6442 = vmatpush1.msra.mxu0 0.0
    %6443 = vmatprep.subr.mxu0 0.0
    %6444 = vmatpush1.msra.mxu0 0.0
    %6445 = vmatprep.subr.mxu0 0.0
    %6446 = vmatpush1.msra.mxu0 0.0
    %6447 = vmatprep.subr.mxu0 0.0
    %6448 = vmatpush1.msra.mxu0 0.0
    %6449 = vmatprep.subr.mxu0 0.0
    %6450 = vmatpush1.msra.mxu0 0.0
    %6451 = vmatprep.mubr.f32.mxu0 0.0
    %6452 = vmatmul.mubr.f32.gmra.mrb[0].mxu0 %v6370
    %v6453 = vpop.f32.mrb[0].mxu0
    %v6454 = vadd.f32 %v6367, %v6453
    %v6455 = vpop.f32.mrb[0].mxu0
    %6456 = vmatprep.mubr.f32.mxu0 0.0
    %6457 = vmatmul.mubr.f32.gmra.mrb[0].mxu0 %v6373
    %v6458 = vpop.f32.mrb[0].mxu0
    %v6459 = vadd.f32 %v6367, %v6458
    %v6460 = vpop.f32.mrb[0].mxu0
    %6461 = vmatprep.mubr.f32.mxu0 0.0
    %6462 = vmatmul.mubr.f32.gmra.mrb[0].mxu0 %v6376
    %v6463 = vpop.f32.mrb[0].mxu0
    %v6464 = vadd.f32 %v6367, %v6463
    %v6465 = vpop.f32.mrb[0].mxu0
    %6466 = vmatprep.mubr.f32.mxu0 0.0
    %6467 = vmatmul.mubr.f32.gmra.mrb[0].mxu0 %v6379
    %v6468 = vpop.f32.mrb[0].mxu0
    %v6469 = vadd.f32 %v6367, %v6468
    %v6470 = vpop.f32.mrb[0].mxu0
    %6471 = vmatprep.mubr.f32.mxu0 0.0
    %6472 = vmatmul.mubr.f32.gmra.mrb[0].mxu0 %v6382
    %v6473 = vpop.f32.mrb[0].mxu0
    %v6474 = vadd.f32 %v6367, %v6473
    %v6475 = vpop.f32.mrb[0].mxu0
    %6476 = vmatprep.mubr.f32.mxu0 0.0
    %6477 = vmatmul.mubr.f32.gmra.mrb[0].mxu0 %v6385
    %v6478 = vpop.f32.mrb[0].mxu0
    %v6479 = vadd.f32 %v6367, %v6478
    %v6480 = vpop.f32.mrb[0].mxu0
    %6481 = vdwg.mxu0
    %v6482 = vmul.f32 %v6454, 0.5
    %v6483 = vmul.f32 %v6459, 0.5
    %v6484 = vmul.f32 %v6464, 0.5
    %v6485 = vmul.f32 %v6469, 0.5
    %v6486 = vmul.f32 %v6474, 0.5
    %v6487 = vmul.f32 %v6479, 0.5
    %v6488 = vmul.f32 %v6454, 0.70710677
    %v6489 = vmul.f32 %v6459, 0.70710677
    %v6490 = vmul.f32 %v6464, 0.70710677
    %v6491 = vmul.f32 %v6469, 0.70710677
    %v6492 = vmul.f32 %v6474, 0.70710677
    %v6493 = vmul.f32 %v6479, 0.70710677
    %vm6494 = vcmp.ge.f32.partialorder %v6488, 0.0
    %vm6495 = vcmp.ge.f32.partialorder %v6489, 0.0
    %vm6496 = vcmp.ge.f32.partialorder %v6490, 0.0
    %vm6497 = vcmp.ge.f32.partialorder %v6491, 0.0
    %vm6498 = vcmp.ge.f32.partialorder %v6492, 0.0
    %vm6499 = vcmp.ge.f32.partialorder %v6493, 0.0
    %v6500 = vsel %vm6494, 1.0, -1.0
    %v6501 = vsel %vm6495, 1.0, -1.0
    %v6502 = vsel %vm6496, 1.0, -1.0
    %v6503 = vsel %vm6497, 1.0, -1.0
    %v6504 = vsel %vm6498, 1.0, -1.0
    %v6505 = vsel %vm6499, 1.0, -1.0
    %v6506 = vand.u32 2147483647, %v6488
    %v6507 = vand.u32 2147483647, %v6489
    %v6508 = vand.u32 2147483647, %v6490
    %v6509 = vand.u32 2147483647, %v6491
    %v6510 = vand.u32 2147483647, %v6492
    %v6511 = vand.u32 2147483647, %v6493
    %v6512 = vmul.f32 %v6506, 0.3275911
    %v6513 = vmul.f32 %v6507, 0.3275911
    %v6514 = vmul.f32 %v6508, 0.3275911
    %v6515 = vmul.f32 %v6509, 0.3275911
    %v6516 = vmul.f32 %v6510, 0.3275911
    %v6517 = vmul.f32 %v6511, 0.3275911
    %v6518 = vadd.f32 %v6512, 1.0
    %v6519 = vadd.f32 %v6513, 1.0
    %v6520 = vadd.f32 %v6514, 1.0
    %v6521 = vadd.f32 %v6515, 1.0
    %v6522 = vadd.f32 %v6516, 1.0
    %v6523 = vadd.f32 %v6517, 1.0
    %v6524 = vrcp.pop %v6518
    %v6525 = vmul.f32 1.0, %v6524
    %v6526 = vrcp.pop %v6519
    %v6527 = vmul.f32 1.0, %v6526
    %v6528 = vrcp.pop %v6520
    %v6529 = vmul.f32 1.0, %v6528
    %v6530 = vrcp.pop %v6521
    %v6531 = vmul.f32 1.0, %v6530
    %v6532 = vrcp.pop %v6522
    %v6533 = vmul.f32 1.0, %v6532
    %v6534 = vrcp.pop %v6523
    %v6535 = vmul.f32 1.0, %v6534
    %v6536 = vmul.f32 %v6525, 1.0614054
    %v6537 = vmul.f32 %v6527, 1.0614054
    %v6538 = vmul.f32 %v6529, 1.0614054
    %v6539 = vmul.f32 %v6531, 1.0614054
    %v6540 = vmul.f32 %v6533, 1.0614054
    %v6541 = vmul.f32 %v6535, 1.0614054
    %v6542 = vadd.f32 %v6536, -1.4531521
    %v6543 = vadd.f32 %v6537, -1.4531521
    %v6544 = vadd.f32 %v6538, -1.4531521
    %v6545 = vadd.f32 %v6539, -1.4531521
    %v6546 = vadd.f32 %v6540, -1.4531521
    %v6547 = vadd.f32 %v6541, -1.4531521
    %v6548 = vmul.f32 %v6542, %v6525
    %v6549 = vmul.f32 %v6543, %v6527
    %v6550 = vmul.f32 %v6544, %v6529
    %v6551 = vmul.f32 %v6545, %v6531
    %v6552 = vmul.f32 %v6546, %v6533
    %v6553 = vmul.f32 %v6547, %v6535
    %v6554 = vadd.f32 %v6548, 1.4214138
    %v6555 = vadd.f32 %v6549, 1.4214138
    %v6556 = vadd.f32 %v6550, 1.4214138
    %v6557 = vadd.f32 %v6551, 1.4214138
    %v6558 = vadd.f32 %v6552, 1.4214138
    %v6559 = vadd.f32 %v6553, 1.4214138
    %v6560 = vmul.f32 %v6554, %v6525
    %v6561 = vmul.f32 %v6555, %v6527
    %v6562 = vmul.f32 %v6556, %v6529
    %v6563 = vmul.f32 %v6557, %v6531
    %v6564 = vmul.f32 %v6558, %v6533
    %v6565 = vmul.f32 %v6559, %v6535
    %v6566 = vadd.f32 %v6560, -0.28449672
    %v6567 = vadd.f32 %v6561, -0.28449672
    %v6568 = vadd.f32 %v6562, -0.28449672
    %v6569 = vadd.f32 %v6563, -0.28449672
    %v6570 = vadd.f32 %v6564, -0.28449672
    %v6571 = vadd.f32 %v6565, -0.28449672
    %v6572 = vmul.f32 %v6566, %v6525
    %v6573 = vmul.f32 %v6567, %v6527
    %v6574 = vmul.f32 %v6568, %v6529
    %v6575 = vmul.f32 %v6569, %v6531
    %v6576 = vmul.f32 %v6570, %v6533
    %v6577 = vmul.f32 %v6571, %v6535
    %v6578 = vadd.f32 %v6572, 0.2548296
    %v6579 = vadd.f32 %v6573, 0.2548296
    %v6580 = vadd.f32 %v6574, 0.2548296
    %v6581 = vadd.f32 %v6575, 0.2548296
    %v6582 = vadd.f32 %v6576, 0.2548296
    %v6583 = vadd.f32 %v6577, 0.2548296
    %v6584 = vmul.f32 %v6578, %v6525
    %v6585 = vmul.f32 %v6579, %v6527
    %v6586 = vmul.f32 %v6580, %v6529
    %v6587 = vmul.f32 %v6581, %v6531
    %v6588 = vmul.f32 %v6582, %v6533
    %v6589 = vmul.f32 %v6583, %v6535
    %v6590 = vsub.f32 0.0, %v6506
    %v6591 = vsub.f32 0.0, %v6507
    %v6592 = vsub.f32 0.0, %v6508
    %v6593 = vsub.f32 0.0, %v6509
    %v6594 = vsub.f32 0.0, %v6510
    %v6595 = vsub.f32 0.0, %v6511
    %v6596 = vmul.f32 %v6590, %v6506
    %v6597 = vmul.f32 %v6591, %v6507
    %v6598 = vmul.f32 %v6592, %v6508
    %v6599 = vmul.f32 %v6593, %v6509
    %v6600 = vmul.f32 %v6594, %v6510
    %v6601 = vmul.f32 %v6595, %v6511
    %v6602 = vmul.f32 %v6596, 1.442695
    %v6603 = vpow.pop %v6602
    %v6604 = vmul.f32 %v6597, 1.442695
    %v6605 = vpow.pop %v6604
    %v6606 = vmul.f32 %v6598, 1.442695
    %v6607 = vpow.pop %v6606
    %v6608 = vmul.f32 %v6599, 1.442695
    %v6609 = vpow.pop %v6608
    %v6610 = vmul.f32 %v6600, 1.442695
    %v6611 = vpow.pop %v6610
    %v6612 = vmul.f32 %v6601, 1.442695
    %v6613 = vpow.pop %v6612
    %v6614 = vmul.f32 %v6584, %v6603
    %v6615 = vmul.f32 %v6585, %v6605
    %v6616 = vmul.f32 %v6586, %v6607
    %v6617 = vmul.f32 %v6587, %v6609
    %v6618 = vmul.f32 %v6588, %v6611
    %v6619 = vmul.f32 %v6589, %v6613
    %v6620 = vsub.f32 1.0, %v6614
    %v6621 = vsub.f32 1.0, %v6615
    %v6622 = vsub.f32 1.0, %v6616
    %v6623 = vsub.f32 1.0, %v6617
    %v6624 = vsub.f32 1.0, %v6618
    %v6625 = vsub.f32 1.0, %v6619
    %v6626 = vmul.f32 %v6500, %v6620
    %v6627 = vmul.f32 %v6501, %v6621
    %v6628 = vmul.f32 %v6502, %v6622
    %v6629 = vmul.f32 %v6503, %v6623
    %v6630 = vmul.f32 %v6504, %v6624
    %v6631 = vmul.f32 %v6505, %v6625
    %v6632 = vadd.f32 %v6626, 1.0
    %v6633 = vadd.f32 %v6627, 1.0
    %v6634 = vadd.f32 %v6628, 1.0
    %v6635 = vadd.f32 %v6629, 1.0
    %v6636 = vadd.f32 %v6630, 1.0
    %v6637 = vadd.f32 %v6631, 1.0
    %v6638 = vmul.f32 %v6482, %v6632
    %v6639 = vmul.f32 %v6483, %v6633
    %v6640 = vmul.f32 %v6484, %v6634
    %v6641 = vmul.f32 %v6485, %v6635
    %v6642 = vmul.f32 %v6486, %v6636
    %v6643 = vmul.f32 %v6487, %v6637
    %s6644 = scalar_lea.vmem %s19, 32
    %v6645 = vld [vmem:[%s6644] sm:$0xff]
    %v6646 = vld [vmem:[%s6644 + $0x8] sm:$0xff]
    %v6647 = vld [vmem:[%s6644 + $0x10] sm:$0xff]
    %v6648 = vld [vmem:[%s6644 + $0x18] sm:$0xff]
    %s6649 = scalar_lea.vmem %s20, 1
    %v6650 = vld [vmem:[%s6649] sm:$0x1]
    %v6652 = vlaneseq
    %v6653 = vshrl.u32 %v6652, 7
    %v6654 = vsub.s32 0, %v6653
    %v6655 = vrot.slane %v6650, %v6654
    %v6658 = vsel %vm354, %v6638, 0
    %v6661 = vsel %vm354, %v6639, 0
    %v6664 = vsel %vm354, %v6640, 0
    %v6667 = vsel %vm354, %v6641, 0
    %v6670 = vsel %vm354, %v6642, 0
    %v6673 = vsel %vm354, %v6643, 0
    %6675 = vmatprep.subr.mxu0 0.0
    %6676 = vmatpush1.msra.mxu0 %v6645
    %6677 = vmatprep.subr.mxu0 0.0
    %6678 = vmatpush1.msra.mxu0 %v6646
    %6679 = vmatprep.subr.mxu0 0.0
    %6680 = vmatpush1.msra.mxu0 %v6647
    %6681 = vmatprep.subr.mxu0 0.0
    %6682 = vmatpush1.msra.mxu0 %v6648
    %6683 = vmatprep.subr.mxu0 0.0
    %6684 = vmatpush1.msra.mxu0 0.0
    %6685 = vmatprep.subr.mxu0 0.0
    %6686 = vmatpush1.msra.mxu0 0.0
    %6687 = vmatprep.subr.mxu0 0.0
    %6688 = vmatpush1.msra.mxu0 0.0
    %6689 = vmatprep.subr.mxu0 0.0
    %6690 = vmatpush1.msra.mxu0 0.0
    %6691 = vmatprep.subr.mxu0 0.0
    %6692 = vmatpush1.msra.mxu0 0.0
    %6693 = vmatprep.subr.mxu0 0.0
    %6694 = vmatpush1.msra.mxu0 0.0
    %6695 = vmatprep.subr.mxu0 0.0
    %6696 = vmatpush1.msra.mxu0 0.0
    %6697 = vmatprep.subr.mxu0 0.0
    %6698 = vmatpush1.msra.mxu0 0.0
    %6699 = vmatprep.subr.mxu0 0.0
    %6700 = vmatpush1.msra.mxu0 0.0
    %6701 = vmatprep.subr.mxu0 0.0
    %6702 = vmatpush1.msra.mxu0 0.0
    %6703 = vmatprep.subr.mxu0 0.0
    %6704 = vmatpush1.msra.mxu0 0.0
    %6705 = vmatprep.subr.mxu0 0.0
    %6706 = vmatpush1.msra.mxu0 0.0
    %6707 = vmatprep.subr.mxu0 0.0
    %6708 = vmatpush1.msra.mxu0 0.0
    %6709 = vmatprep.subr.mxu0 0.0
    %6710 = vmatpush1.msra.mxu0 0.0
    %6711 = vmatprep.subr.mxu0 0.0
    %6712 = vmatpush1.msra.mxu0 0.0
    %6713 = vmatprep.subr.mxu0 0.0
    %6714 = vmatpush1.msra.mxu0 0.0
    %6715 = vmatprep.subr.mxu0 0.0
    %6716 = vmatpush1.msra.mxu0 0.0
    %6717 = vmatprep.subr.mxu0 0.0
    %6718 = vmatpush1.msra.mxu0 0.0
    %6719 = vmatprep.subr.mxu0 0.0
    %6720 = vmatpush1.msra.mxu0 0.0
    %6721 = vmatprep.subr.mxu0 0.0
    %6722 = vmatpush1.msra.mxu0 0.0
    %6723 = vmatprep.subr.mxu0 0.0
    %6724 = vmatpush1.msra.mxu0 0.0
    %6725 = vmatprep.subr.mxu0 0.0
    %6726 = vmatpush1.msra.mxu0 0.0
    %6727 = vmatprep.subr.mxu0 0.0
    %6728 = vmatpush1.msra.mxu0 0.0
    %6729 = vmatprep.subr.mxu0 0.0
    %6730 = vmatpush1.msra.mxu0 0.0
    %6731 = vmatprep.subr.mxu0 0.0
    %6732 = vmatpush1.msra.mxu0 0.0
    %6733 = vmatprep.subr.mxu0 0.0
    %6734 = vmatpush1.msra.mxu0 0.0
    %6735 = vmatprep.subr.mxu0 0.0
    %6736 = vmatpush1.msra.mxu0 0.0
    %6737 = vmatprep.subr.mxu0 0.0
    %6738 = vmatpush1.msra.mxu0 0.0
    %6739 = vmatprep.mubr.f32.mxu0 0.0
    %6740 = vmatmul.mubr.f32.gmra.mrb[0].mxu0 %v6658
    %v6741 = vpop.f32.mrb[0].mxu0
    %v6742 = vadd.f32 %v6655, %v6741
    %v6743 = vpop.f32.mrb[0].mxu0
    %6744 = vmatprep.mubr.f32.mxu0 0.0
    %6745 = vmatmul.mubr.f32.gmra.mrb[0].mxu0 %v6661
    %v6746 = vpop.f32.mrb[0].mxu0
    %v6747 = vadd.f32 %v6655, %v6746
    %v6748 = vpop.f32.mrb[0].mxu0
    %6749 = vmatprep.mubr.f32.mxu0 0.0
    %6750 = vmatmul.mubr.f32.gmra.mrb[0].mxu0 %v6664
    %v6751 = vpop.f32.mrb[0].mxu0
    %v6752 = vadd.f32 %v6655, %v6751
    %v6753 = vpop.f32.mrb[0].mxu0
    %6754 = vmatprep.mubr.f32.mxu0 0.0
    %6755 = vmatmul.mubr.f32.gmra.mrb[0].mxu0 %v6667
    %v6756 = vpop.f32.mrb[0].mxu0
    %v6757 = vadd.f32 %v6655, %v6756
    %v6758 = vpop.f32.mrb[0].mxu0
    %6759 = vmatprep.mubr.f32.mxu0 0.0
    %6760 = vmatmul.mubr.f32.gmra.mrb[0].mxu0 %v6670
    %v6761 = vpop.f32.mrb[0].mxu0
    %v6762 = vadd.f32 %v6655, %v6761
    %v6763 = vpop.f32.mrb[0].mxu0
    %6764 = vmatprep.mubr.f32.mxu0 0.0
    %6765 = vmatmul.mubr.f32.gmra.mrb[0].mxu0 %v6673
    %v6766 = vpop.f32.mrb[0].mxu0
    %v6767 = vadd.f32 %v6655, %v6766
    %v6768 = vpop.f32.mrb[0].mxu0
    %6769 = vdwg.mxu0
    %v6770 = vadd.f32 %v6742, %v6350
    %v6771 = vadd.f32 %v6747, %v6351
    %v6772 = vadd.f32 %v6752, %v6352
    %v6773 = vadd.f32 %v6757, %v6353
    %v6774 = vadd.f32 %v6762, %v6354
    %v6775 = vadd.f32 %v6767, %v6355
    %s6776 = scalar_lea.vmem %s21, 1
    %v6777 = vld [vmem:[%s6776] sm:$0x1]
    %s6778 = scalar_lea.vmem %s22, 1
    %v6779 = vld [vmem:[%s6778] sm:$0x1]
    %v6780 = vsel %vm354, %v6770, 0.0
    %6781 = vadd.xlane.f32.xlu0 %v6780
    %v6782 = vpop.xlane.xlu0 %6781
    %v6783 = vsel %vm354, %v6771, 0.0
    %6784 = vadd.xlane.f32.xlu0 %v6783
    %v6785 = vpop.xlane.xlu0 %6784
    %v6786 = vsel %vm354, %v6772, 0.0
    %6787 = vadd.xlane.f32.xlu0 %v6786
    %v6788 = vpop.xlane.xlu0 %6787
    %v6789 = vsel %vm354, %v6773, 0.0
    %6790 = vadd.xlane.f32.xlu0 %v6789
    %v6791 = vpop.xlane.xlu0 %6790
    %v6792 = vsel %vm354, %v6774, 0.0
    %6793 = vadd.xlane.f32.xlu0 %v6792
    %v6794 = vpop.xlane.xlu0 %6793
    %v6795 = vsel %vm354, %v6775, 0.0
    %6796 = vadd.xlane.f32.xlu0 %v6795
    %v6797 = vpop.xlane.xlu0 %6796
    %v6798 = vmul.f32 %v6782, %v780
    %v6799 = vmul.f32 %v6785, %v780
    %v6800 = vmul.f32 %v6788, %v780
    %v6801 = vmul.f32 %v6791, %v780
    %v6802 = vmul.f32 %v6794, %v780
    %v6803 = vmul.f32 %v6797, %v780
    %v6804 = vsub.f32 %v6770, %v6798
    %v6805 = vsub.f32 %v6771, %v6799
    %v6806 = vsub.f32 %v6772, %v6800
    %v6807 = vsub.f32 %v6773, %v6801
    %v6808 = vsub.f32 %v6774, %v6802
    %v6809 = vsub.f32 %v6775, %v6803
    %v6810 = vmul.f32 %v6804, %v6804
    %v6811 = vmul.f32 %v6805, %v6805
    %v6812 = vmul.f32 %v6806, %v6806
    %v6813 = vmul.f32 %v6807, %v6807
    %v6814 = vmul.f32 %v6808, %v6808
    %v6815 = vmul.f32 %v6809, %v6809
    %v6816 = vsel %vm354, %v6810, 0.0
    %6817 = vadd.xlane.f32.xlu0 %v6816
    %v6818 = vpop.xlane.xlu0 %6817
    %v6819 = vsel %vm354, %v6811, 0.0
    %6820 = vadd.xlane.f32.xlu0 %v6819
    %v6821 = vpop.xlane.xlu0 %6820
    %v6822 = vsel %vm354, %v6812, 0.0
    %6823 = vadd.xlane.f32.xlu0 %v6822
    %v6824 = vpop.xlane.xlu0 %6823
    %v6825 = vsel %vm354, %v6813, 0.0
    %6826 = vadd.xlane.f32.xlu0 %v6825
    %v6827 = vpop.xlane.xlu0 %6826
    %v6828 = vsel %vm354, %v6814, 0.0
    %6829 = vadd.xlane.f32.xlu0 %v6828
    %v6830 = vpop.xlane.xlu0 %6829
    %v6831 = vsel %vm354, %v6815, 0.0
    %6832 = vadd.xlane.f32.xlu0 %v6831
    %v6833 = vpop.xlane.xlu0 %6832
    %v6834 = vmul.f32 %v6818, %v780
    %v6835 = vmul.f32 %v6821, %v780
    %v6836 = vmul.f32 %v6824, %v780
    %v6837 = vmul.f32 %v6827, %v780
    %v6838 = vmul.f32 %v6830, %v780
    %v6839 = vmul.f32 %v6833, %v780
    %v6840 = vadd.f32 %v6834, 1e-06
    %v6841 = vadd.f32 %v6835, 1e-06
    %v6842 = vadd.f32 %v6836, 1e-06
    %v6843 = vadd.f32 %v6837, 1e-06
    %v6844 = vadd.f32 %v6838, 1e-06
    %v6845 = vadd.f32 %v6839, 1e-06
    %v6846 = vrsqrt.pop %v6840
    %v6847 = vrsqrt.pop %v6841
    %v6848 = vrsqrt.pop %v6842
    %v6849 = vrsqrt.pop %v6843
    %v6850 = vrsqrt.pop %v6844
    %v6851 = vrsqrt.pop %v6845
    %v6852 = vmul.f32 %v6804, %v6846
    %v6853 = vmul.f32 %v6805, %v6847
    %v6854 = vmul.f32 %v6806, %v6848
    %v6855 = vmul.f32 %v6807, %v6849
    %v6856 = vmul.f32 %v6808, %v6850
    %v6857 = vmul.f32 %v6809, %v6851
    %v6859 = vlaneseq
    %v6860 = vshrl.u32 %v6859, 7
    %v6861 = vsub.s32 0, %v6860
    %v6862 = vrot.slane %v6777, %v6861
    %v6864 = vmul.f32 %v6852, %v6862
    %v6865 = vmul.f32 %v6853, %v6862
    %v6866 = vmul.f32 %v6854, %v6862
    %v6867 = vmul.f32 %v6855, %v6862
    %v6868 = vmul.f32 %v6856, %v6862
    %v6869 = vmul.f32 %v6857, %v6862
    %v6871 = vlaneseq
    %v6872 = vshrl.u32 %v6871, 7
    %v6873 = vsub.s32 0, %v6872
    %v6874 = vrot.slane %v6779, %v6873
    %v6876 = vadd.f32 %v6864, %v6874
    %v6877 = vadd.f32 %v6865, %v6874
    %v6878 = vadd.f32 %v6866, %v6874
    %v6879 = vadd.f32 %v6867, %v6874
    %v6880 = vadd.f32 %v6868, %v6874
    %v6881 = vadd.f32 %v6869, %v6874
    %v6882 = vld [vmem:[%s25] sm:$0xff]
    %v6883 = vld [vmem:[%s25 + $0x8] sm:$0xff]
    %v6885 = vsel %vm180, %v6882, 0
    %v6888 = vsel %vm180, %v6883, 0
    %6890 = vmatprep.subr.mxu0 0.0
    %6891 = vmatpush1.msra.mxu0 %v6878
    %6892 = vmatprep.subr.mxu0 0.0
    %6893 = vmatpush1.msra.mxu0 0.0
    %6894 = vmatprep.subr.mxu0 0.0
    %6895 = vmatpush1.msra.mxu0 0.0
    %6896 = vmatprep.subr.mxu0 0.0
    %6897 = vmatpush1.msra.mxu0 0.0
    %6898 = vmatprep.subr.mxu0 0.0
    %6899 = vmatpush1.msra.mxu0 0.0
    %6900 = vmatprep.subr.mxu0 0.0
    %6901 = vmatpush1.msra.mxu0 0.0
    %6902 = vmatprep.subr.mxu0 0.0
    %6903 = vmatpush1.msra.mxu0 0.0
    %6904 = vmatprep.subr.mxu0 0.0
    %6905 = vmatpush1.msra.mxu0 0.0
    %6906 = vmatprep.subr.mxu0 0.0
    %6907 = vmatpush1.msra.mxu0 0.0
    %6908 = vmatprep.subr.mxu0 0.0
    %6909 = vmatpush1.msra.mxu0 0.0
    %6910 = vmatprep.subr.mxu0 0.0
    %6911 = vmatpush1.msra.mxu0 0.0
    %6912 = vmatprep.subr.mxu0 0.0
    %6913 = vmatpush1.msra.mxu0 0.0
    %6914 = vmatprep.subr.mxu0 0.0
    %6915 = vmatpush1.msra.mxu0 0.0
    %6916 = vmatprep.subr.mxu0 0.0
    %6917 = vmatpush1.msra.mxu0 0.0
    %6918 = vmatprep.subr.mxu0 0.0
    %6919 = vmatpush1.msra.mxu0 0.0
    %6920 = vmatprep.subr.mxu0 0.0
    %6921 = vmatpush1.msra.mxu0 0.0
    %6922 = vmatprep.subr.mxu0 0.0
    %6923 = vmatpush1.msra.mxu0 0.0
    %6924 = vmatprep.subr.mxu0 0.0
    %6925 = vmatpush1.msra.mxu0 0.0
    %6926 = vmatprep.subr.mxu0 0.0
    %6927 = vmatpush1.msra.mxu0 0.0
    %6928 = vmatprep.subr.mxu0 0.0
    %6929 = vmatpush1.msra.mxu0 0.0
    %6930 = vmatprep.subr.mxu0 0.0
    %6931 = vmatpush1.msra.mxu0 0.0
    %6932 = vmatprep.subr.mxu0 0.0
    %6933 = vmatpush1.msra.mxu0 0.0
    %6934 = vmatprep.subr.mxu0 0.0
    %6935 = vmatpush1.msra.mxu0 0.0
    %6936 = vmatprep.subr.mxu0 0.0
    %6937 = vmatpush1.msra.mxu0 0.0
    %6938 = vmatprep.subr.mxu0 0.0
    %6939 = vmatpush1.msra.mxu0 0.0
    %6940 = vmatprep.subr.mxu0 0.0
    %6941 = vmatpush1.msra.mxu0 0.0
    %6942 = vmatprep.subr.mxu0 0.0
    %6943 = vmatpush1.msra.mxu0 0.0
    %6944 = vmatprep.subr.mxu0 0.0
    %6945 = vmatpush1.msra.mxu0 0.0
    %6946 = vmatprep.subr.mxu0 0.0
    %6947 = vmatpush1.msra.mxu0 0.0
    %6948 = vmatprep.subr.mxu0 0.0
    %6949 = vmatpush1.msra.mxu0 0.0
    %6950 = vmatprep.subr.mxu0 0.0
    %6951 = vmatpush1.msra.mxu0 0.0
    %6952 = vmatprep.subr.mxu0 0.0
    %6953 = vmatpush1.msra.mxu0 0.0
    %6954 = vmatprep.mubr.f32.mxu0 0.0
    %6955 = vmatmul.mubr.f32.gmra.mrb[0].mxu0 %v6885
    %v6956 = vpop.f32.mrb[0].mxu0
    %v6957 = vadd.f32 0.0, %v6956
    %v6958 = vpop.f32.mrb[0].mxu0
    %6959 = vmatprep.mubr.f32.mxu0 0.0
    %6960 = vmatmul.mubr.f32.gmra.mrb[0].mxu0 %v6888
    %v6961 = vpop.f32.mrb[0].mxu0
    %v6962 = vadd.f32 0.0, %v6961
    %v6963 = vpop.f32.mrb[0].mxu0
    %6964 = vdwg.mxu0
    %6967 = vrot.lane.b32.xlu0 %v6957, 32
    %v6968 = vpop.permute.xlu0 %6967
    %6969 = vrot.lane.b32.xlu0 %v6962, 32
    %v6970 = vpop.permute.xlu0 %6969
    %v6973 = vsel %vm354, %v6876, %v6968
    %v6974 = vsel %vm354, %v6877, %v6970
    %6975 = vst.msk [vmem:[#allocation11] sm:$0xff] %vm452, %v6973
    %6976 = vst.msk [vmem:[#allocation11 + $0x8] sm:$0xff] %vm452, %v6974
    %v6977 = vld [vmem:[%s25] sm:$0xff]
    %v6978 = vld [vmem:[%s25 + $0x8] sm:$0xff]
    %v6980 = vsel %vm180, %v6977, 0
    %v6983 = vsel %vm180, %v6978, 0
    %6985 = vmatprep.subr.mxu0 0.0
    %6986 = vmatpush1.msra.mxu0 %v6881
    %6987 = vmatprep.subr.mxu0 0.0
    %6988 = vmatpush1.msra.mxu0 0.0
    %6989 = vmatprep.subr.mxu0 0.0
    %6990 = vmatpush1.msra.mxu0 0.0
    %6991 = vmatprep.subr.mxu0 0.0
    %6992 = vmatpush1.msra.mxu0 0.0
    %6993 = vmatprep.subr.mxu0 0.0
    %6994 = vmatpush1.msra.mxu0 0.0
    %6995 = vmatprep.subr.mxu0 0.0
    %6996 = vmatpush1.msra.mxu0 0.0
    %6997 = vmatprep.subr.mxu0 0.0
    %6998 = vmatpush1.msra.mxu0 0.0
    %6999 = vmatprep.subr.mxu0 0.0
    %7000 = vmatpush1.msra.mxu0 0.0
    %7001 = vmatprep.subr.mxu0 0.0
    %7002 = vmatpush1.msra.mxu0 0.0
    %7003 = vmatprep.subr.mxu0 0.0
    %7004 = vmatpush1.msra.mxu0 0.0
    %7005 = vmatprep.subr.mxu0 0.0
    %7006 = vmatpush1.msra.mxu0 0.0
    %7007 = vmatprep.subr.mxu0 0.0
    %7008 = vmatpush1.msra.mxu0 0.0
    %7009 = vmatprep.subr.mxu0 0.0
    %7010 = vmatpush1.msra.mxu0 0.0
    %7011 = vmatprep.subr.mxu0 0.0
    %7012 = vmatpush1.msra.mxu0 0.0
    %7013 = vmatprep.subr.mxu0 0.0
    %7014 = vmatpush1.msra.mxu0 0.0
    %7015 = vmatprep.subr.mxu0 0.0
    %7016 = vmatpush1.msra.mxu0 0.0
    %7017 = vmatprep.subr.mxu0 0.0
    %7018 = vmatpush1.msra.mxu0 0.0
    %7019 = vmatprep.subr.mxu0 0.0
    %7020 = vmatpush1.msra.mxu0 0.0
    %7021 = vmatprep.subr.mxu0 0.0
    %7022 = vmatpush1.msra.mxu0 0.0
    %7023 = vmatprep.subr.mxu0 0.0
    %7024 = vmatpush1.msra.mxu0 0.0
    %7025 = vmatprep.subr.mxu0 0.0
    %7026 = vmatpush1.msra.mxu0 0.0
    %7027 = vmatprep.subr.mxu0 0.0
    %7028 = vmatpush1.msra.mxu0 0.0
    %7029 = vmatprep.subr.mxu0 0.0
    %7030 = vmatpush1.msra.mxu0 0.0
    %7031 = vmatprep.subr.mxu0 0.0
    %7032 = vmatpush1.msra.mxu0 0.0
    %7033 = vmatprep.subr.mxu0 0.0
    %7034 = vmatpush1.msra.mxu0 0.0
    %7035 = vmatprep.subr.mxu0 0.0
    %7036 = vmatpush1.msra.mxu0 0.0
    %7037 = vmatprep.subr.mxu0 0.0
    %7038 = vmatpush1.msra.mxu0 0.0
    %7039 = vmatprep.subr.mxu0 0.0
    %7040 = vmatpush1.msra.mxu0 0.0
    %7041 = vmatprep.subr.mxu0 0.0
    %7042 = vmatpush1.msra.mxu0 0.0
    %7043 = vmatprep.subr.mxu0 0.0
    %7044 = vmatpush1.msra.mxu0 0.0
    %7045 = vmatprep.subr.mxu0 0.0
    %7046 = vmatpush1.msra.mxu0 0.0
    %7047 = vmatprep.subr.mxu0 0.0
    %7048 = vmatpush1.msra.mxu0 0.0
    %7049 = vmatprep.mubr.f32.mxu0 0.0
    %7050 = vmatmul.mubr.f32.gmra.mrb[0].mxu0 %v6980
    %v7051 = vpop.f32.mrb[0].mxu0
    %v7052 = vadd.f32 0.0, %v7051
    %v7053 = vpop.f32.mrb[0].mxu0
    %7054 = vmatprep.mubr.f32.mxu0 0.0
    %7055 = vmatmul.mubr.f32.gmra.mrb[0].mxu0 %v6983
    %v7056 = vpop.f32.mrb[0].mxu0
    %v7057 = vadd.f32 0.0, %v7056
    %v7058 = vpop.f32.mrb[0].mxu0
    %7059 = vdwg.mxu0
    %7062 = vrot.lane.b32.xlu0 %v7052, 32
    %v7063 = vpop.permute.xlu0 %7062
    %7064 = vrot.lane.b32.xlu0 %v7057, 32
    %v7065 = vpop.permute.xlu0 %7064
    %v7068 = vsel %vm354, %v6879, %v7063
    %v7069 = vsel %vm354, %v6880, %v7065
    %s7070 = scalar_lea.vmem [#allocation11], 16
    %7071 = vst.msk [vmem:[%s7070] sm:$0xff] %vm452, %v7068
    %7072 = vst.msk [vmem:[%s7070 + $0x8] sm:$0xff] %vm452, %v7069
    // Predicated region
    $region122: #{tpu_custom_call.1} parent=1 // pred_check
      _
    $region123: #{tpu_custom_call.1} parent=1 // pred_check_branch
      %7074 = sbr.rel (0) target = $region125
    $region124: #{tpu_custom_call.1} parent=1 // pred_region
      %s7076 = ssub.s32 512, 512
      %7077 = vsyncadd [#allocation5], %s7076
      %s7078 = sshll.u32 [#allocation11], 4
      %s7079 = int_to_ptr.vmem [resolvable:$true] %s7078
      %7084 = dma.vmem_to_hbm [thread:$0]  %s7079, 512, %s26, [#allocation5], 128, 128, 8
    $region125: #{tpu_custom_call.1} parent=1 // pred_fallthru
      _
    // Predicated region
    $region126: #{tpu_custom_call.1} parent=1 // pred_check
      _
    $region127: #{tpu_custom_call.1} parent=1 // pred_check_branch
      %7086 = sbr.rel (0) target = $region129
    $region128: #{tpu_custom_call.1} parent=1 // pred_region
      %7087 = dma.done [#allocation5], 512
    $region129: #{tpu_custom_call.1} parent=1 // pred_fallthru
      _
    %7088 = vsyncpa [#allocation4], 1
    %7089 = vsyncpa [#allocation7], 1
    %7090 = vsyncpa [#allocation10], 1
    %7091 = vsyncpa [#allocation5], 1

</llo_original>
